<compile_context>
chip_gen: v7x
topology: tpu7x:2x2x1
jax: 0.10.0
libtpu: 0.0.40
codegen_flags: <defaults>
</compile_context>

<pallas_src>
import jax
import jax.numpy as jnp
from jax.experimental import pallas as pl
from jax.experimental.pallas import tpu as pltpu


def _round_up(n, m):
    return ((n + m - 1) // m) * m


def _linear_rowsum_kernel(x_ref, w_ref, b_ref, o_ref):
    # x_ref: (tile_b, D) VMEM (streamed)     w_ref: (1, D) VMEM (resident)
    # b_ref: (1,)       SMEM scalar          o_ref: (1, 1, tile_b) VMEM (lane-dense)
    prod = x_ref[...] * w_ref[...]              # VPU broadcast multiply
    row_sum = jnp.sum(prod, axis=-1)            # XLU cross-lane reduce -> (tile_b,)
    # Sublane->lane relayout (XLU) + dense, unmasked lane-oriented store.
    o_ref[0, 0, :] = (row_sum + b_ref[0]).astype(o_ref.dtype)


def simple_test_model(x, w, b, *, max_tile_b=4096):
    """Forward of SimpleTestModel: squeeze(x @ w.T + b, -1).

    x: (B, D) float32
    w: (1, D) float32   (PyTorch nn.Linear weight layout, out_features=1)
    b: (1,)   float32   (PyTorch nn.Linear bias)
    returns: (B,) float32
    """
    B, D = x.shape
    assert w.shape == (1, D) and b.shape == (1,)

    # Small B: collapse to a single grid step (per-step overhead dominates).
    # Large B: big streamed tiles, double-buffered, sharded across TCs.
    if B <= max_tile_b:
        tile_b = max(_round_up(B, 8), 8)
    else:
        tile_b = max_tile_b
    num_tiles = pl.cdiv(B, tile_b)

    out = pl.pallas_call(
        _linear_rowsum_kernel,
        # Lane-dense output slab: one (1, tile_b) row of results per grid step.
        out_shape=jax.ShapeDtypeStruct((num_tiles, 1, tile_b), x.dtype),
        grid=(num_tiles,),
        in_specs=[
            pl.BlockSpec((tile_b, D), lambda i: (i, 0)),   # streamed x tiles
            pl.BlockSpec((1, D), lambda i: (0, 0)),        # resident weight row
            pl.BlockSpec(memory_space=pltpu.SMEM),         # scalar bias in SMEM
        ],
        out_specs=pl.BlockSpec((1, 1, tile_b), lambda i: (i, 0, 0)),
        compiler_params=pltpu.CompilerParams(
            dimension_semantics=("parallel",),
        ),
    )(x, w, b)

    # squeeze(-1) is shape glue; the padded tail (ragged last tile) is sliced off.
    return out.reshape(-1)[:B]


if __name__ == "__main__":
    n_dim = 20     # SimpleTestModel default
    batch = 1024   # single lane-dense grid step

    key = jax.random.PRNGKey(0)
    kx, kw, kb = jax.random.split(key, 3)

    # torch.nn.Linear default init: U(-1/sqrt(in_features), 1/sqrt(in_features))
    bound = 1.0 / (n_dim ** 0.5)
    w = jax.random.uniform(kw, (1, n_dim), jnp.float32, -bound, bound)
    b = jax.random.uniform(kb, (1,), jnp.float32, -bound, bound)

    x = jax.random.normal(kx, (batch, n_dim), jnp.float32)
    y = jax.block_until_ready(simple_test_model(x, w, b))

    # Reference: plain JAX, same semantics as the PyTorch module.
    y_ref = x @ w[0] + b[0]
    assert y.shape == (batch,)
    assert jnp.allclose(y, y_ref, atol=1e-5, rtol=1e-5)

    # Ragged, multi-tile path: forces tile_b=128, 3 grid steps, padded tail.
    x2 = jax.random.normal(kx, (300, n_dim), jnp.float32)
    y2 = jax.block_until_ready(simple_test_model(x2, w, b, max_tile_b=128))
    y2_ref = x2 @ w[0] + b[0]
    assert y2.shape == (300,)
    assert jnp.allclose(y2, y2_ref, atol=1e-5, rtol=1e-5)

    print("KERNEL_OK")
</pallas_src>

<mosaic_0001>
module attributes {stable_mosaic.version = 11 : i64} {
  func.func @_linear_rowsum_kernel(%arg0: i32, %arg1: memref<1024x20xf32, #tpu.memory_space<vmem>>, %arg2: memref<1x20xf32, #tpu.memory_space<vmem>>, %arg3: memref<1xf32, #tpu.memory_space<smem>>, %arg4: memref<1x1x1024xf32, #tpu.memory_space<vmem>>) attributes {dimension_semantics = [#tpu.dimension_semantics<parallel>], iteration_bounds = array<i64: 1>, scalar_prefetch = 0 : i64, scratch_operands = 0 : i64, tpu.core_type = #tpu.core_type<tc>, window_params = [{transform_indices = @transform_0, window_bounds = array<i64: 1024, 20>}, {pipeline_mode = #tpu.pipeline_mode<synchronous>, transform_indices = @transform_1, window_bounds = array<i64: 1, 20>}, {transform_indices = @transform_2, window_bounds = array<i64: 1>}, {transform_indices = @transform_3, window_bounds = array<i64: 1, 1, 1024>}]} {
    %c0 = arith.constant 0 : index
    %c0_0 = arith.constant 0 : index
    %0 = vector.load %arg1[%c0, %c0_0] : memref<1024x20xf32, #tpu.memory_space<vmem>>, vector<1024x20xf32>
    %c0_1 = arith.constant 0 : index
    %c0_2 = arith.constant 0 : index
    %1 = vector.load %arg2[%c0_1, %c0_2] : memref<1x20xf32, #tpu.memory_space<vmem>>, vector<1x20xf32>
    %2 = vector.broadcast %1 : vector<1x20xf32> to vector<1024x20xf32>
    %3 = arith.mulf %0, %2 : vector<1024x20xf32>
    %cst = arith.constant dense<0.000000e+00> : vector<1024xf32>
    %4 = vector.multi_reduction <add>, %3, %cst [1] : vector<1024x20xf32> to vector<1024xf32>
    %c0_3 = arith.constant 0 : index
    %5 = memref.load %arg3[%c0_3] : memref<1xf32, #tpu.memory_space<smem>>
    %6 = vector.broadcast %5 : f32 to vector<1024xf32>
    %7 = arith.addf %4, %6 : vector<1024xf32>
    %c0_4 = arith.constant 0 : index
    %c0_5 = arith.constant 0 : index
    %c0_6 = arith.constant 0 : index
    %8 = vector.load %arg4[%c0_4, %c0_5, %c0_6] : memref<1x1x1024xf32, #tpu.memory_space<vmem>>, vector<1x1x1024xf32>
    %9 = vector.shape_cast %8 : vector<1x1x1024xf32> to vector<1024xf32>
    %10 = vector.shape_cast %7 : vector<1024xf32> to vector<1x1x1024xf32>
    tpu.vector_store %arg4[%c0_4, %c0_5, %c0_6], %10 {strides = array<i32>} : memref<1x1x1024xf32, #tpu.memory_space<vmem>>, vector<1x1x1024xf32>,
    return
  }
  func.func @transform_0(%arg0: i32) -> (i32, i32) {
    %c0_i32 = arith.constant 0 : i32
    %c0_i32_0 = arith.constant 0 : i32
    return %arg0, %c0_i32 : i32, i32
  }
  func.func @transform_1(%arg0: i32) -> (i32, i32) {
    %c0_i32 = arith.constant 0 : i32
    %c0_i32_0 = arith.constant 0 : i32
    %c0_i32_1 = arith.constant 0 : i32
    return %c0_i32, %c0_i32_0 : i32, i32
  }
  func.func @transform_2(%arg0: i32) -> i32 {
    %c0_i32 = arith.constant 0 : i32
    %c0_i32_0 = arith.constant 0 : i32
    return %c0_i32 : i32
  }
  func.func @transform_3(%arg0: i32) -> (i32, i32, i32) {
    %c0_i32 = arith.constant 0 : i32
    %c0_i32_0 = arith.constant 0 : i32
    %c0_i32_1 = arith.constant 0 : i32
    return %arg0, %c0_i32, %c0_i32_0 : i32, i32, i32
  }
}

</mosaic_0001>

<llo_original>
// kernel: tpu_custom_call.1
$region0: #{tpu_custom_call.1}
  #allocation0 [shape = 'u32[]', space=smem, size = 0x4, offset = 0x4, fixed_abs, tag = 'smem constant byte address 0x4 - core index']
  #allocation1 [shape = 'u32[144,128]{1,0:T(1,128)}', space=vmem, size = 0x12000, scoped, tag = 'internal scratch']
  #allocation2 [shape = 'f32[1]{0:T(128)S(6)}', space=smem, size = 0x200, scoped, tag = 'scoped memory for tpu_custom_call.1']
  %s0 = inlined_call_operand.vmem [shape: f32[1024,20], index: 0, kind: input, shape index: {}]
  %s1 = inlined_call_operand.vmem [shape: f32[1,20], index: 1, kind: input, shape index: {}]
  %s2 = inlined_call_operand.<no memory space> [shape: f32[1], index: 2, kind: input, shape index: {}]
  %s3 = inlined_call_operand.hbm [shape: f32[1,1,1024], index: 3, kind: output, shape index: {}]
  %s4 = sld [smem:[#allocation0]]
  $region22: #{tpu_custom_call.1} parent=0
    _
  %s6 = ssub.s32 1, %s4
  %s7 = scalar_select 0, %s6, %s4
  %8 = sst [smem:[#allocation2]] %s2
  $region1: #{tpu_custom_call.1} parent=0
    #allocation3 [shape = 'u8[4096]{0}', space=vmem, size = 0x1000, scoped, tag = 'output window, operand 0, single buffered']
    #allocation4 [shape = 's32[1]{0}', space=sflag, size = 0x4, scoped, tag = 'scoped memory for tpu_custom_call.1']
    %9 = vsyncpa [#allocation4], 0
    // Predicated region
    $region2: #{tpu_custom_call.1} parent=1 // pred_check
      _
    $region3: #{tpu_custom_call.1} parent=1 // pred_check_branch
      %11 = sbr.rel (0) target = $region5
    $region4: #{tpu_custom_call.1} parent=1 // pred_region
      _
    $region5: #{tpu_custom_call.1} parent=1 // pred_fallthru
      _
    // Predicated region
    $region6: #{tpu_custom_call.1} parent=1 // pred_check
      _
    $region7: #{tpu_custom_call.1} parent=1 // pred_check_branch
      %13 = sbr.rel (0) target = $region9
    $region8: #{tpu_custom_call.1} parent=1 // pred_region
      _
    $region9: #{tpu_custom_call.1} parent=1 // pred_fallthru
      _
    // Predicated region
    $region10: #{tpu_custom_call.1} parent=1 // pred_check
      _
    $region11: #{tpu_custom_call.1} parent=1 // pred_check_branch
      %15 = sbr.rel (0) target = $region13
    $region12: #{tpu_custom_call.1} parent=1 // pred_region
      _
    $region13: #{tpu_custom_call.1} parent=1 // pred_fallthru
      _
    %v16 = vld [vmem:[%s0] sm:$0xff]
    %v17 = vld [vmem:[%s0 + $0x8] sm:$0xff]
    %v18 = vld [vmem:[%s0 + $0x10] sm:$0xff]
    %v19 = vld [vmem:[%s0 + $0x18] sm:$0xff]
    %v20 = vld [vmem:[%s0 + $0x20] sm:$0xff]
    %v21 = vld [vmem:[%s0 + $0x28] sm:$0xff]
    %v22 = vld [vmem:[%s0 + $0x30] sm:$0xff]
    %v23 = vld [vmem:[%s0 + $0x38] sm:$0xff]
    %v24 = vld [vmem:[%s0 + $0x40] sm:$0xff]
    %v25 = vld [vmem:[%s0 + $0x48] sm:$0xff]
    %v26 = vld [vmem:[%s0 + $0x50] sm:$0xff]
    %v27 = vld [vmem:[%s0 + $0x58] sm:$0xff]
    %v28 = vld [vmem:[%s0 + $0x60] sm:$0xff]
    %v29 = vld [vmem:[%s0 + $0x68] sm:$0xff]
    %v30 = vld [vmem:[%s0 + $0x70] sm:$0xff]
    %v31 = vld [vmem:[%s0 + $0x78] sm:$0xff]
    %v32 = vld [vmem:[%s0 + $0x80] sm:$0xff]
    %v33 = vld [vmem:[%s0 + $0x88] sm:$0xff]
    %v34 = vld [vmem:[%s0 + $0x90] sm:$0xff]
    %v35 = vld [vmem:[%s0 + $0x98] sm:$0xff]
    %v36 = vld [vmem:[%s0 + $0xa0] sm:$0xff]
    %v37 = vld [vmem:[%s0 + $0xa8] sm:$0xff]
    %v38 = vld [vmem:[%s0 + $0xb0] sm:$0xff]
    %v39 = vld [vmem:[%s0 + $0xb8] sm:$0xff]
    %v40 = vld [vmem:[%s0 + $0xc0] sm:$0xff]
    %v41 = vld [vmem:[%s0 + $0xc8] sm:$0xff]
    %v42 = vld [vmem:[%s0 + $0xd0] sm:$0xff]
    %v43 = vld [vmem:[%s0 + $0xd8] sm:$0xff]
    %v44 = vld [vmem:[%s0 + $0xe0] sm:$0xff]
    %v45 = vld [vmem:[%s0 + $0xe8] sm:$0xff]
    %v46 = vld [vmem:[%s0 + $0xf0] sm:$0xff]
    %v47 = vld [vmem:[%s0 + $0xf8] sm:$0xff]
    %v48 = vld [vmem:[%s0 + $0x100] sm:$0xff]
    %v49 = vld [vmem:[%s0 + $0x108] sm:$0xff]
    %v50 = vld [vmem:[%s0 + $0x110] sm:$0xff]
    %v51 = vld [vmem:[%s0 + $0x118] sm:$0xff]
    %v52 = vld [vmem:[%s0 + $0x120] sm:$0xff]
    %v53 = vld [vmem:[%s0 + $0x128] sm:$0xff]
    %v54 = vld [vmem:[%s0 + $0x130] sm:$0xff]
    %v55 = vld [vmem:[%s0 + $0x138] sm:$0xff]
    %v56 = vld [vmem:[%s0 + $0x140] sm:$0xff]
    %v57 = vld [vmem:[%s0 + $0x148] sm:$0xff]
    %v58 = vld [vmem:[%s0 + $0x150] sm:$0xff]
    %v59 = vld [vmem:[%s0 + $0x158] sm:$0xff]
    %v60 = vld [vmem:[%s0 + $0x160] sm:$0xff]
    %v61 = vld [vmem:[%s0 + $0x168] sm:$0xff]
    %v62 = vld [vmem:[%s0 + $0x170] sm:$0xff]
    %v63 = vld [vmem:[%s0 + $0x178] sm:$0xff]
    %v64 = vld [vmem:[%s0 + $0x180] sm:$0xff]
    %v65 = vld [vmem:[%s0 + $0x188] sm:$0xff]
    %v66 = vld [vmem:[%s0 + $0x190] sm:$0xff]
    %v67 = vld [vmem:[%s0 + $0x198] sm:$0xff]
    %v68 = vld [vmem:[%s0 + $0x1a0] sm:$0xff]
    %v69 = vld [vmem:[%s0 + $0x1a8] sm:$0xff]
    %v70 = vld [vmem:[%s0 + $0x1b0] sm:$0xff]
    %v71 = vld [vmem:[%s0 + $0x1b8] sm:$0xff]
    %v72 = vld [vmem:[%s0 + $0x1c0] sm:$0xff]
    %v73 = vld [vmem:[%s0 + $0x1c8] sm:$0xff]
    %v74 = vld [vmem:[%s0 + $0x1d0] sm:$0xff]
    %v75 = vld [vmem:[%s0 + $0x1d8] sm:$0xff]
    %v76 = vld [vmem:[%s0 + $0x1e0] sm:$0xff]
    %v77 = vld [vmem:[%s0 + $0x1e8] sm:$0xff]
    %v78 = vld [vmem:[%s0 + $0x1f0] sm:$0xff]
    %v79 = vld [vmem:[%s0 + $0x1f8] sm:$0xff]
    %v80 = vld [vmem:[%s0 + $0x200] sm:$0xff]
    %v81 = vld [vmem:[%s0 + $0x208] sm:$0xff]
    %v82 = vld [vmem:[%s0 + $0x210] sm:$0xff]
    %v83 = vld [vmem:[%s0 + $0x218] sm:$0xff]
    %v84 = vld [vmem:[%s0 + $0x220] sm:$0xff]
    %v85 = vld [vmem:[%s0 + $0x228] sm:$0xff]
    %v86 = vld [vmem:[%s0 + $0x230] sm:$0xff]
    %v87 = vld [vmem:[%s0 + $0x238] sm:$0xff]
    %v88 = vld [vmem:[%s0 + $0x240] sm:$0xff]
    %v89 = vld [vmem:[%s0 + $0x248] sm:$0xff]
    %v90 = vld [vmem:[%s0 + $0x250] sm:$0xff]
    %v91 = vld [vmem:[%s0 + $0x258] sm:$0xff]
    %v92 = vld [vmem:[%s0 + $0x260] sm:$0xff]
    %v93 = vld [vmem:[%s0 + $0x268] sm:$0xff]
    %v94 = vld [vmem:[%s0 + $0x270] sm:$0xff]
    %v95 = vld [vmem:[%s0 + $0x278] sm:$0xff]
    %v96 = vld [vmem:[%s0 + $0x280] sm:$0xff]
    %v97 = vld [vmem:[%s0 + $0x288] sm:$0xff]
    %v98 = vld [vmem:[%s0 + $0x290] sm:$0xff]
    %v99 = vld [vmem:[%s0 + $0x298] sm:$0xff]
    %v100 = vld [vmem:[%s0 + $0x2a0] sm:$0xff]
    %v101 = vld [vmem:[%s0 + $0x2a8] sm:$0xff]
    %v102 = vld [vmem:[%s0 + $0x2b0] sm:$0xff]
    %v103 = vld [vmem:[%s0 + $0x2b8] sm:$0xff]
    %v104 = vld [vmem:[%s0 + $0x2c0] sm:$0xff]
    %v105 = vld [vmem:[%s0 + $0x2c8] sm:$0xff]
    %v106 = vld [vmem:[%s0 + $0x2d0] sm:$0xff]
    %v107 = vld [vmem:[%s0 + $0x2d8] sm:$0xff]
    %v108 = vld [vmem:[%s0 + $0x2e0] sm:$0xff]
    %v109 = vld [vmem:[%s0 + $0x2e8] sm:$0xff]
    %v110 = vld [vmem:[%s0 + $0x2f0] sm:$0xff]
    %v111 = vld [vmem:[%s0 + $0x2f8] sm:$0xff]
    %v112 = vld [vmem:[%s0 + $0x300] sm:$0xff]
    %v113 = vld [vmem:[%s0 + $0x308] sm:$0xff]
    %v114 = vld [vmem:[%s0 + $0x310] sm:$0xff]
    %v115 = vld [vmem:[%s0 + $0x318] sm:$0xff]
    %v116 = vld [vmem:[%s0 + $0x320] sm:$0xff]
    %v117 = vld [vmem:[%s0 + $0x328] sm:$0xff]
    %v118 = vld [vmem:[%s0 + $0x330] sm:$0xff]
    %v119 = vld [vmem:[%s0 + $0x338] sm:$0xff]
    %v120 = vld [vmem:[%s0 + $0x340] sm:$0xff]
    %v121 = vld [vmem:[%s0 + $0x348] sm:$0xff]
    %v122 = vld [vmem:[%s0 + $0x350] sm:$0xff]
    %v123 = vld [vmem:[%s0 + $0x358] sm:$0xff]
    %v124 = vld [vmem:[%s0 + $0x360] sm:$0xff]
    %v125 = vld [vmem:[%s0 + $0x368] sm:$0xff]
    %v126 = vld [vmem:[%s0 + $0x370] sm:$0xff]
    %v127 = vld [vmem:[%s0 + $0x378] sm:$0xff]
    %v128 = vld [vmem:[%s0 + $0x380] sm:$0xff]
    %v129 = vld [vmem:[%s0 + $0x388] sm:$0xff]
    %v130 = vld [vmem:[%s0 + $0x390] sm:$0xff]
    %v131 = vld [vmem:[%s0 + $0x398] sm:$0xff]
    %v132 = vld [vmem:[%s0 + $0x3a0] sm:$0xff]
    %v133 = vld [vmem:[%s0 + $0x3a8] sm:$0xff]
    %v134 = vld [vmem:[%s0 + $0x3b0] sm:$0xff]
    %v135 = vld [vmem:[%s0 + $0x3b8] sm:$0xff]
    %v136 = vld [vmem:[%s0 + $0x3c0] sm:$0xff]
    %v137 = vld [vmem:[%s0 + $0x3c8] sm:$0xff]
    %v138 = vld [vmem:[%s0 + $0x3d0] sm:$0xff]
    %v139 = vld [vmem:[%s0 + $0x3d8] sm:$0xff]
    %v140 = vld [vmem:[%s0 + $0x3e0] sm:$0xff]
    %v141 = vld [vmem:[%s0 + $0x3e8] sm:$0xff]
    %v142 = vld [vmem:[%s0 + $0x3f0] sm:$0xff]
    %v143 = vld [vmem:[%s0 + $0x3f8] sm:$0xff]
    %v144 = vld [vmem:[%s1] sm:$0x1]
    %v146 = vlaneseq
    %v147 = vshrl.u32 %v146, 7
    %v148 = vsub.s32 0, %v147
    %v149 = vrot.slane %v144, %v148
    %v151 = vmul.f32 %v16, %v149
    %v152 = vmul.f32 %v17, %v149
    %v153 = vmul.f32 %v18, %v149
    %v154 = vmul.f32 %v19, %v149
    %v155 = vmul.f32 %v20, %v149
    %v156 = vmul.f32 %v21, %v149
    %v157 = vmul.f32 %v22, %v149
    %v158 = vmul.f32 %v23, %v149
    %v159 = vmul.f32 %v24, %v149
    %v160 = vmul.f32 %v25, %v149
    %v161 = vmul.f32 %v26, %v149
    %v162 = vmul.f32 %v27, %v149
    %v163 = vmul.f32 %v28, %v149
    %v164 = vmul.f32 %v29, %v149
    %v165 = vmul.f32 %v30, %v149
    %v166 = vmul.f32 %v31, %v149
    %v167 = vmul.f32 %v32, %v149
    %v168 = vmul.f32 %v33, %v149
    %v169 = vmul.f32 %v34, %v149
    %v170 = vmul.f32 %v35, %v149
    %v171 = vmul.f32 %v36, %v149
    %v172 = vmul.f32 %v37, %v149
    %v173 = vmul.f32 %v38, %v149
    %v174 = vmul.f32 %v39, %v149
    %v175 = vmul.f32 %v40, %v149
    %v176 = vmul.f32 %v41, %v149
    %v177 = vmul.f32 %v42, %v149
    %v178 = vmul.f32 %v43, %v149
    %v179 = vmul.f32 %v44, %v149
    %v180 = vmul.f32 %v45, %v149
    %v181 = vmul.f32 %v46, %v149
    %v182 = vmul.f32 %v47, %v149
    %v183 = vmul.f32 %v48, %v149
    %v184 = vmul.f32 %v49, %v149
    %v185 = vmul.f32 %v50, %v149
    %v186 = vmul.f32 %v51, %v149
    %v187 = vmul.f32 %v52, %v149
    %v188 = vmul.f32 %v53, %v149
    %v189 = vmul.f32 %v54, %v149
    %v190 = vmul.f32 %v55, %v149
    %v191 = vmul.f32 %v56, %v149
    %v192 = vmul.f32 %v57, %v149
    %v193 = vmul.f32 %v58, %v149
    %v194 = vmul.f32 %v59, %v149
    %v195 = vmul.f32 %v60, %v149
    %v196 = vmul.f32 %v61, %v149
    %v197 = vmul.f32 %v62, %v149
    %v198 = vmul.f32 %v63, %v149
    %v199 = vmul.f32 %v64, %v149
    %v200 = vmul.f32 %v65, %v149
    %v201 = vmul.f32 %v66, %v149
    %v202 = vmul.f32 %v67, %v149
    %v203 = vmul.f32 %v68, %v149
    %v204 = vmul.f32 %v69, %v149
    %v205 = vmul.f32 %v70, %v149
    %v206 = vmul.f32 %v71, %v149
    %v207 = vmul.f32 %v72, %v149
    %v208 = vmul.f32 %v73, %v149
    %v209 = vmul.f32 %v74, %v149
    %v210 = vmul.f32 %v75, %v149
    %v211 = vmul.f32 %v76, %v149
    %v212 = vmul.f32 %v77, %v149
    %v213 = vmul.f32 %v78, %v149
    %v214 = vmul.f32 %v79, %v149
    %v215 = vmul.f32 %v80, %v149
    %v216 = vmul.f32 %v81, %v149
    %v217 = vmul.f32 %v82, %v149
    %v218 = vmul.f32 %v83, %v149
    %v219 = vmul.f32 %v84, %v149
    %v220 = vmul.f32 %v85, %v149
    %v221 = vmul.f32 %v86, %v149
    %v222 = vmul.f32 %v87, %v149
    %v223 = vmul.f32 %v88, %v149
    %v224 = vmul.f32 %v89, %v149
    %v225 = vmul.f32 %v90, %v149
    %v226 = vmul.f32 %v91, %v149
    %v227 = vmul.f32 %v92, %v149
    %v228 = vmul.f32 %v93, %v149
    %v229 = vmul.f32 %v94, %v149
    %v230 = vmul.f32 %v95, %v149
    %v231 = vmul.f32 %v96, %v149
    %v232 = vmul.f32 %v97, %v149
    %v233 = vmul.f32 %v98, %v149
    %v234 = vmul.f32 %v99, %v149
    %v235 = vmul.f32 %v100, %v149
    %v236 = vmul.f32 %v101, %v149
    %v237 = vmul.f32 %v102, %v149
    %v238 = vmul.f32 %v103, %v149
    %v239 = vmul.f32 %v104, %v149
    %v240 = vmul.f32 %v105, %v149
    %v241 = vmul.f32 %v106, %v149
    %v242 = vmul.f32 %v107, %v149
    %v243 = vmul.f32 %v108, %v149
    %v244 = vmul.f32 %v109, %v149
    %v245 = vmul.f32 %v110, %v149
    %v246 = vmul.f32 %v111, %v149
    %v247 = vmul.f32 %v112, %v149
    %v248 = vmul.f32 %v113, %v149
    %v249 = vmul.f32 %v114, %v149
    %v250 = vmul.f32 %v115, %v149
    %v251 = vmul.f32 %v116, %v149
    %v252 = vmul.f32 %v117, %v149
    %v253 = vmul.f32 %v118, %v149
    %v254 = vmul.f32 %v119, %v149
    %v255 = vmul.f32 %v120, %v149
    %v256 = vmul.f32 %v121, %v149
    %v257 = vmul.f32 %v122, %v149
    %v258 = vmul.f32 %v123, %v149
    %v259 = vmul.f32 %v124, %v149
    %v260 = vmul.f32 %v125, %v149
    %v261 = vmul.f32 %v126, %v149
    %v262 = vmul.f32 %v127, %v149
    %v263 = vmul.f32 %v128, %v149
    %v264 = vmul.f32 %v129, %v149
    %v265 = vmul.f32 %v130, %v149
    %v266 = vmul.f32 %v131, %v149
    %v267 = vmul.f32 %v132, %v149
    %v268 = vmul.f32 %v133, %v149
    %v269 = vmul.f32 %v134, %v149
    %v270 = vmul.f32 %v135, %v149
    %v271 = vmul.f32 %v136, %v149
    %v272 = vmul.f32 %v137, %v149
    %v273 = vmul.f32 %v138, %v149
    %v274 = vmul.f32 %v139, %v149
    %v275 = vmul.f32 %v140, %v149
    %v276 = vmul.f32 %v141, %v149
    %v277 = vmul.f32 %v142, %v149
    %v278 = vmul.f32 %v143, %v149
    %vm279 = vcmask 162816
    %v280 = vsel %vm279, %v151, 0.0
    %281 = vadd.xlane.f32.xlu0 %v280
    %v282 = vpop.xlane.xlu0 %281
    %v283 = vsel %vm279, %v152, 0.0
    %284 = vadd.xlane.f32.xlu0 %v283
    %v285 = vpop.xlane.xlu0 %284
    %v286 = vsel %vm279, %v153, 0.0
    %287 = vadd.xlane.f32.xlu0 %v286
    %v288 = vpop.xlane.xlu0 %287
    %v289 = vsel %vm279, %v154, 0.0
    %290 = vadd.xlane.f32.xlu0 %v289
    %v291 = vpop.xlane.xlu0 %290
    %v292 = vsel %vm279, %v155, 0.0
    %293 = vadd.xlane.f32.xlu0 %v292
    %v294 = vpop.xlane.xlu0 %293
    %v295 = vsel %vm279, %v156, 0.0
    %296 = vadd.xlane.f32.xlu0 %v295
    %v297 = vpop.xlane.xlu0 %296
    %v298 = vsel %vm279, %v157, 0.0
    %299 = vadd.xlane.f32.xlu0 %v298
    %v300 = vpop.xlane.xlu0 %299
    %v301 = vsel %vm279, %v158, 0.0
    %302 = vadd.xlane.f32.xlu0 %v301
    %v303 = vpop.xlane.xlu0 %302
    %v304 = vsel %vm279, %v159, 0.0
    %305 = vadd.xlane.f32.xlu0 %v304
    %v306 = vpop.xlane.xlu0 %305
    %v307 = vsel %vm279, %v160, 0.0
    %308 = vadd.xlane.f32.xlu0 %v307
    %v309 = vpop.xlane.xlu0 %308
    %v310 = vsel %vm279, %v161, 0.0
    %311 = vadd.xlane.f32.xlu0 %v310
    %v312 = vpop.xlane.xlu0 %311
    %v313 = vsel %vm279, %v162, 0.0
    %314 = vadd.xlane.f32.xlu0 %v313
    %v315 = vpop.xlane.xlu0 %314
    %v316 = vsel %vm279, %v163, 0.0
    %317 = vadd.xlane.f32.xlu0 %v316
    %v318 = vpop.xlane.xlu0 %317
    %v319 = vsel %vm279, %v164, 0.0
    %320 = vadd.xlane.f32.xlu0 %v319
    %v321 = vpop.xlane.xlu0 %320
    %v322 = vsel %vm279, %v165, 0.0
    %323 = vadd.xlane.f32.xlu0 %v322
    %v324 = vpop.xlane.xlu0 %323
    %v325 = vsel %vm279, %v166, 0.0
    %326 = vadd.xlane.f32.xlu0 %v325
    %v327 = vpop.xlane.xlu0 %326
    %v328 = vsel %vm279, %v167, 0.0
    %329 = vadd.xlane.f32.xlu0 %v328
    %v330 = vpop.xlane.xlu0 %329
    %v331 = vsel %vm279, %v168, 0.0
    %332 = vadd.xlane.f32.xlu0 %v331
    %v333 = vpop.xlane.xlu0 %332
    %v334 = vsel %vm279, %v169, 0.0
    %335 = vadd.xlane.f32.xlu0 %v334
    %v336 = vpop.xlane.xlu0 %335
    %v337 = vsel %vm279, %v170, 0.0
    %338 = vadd.xlane.f32.xlu0 %v337
    %v339 = vpop.xlane.xlu0 %338
    %v340 = vsel %vm279, %v171, 0.0
    %341 = vadd.xlane.f32.xlu0 %v340
    %v342 = vpop.xlane.xlu0 %341
    %v343 = vsel %vm279, %v172, 0.0
    %344 = vadd.xlane.f32.xlu0 %v343
    %v345 = vpop.xlane.xlu0 %344
    %v346 = vsel %vm279, %v173, 0.0
    %347 = vadd.xlane.f32.xlu0 %v346
    %v348 = vpop.xlane.xlu0 %347
    %v349 = vsel %vm279, %v174, 0.0
    %350 = vadd.xlane.f32.xlu0 %v349
    %v351 = vpop.xlane.xlu0 %350
    %v352 = vsel %vm279, %v175, 0.0
    %353 = vadd.xlane.f32.xlu0 %v352
    %v354 = vpop.xlane.xlu0 %353
    %v355 = vsel %vm279, %v176, 0.0
    %356 = vadd.xlane.f32.xlu0 %v355
    %v357 = vpop.xlane.xlu0 %356
    %v358 = vsel %vm279, %v177, 0.0
    %359 = vadd.xlane.f32.xlu0 %v358
    %v360 = vpop.xlane.xlu0 %359
    %v361 = vsel %vm279, %v178, 0.0
    %362 = vadd.xlane.f32.xlu0 %v361
    %v363 = vpop.xlane.xlu0 %362
    %v364 = vsel %vm279, %v179, 0.0
    %365 = vadd.xlane.f32.xlu0 %v364
    %v366 = vpop.xlane.xlu0 %365
    %v367 = vsel %vm279, %v180, 0.0
    %368 = vadd.xlane.f32.xlu0 %v367
    %v369 = vpop.xlane.xlu0 %368
    %v370 = vsel %vm279, %v181, 0.0
    %371 = vadd.xlane.f32.xlu0 %v370
    %v372 = vpop.xlane.xlu0 %371
    %v373 = vsel %vm279, %v182, 0.0
    %374 = vadd.xlane.f32.xlu0 %v373
    %v375 = vpop.xlane.xlu0 %374
    %v376 = vsel %vm279, %v183, 0.0
    %377 = vadd.xlane.f32.xlu0 %v376
    %v378 = vpop.xlane.xlu0 %377
    %v379 = vsel %vm279, %v184, 0.0
    %380 = vadd.xlane.f32.xlu0 %v379
    %v381 = vpop.xlane.xlu0 %380
    %v382 = vsel %vm279, %v185, 0.0
    %383 = vadd.xlane.f32.xlu0 %v382
    %v384 = vpop.xlane.xlu0 %383
    %v385 = vsel %vm279, %v186, 0.0
    %386 = vadd.xlane.f32.xlu0 %v385
    %v387 = vpop.xlane.xlu0 %386
    %v388 = vsel %vm279, %v187, 0.0
    %389 = vadd.xlane.f32.xlu0 %v388
    %v390 = vpop.xlane.xlu0 %389
    %v391 = vsel %vm279, %v188, 0.0
    %392 = vadd.xlane.f32.xlu0 %v391
    %v393 = vpop.xlane.xlu0 %392
    %v394 = vsel %vm279, %v189, 0.0
    %395 = vadd.xlane.f32.xlu0 %v394
    %v396 = vpop.xlane.xlu0 %395
    %v397 = vsel %vm279, %v190, 0.0
    %398 = vadd.xlane.f32.xlu0 %v397
    %v399 = vpop.xlane.xlu0 %398
    %v400 = vsel %vm279, %v191, 0.0
    %401 = vadd.xlane.f32.xlu0 %v400
    %v402 = vpop.xlane.xlu0 %401
    %v403 = vsel %vm279, %v192, 0.0
    %404 = vadd.xlane.f32.xlu0 %v403
    %v405 = vpop.xlane.xlu0 %404
    %v406 = vsel %vm279, %v193, 0.0
    %407 = vadd.xlane.f32.xlu0 %v406
    %v408 = vpop.xlane.xlu0 %407
    %v409 = vsel %vm279, %v194, 0.0
    %410 = vadd.xlane.f32.xlu0 %v409
    %v411 = vpop.xlane.xlu0 %410
    %v412 = vsel %vm279, %v195, 0.0
    %413 = vadd.xlane.f32.xlu0 %v412
    %v414 = vpop.xlane.xlu0 %413
    %v415 = vsel %vm279, %v196, 0.0
    %416 = vadd.xlane.f32.xlu0 %v415
    %v417 = vpop.xlane.xlu0 %416
    %v418 = vsel %vm279, %v197, 0.0
    %419 = vadd.xlane.f32.xlu0 %v418
    %v420 = vpop.xlane.xlu0 %419
    %v421 = vsel %vm279, %v198, 0.0
    %422 = vadd.xlane.f32.xlu0 %v421
    %v423 = vpop.xlane.xlu0 %422
    %v424 = vsel %vm279, %v199, 0.0
    %425 = vadd.xlane.f32.xlu0 %v424
    %v426 = vpop.xlane.xlu0 %425
    %v427 = vsel %vm279, %v200, 0.0
    %428 = vadd.xlane.f32.xlu0 %v427
    %v429 = vpop.xlane.xlu0 %428
    %v430 = vsel %vm279, %v201, 0.0
    %431 = vadd.xlane.f32.xlu0 %v430
    %v432 = vpop.xlane.xlu0 %431
    %v433 = vsel %vm279, %v202, 0.0
    %434 = vadd.xlane.f32.xlu0 %v433
    %v435 = vpop.xlane.xlu0 %434
    %v436 = vsel %vm279, %v203, 0.0
    %437 = vadd.xlane.f32.xlu0 %v436
    %v438 = vpop.xlane.xlu0 %437
    %v439 = vsel %vm279, %v204, 0.0
    %440 = vadd.xlane.f32.xlu0 %v439
    %v441 = vpop.xlane.xlu0 %440
    %v442 = vsel %vm279, %v205, 0.0
    %443 = vadd.xlane.f32.xlu0 %v442
    %v444 = vpop.xlane.xlu0 %443
    %v445 = vsel %vm279, %v206, 0.0
    %446 = vadd.xlane.f32.xlu0 %v445
    %v447 = vpop.xlane.xlu0 %446
    %v448 = vsel %vm279, %v207, 0.0
    %449 = vadd.xlane.f32.xlu0 %v448
    %v450 = vpop.xlane.xlu0 %449
    %v451 = vsel %vm279, %v208, 0.0
    %452 = vadd.xlane.f32.xlu0 %v451
    %v453 = vpop.xlane.xlu0 %452
    %v454 = vsel %vm279, %v209, 0.0
    %455 = vadd.xlane.f32.xlu0 %v454
    %v456 = vpop.xlane.xlu0 %455
    %v457 = vsel %vm279, %v210, 0.0
    %458 = vadd.xlane.f32.xlu0 %v457
    %v459 = vpop.xlane.xlu0 %458
    %v460 = vsel %vm279, %v211, 0.0
    %461 = vadd.xlane.f32.xlu0 %v460
    %v462 = vpop.xlane.xlu0 %461
    %v463 = vsel %vm279, %v212, 0.0
    %464 = vadd.xlane.f32.xlu0 %v463
    %v465 = vpop.xlane.xlu0 %464
    %v466 = vsel %vm279, %v213, 0.0
    %467 = vadd.xlane.f32.xlu0 %v466
    %v468 = vpop.xlane.xlu0 %467
    %v469 = vsel %vm279, %v214, 0.0
    %470 = vadd.xlane.f32.xlu0 %v469
    %v471 = vpop.xlane.xlu0 %470
    %v472 = vsel %vm279, %v215, 0.0
    %473 = vadd.xlane.f32.xlu0 %v472
    %v474 = vpop.xlane.xlu0 %473
    %v475 = vsel %vm279, %v216, 0.0
    %476 = vadd.xlane.f32.xlu0 %v475
    %v477 = vpop.xlane.xlu0 %476
    %v478 = vsel %vm279, %v217, 0.0
    %479 = vadd.xlane.f32.xlu0 %v478
    %v480 = vpop.xlane.xlu0 %479
    %v481 = vsel %vm279, %v218, 0.0
    %482 = vadd.xlane.f32.xlu0 %v481
    %v483 = vpop.xlane.xlu0 %482
    %v484 = vsel %vm279, %v219, 0.0
    %485 = vadd.xlane.f32.xlu0 %v484
    %v486 = vpop.xlane.xlu0 %485
    %v487 = vsel %vm279, %v220, 0.0
    %488 = vadd.xlane.f32.xlu0 %v487
    %v489 = vpop.xlane.xlu0 %488
    %v490 = vsel %vm279, %v221, 0.0
    %491 = vadd.xlane.f32.xlu0 %v490
    %v492 = vpop.xlane.xlu0 %491
    %v493 = vsel %vm279, %v222, 0.0
    %494 = vadd.xlane.f32.xlu0 %v493
    %v495 = vpop.xlane.xlu0 %494
    %v496 = vsel %vm279, %v223, 0.0
    %497 = vadd.xlane.f32.xlu0 %v496
    %v498 = vpop.xlane.xlu0 %497
    %v499 = vsel %vm279, %v224, 0.0
    %500 = vadd.xlane.f32.xlu0 %v499
    %v501 = vpop.xlane.xlu0 %500
    %v502 = vsel %vm279, %v225, 0.0
    %503 = vadd.xlane.f32.xlu0 %v502
    %v504 = vpop.xlane.xlu0 %503
    %v505 = vsel %vm279, %v226, 0.0
    %506 = vadd.xlane.f32.xlu0 %v505
    %v507 = vpop.xlane.xlu0 %506
    %v508 = vsel %vm279, %v227, 0.0
    %509 = vadd.xlane.f32.xlu0 %v508
    %v510 = vpop.xlane.xlu0 %509
    %v511 = vsel %vm279, %v228, 0.0
    %512 = vadd.xlane.f32.xlu0 %v511
    %v513 = vpop.xlane.xlu0 %512
    %v514 = vsel %vm279, %v229, 0.0
    %515 = vadd.xlane.f32.xlu0 %v514
    %v516 = vpop.xlane.xlu0 %515
    %v517 = vsel %vm279, %v230, 0.0
    %518 = vadd.xlane.f32.xlu0 %v517
    %v519 = vpop.xlane.xlu0 %518
    %v520 = vsel %vm279, %v231, 0.0
    %521 = vadd.xlane.f32.xlu0 %v520
    %v522 = vpop.xlane.xlu0 %521
    %v523 = vsel %vm279, %v232, 0.0
    %524 = vadd.xlane.f32.xlu0 %v523
    %v525 = vpop.xlane.xlu0 %524
    %v526 = vsel %vm279, %v233, 0.0
    %527 = vadd.xlane.f32.xlu0 %v526
    %v528 = vpop.xlane.xlu0 %527
    %v529 = vsel %vm279, %v234, 0.0
    %530 = vadd.xlane.f32.xlu0 %v529
    %v531 = vpop.xlane.xlu0 %530
    %v532 = vsel %vm279, %v235, 0.0
    %533 = vadd.xlane.f32.xlu0 %v532
    %v534 = vpop.xlane.xlu0 %533
    %v535 = vsel %vm279, %v236, 0.0
    %536 = vadd.xlane.f32.xlu0 %v535
    %v537 = vpop.xlane.xlu0 %536
    %v538 = vsel %vm279, %v237, 0.0
    %539 = vadd.xlane.f32.xlu0 %v538
    %v540 = vpop.xlane.xlu0 %539
    %v541 = vsel %vm279, %v238, 0.0
    %542 = vadd.xlane.f32.xlu0 %v541
    %v543 = vpop.xlane.xlu0 %542
    %v544 = vsel %vm279, %v239, 0.0
    %545 = vadd.xlane.f32.xlu0 %v544
    %v546 = vpop.xlane.xlu0 %545
    %v547 = vsel %vm279, %v240, 0.0
    %548 = vadd.xlane.f32.xlu0 %v547
    %v549 = vpop.xlane.xlu0 %548
    %v550 = vsel %vm279, %v241, 0.0
    %551 = vadd.xlane.f32.xlu0 %v550
    %v552 = vpop.xlane.xlu0 %551
    %v553 = vsel %vm279, %v242, 0.0
    %554 = vadd.xlane.f32.xlu0 %v553
    %v555 = vpop.xlane.xlu0 %554
    %v556 = vsel %vm279, %v243, 0.0
    %557 = vadd.xlane.f32.xlu0 %v556
    %v558 = vpop.xlane.xlu0 %557
    %v559 = vsel %vm279, %v244, 0.0
    %560 = vadd.xlane.f32.xlu0 %v559
    %v561 = vpop.xlane.xlu0 %560
    %v562 = vsel %vm279, %v245, 0.0
    %563 = vadd.xlane.f32.xlu0 %v562
    %v564 = vpop.xlane.xlu0 %563
    %v565 = vsel %vm279, %v246, 0.0
    %566 = vadd.xlane.f32.xlu0 %v565
    %v567 = vpop.xlane.xlu0 %566
    %v568 = vsel %vm279, %v247, 0.0
    %569 = vadd.xlane.f32.xlu0 %v568
    %v570 = vpop.xlane.xlu0 %569
    %v571 = vsel %vm279, %v248, 0.0
    %572 = vadd.xlane.f32.xlu0 %v571
    %v573 = vpop.xlane.xlu0 %572
    %v574 = vsel %vm279, %v249, 0.0
    %575 = vadd.xlane.f32.xlu0 %v574
    %v576 = vpop.xlane.xlu0 %575
    %v577 = vsel %vm279, %v250, 0.0
    %578 = vadd.xlane.f32.xlu0 %v577
    %v579 = vpop.xlane.xlu0 %578
    %v580 = vsel %vm279, %v251, 0.0
    %581 = vadd.xlane.f32.xlu0 %v580
    %v582 = vpop.xlane.xlu0 %581
    %v583 = vsel %vm279, %v252, 0.0
    %584 = vadd.xlane.f32.xlu0 %v583
    %v585 = vpop.xlane.xlu0 %584
    %v586 = vsel %vm279, %v253, 0.0
    %587 = vadd.xlane.f32.xlu0 %v586
    %v588 = vpop.xlane.xlu0 %587
    %v589 = vsel %vm279, %v254, 0.0
    %590 = vadd.xlane.f32.xlu0 %v589
    %v591 = vpop.xlane.xlu0 %590
    %v592 = vsel %vm279, %v255, 0.0
    %593 = vadd.xlane.f32.xlu0 %v592
    %v594 = vpop.xlane.xlu0 %593
    %v595 = vsel %vm279, %v256, 0.0
    %596 = vadd.xlane.f32.xlu0 %v595
    %v597 = vpop.xlane.xlu0 %596
    %v598 = vsel %vm279, %v257, 0.0
    %599 = vadd.xlane.f32.xlu0 %v598
    %v600 = vpop.xlane.xlu0 %599
    %v601 = vsel %vm279, %v258, 0.0
    %602 = vadd.xlane.f32.xlu0 %v601
    %v603 = vpop.xlane.xlu0 %602
    %v604 = vsel %vm279, %v259, 0.0
    %605 = vadd.xlane.f32.xlu0 %v604
    %v606 = vpop.xlane.xlu0 %605
    %v607 = vsel %vm279, %v260, 0.0
    %608 = vadd.xlane.f32.xlu0 %v607
    %v609 = vpop.xlane.xlu0 %608
    %v610 = vsel %vm279, %v261, 0.0
    %611 = vadd.xlane.f32.xlu0 %v610
    %v612 = vpop.xlane.xlu0 %611
    %v613 = vsel %vm279, %v262, 0.0
    %614 = vadd.xlane.f32.xlu0 %v613
    %v615 = vpop.xlane.xlu0 %614
    %v616 = vsel %vm279, %v263, 0.0
    %617 = vadd.xlane.f32.xlu0 %v616
    %v618 = vpop.xlane.xlu0 %617
    %v619 = vsel %vm279, %v264, 0.0
    %620 = vadd.xlane.f32.xlu0 %v619
    %v621 = vpop.xlane.xlu0 %620
    %v622 = vsel %vm279, %v265, 0.0
    %623 = vadd.xlane.f32.xlu0 %v622
    %v624 = vpop.xlane.xlu0 %623
    %v625 = vsel %vm279, %v266, 0.0
    %626 = vadd.xlane.f32.xlu0 %v625
    %v627 = vpop.xlane.xlu0 %626
    %v628 = vsel %vm279, %v267, 0.0
    %629 = vadd.xlane.f32.xlu0 %v628
    %v630 = vpop.xlane.xlu0 %629
    %v631 = vsel %vm279, %v268, 0.0
    %632 = vadd.xlane.f32.xlu0 %v631
    %v633 = vpop.xlane.xlu0 %632
    %v634 = vsel %vm279, %v269, 0.0
    %635 = vadd.xlane.f32.xlu0 %v634
    %v636 = vpop.xlane.xlu0 %635
    %v637 = vsel %vm279, %v270, 0.0
    %638 = vadd.xlane.f32.xlu0 %v637
    %v639 = vpop.xlane.xlu0 %638
    %v640 = vsel %vm279, %v271, 0.0
    %641 = vadd.xlane.f32.xlu0 %v640
    %v642 = vpop.xlane.xlu0 %641
    %v643 = vsel %vm279, %v272, 0.0
    %644 = vadd.xlane.f32.xlu0 %v643
    %v645 = vpop.xlane.xlu0 %644
    %v646 = vsel %vm279, %v273, 0.0
    %647 = vadd.xlane.f32.xlu0 %v646
    %v648 = vpop.xlane.xlu0 %647
    %v649 = vsel %vm279, %v274, 0.0
    %650 = vadd.xlane.f32.xlu0 %v649
    %v651 = vpop.xlane.xlu0 %650
    %v652 = vsel %vm279, %v275, 0.0
    %653 = vadd.xlane.f32.xlu0 %v652
    %v654 = vpop.xlane.xlu0 %653
    %v655 = vsel %vm279, %v276, 0.0
    %656 = vadd.xlane.f32.xlu0 %v655
    %v657 = vpop.xlane.xlu0 %656
    %v658 = vsel %vm279, %v277, 0.0
    %659 = vadd.xlane.f32.xlu0 %v658
    %v660 = vpop.xlane.xlu0 %659
    %v661 = vsel %vm279, %v278, 0.0
    %662 = vadd.xlane.f32.xlu0 %v661
    %v663 = vpop.xlane.xlu0 %662
    %s664 = sld [smem:[#allocation2]]
    %v665 = vstv %s664
    %v666 = vadd.f32 %v282, %v665
    %v667 = vadd.f32 %v285, %v665
    %v668 = vadd.f32 %v288, %v665
    %v669 = vadd.f32 %v291, %v665
    %v670 = vadd.f32 %v294, %v665
    %v671 = vadd.f32 %v297, %v665
    %v672 = vadd.f32 %v300, %v665
    %v673 = vadd.f32 %v303, %v665
    %v674 = vadd.f32 %v306, %v665
    %v675 = vadd.f32 %v309, %v665
    %v676 = vadd.f32 %v312, %v665
    %v677 = vadd.f32 %v315, %v665
    %v678 = vadd.f32 %v318, %v665
    %v679 = vadd.f32 %v321, %v665
    %v680 = vadd.f32 %v324, %v665
    %v681 = vadd.f32 %v327, %v665
    %v682 = vadd.f32 %v330, %v665
    %v683 = vadd.f32 %v333, %v665
    %v684 = vadd.f32 %v336, %v665
    %v685 = vadd.f32 %v339, %v665
    %v686 = vadd.f32 %v342, %v665
    %v687 = vadd.f32 %v345, %v665
    %v688 = vadd.f32 %v348, %v665
    %v689 = vadd.f32 %v351, %v665
    %v690 = vadd.f32 %v354, %v665
    %v691 = vadd.f32 %v357, %v665
    %v692 = vadd.f32 %v360, %v665
    %v693 = vadd.f32 %v363, %v665
    %v694 = vadd.f32 %v366, %v665
    %v695 = vadd.f32 %v369, %v665
    %v696 = vadd.f32 %v372, %v665
    %v697 = vadd.f32 %v375, %v665
    %v698 = vadd.f32 %v378, %v665
    %v699 = vadd.f32 %v381, %v665
    %v700 = vadd.f32 %v384, %v665
    %v701 = vadd.f32 %v387, %v665
    %v702 = vadd.f32 %v390, %v665
    %v703 = vadd.f32 %v393, %v665
    %v704 = vadd.f32 %v396, %v665
    %v705 = vadd.f32 %v399, %v665
    %v706 = vadd.f32 %v402, %v665
    %v707 = vadd.f32 %v405, %v665
    %v708 = vadd.f32 %v408, %v665
    %v709 = vadd.f32 %v411, %v665
    %v710 = vadd.f32 %v414, %v665
    %v711 = vadd.f32 %v417, %v665
    %v712 = vadd.f32 %v420, %v665
    %v713 = vadd.f32 %v423, %v665
    %v714 = vadd.f32 %v426, %v665
    %v715 = vadd.f32 %v429, %v665
    %v716 = vadd.f32 %v432, %v665
    %v717 = vadd.f32 %v435, %v665
    %v718 = vadd.f32 %v438, %v665
    %v719 = vadd.f32 %v441, %v665
    %v720 = vadd.f32 %v444, %v665
    %v721 = vadd.f32 %v447, %v665
    %v722 = vadd.f32 %v450, %v665
    %v723 = vadd.f32 %v453, %v665
    %v724 = vadd.f32 %v456, %v665
    %v725 = vadd.f32 %v459, %v665
    %v726 = vadd.f32 %v462, %v665
    %v727 = vadd.f32 %v465, %v665
    %v728 = vadd.f32 %v468, %v665
    %v729 = vadd.f32 %v471, %v665
    %v730 = vadd.f32 %v474, %v665
    %v731 = vadd.f32 %v477, %v665
    %v732 = vadd.f32 %v480, %v665
    %v733 = vadd.f32 %v483, %v665
    %v734 = vadd.f32 %v486, %v665
    %v735 = vadd.f32 %v489, %v665
    %v736 = vadd.f32 %v492, %v665
    %v737 = vadd.f32 %v495, %v665
    %v738 = vadd.f32 %v498, %v665
    %v739 = vadd.f32 %v501, %v665
    %v740 = vadd.f32 %v504, %v665
    %v741 = vadd.f32 %v507, %v665
    %v742 = vadd.f32 %v510, %v665
    %v743 = vadd.f32 %v513, %v665
    %v744 = vadd.f32 %v516, %v665
    %v745 = vadd.f32 %v519, %v665
    %v746 = vadd.f32 %v522, %v665
    %v747 = vadd.f32 %v525, %v665
    %v748 = vadd.f32 %v528, %v665
    %v749 = vadd.f32 %v531, %v665
    %v750 = vadd.f32 %v534, %v665
    %v751 = vadd.f32 %v537, %v665
    %v752 = vadd.f32 %v540, %v665
    %v753 = vadd.f32 %v543, %v665
    %v754 = vadd.f32 %v546, %v665
    %v755 = vadd.f32 %v549, %v665
    %v756 = vadd.f32 %v552, %v665
    %v757 = vadd.f32 %v555, %v665
    %v758 = vadd.f32 %v558, %v665
    %v759 = vadd.f32 %v561, %v665
    %v760 = vadd.f32 %v564, %v665
    %v761 = vadd.f32 %v567, %v665
    %v762 = vadd.f32 %v570, %v665
    %v763 = vadd.f32 %v573, %v665
    %v764 = vadd.f32 %v576, %v665
    %v765 = vadd.f32 %v579, %v665
    %v766 = vadd.f32 %v582, %v665
    %v767 = vadd.f32 %v585, %v665
    %v768 = vadd.f32 %v588, %v665
    %v769 = vadd.f32 %v591, %v665
    %v770 = vadd.f32 %v594, %v665
    %v771 = vadd.f32 %v597, %v665
    %v772 = vadd.f32 %v600, %v665
    %v773 = vadd.f32 %v603, %v665
    %v774 = vadd.f32 %v606, %v665
    %v775 = vadd.f32 %v609, %v665
    %v776 = vadd.f32 %v612, %v665
    %v777 = vadd.f32 %v615, %v665
    %v778 = vadd.f32 %v618, %v665
    %v779 = vadd.f32 %v621, %v665
    %v780 = vadd.f32 %v624, %v665
    %v781 = vadd.f32 %v627, %v665
    %v782 = vadd.f32 %v630, %v665
    %v783 = vadd.f32 %v633, %v665
    %v784 = vadd.f32 %v636, %v665
    %v785 = vadd.f32 %v639, %v665
    %v786 = vadd.f32 %v642, %v665
    %v787 = vadd.f32 %v645, %v665
    %v788 = vadd.f32 %v648, %v665
    %v789 = vadd.f32 %v651, %v665
    %v790 = vadd.f32 %v654, %v665
    %v791 = vadd.f32 %v657, %v665
    %v792 = vadd.f32 %v660, %v665
    %v793 = vadd.f32 %v663, %v665
    %v922 = vlaneseq
    %v923 = vshrl.u32 %v922, 7
    %v924 = vsub.s32 0, %v923
    %v925 = vrot.slane %v666, %v924
    %v926 = vlaneseq
    %v927 = vshrl.u32 %v926, 7
    %v928 = vsub.s32 1, %v927
    %v929 = vrot.slane %v666, %v928
    %v930 = vlaneseq
    %v931 = vshrl.u32 %v930, 7
    %v932 = vsub.s32 2, %v931
    %v933 = vrot.slane %v666, %v932
    %v934 = vlaneseq
    %v935 = vshrl.u32 %v934, 7
    %v936 = vsub.s32 3, %v935
    %v937 = vrot.slane %v666, %v936
    %v938 = vlaneseq
    %v939 = vshrl.u32 %v938, 7
    %v940 = vsub.s32 4, %v939
    %v941 = vrot.slane %v666, %v940
    %v942 = vlaneseq
    %v943 = vshrl.u32 %v942, 7
    %v944 = vsub.s32 5, %v943
    %v945 = vrot.slane %v666, %v944
    %v946 = vlaneseq
    %v947 = vshrl.u32 %v946, 7
    %v948 = vsub.s32 6, %v947
    %v949 = vrot.slane %v666, %v948
    %v950 = vlaneseq
    %v951 = vshrl.u32 %v950, 7
    %v952 = vsub.s32 7, %v951
    %v953 = vrot.slane %v666, %v952
    %v954 = vlaneseq
    %v955 = vshrl.u32 %v954, 7
    %v956 = vsub.s32 0, %v955
    %v957 = vrot.slane %v667, %v956
    %v958 = vlaneseq
    %v959 = vshrl.u32 %v958, 7
    %v960 = vsub.s32 1, %v959
    %v961 = vrot.slane %v667, %v960
    %v962 = vlaneseq
    %v963 = vshrl.u32 %v962, 7
    %v964 = vsub.s32 2, %v963
    %v965 = vrot.slane %v667, %v964
    %v966 = vlaneseq
    %v967 = vshrl.u32 %v966, 7
    %v968 = vsub.s32 3, %v967
    %v969 = vrot.slane %v667, %v968
    %v970 = vlaneseq
    %v971 = vshrl.u32 %v970, 7
    %v972 = vsub.s32 4, %v971
    %v973 = vrot.slane %v667, %v972
    %v974 = vlaneseq
    %v975 = vshrl.u32 %v974, 7
    %v976 = vsub.s32 5, %v975
    %v977 = vrot.slane %v667, %v976
    %v978 = vlaneseq
    %v979 = vshrl.u32 %v978, 7
    %v980 = vsub.s32 6, %v979
    %v981 = vrot.slane %v667, %v980
    %v982 = vlaneseq
    %v983 = vshrl.u32 %v982, 7
    %v984 = vsub.s32 7, %v983
    %v985 = vrot.slane %v667, %v984
    %v986 = vlaneseq
    %v987 = vshrl.u32 %v986, 7
    %v988 = vsub.s32 0, %v987
    %v989 = vrot.slane %v668, %v988
    %v990 = vlaneseq
    %v991 = vshrl.u32 %v990, 7
    %v992 = vsub.s32 1, %v991
    %v993 = vrot.slane %v668, %v992
    %v994 = vlaneseq
    %v995 = vshrl.u32 %v994, 7
    %v996 = vsub.s32 2, %v995
    %v997 = vrot.slane %v668, %v996
    %v998 = vlaneseq
    %v999 = vshrl.u32 %v998, 7
    %v1000 = vsub.s32 3, %v999
    %v1001 = vrot.slane %v668, %v1000
    %v1002 = vlaneseq
    %v1003 = vshrl.u32 %v1002, 7
    %v1004 = vsub.s32 4, %v1003
    %v1005 = vrot.slane %v668, %v1004
    %v1006 = vlaneseq
    %v1007 = vshrl.u32 %v1006, 7
    %v1008 = vsub.s32 5, %v1007
    %v1009 = vrot.slane %v668, %v1008
    %v1010 = vlaneseq
    %v1011 = vshrl.u32 %v1010, 7
    %v1012 = vsub.s32 6, %v1011
    %v1013 = vrot.slane %v668, %v1012
    %v1014 = vlaneseq
    %v1015 = vshrl.u32 %v1014, 7
    %v1016 = vsub.s32 7, %v1015
    %v1017 = vrot.slane %v668, %v1016
    %v1018 = vlaneseq
    %v1019 = vshrl.u32 %v1018, 7
    %v1020 = vsub.s32 0, %v1019
    %v1021 = vrot.slane %v669, %v1020
    %v1022 = vlaneseq
    %v1023 = vshrl.u32 %v1022, 7
    %v1024 = vsub.s32 1, %v1023
    %v1025 = vrot.slane %v669, %v1024
    %v1026 = vlaneseq
    %v1027 = vshrl.u32 %v1026, 7
    %v1028 = vsub.s32 2, %v1027
    %v1029 = vrot.slane %v669, %v1028
    %v1030 = vlaneseq
    %v1031 = vshrl.u32 %v1030, 7
    %v1032 = vsub.s32 3, %v1031
    %v1033 = vrot.slane %v669, %v1032
    %v1034 = vlaneseq
    %v1035 = vshrl.u32 %v1034, 7
    %v1036 = vsub.s32 4, %v1035
    %v1037 = vrot.slane %v669, %v1036
    %v1038 = vlaneseq
    %v1039 = vshrl.u32 %v1038, 7
    %v1040 = vsub.s32 5, %v1039
    %v1041 = vrot.slane %v669, %v1040
    %v1042 = vlaneseq
    %v1043 = vshrl.u32 %v1042, 7
    %v1044 = vsub.s32 6, %v1043
    %v1045 = vrot.slane %v669, %v1044
    %v1046 = vlaneseq
    %v1047 = vshrl.u32 %v1046, 7
    %v1048 = vsub.s32 7, %v1047
    %v1049 = vrot.slane %v669, %v1048
    %v1050 = vlaneseq
    %v1051 = vshrl.u32 %v1050, 7
    %v1052 = vsub.s32 0, %v1051
    %v1053 = vrot.slane %v670, %v1052
    %v1054 = vlaneseq
    %v1055 = vshrl.u32 %v1054, 7
    %v1056 = vsub.s32 1, %v1055
    %v1057 = vrot.slane %v670, %v1056
    %v1058 = vlaneseq
    %v1059 = vshrl.u32 %v1058, 7
    %v1060 = vsub.s32 2, %v1059
    %v1061 = vrot.slane %v670, %v1060
    %v1062 = vlaneseq
    %v1063 = vshrl.u32 %v1062, 7
    %v1064 = vsub.s32 3, %v1063
    %v1065 = vrot.slane %v670, %v1064
    %v1066 = vlaneseq
    %v1067 = vshrl.u32 %v1066, 7
    %v1068 = vsub.s32 4, %v1067
    %v1069 = vrot.slane %v670, %v1068
    %v1070 = vlaneseq
    %v1071 = vshrl.u32 %v1070, 7
    %v1072 = vsub.s32 5, %v1071
    %v1073 = vrot.slane %v670, %v1072
    %v1074 = vlaneseq
    %v1075 = vshrl.u32 %v1074, 7
    %v1076 = vsub.s32 6, %v1075
    %v1077 = vrot.slane %v670, %v1076
    %v1078 = vlaneseq
    %v1079 = vshrl.u32 %v1078, 7
    %v1080 = vsub.s32 7, %v1079
    %v1081 = vrot.slane %v670, %v1080
    %v1082 = vlaneseq
    %v1083 = vshrl.u32 %v1082, 7
    %v1084 = vsub.s32 0, %v1083
    %v1085 = vrot.slane %v671, %v1084
    %v1086 = vlaneseq
    %v1087 = vshrl.u32 %v1086, 7
    %v1088 = vsub.s32 1, %v1087
    %v1089 = vrot.slane %v671, %v1088
    %v1090 = vlaneseq
    %v1091 = vshrl.u32 %v1090, 7
    %v1092 = vsub.s32 2, %v1091
    %v1093 = vrot.slane %v671, %v1092
    %v1094 = vlaneseq
    %v1095 = vshrl.u32 %v1094, 7
    %v1096 = vsub.s32 3, %v1095
    %v1097 = vrot.slane %v671, %v1096
    %v1098 = vlaneseq
    %v1099 = vshrl.u32 %v1098, 7
    %v1100 = vsub.s32 4, %v1099
    %v1101 = vrot.slane %v671, %v1100
    %v1102 = vlaneseq
    %v1103 = vshrl.u32 %v1102, 7
    %v1104 = vsub.s32 5, %v1103
    %v1105 = vrot.slane %v671, %v1104
    %v1106 = vlaneseq
    %v1107 = vshrl.u32 %v1106, 7
    %v1108 = vsub.s32 6, %v1107
    %v1109 = vrot.slane %v671, %v1108
    %v1110 = vlaneseq
    %v1111 = vshrl.u32 %v1110, 7
    %v1112 = vsub.s32 7, %v1111
    %v1113 = vrot.slane %v671, %v1112
    %v1114 = vlaneseq
    %v1115 = vshrl.u32 %v1114, 7
    %v1116 = vsub.s32 0, %v1115
    %v1117 = vrot.slane %v672, %v1116
    %v1118 = vlaneseq
    %v1119 = vshrl.u32 %v1118, 7
    %v1120 = vsub.s32 1, %v1119
    %v1121 = vrot.slane %v672, %v1120
    %v1122 = vlaneseq
    %v1123 = vshrl.u32 %v1122, 7
    %v1124 = vsub.s32 2, %v1123
    %v1125 = vrot.slane %v672, %v1124
    %v1126 = vlaneseq
    %v1127 = vshrl.u32 %v1126, 7
    %v1128 = vsub.s32 3, %v1127
    %v1129 = vrot.slane %v672, %v1128
    %v1130 = vlaneseq
    %v1131 = vshrl.u32 %v1130, 7
    %v1132 = vsub.s32 4, %v1131
    %v1133 = vrot.slane %v672, %v1132
    %v1134 = vlaneseq
    %v1135 = vshrl.u32 %v1134, 7
    %v1136 = vsub.s32 5, %v1135
    %v1137 = vrot.slane %v672, %v1136
    %v1138 = vlaneseq
    %v1139 = vshrl.u32 %v1138, 7
    %v1140 = vsub.s32 6, %v1139
    %v1141 = vrot.slane %v672, %v1140
    %v1142 = vlaneseq
    %v1143 = vshrl.u32 %v1142, 7
    %v1144 = vsub.s32 7, %v1143
    %v1145 = vrot.slane %v672, %v1144
    %v1146 = vlaneseq
    %v1147 = vshrl.u32 %v1146, 7
    %v1148 = vsub.s32 0, %v1147
    %v1149 = vrot.slane %v673, %v1148
    %v1150 = vlaneseq
    %v1151 = vshrl.u32 %v1150, 7
    %v1152 = vsub.s32 1, %v1151
    %v1153 = vrot.slane %v673, %v1152
    %v1154 = vlaneseq
    %v1155 = vshrl.u32 %v1154, 7
    %v1156 = vsub.s32 2, %v1155
    %v1157 = vrot.slane %v673, %v1156
    %v1158 = vlaneseq
    %v1159 = vshrl.u32 %v1158, 7
    %v1160 = vsub.s32 3, %v1159
    %v1161 = vrot.slane %v673, %v1160
    %v1162 = vlaneseq
    %v1163 = vshrl.u32 %v1162, 7
    %v1164 = vsub.s32 4, %v1163
    %v1165 = vrot.slane %v673, %v1164
    %v1166 = vlaneseq
    %v1167 = vshrl.u32 %v1166, 7
    %v1168 = vsub.s32 5, %v1167
    %v1169 = vrot.slane %v673, %v1168
    %v1170 = vlaneseq
    %v1171 = vshrl.u32 %v1170, 7
    %v1172 = vsub.s32 6, %v1171
    %v1173 = vrot.slane %v673, %v1172
    %v1174 = vlaneseq
    %v1175 = vshrl.u32 %v1174, 7
    %v1176 = vsub.s32 7, %v1175
    %v1177 = vrot.slane %v673, %v1176
    %v1178 = vlaneseq
    %v1179 = vshrl.u32 %v1178, 7
    %v1180 = vsub.s32 0, %v1179
    %v1181 = vrot.slane %v674, %v1180
    %v1182 = vlaneseq
    %v1183 = vshrl.u32 %v1182, 7
    %v1184 = vsub.s32 1, %v1183
    %v1185 = vrot.slane %v674, %v1184
    %v1186 = vlaneseq
    %v1187 = vshrl.u32 %v1186, 7
    %v1188 = vsub.s32 2, %v1187
    %v1189 = vrot.slane %v674, %v1188
    %v1190 = vlaneseq
    %v1191 = vshrl.u32 %v1190, 7
    %v1192 = vsub.s32 3, %v1191
    %v1193 = vrot.slane %v674, %v1192
    %v1194 = vlaneseq
    %v1195 = vshrl.u32 %v1194, 7
    %v1196 = vsub.s32 4, %v1195
    %v1197 = vrot.slane %v674, %v1196
    %v1198 = vlaneseq
    %v1199 = vshrl.u32 %v1198, 7
    %v1200 = vsub.s32 5, %v1199
    %v1201 = vrot.slane %v674, %v1200
    %v1202 = vlaneseq
    %v1203 = vshrl.u32 %v1202, 7
    %v1204 = vsub.s32 6, %v1203
    %v1205 = vrot.slane %v674, %v1204
    %v1206 = vlaneseq
    %v1207 = vshrl.u32 %v1206, 7
    %v1208 = vsub.s32 7, %v1207
    %v1209 = vrot.slane %v674, %v1208
    %v1210 = vlaneseq
    %v1211 = vshrl.u32 %v1210, 7
    %v1212 = vsub.s32 0, %v1211
    %v1213 = vrot.slane %v675, %v1212
    %v1214 = vlaneseq
    %v1215 = vshrl.u32 %v1214, 7
    %v1216 = vsub.s32 1, %v1215
    %v1217 = vrot.slane %v675, %v1216
    %v1218 = vlaneseq
    %v1219 = vshrl.u32 %v1218, 7
    %v1220 = vsub.s32 2, %v1219
    %v1221 = vrot.slane %v675, %v1220
    %v1222 = vlaneseq
    %v1223 = vshrl.u32 %v1222, 7
    %v1224 = vsub.s32 3, %v1223
    %v1225 = vrot.slane %v675, %v1224
    %v1226 = vlaneseq
    %v1227 = vshrl.u32 %v1226, 7
    %v1228 = vsub.s32 4, %v1227
    %v1229 = vrot.slane %v675, %v1228
    %v1230 = vlaneseq
    %v1231 = vshrl.u32 %v1230, 7
    %v1232 = vsub.s32 5, %v1231
    %v1233 = vrot.slane %v675, %v1232
    %v1234 = vlaneseq
    %v1235 = vshrl.u32 %v1234, 7
    %v1236 = vsub.s32 6, %v1235
    %v1237 = vrot.slane %v675, %v1236
    %v1238 = vlaneseq
    %v1239 = vshrl.u32 %v1238, 7
    %v1240 = vsub.s32 7, %v1239
    %v1241 = vrot.slane %v675, %v1240
    %v1242 = vlaneseq
    %v1243 = vshrl.u32 %v1242, 7
    %v1244 = vsub.s32 0, %v1243
    %v1245 = vrot.slane %v676, %v1244
    %v1246 = vlaneseq
    %v1247 = vshrl.u32 %v1246, 7
    %v1248 = vsub.s32 1, %v1247
    %v1249 = vrot.slane %v676, %v1248
    %v1250 = vlaneseq
    %v1251 = vshrl.u32 %v1250, 7
    %v1252 = vsub.s32 2, %v1251
    %v1253 = vrot.slane %v676, %v1252
    %v1254 = vlaneseq
    %v1255 = vshrl.u32 %v1254, 7
    %v1256 = vsub.s32 3, %v1255
    %v1257 = vrot.slane %v676, %v1256
    %v1258 = vlaneseq
    %v1259 = vshrl.u32 %v1258, 7
    %v1260 = vsub.s32 4, %v1259
    %v1261 = vrot.slane %v676, %v1260
    %v1262 = vlaneseq
    %v1263 = vshrl.u32 %v1262, 7
    %v1264 = vsub.s32 5, %v1263
    %v1265 = vrot.slane %v676, %v1264
    %v1266 = vlaneseq
    %v1267 = vshrl.u32 %v1266, 7
    %v1268 = vsub.s32 6, %v1267
    %v1269 = vrot.slane %v676, %v1268
    %v1270 = vlaneseq
    %v1271 = vshrl.u32 %v1270, 7
    %v1272 = vsub.s32 7, %v1271
    %v1273 = vrot.slane %v676, %v1272
    %v1274 = vlaneseq
    %v1275 = vshrl.u32 %v1274, 7
    %v1276 = vsub.s32 0, %v1275
    %v1277 = vrot.slane %v677, %v1276
    %v1278 = vlaneseq
    %v1279 = vshrl.u32 %v1278, 7
    %v1280 = vsub.s32 1, %v1279
    %v1281 = vrot.slane %v677, %v1280
    %v1282 = vlaneseq
    %v1283 = vshrl.u32 %v1282, 7
    %v1284 = vsub.s32 2, %v1283
    %v1285 = vrot.slane %v677, %v1284
    %v1286 = vlaneseq
    %v1287 = vshrl.u32 %v1286, 7
    %v1288 = vsub.s32 3, %v1287
    %v1289 = vrot.slane %v677, %v1288
    %v1290 = vlaneseq
    %v1291 = vshrl.u32 %v1290, 7
    %v1292 = vsub.s32 4, %v1291
    %v1293 = vrot.slane %v677, %v1292
    %v1294 = vlaneseq
    %v1295 = vshrl.u32 %v1294, 7
    %v1296 = vsub.s32 5, %v1295
    %v1297 = vrot.slane %v677, %v1296
    %v1298 = vlaneseq
    %v1299 = vshrl.u32 %v1298, 7
    %v1300 = vsub.s32 6, %v1299
    %v1301 = vrot.slane %v677, %v1300
    %v1302 = vlaneseq
    %v1303 = vshrl.u32 %v1302, 7
    %v1304 = vsub.s32 7, %v1303
    %v1305 = vrot.slane %v677, %v1304
    %v1306 = vlaneseq
    %v1307 = vshrl.u32 %v1306, 7
    %v1308 = vsub.s32 0, %v1307
    %v1309 = vrot.slane %v678, %v1308
    %v1310 = vlaneseq
    %v1311 = vshrl.u32 %v1310, 7
    %v1312 = vsub.s32 1, %v1311
    %v1313 = vrot.slane %v678, %v1312
    %v1314 = vlaneseq
    %v1315 = vshrl.u32 %v1314, 7
    %v1316 = vsub.s32 2, %v1315
    %v1317 = vrot.slane %v678, %v1316
    %v1318 = vlaneseq
    %v1319 = vshrl.u32 %v1318, 7
    %v1320 = vsub.s32 3, %v1319
    %v1321 = vrot.slane %v678, %v1320
    %v1322 = vlaneseq
    %v1323 = vshrl.u32 %v1322, 7
    %v1324 = vsub.s32 4, %v1323
    %v1325 = vrot.slane %v678, %v1324
    %v1326 = vlaneseq
    %v1327 = vshrl.u32 %v1326, 7
    %v1328 = vsub.s32 5, %v1327
    %v1329 = vrot.slane %v678, %v1328
    %v1330 = vlaneseq
    %v1331 = vshrl.u32 %v1330, 7
    %v1332 = vsub.s32 6, %v1331
    %v1333 = vrot.slane %v678, %v1332
    %v1334 = vlaneseq
    %v1335 = vshrl.u32 %v1334, 7
    %v1336 = vsub.s32 7, %v1335
    %v1337 = vrot.slane %v678, %v1336
    %v1338 = vlaneseq
    %v1339 = vshrl.u32 %v1338, 7
    %v1340 = vsub.s32 0, %v1339
    %v1341 = vrot.slane %v679, %v1340
    %v1342 = vlaneseq
    %v1343 = vshrl.u32 %v1342, 7
    %v1344 = vsub.s32 1, %v1343
    %v1345 = vrot.slane %v679, %v1344
    %v1346 = vlaneseq
    %v1347 = vshrl.u32 %v1346, 7
    %v1348 = vsub.s32 2, %v1347
    %v1349 = vrot.slane %v679, %v1348
    %v1350 = vlaneseq
    %v1351 = vshrl.u32 %v1350, 7
    %v1352 = vsub.s32 3, %v1351
    %v1353 = vrot.slane %v679, %v1352
    %v1354 = vlaneseq
    %v1355 = vshrl.u32 %v1354, 7
    %v1356 = vsub.s32 4, %v1355
    %v1357 = vrot.slane %v679, %v1356
    %v1358 = vlaneseq
    %v1359 = vshrl.u32 %v1358, 7
    %v1360 = vsub.s32 5, %v1359
    %v1361 = vrot.slane %v679, %v1360
    %v1362 = vlaneseq
    %v1363 = vshrl.u32 %v1362, 7
    %v1364 = vsub.s32 6, %v1363
    %v1365 = vrot.slane %v679, %v1364
    %v1366 = vlaneseq
    %v1367 = vshrl.u32 %v1366, 7
    %v1368 = vsub.s32 7, %v1367
    %v1369 = vrot.slane %v679, %v1368
    %v1370 = vlaneseq
    %v1371 = vshrl.u32 %v1370, 7
    %v1372 = vsub.s32 0, %v1371
    %v1373 = vrot.slane %v680, %v1372
    %v1374 = vlaneseq
    %v1375 = vshrl.u32 %v1374, 7
    %v1376 = vsub.s32 1, %v1375
    %v1377 = vrot.slane %v680, %v1376
    %v1378 = vlaneseq
    %v1379 = vshrl.u32 %v1378, 7
    %v1380 = vsub.s32 2, %v1379
    %v1381 = vrot.slane %v680, %v1380
    %v1382 = vlaneseq
    %v1383 = vshrl.u32 %v1382, 7
    %v1384 = vsub.s32 3, %v1383
    %v1385 = vrot.slane %v680, %v1384
    %v1386 = vlaneseq
    %v1387 = vshrl.u32 %v1386, 7
    %v1388 = vsub.s32 4, %v1387
    %v1389 = vrot.slane %v680, %v1388
    %v1390 = vlaneseq
    %v1391 = vshrl.u32 %v1390, 7
    %v1392 = vsub.s32 5, %v1391
    %v1393 = vrot.slane %v680, %v1392
    %v1394 = vlaneseq
    %v1395 = vshrl.u32 %v1394, 7
    %v1396 = vsub.s32 6, %v1395
    %v1397 = vrot.slane %v680, %v1396
    %v1398 = vlaneseq
    %v1399 = vshrl.u32 %v1398, 7
    %v1400 = vsub.s32 7, %v1399
    %v1401 = vrot.slane %v680, %v1400
    %v1402 = vlaneseq
    %v1403 = vshrl.u32 %v1402, 7
    %v1404 = vsub.s32 0, %v1403
    %v1405 = vrot.slane %v681, %v1404
    %v1406 = vlaneseq
    %v1407 = vshrl.u32 %v1406, 7
    %v1408 = vsub.s32 1, %v1407
    %v1409 = vrot.slane %v681, %v1408
    %v1410 = vlaneseq
    %v1411 = vshrl.u32 %v1410, 7
    %v1412 = vsub.s32 2, %v1411
    %v1413 = vrot.slane %v681, %v1412
    %v1414 = vlaneseq
    %v1415 = vshrl.u32 %v1414, 7
    %v1416 = vsub.s32 3, %v1415
    %v1417 = vrot.slane %v681, %v1416
    %v1418 = vlaneseq
    %v1419 = vshrl.u32 %v1418, 7
    %v1420 = vsub.s32 4, %v1419
    %v1421 = vrot.slane %v681, %v1420
    %v1422 = vlaneseq
    %v1423 = vshrl.u32 %v1422, 7
    %v1424 = vsub.s32 5, %v1423
    %v1425 = vrot.slane %v681, %v1424
    %v1426 = vlaneseq
    %v1427 = vshrl.u32 %v1426, 7
    %v1428 = vsub.s32 6, %v1427
    %v1429 = vrot.slane %v681, %v1428
    %v1430 = vlaneseq
    %v1431 = vshrl.u32 %v1430, 7
    %v1432 = vsub.s32 7, %v1431
    %v1433 = vrot.slane %v681, %v1432
    %v1434 = vlaneseq
    %v1435 = vshrl.u32 %v1434, 7
    %v1436 = vsub.s32 0, %v1435
    %v1437 = vrot.slane %v682, %v1436
    %v1438 = vlaneseq
    %v1439 = vshrl.u32 %v1438, 7
    %v1440 = vsub.s32 1, %v1439
    %v1441 = vrot.slane %v682, %v1440
    %v1442 = vlaneseq
    %v1443 = vshrl.u32 %v1442, 7
    %v1444 = vsub.s32 2, %v1443
    %v1445 = vrot.slane %v682, %v1444
    %v1446 = vlaneseq
    %v1447 = vshrl.u32 %v1446, 7
    %v1448 = vsub.s32 3, %v1447
    %v1449 = vrot.slane %v682, %v1448
    %v1450 = vlaneseq
    %v1451 = vshrl.u32 %v1450, 7
    %v1452 = vsub.s32 4, %v1451
    %v1453 = vrot.slane %v682, %v1452
    %v1454 = vlaneseq
    %v1455 = vshrl.u32 %v1454, 7
    %v1456 = vsub.s32 5, %v1455
    %v1457 = vrot.slane %v682, %v1456
    %v1458 = vlaneseq
    %v1459 = vshrl.u32 %v1458, 7
    %v1460 = vsub.s32 6, %v1459
    %v1461 = vrot.slane %v682, %v1460
    %v1462 = vlaneseq
    %v1463 = vshrl.u32 %v1462, 7
    %v1464 = vsub.s32 7, %v1463
    %v1465 = vrot.slane %v682, %v1464
    %v1466 = vlaneseq
    %v1467 = vshrl.u32 %v1466, 7
    %v1468 = vsub.s32 0, %v1467
    %v1469 = vrot.slane %v683, %v1468
    %v1470 = vlaneseq
    %v1471 = vshrl.u32 %v1470, 7
    %v1472 = vsub.s32 1, %v1471
    %v1473 = vrot.slane %v683, %v1472
    %v1474 = vlaneseq
    %v1475 = vshrl.u32 %v1474, 7
    %v1476 = vsub.s32 2, %v1475
    %v1477 = vrot.slane %v683, %v1476
    %v1478 = vlaneseq
    %v1479 = vshrl.u32 %v1478, 7
    %v1480 = vsub.s32 3, %v1479
    %v1481 = vrot.slane %v683, %v1480
    %v1482 = vlaneseq
    %v1483 = vshrl.u32 %v1482, 7
    %v1484 = vsub.s32 4, %v1483
    %v1485 = vrot.slane %v683, %v1484
    %v1486 = vlaneseq
    %v1487 = vshrl.u32 %v1486, 7
    %v1488 = vsub.s32 5, %v1487
    %v1489 = vrot.slane %v683, %v1488
    %v1490 = vlaneseq
    %v1491 = vshrl.u32 %v1490, 7
    %v1492 = vsub.s32 6, %v1491
    %v1493 = vrot.slane %v683, %v1492
    %v1494 = vlaneseq
    %v1495 = vshrl.u32 %v1494, 7
    %v1496 = vsub.s32 7, %v1495
    %v1497 = vrot.slane %v683, %v1496
    %v1498 = vlaneseq
    %v1499 = vshrl.u32 %v1498, 7
    %v1500 = vsub.s32 0, %v1499
    %v1501 = vrot.slane %v684, %v1500
    %v1502 = vlaneseq
    %v1503 = vshrl.u32 %v1502, 7
    %v1504 = vsub.s32 1, %v1503
    %v1505 = vrot.slane %v684, %v1504
    %v1506 = vlaneseq
    %v1507 = vshrl.u32 %v1506, 7
    %v1508 = vsub.s32 2, %v1507
    %v1509 = vrot.slane %v684, %v1508
    %v1510 = vlaneseq
    %v1511 = vshrl.u32 %v1510, 7
    %v1512 = vsub.s32 3, %v1511
    %v1513 = vrot.slane %v684, %v1512
    %v1514 = vlaneseq
    %v1515 = vshrl.u32 %v1514, 7
    %v1516 = vsub.s32 4, %v1515
    %v1517 = vrot.slane %v684, %v1516
    %v1518 = vlaneseq
    %v1519 = vshrl.u32 %v1518, 7
    %v1520 = vsub.s32 5, %v1519
    %v1521 = vrot.slane %v684, %v1520
    %v1522 = vlaneseq
    %v1523 = vshrl.u32 %v1522, 7
    %v1524 = vsub.s32 6, %v1523
    %v1525 = vrot.slane %v684, %v1524
    %v1526 = vlaneseq
    %v1527 = vshrl.u32 %v1526, 7
    %v1528 = vsub.s32 7, %v1527
    %v1529 = vrot.slane %v684, %v1528
    %v1530 = vlaneseq
    %v1531 = vshrl.u32 %v1530, 7
    %v1532 = vsub.s32 0, %v1531
    %v1533 = vrot.slane %v685, %v1532
    %v1534 = vlaneseq
    %v1535 = vshrl.u32 %v1534, 7
    %v1536 = vsub.s32 1, %v1535
    %v1537 = vrot.slane %v685, %v1536
    %v1538 = vlaneseq
    %v1539 = vshrl.u32 %v1538, 7
    %v1540 = vsub.s32 2, %v1539
    %v1541 = vrot.slane %v685, %v1540
    %v1542 = vlaneseq
    %v1543 = vshrl.u32 %v1542, 7
    %v1544 = vsub.s32 3, %v1543
    %v1545 = vrot.slane %v685, %v1544
    %v1546 = vlaneseq
    %v1547 = vshrl.u32 %v1546, 7
    %v1548 = vsub.s32 4, %v1547
    %v1549 = vrot.slane %v685, %v1548
    %v1550 = vlaneseq
    %v1551 = vshrl.u32 %v1550, 7
    %v1552 = vsub.s32 5, %v1551
    %v1553 = vrot.slane %v685, %v1552
    %v1554 = vlaneseq
    %v1555 = vshrl.u32 %v1554, 7
    %v1556 = vsub.s32 6, %v1555
    %v1557 = vrot.slane %v685, %v1556
    %v1558 = vlaneseq
    %v1559 = vshrl.u32 %v1558, 7
    %v1560 = vsub.s32 7, %v1559
    %v1561 = vrot.slane %v685, %v1560
    %v1562 = vlaneseq
    %v1563 = vshrl.u32 %v1562, 7
    %v1564 = vsub.s32 0, %v1563
    %v1565 = vrot.slane %v686, %v1564
    %v1566 = vlaneseq
    %v1567 = vshrl.u32 %v1566, 7
    %v1568 = vsub.s32 1, %v1567
    %v1569 = vrot.slane %v686, %v1568
    %v1570 = vlaneseq
    %v1571 = vshrl.u32 %v1570, 7
    %v1572 = vsub.s32 2, %v1571
    %v1573 = vrot.slane %v686, %v1572
    %v1574 = vlaneseq
    %v1575 = vshrl.u32 %v1574, 7
    %v1576 = vsub.s32 3, %v1575
    %v1577 = vrot.slane %v686, %v1576
    %v1578 = vlaneseq
    %v1579 = vshrl.u32 %v1578, 7
    %v1580 = vsub.s32 4, %v1579
    %v1581 = vrot.slane %v686, %v1580
    %v1582 = vlaneseq
    %v1583 = vshrl.u32 %v1582, 7
    %v1584 = vsub.s32 5, %v1583
    %v1585 = vrot.slane %v686, %v1584
    %v1586 = vlaneseq
    %v1587 = vshrl.u32 %v1586, 7
    %v1588 = vsub.s32 6, %v1587
    %v1589 = vrot.slane %v686, %v1588
    %v1590 = vlaneseq
    %v1591 = vshrl.u32 %v1590, 7
    %v1592 = vsub.s32 7, %v1591
    %v1593 = vrot.slane %v686, %v1592
    %v1594 = vlaneseq
    %v1595 = vshrl.u32 %v1594, 7
    %v1596 = vsub.s32 0, %v1595
    %v1597 = vrot.slane %v687, %v1596
    %v1598 = vlaneseq
    %v1599 = vshrl.u32 %v1598, 7
    %v1600 = vsub.s32 1, %v1599
    %v1601 = vrot.slane %v687, %v1600
    %v1602 = vlaneseq
    %v1603 = vshrl.u32 %v1602, 7
    %v1604 = vsub.s32 2, %v1603
    %v1605 = vrot.slane %v687, %v1604
    %v1606 = vlaneseq
    %v1607 = vshrl.u32 %v1606, 7
    %v1608 = vsub.s32 3, %v1607
    %v1609 = vrot.slane %v687, %v1608
    %v1610 = vlaneseq
    %v1611 = vshrl.u32 %v1610, 7
    %v1612 = vsub.s32 4, %v1611
    %v1613 = vrot.slane %v687, %v1612
    %v1614 = vlaneseq
    %v1615 = vshrl.u32 %v1614, 7
    %v1616 = vsub.s32 5, %v1615
    %v1617 = vrot.slane %v687, %v1616
    %v1618 = vlaneseq
    %v1619 = vshrl.u32 %v1618, 7
    %v1620 = vsub.s32 6, %v1619
    %v1621 = vrot.slane %v687, %v1620
    %v1622 = vlaneseq
    %v1623 = vshrl.u32 %v1622, 7
    %v1624 = vsub.s32 7, %v1623
    %v1625 = vrot.slane %v687, %v1624
    %v1626 = vlaneseq
    %v1627 = vshrl.u32 %v1626, 7
    %v1628 = vsub.s32 0, %v1627
    %v1629 = vrot.slane %v688, %v1628
    %v1630 = vlaneseq
    %v1631 = vshrl.u32 %v1630, 7
    %v1632 = vsub.s32 1, %v1631
    %v1633 = vrot.slane %v688, %v1632
    %v1634 = vlaneseq
    %v1635 = vshrl.u32 %v1634, 7
    %v1636 = vsub.s32 2, %v1635
    %v1637 = vrot.slane %v688, %v1636
    %v1638 = vlaneseq
    %v1639 = vshrl.u32 %v1638, 7
    %v1640 = vsub.s32 3, %v1639
    %v1641 = vrot.slane %v688, %v1640
    %v1642 = vlaneseq
    %v1643 = vshrl.u32 %v1642, 7
    %v1644 = vsub.s32 4, %v1643
    %v1645 = vrot.slane %v688, %v1644
    %v1646 = vlaneseq
    %v1647 = vshrl.u32 %v1646, 7
    %v1648 = vsub.s32 5, %v1647
    %v1649 = vrot.slane %v688, %v1648
    %v1650 = vlaneseq
    %v1651 = vshrl.u32 %v1650, 7
    %v1652 = vsub.s32 6, %v1651
    %v1653 = vrot.slane %v688, %v1652
    %v1654 = vlaneseq
    %v1655 = vshrl.u32 %v1654, 7
    %v1656 = vsub.s32 7, %v1655
    %v1657 = vrot.slane %v688, %v1656
    %v1658 = vlaneseq
    %v1659 = vshrl.u32 %v1658, 7
    %v1660 = vsub.s32 0, %v1659
    %v1661 = vrot.slane %v689, %v1660
    %v1662 = vlaneseq
    %v1663 = vshrl.u32 %v1662, 7
    %v1664 = vsub.s32 1, %v1663
    %v1665 = vrot.slane %v689, %v1664
    %v1666 = vlaneseq
    %v1667 = vshrl.u32 %v1666, 7
    %v1668 = vsub.s32 2, %v1667
    %v1669 = vrot.slane %v689, %v1668
    %v1670 = vlaneseq
    %v1671 = vshrl.u32 %v1670, 7
    %v1672 = vsub.s32 3, %v1671
    %v1673 = vrot.slane %v689, %v1672
    %v1674 = vlaneseq
    %v1675 = vshrl.u32 %v1674, 7
    %v1676 = vsub.s32 4, %v1675
    %v1677 = vrot.slane %v689, %v1676
    %v1678 = vlaneseq
    %v1679 = vshrl.u32 %v1678, 7
    %v1680 = vsub.s32 5, %v1679
    %v1681 = vrot.slane %v689, %v1680
    %v1682 = vlaneseq
    %v1683 = vshrl.u32 %v1682, 7
    %v1684 = vsub.s32 6, %v1683
    %v1685 = vrot.slane %v689, %v1684
    %v1686 = vlaneseq
    %v1687 = vshrl.u32 %v1686, 7
    %v1688 = vsub.s32 7, %v1687
    %v1689 = vrot.slane %v689, %v1688
    %v1690 = vlaneseq
    %v1691 = vshrl.u32 %v1690, 7
    %v1692 = vsub.s32 0, %v1691
    %v1693 = vrot.slane %v690, %v1692
    %v1694 = vlaneseq
    %v1695 = vshrl.u32 %v1694, 7
    %v1696 = vsub.s32 1, %v1695
    %v1697 = vrot.slane %v690, %v1696
    %v1698 = vlaneseq
    %v1699 = vshrl.u32 %v1698, 7
    %v1700 = vsub.s32 2, %v1699
    %v1701 = vrot.slane %v690, %v1700
    %v1702 = vlaneseq
    %v1703 = vshrl.u32 %v1702, 7
    %v1704 = vsub.s32 3, %v1703
    %v1705 = vrot.slane %v690, %v1704
    %v1706 = vlaneseq
    %v1707 = vshrl.u32 %v1706, 7
    %v1708 = vsub.s32 4, %v1707
    %v1709 = vrot.slane %v690, %v1708
    %v1710 = vlaneseq
    %v1711 = vshrl.u32 %v1710, 7
    %v1712 = vsub.s32 5, %v1711
    %v1713 = vrot.slane %v690, %v1712
    %v1714 = vlaneseq
    %v1715 = vshrl.u32 %v1714, 7
    %v1716 = vsub.s32 6, %v1715
    %v1717 = vrot.slane %v690, %v1716
    %v1718 = vlaneseq
    %v1719 = vshrl.u32 %v1718, 7
    %v1720 = vsub.s32 7, %v1719
    %v1721 = vrot.slane %v690, %v1720
    %v1722 = vlaneseq
    %v1723 = vshrl.u32 %v1722, 7
    %v1724 = vsub.s32 0, %v1723
    %v1725 = vrot.slane %v691, %v1724
    %v1726 = vlaneseq
    %v1727 = vshrl.u32 %v1726, 7
    %v1728 = vsub.s32 1, %v1727
    %v1729 = vrot.slane %v691, %v1728
    %v1730 = vlaneseq
    %v1731 = vshrl.u32 %v1730, 7
    %v1732 = vsub.s32 2, %v1731
    %v1733 = vrot.slane %v691, %v1732
    %v1734 = vlaneseq
    %v1735 = vshrl.u32 %v1734, 7
    %v1736 = vsub.s32 3, %v1735
    %v1737 = vrot.slane %v691, %v1736
    %v1738 = vlaneseq
    %v1739 = vshrl.u32 %v1738, 7
    %v1740 = vsub.s32 4, %v1739
    %v1741 = vrot.slane %v691, %v1740
    %v1742 = vlaneseq
    %v1743 = vshrl.u32 %v1742, 7
    %v1744 = vsub.s32 5, %v1743
    %v1745 = vrot.slane %v691, %v1744
    %v1746 = vlaneseq
    %v1747 = vshrl.u32 %v1746, 7
    %v1748 = vsub.s32 6, %v1747
    %v1749 = vrot.slane %v691, %v1748
    %v1750 = vlaneseq
    %v1751 = vshrl.u32 %v1750, 7
    %v1752 = vsub.s32 7, %v1751
    %v1753 = vrot.slane %v691, %v1752
    %v1754 = vlaneseq
    %v1755 = vshrl.u32 %v1754, 7
    %v1756 = vsub.s32 0, %v1755
    %v1757 = vrot.slane %v692, %v1756
    %v1758 = vlaneseq
    %v1759 = vshrl.u32 %v1758, 7
    %v1760 = vsub.s32 1, %v1759
    %v1761 = vrot.slane %v692, %v1760
    %v1762 = vlaneseq
    %v1763 = vshrl.u32 %v1762, 7
    %v1764 = vsub.s32 2, %v1763
    %v1765 = vrot.slane %v692, %v1764
    %v1766 = vlaneseq
    %v1767 = vshrl.u32 %v1766, 7
    %v1768 = vsub.s32 3, %v1767
    %v1769 = vrot.slane %v692, %v1768
    %v1770 = vlaneseq
    %v1771 = vshrl.u32 %v1770, 7
    %v1772 = vsub.s32 4, %v1771
    %v1773 = vrot.slane %v692, %v1772
    %v1774 = vlaneseq
    %v1775 = vshrl.u32 %v1774, 7
    %v1776 = vsub.s32 5, %v1775
    %v1777 = vrot.slane %v692, %v1776
    %v1778 = vlaneseq
    %v1779 = vshrl.u32 %v1778, 7
    %v1780 = vsub.s32 6, %v1779
    %v1781 = vrot.slane %v692, %v1780
    %v1782 = vlaneseq
    %v1783 = vshrl.u32 %v1782, 7
    %v1784 = vsub.s32 7, %v1783
    %v1785 = vrot.slane %v692, %v1784
    %v1786 = vlaneseq
    %v1787 = vshrl.u32 %v1786, 7
    %v1788 = vsub.s32 0, %v1787
    %v1789 = vrot.slane %v693, %v1788
    %v1790 = vlaneseq
    %v1791 = vshrl.u32 %v1790, 7
    %v1792 = vsub.s32 1, %v1791
    %v1793 = vrot.slane %v693, %v1792
    %v1794 = vlaneseq
    %v1795 = vshrl.u32 %v1794, 7
    %v1796 = vsub.s32 2, %v1795
    %v1797 = vrot.slane %v693, %v1796
    %v1798 = vlaneseq
    %v1799 = vshrl.u32 %v1798, 7
    %v1800 = vsub.s32 3, %v1799
    %v1801 = vrot.slane %v693, %v1800
    %v1802 = vlaneseq
    %v1803 = vshrl.u32 %v1802, 7
    %v1804 = vsub.s32 4, %v1803
    %v1805 = vrot.slane %v693, %v1804
    %v1806 = vlaneseq
    %v1807 = vshrl.u32 %v1806, 7
    %v1808 = vsub.s32 5, %v1807
    %v1809 = vrot.slane %v693, %v1808
    %v1810 = vlaneseq
    %v1811 = vshrl.u32 %v1810, 7
    %v1812 = vsub.s32 6, %v1811
    %v1813 = vrot.slane %v693, %v1812
    %v1814 = vlaneseq
    %v1815 = vshrl.u32 %v1814, 7
    %v1816 = vsub.s32 7, %v1815
    %v1817 = vrot.slane %v693, %v1816
    %v1818 = vlaneseq
    %v1819 = vshrl.u32 %v1818, 7
    %v1820 = vsub.s32 0, %v1819
    %v1821 = vrot.slane %v694, %v1820
    %v1822 = vlaneseq
    %v1823 = vshrl.u32 %v1822, 7
    %v1824 = vsub.s32 1, %v1823
    %v1825 = vrot.slane %v694, %v1824
    %v1826 = vlaneseq
    %v1827 = vshrl.u32 %v1826, 7
    %v1828 = vsub.s32 2, %v1827
    %v1829 = vrot.slane %v694, %v1828
    %v1830 = vlaneseq
    %v1831 = vshrl.u32 %v1830, 7
    %v1832 = vsub.s32 3, %v1831
    %v1833 = vrot.slane %v694, %v1832
    %v1834 = vlaneseq
    %v1835 = vshrl.u32 %v1834, 7
    %v1836 = vsub.s32 4, %v1835
    %v1837 = vrot.slane %v694, %v1836
    %v1838 = vlaneseq
    %v1839 = vshrl.u32 %v1838, 7
    %v1840 = vsub.s32 5, %v1839
    %v1841 = vrot.slane %v694, %v1840
    %v1842 = vlaneseq
    %v1843 = vshrl.u32 %v1842, 7
    %v1844 = vsub.s32 6, %v1843
    %v1845 = vrot.slane %v694, %v1844
    %v1846 = vlaneseq
    %v1847 = vshrl.u32 %v1846, 7
    %v1848 = vsub.s32 7, %v1847
    %v1849 = vrot.slane %v694, %v1848
    %v1850 = vlaneseq
    %v1851 = vshrl.u32 %v1850, 7
    %v1852 = vsub.s32 0, %v1851
    %v1853 = vrot.slane %v695, %v1852
    %v1854 = vlaneseq
    %v1855 = vshrl.u32 %v1854, 7
    %v1856 = vsub.s32 1, %v1855
    %v1857 = vrot.slane %v695, %v1856
    %v1858 = vlaneseq
    %v1859 = vshrl.u32 %v1858, 7
    %v1860 = vsub.s32 2, %v1859
    %v1861 = vrot.slane %v695, %v1860
    %v1862 = vlaneseq
    %v1863 = vshrl.u32 %v1862, 7
    %v1864 = vsub.s32 3, %v1863
    %v1865 = vrot.slane %v695, %v1864
    %v1866 = vlaneseq
    %v1867 = vshrl.u32 %v1866, 7
    %v1868 = vsub.s32 4, %v1867
    %v1869 = vrot.slane %v695, %v1868
    %v1870 = vlaneseq
    %v1871 = vshrl.u32 %v1870, 7
    %v1872 = vsub.s32 5, %v1871
    %v1873 = vrot.slane %v695, %v1872
    %v1874 = vlaneseq
    %v1875 = vshrl.u32 %v1874, 7
    %v1876 = vsub.s32 6, %v1875
    %v1877 = vrot.slane %v695, %v1876
    %v1878 = vlaneseq
    %v1879 = vshrl.u32 %v1878, 7
    %v1880 = vsub.s32 7, %v1879
    %v1881 = vrot.slane %v695, %v1880
    %v1882 = vlaneseq
    %v1883 = vshrl.u32 %v1882, 7
    %v1884 = vsub.s32 0, %v1883
    %v1885 = vrot.slane %v696, %v1884
    %v1886 = vlaneseq
    %v1887 = vshrl.u32 %v1886, 7
    %v1888 = vsub.s32 1, %v1887
    %v1889 = vrot.slane %v696, %v1888
    %v1890 = vlaneseq
    %v1891 = vshrl.u32 %v1890, 7
    %v1892 = vsub.s32 2, %v1891
    %v1893 = vrot.slane %v696, %v1892
    %v1894 = vlaneseq
    %v1895 = vshrl.u32 %v1894, 7
    %v1896 = vsub.s32 3, %v1895
    %v1897 = vrot.slane %v696, %v1896
    %v1898 = vlaneseq
    %v1899 = vshrl.u32 %v1898, 7
    %v1900 = vsub.s32 4, %v1899
    %v1901 = vrot.slane %v696, %v1900
    %v1902 = vlaneseq
    %v1903 = vshrl.u32 %v1902, 7
    %v1904 = vsub.s32 5, %v1903
    %v1905 = vrot.slane %v696, %v1904
    %v1906 = vlaneseq
    %v1907 = vshrl.u32 %v1906, 7
    %v1908 = vsub.s32 6, %v1907
    %v1909 = vrot.slane %v696, %v1908
    %v1910 = vlaneseq
    %v1911 = vshrl.u32 %v1910, 7
    %v1912 = vsub.s32 7, %v1911
    %v1913 = vrot.slane %v696, %v1912
    %v1914 = vlaneseq
    %v1915 = vshrl.u32 %v1914, 7
    %v1916 = vsub.s32 0, %v1915
    %v1917 = vrot.slane %v697, %v1916
    %v1918 = vlaneseq
    %v1919 = vshrl.u32 %v1918, 7
    %v1920 = vsub.s32 1, %v1919
    %v1921 = vrot.slane %v697, %v1920
    %v1922 = vlaneseq
    %v1923 = vshrl.u32 %v1922, 7
    %v1924 = vsub.s32 2, %v1923
    %v1925 = vrot.slane %v697, %v1924
    %v1926 = vlaneseq
    %v1927 = vshrl.u32 %v1926, 7
    %v1928 = vsub.s32 3, %v1927
    %v1929 = vrot.slane %v697, %v1928
    %v1930 = vlaneseq
    %v1931 = vshrl.u32 %v1930, 7
    %v1932 = vsub.s32 4, %v1931
    %v1933 = vrot.slane %v697, %v1932
    %v1934 = vlaneseq
    %v1935 = vshrl.u32 %v1934, 7
    %v1936 = vsub.s32 5, %v1935
    %v1937 = vrot.slane %v697, %v1936
    %v1938 = vlaneseq
    %v1939 = vshrl.u32 %v1938, 7
    %v1940 = vsub.s32 6, %v1939
    %v1941 = vrot.slane %v697, %v1940
    %v1942 = vlaneseq
    %v1943 = vshrl.u32 %v1942, 7
    %v1944 = vsub.s32 7, %v1943
    %v1945 = vrot.slane %v697, %v1944
    %v1946 = vlaneseq
    %v1947 = vshrl.u32 %v1946, 7
    %v1948 = vsub.s32 0, %v1947
    %v1949 = vrot.slane %v698, %v1948
    %v1950 = vlaneseq
    %v1951 = vshrl.u32 %v1950, 7
    %v1952 = vsub.s32 1, %v1951
    %v1953 = vrot.slane %v698, %v1952
    %v1954 = vlaneseq
    %v1955 = vshrl.u32 %v1954, 7
    %v1956 = vsub.s32 2, %v1955
    %v1957 = vrot.slane %v698, %v1956
    %v1958 = vlaneseq
    %v1959 = vshrl.u32 %v1958, 7
    %v1960 = vsub.s32 3, %v1959
    %v1961 = vrot.slane %v698, %v1960
    %v1962 = vlaneseq
    %v1963 = vshrl.u32 %v1962, 7
    %v1964 = vsub.s32 4, %v1963
    %v1965 = vrot.slane %v698, %v1964
    %v1966 = vlaneseq
    %v1967 = vshrl.u32 %v1966, 7
    %v1968 = vsub.s32 5, %v1967
    %v1969 = vrot.slane %v698, %v1968
    %v1970 = vlaneseq
    %v1971 = vshrl.u32 %v1970, 7
    %v1972 = vsub.s32 6, %v1971
    %v1973 = vrot.slane %v698, %v1972
    %v1974 = vlaneseq
    %v1975 = vshrl.u32 %v1974, 7
    %v1976 = vsub.s32 7, %v1975
    %v1977 = vrot.slane %v698, %v1976
    %v1978 = vlaneseq
    %v1979 = vshrl.u32 %v1978, 7
    %v1980 = vsub.s32 0, %v1979
    %v1981 = vrot.slane %v699, %v1980
    %v1982 = vlaneseq
    %v1983 = vshrl.u32 %v1982, 7
    %v1984 = vsub.s32 1, %v1983
    %v1985 = vrot.slane %v699, %v1984
    %v1986 = vlaneseq
    %v1987 = vshrl.u32 %v1986, 7
    %v1988 = vsub.s32 2, %v1987
    %v1989 = vrot.slane %v699, %v1988
    %v1990 = vlaneseq
    %v1991 = vshrl.u32 %v1990, 7
    %v1992 = vsub.s32 3, %v1991
    %v1993 = vrot.slane %v699, %v1992
    %v1994 = vlaneseq
    %v1995 = vshrl.u32 %v1994, 7
    %v1996 = vsub.s32 4, %v1995
    %v1997 = vrot.slane %v699, %v1996
    %v1998 = vlaneseq
    %v1999 = vshrl.u32 %v1998, 7
    %v2000 = vsub.s32 5, %v1999
    %v2001 = vrot.slane %v699, %v2000
    %v2002 = vlaneseq
    %v2003 = vshrl.u32 %v2002, 7
    %v2004 = vsub.s32 6, %v2003
    %v2005 = vrot.slane %v699, %v2004
    %v2006 = vlaneseq
    %v2007 = vshrl.u32 %v2006, 7
    %v2008 = vsub.s32 7, %v2007
    %v2009 = vrot.slane %v699, %v2008
    %v2010 = vlaneseq
    %v2011 = vshrl.u32 %v2010, 7
    %v2012 = vsub.s32 0, %v2011
    %v2013 = vrot.slane %v700, %v2012
    %v2014 = vlaneseq
    %v2015 = vshrl.u32 %v2014, 7
    %v2016 = vsub.s32 1, %v2015
    %v2017 = vrot.slane %v700, %v2016
    %v2018 = vlaneseq
    %v2019 = vshrl.u32 %v2018, 7
    %v2020 = vsub.s32 2, %v2019
    %v2021 = vrot.slane %v700, %v2020
    %v2022 = vlaneseq
    %v2023 = vshrl.u32 %v2022, 7
    %v2024 = vsub.s32 3, %v2023
    %v2025 = vrot.slane %v700, %v2024
    %v2026 = vlaneseq
    %v2027 = vshrl.u32 %v2026, 7
    %v2028 = vsub.s32 4, %v2027
    %v2029 = vrot.slane %v700, %v2028
    %v2030 = vlaneseq
    %v2031 = vshrl.u32 %v2030, 7
    %v2032 = vsub.s32 5, %v2031
    %v2033 = vrot.slane %v700, %v2032
    %v2034 = vlaneseq
    %v2035 = vshrl.u32 %v2034, 7
    %v2036 = vsub.s32 6, %v2035
    %v2037 = vrot.slane %v700, %v2036
    %v2038 = vlaneseq
    %v2039 = vshrl.u32 %v2038, 7
    %v2040 = vsub.s32 7, %v2039
    %v2041 = vrot.slane %v700, %v2040
    %v2042 = vlaneseq
    %v2043 = vshrl.u32 %v2042, 7
    %v2044 = vsub.s32 0, %v2043
    %v2045 = vrot.slane %v701, %v2044
    %v2046 = vlaneseq
    %v2047 = vshrl.u32 %v2046, 7
    %v2048 = vsub.s32 1, %v2047
    %v2049 = vrot.slane %v701, %v2048
    %v2050 = vlaneseq
    %v2051 = vshrl.u32 %v2050, 7
    %v2052 = vsub.s32 2, %v2051
    %v2053 = vrot.slane %v701, %v2052
    %v2054 = vlaneseq
    %v2055 = vshrl.u32 %v2054, 7
    %v2056 = vsub.s32 3, %v2055
    %v2057 = vrot.slane %v701, %v2056
    %v2058 = vlaneseq
    %v2059 = vshrl.u32 %v2058, 7
    %v2060 = vsub.s32 4, %v2059
    %v2061 = vrot.slane %v701, %v2060
    %v2062 = vlaneseq
    %v2063 = vshrl.u32 %v2062, 7
    %v2064 = vsub.s32 5, %v2063
    %v2065 = vrot.slane %v701, %v2064
    %v2066 = vlaneseq
    %v2067 = vshrl.u32 %v2066, 7
    %v2068 = vsub.s32 6, %v2067
    %v2069 = vrot.slane %v701, %v2068
    %v2070 = vlaneseq
    %v2071 = vshrl.u32 %v2070, 7
    %v2072 = vsub.s32 7, %v2071
    %v2073 = vrot.slane %v701, %v2072
    %v2074 = vlaneseq
    %v2075 = vshrl.u32 %v2074, 7
    %v2076 = vsub.s32 0, %v2075
    %v2077 = vrot.slane %v702, %v2076
    %v2078 = vlaneseq
    %v2079 = vshrl.u32 %v2078, 7
    %v2080 = vsub.s32 1, %v2079
    %v2081 = vrot.slane %v702, %v2080
    %v2082 = vlaneseq
    %v2083 = vshrl.u32 %v2082, 7
    %v2084 = vsub.s32 2, %v2083
    %v2085 = vrot.slane %v702, %v2084
    %v2086 = vlaneseq
    %v2087 = vshrl.u32 %v2086, 7
    %v2088 = vsub.s32 3, %v2087
    %v2089 = vrot.slane %v702, %v2088
    %v2090 = vlaneseq
    %v2091 = vshrl.u32 %v2090, 7
    %v2092 = vsub.s32 4, %v2091
    %v2093 = vrot.slane %v702, %v2092
    %v2094 = vlaneseq
    %v2095 = vshrl.u32 %v2094, 7
    %v2096 = vsub.s32 5, %v2095
    %v2097 = vrot.slane %v702, %v2096
    %v2098 = vlaneseq
    %v2099 = vshrl.u32 %v2098, 7
    %v2100 = vsub.s32 6, %v2099
    %v2101 = vrot.slane %v702, %v2100
    %v2102 = vlaneseq
    %v2103 = vshrl.u32 %v2102, 7
    %v2104 = vsub.s32 7, %v2103
    %v2105 = vrot.slane %v702, %v2104
    %v2106 = vlaneseq
    %v2107 = vshrl.u32 %v2106, 7
    %v2108 = vsub.s32 0, %v2107
    %v2109 = vrot.slane %v703, %v2108
    %v2110 = vlaneseq
    %v2111 = vshrl.u32 %v2110, 7
    %v2112 = vsub.s32 1, %v2111
    %v2113 = vrot.slane %v703, %v2112
    %v2114 = vlaneseq
    %v2115 = vshrl.u32 %v2114, 7
    %v2116 = vsub.s32 2, %v2115
    %v2117 = vrot.slane %v703, %v2116
    %v2118 = vlaneseq
    %v2119 = vshrl.u32 %v2118, 7
    %v2120 = vsub.s32 3, %v2119
    %v2121 = vrot.slane %v703, %v2120
    %v2122 = vlaneseq
    %v2123 = vshrl.u32 %v2122, 7
    %v2124 = vsub.s32 4, %v2123
    %v2125 = vrot.slane %v703, %v2124
    %v2126 = vlaneseq
    %v2127 = vshrl.u32 %v2126, 7
    %v2128 = vsub.s32 5, %v2127
    %v2129 = vrot.slane %v703, %v2128
    %v2130 = vlaneseq
    %v2131 = vshrl.u32 %v2130, 7
    %v2132 = vsub.s32 6, %v2131
    %v2133 = vrot.slane %v703, %v2132
    %v2134 = vlaneseq
    %v2135 = vshrl.u32 %v2134, 7
    %v2136 = vsub.s32 7, %v2135
    %v2137 = vrot.slane %v703, %v2136
    %v2138 = vlaneseq
    %v2139 = vshrl.u32 %v2138, 7
    %v2140 = vsub.s32 0, %v2139
    %v2141 = vrot.slane %v704, %v2140
    %v2142 = vlaneseq
    %v2143 = vshrl.u32 %v2142, 7
    %v2144 = vsub.s32 1, %v2143
    %v2145 = vrot.slane %v704, %v2144
    %v2146 = vlaneseq
    %v2147 = vshrl.u32 %v2146, 7
    %v2148 = vsub.s32 2, %v2147
    %v2149 = vrot.slane %v704, %v2148
    %v2150 = vlaneseq
    %v2151 = vshrl.u32 %v2150, 7
    %v2152 = vsub.s32 3, %v2151
    %v2153 = vrot.slane %v704, %v2152
    %v2154 = vlaneseq
    %v2155 = vshrl.u32 %v2154, 7
    %v2156 = vsub.s32 4, %v2155
    %v2157 = vrot.slane %v704, %v2156
    %v2158 = vlaneseq
    %v2159 = vshrl.u32 %v2158, 7
    %v2160 = vsub.s32 5, %v2159
    %v2161 = vrot.slane %v704, %v2160
    %v2162 = vlaneseq
    %v2163 = vshrl.u32 %v2162, 7
    %v2164 = vsub.s32 6, %v2163
    %v2165 = vrot.slane %v704, %v2164
    %v2166 = vlaneseq
    %v2167 = vshrl.u32 %v2166, 7
    %v2168 = vsub.s32 7, %v2167
    %v2169 = vrot.slane %v704, %v2168
    %v2170 = vlaneseq
    %v2171 = vshrl.u32 %v2170, 7
    %v2172 = vsub.s32 0, %v2171
    %v2173 = vrot.slane %v705, %v2172
    %v2174 = vlaneseq
    %v2175 = vshrl.u32 %v2174, 7
    %v2176 = vsub.s32 1, %v2175
    %v2177 = vrot.slane %v705, %v2176
    %v2178 = vlaneseq
    %v2179 = vshrl.u32 %v2178, 7
    %v2180 = vsub.s32 2, %v2179
    %v2181 = vrot.slane %v705, %v2180
    %v2182 = vlaneseq
    %v2183 = vshrl.u32 %v2182, 7
    %v2184 = vsub.s32 3, %v2183
    %v2185 = vrot.slane %v705, %v2184
    %v2186 = vlaneseq
    %v2187 = vshrl.u32 %v2186, 7
    %v2188 = vsub.s32 4, %v2187
    %v2189 = vrot.slane %v705, %v2188
    %v2190 = vlaneseq
    %v2191 = vshrl.u32 %v2190, 7
    %v2192 = vsub.s32 5, %v2191
    %v2193 = vrot.slane %v705, %v2192
    %v2194 = vlaneseq
    %v2195 = vshrl.u32 %v2194, 7
    %v2196 = vsub.s32 6, %v2195
    %v2197 = vrot.slane %v705, %v2196
    %v2198 = vlaneseq
    %v2199 = vshrl.u32 %v2198, 7
    %v2200 = vsub.s32 7, %v2199
    %v2201 = vrot.slane %v705, %v2200
    %v2202 = vlaneseq
    %v2203 = vshrl.u32 %v2202, 7
    %v2204 = vsub.s32 0, %v2203
    %v2205 = vrot.slane %v706, %v2204
    %v2206 = vlaneseq
    %v2207 = vshrl.u32 %v2206, 7
    %v2208 = vsub.s32 1, %v2207
    %v2209 = vrot.slane %v706, %v2208
    %v2210 = vlaneseq
    %v2211 = vshrl.u32 %v2210, 7
    %v2212 = vsub.s32 2, %v2211
    %v2213 = vrot.slane %v706, %v2212
    %v2214 = vlaneseq
    %v2215 = vshrl.u32 %v2214, 7
    %v2216 = vsub.s32 3, %v2215
    %v2217 = vrot.slane %v706, %v2216
    %v2218 = vlaneseq
    %v2219 = vshrl.u32 %v2218, 7
    %v2220 = vsub.s32 4, %v2219
    %v2221 = vrot.slane %v706, %v2220
    %v2222 = vlaneseq
    %v2223 = vshrl.u32 %v2222, 7
    %v2224 = vsub.s32 5, %v2223
    %v2225 = vrot.slane %v706, %v2224
    %v2226 = vlaneseq
    %v2227 = vshrl.u32 %v2226, 7
    %v2228 = vsub.s32 6, %v2227
    %v2229 = vrot.slane %v706, %v2228
    %v2230 = vlaneseq
    %v2231 = vshrl.u32 %v2230, 7
    %v2232 = vsub.s32 7, %v2231
    %v2233 = vrot.slane %v706, %v2232
    %v2234 = vlaneseq
    %v2235 = vshrl.u32 %v2234, 7
    %v2236 = vsub.s32 0, %v2235
    %v2237 = vrot.slane %v707, %v2236
    %v2238 = vlaneseq
    %v2239 = vshrl.u32 %v2238, 7
    %v2240 = vsub.s32 1, %v2239
    %v2241 = vrot.slane %v707, %v2240
    %v2242 = vlaneseq
    %v2243 = vshrl.u32 %v2242, 7
    %v2244 = vsub.s32 2, %v2243
    %v2245 = vrot.slane %v707, %v2244
    %v2246 = vlaneseq
    %v2247 = vshrl.u32 %v2246, 7
    %v2248 = vsub.s32 3, %v2247
    %v2249 = vrot.slane %v707, %v2248
    %v2250 = vlaneseq
    %v2251 = vshrl.u32 %v2250, 7
    %v2252 = vsub.s32 4, %v2251
    %v2253 = vrot.slane %v707, %v2252
    %v2254 = vlaneseq
    %v2255 = vshrl.u32 %v2254, 7
    %v2256 = vsub.s32 5, %v2255
    %v2257 = vrot.slane %v707, %v2256
    %v2258 = vlaneseq
    %v2259 = vshrl.u32 %v2258, 7
    %v2260 = vsub.s32 6, %v2259
    %v2261 = vrot.slane %v707, %v2260
    %v2262 = vlaneseq
    %v2263 = vshrl.u32 %v2262, 7
    %v2264 = vsub.s32 7, %v2263
    %v2265 = vrot.slane %v707, %v2264
    %v2266 = vlaneseq
    %v2267 = vshrl.u32 %v2266, 7
    %v2268 = vsub.s32 0, %v2267
    %v2269 = vrot.slane %v708, %v2268
    %v2270 = vlaneseq
    %v2271 = vshrl.u32 %v2270, 7
    %v2272 = vsub.s32 1, %v2271
    %v2273 = vrot.slane %v708, %v2272
    %v2274 = vlaneseq
    %v2275 = vshrl.u32 %v2274, 7
    %v2276 = vsub.s32 2, %v2275
    %v2277 = vrot.slane %v708, %v2276
    %v2278 = vlaneseq
    %v2279 = vshrl.u32 %v2278, 7
    %v2280 = vsub.s32 3, %v2279
    %v2281 = vrot.slane %v708, %v2280
    %v2282 = vlaneseq
    %v2283 = vshrl.u32 %v2282, 7
    %v2284 = vsub.s32 4, %v2283
    %v2285 = vrot.slane %v708, %v2284
    %v2286 = vlaneseq
    %v2287 = vshrl.u32 %v2286, 7
    %v2288 = vsub.s32 5, %v2287
    %v2289 = vrot.slane %v708, %v2288
    %v2290 = vlaneseq
    %v2291 = vshrl.u32 %v2290, 7
    %v2292 = vsub.s32 6, %v2291
    %v2293 = vrot.slane %v708, %v2292
    %v2294 = vlaneseq
    %v2295 = vshrl.u32 %v2294, 7
    %v2296 = vsub.s32 7, %v2295
    %v2297 = vrot.slane %v708, %v2296
    %v2298 = vlaneseq
    %v2299 = vshrl.u32 %v2298, 7
    %v2300 = vsub.s32 0, %v2299
    %v2301 = vrot.slane %v709, %v2300
    %v2302 = vlaneseq
    %v2303 = vshrl.u32 %v2302, 7
    %v2304 = vsub.s32 1, %v2303
    %v2305 = vrot.slane %v709, %v2304
    %v2306 = vlaneseq
    %v2307 = vshrl.u32 %v2306, 7
    %v2308 = vsub.s32 2, %v2307
    %v2309 = vrot.slane %v709, %v2308
    %v2310 = vlaneseq
    %v2311 = vshrl.u32 %v2310, 7
    %v2312 = vsub.s32 3, %v2311
    %v2313 = vrot.slane %v709, %v2312
    %v2314 = vlaneseq
    %v2315 = vshrl.u32 %v2314, 7
    %v2316 = vsub.s32 4, %v2315
    %v2317 = vrot.slane %v709, %v2316
    %v2318 = vlaneseq
    %v2319 = vshrl.u32 %v2318, 7
    %v2320 = vsub.s32 5, %v2319
    %v2321 = vrot.slane %v709, %v2320
    %v2322 = vlaneseq
    %v2323 = vshrl.u32 %v2322, 7
    %v2324 = vsub.s32 6, %v2323
    %v2325 = vrot.slane %v709, %v2324
    %v2326 = vlaneseq
    %v2327 = vshrl.u32 %v2326, 7
    %v2328 = vsub.s32 7, %v2327
    %v2329 = vrot.slane %v709, %v2328
    %v2330 = vlaneseq
    %v2331 = vshrl.u32 %v2330, 7
    %v2332 = vsub.s32 0, %v2331
    %v2333 = vrot.slane %v710, %v2332
    %v2334 = vlaneseq
    %v2335 = vshrl.u32 %v2334, 7
    %v2336 = vsub.s32 1, %v2335
    %v2337 = vrot.slane %v710, %v2336
    %v2338 = vlaneseq
    %v2339 = vshrl.u32 %v2338, 7
    %v2340 = vsub.s32 2, %v2339
    %v2341 = vrot.slane %v710, %v2340
    %v2342 = vlaneseq
    %v2343 = vshrl.u32 %v2342, 7
    %v2344 = vsub.s32 3, %v2343
    %v2345 = vrot.slane %v710, %v2344
    %v2346 = vlaneseq
    %v2347 = vshrl.u32 %v2346, 7
    %v2348 = vsub.s32 4, %v2347
    %v2349 = vrot.slane %v710, %v2348
    %v2350 = vlaneseq
    %v2351 = vshrl.u32 %v2350, 7
    %v2352 = vsub.s32 5, %v2351
    %v2353 = vrot.slane %v710, %v2352
    %v2354 = vlaneseq
    %v2355 = vshrl.u32 %v2354, 7
    %v2356 = vsub.s32 6, %v2355
    %v2357 = vrot.slane %v710, %v2356
    %v2358 = vlaneseq
    %v2359 = vshrl.u32 %v2358, 7
    %v2360 = vsub.s32 7, %v2359
    %v2361 = vrot.slane %v710, %v2360
    %v2362 = vlaneseq
    %v2363 = vshrl.u32 %v2362, 7
    %v2364 = vsub.s32 0, %v2363
    %v2365 = vrot.slane %v711, %v2364
    %v2366 = vlaneseq
    %v2367 = vshrl.u32 %v2366, 7
    %v2368 = vsub.s32 1, %v2367
    %v2369 = vrot.slane %v711, %v2368
    %v2370 = vlaneseq
    %v2371 = vshrl.u32 %v2370, 7
    %v2372 = vsub.s32 2, %v2371
    %v2373 = vrot.slane %v711, %v2372
    %v2374 = vlaneseq
    %v2375 = vshrl.u32 %v2374, 7
    %v2376 = vsub.s32 3, %v2375
    %v2377 = vrot.slane %v711, %v2376
    %v2378 = vlaneseq
    %v2379 = vshrl.u32 %v2378, 7
    %v2380 = vsub.s32 4, %v2379
    %v2381 = vrot.slane %v711, %v2380
    %v2382 = vlaneseq
    %v2383 = vshrl.u32 %v2382, 7
    %v2384 = vsub.s32 5, %v2383
    %v2385 = vrot.slane %v711, %v2384
    %v2386 = vlaneseq
    %v2387 = vshrl.u32 %v2386, 7
    %v2388 = vsub.s32 6, %v2387
    %v2389 = vrot.slane %v711, %v2388
    %v2390 = vlaneseq
    %v2391 = vshrl.u32 %v2390, 7
    %v2392 = vsub.s32 7, %v2391
    %v2393 = vrot.slane %v711, %v2392
    %v2394 = vlaneseq
    %v2395 = vshrl.u32 %v2394, 7
    %v2396 = vsub.s32 0, %v2395
    %v2397 = vrot.slane %v712, %v2396
    %v2398 = vlaneseq
    %v2399 = vshrl.u32 %v2398, 7
    %v2400 = vsub.s32 1, %v2399
    %v2401 = vrot.slane %v712, %v2400
    %v2402 = vlaneseq
    %v2403 = vshrl.u32 %v2402, 7
    %v2404 = vsub.s32 2, %v2403
    %v2405 = vrot.slane %v712, %v2404
    %v2406 = vlaneseq
    %v2407 = vshrl.u32 %v2406, 7
    %v2408 = vsub.s32 3, %v2407
    %v2409 = vrot.slane %v712, %v2408
    %v2410 = vlaneseq
    %v2411 = vshrl.u32 %v2410, 7
    %v2412 = vsub.s32 4, %v2411
    %v2413 = vrot.slane %v712, %v2412
    %v2414 = vlaneseq
    %v2415 = vshrl.u32 %v2414, 7
    %v2416 = vsub.s32 5, %v2415
    %v2417 = vrot.slane %v712, %v2416
    %v2418 = vlaneseq
    %v2419 = vshrl.u32 %v2418, 7
    %v2420 = vsub.s32 6, %v2419
    %v2421 = vrot.slane %v712, %v2420
    %v2422 = vlaneseq
    %v2423 = vshrl.u32 %v2422, 7
    %v2424 = vsub.s32 7, %v2423
    %v2425 = vrot.slane %v712, %v2424
    %v2426 = vlaneseq
    %v2427 = vshrl.u32 %v2426, 7
    %v2428 = vsub.s32 0, %v2427
    %v2429 = vrot.slane %v713, %v2428
    %v2430 = vlaneseq
    %v2431 = vshrl.u32 %v2430, 7
    %v2432 = vsub.s32 1, %v2431
    %v2433 = vrot.slane %v713, %v2432
    %v2434 = vlaneseq
    %v2435 = vshrl.u32 %v2434, 7
    %v2436 = vsub.s32 2, %v2435
    %v2437 = vrot.slane %v713, %v2436
    %v2438 = vlaneseq
    %v2439 = vshrl.u32 %v2438, 7
    %v2440 = vsub.s32 3, %v2439
    %v2441 = vrot.slane %v713, %v2440
    %v2442 = vlaneseq
    %v2443 = vshrl.u32 %v2442, 7
    %v2444 = vsub.s32 4, %v2443
    %v2445 = vrot.slane %v713, %v2444
    %v2446 = vlaneseq
    %v2447 = vshrl.u32 %v2446, 7
    %v2448 = vsub.s32 5, %v2447
    %v2449 = vrot.slane %v713, %v2448
    %v2450 = vlaneseq
    %v2451 = vshrl.u32 %v2450, 7
    %v2452 = vsub.s32 6, %v2451
    %v2453 = vrot.slane %v713, %v2452
    %v2454 = vlaneseq
    %v2455 = vshrl.u32 %v2454, 7
    %v2456 = vsub.s32 7, %v2455
    %v2457 = vrot.slane %v713, %v2456
    %v2458 = vlaneseq
    %v2459 = vshrl.u32 %v2458, 7
    %v2460 = vsub.s32 0, %v2459
    %v2461 = vrot.slane %v714, %v2460
    %v2462 = vlaneseq
    %v2463 = vshrl.u32 %v2462, 7
    %v2464 = vsub.s32 1, %v2463
    %v2465 = vrot.slane %v714, %v2464
    %v2466 = vlaneseq
    %v2467 = vshrl.u32 %v2466, 7
    %v2468 = vsub.s32 2, %v2467
    %v2469 = vrot.slane %v714, %v2468
    %v2470 = vlaneseq
    %v2471 = vshrl.u32 %v2470, 7
    %v2472 = vsub.s32 3, %v2471
    %v2473 = vrot.slane %v714, %v2472
    %v2474 = vlaneseq
    %v2475 = vshrl.u32 %v2474, 7
    %v2476 = vsub.s32 4, %v2475
    %v2477 = vrot.slane %v714, %v2476
    %v2478 = vlaneseq
    %v2479 = vshrl.u32 %v2478, 7
    %v2480 = vsub.s32 5, %v2479
    %v2481 = vrot.slane %v714, %v2480
    %v2482 = vlaneseq
    %v2483 = vshrl.u32 %v2482, 7
    %v2484 = vsub.s32 6, %v2483
    %v2485 = vrot.slane %v714, %v2484
    %v2486 = vlaneseq
    %v2487 = vshrl.u32 %v2486, 7
    %v2488 = vsub.s32 7, %v2487
    %v2489 = vrot.slane %v714, %v2488
    %v2490 = vlaneseq
    %v2491 = vshrl.u32 %v2490, 7
    %v2492 = vsub.s32 0, %v2491
    %v2493 = vrot.slane %v715, %v2492
    %v2494 = vlaneseq
    %v2495 = vshrl.u32 %v2494, 7
    %v2496 = vsub.s32 1, %v2495
    %v2497 = vrot.slane %v715, %v2496
    %v2498 = vlaneseq
    %v2499 = vshrl.u32 %v2498, 7
    %v2500 = vsub.s32 2, %v2499
    %v2501 = vrot.slane %v715, %v2500
    %v2502 = vlaneseq
    %v2503 = vshrl.u32 %v2502, 7
    %v2504 = vsub.s32 3, %v2503
    %v2505 = vrot.slane %v715, %v2504
    %v2506 = vlaneseq
    %v2507 = vshrl.u32 %v2506, 7
    %v2508 = vsub.s32 4, %v2507
    %v2509 = vrot.slane %v715, %v2508
    %v2510 = vlaneseq
    %v2511 = vshrl.u32 %v2510, 7
    %v2512 = vsub.s32 5, %v2511
    %v2513 = vrot.slane %v715, %v2512
    %v2514 = vlaneseq
    %v2515 = vshrl.u32 %v2514, 7
    %v2516 = vsub.s32 6, %v2515
    %v2517 = vrot.slane %v715, %v2516
    %v2518 = vlaneseq
    %v2519 = vshrl.u32 %v2518, 7
    %v2520 = vsub.s32 7, %v2519
    %v2521 = vrot.slane %v715, %v2520
    %v2522 = vlaneseq
    %v2523 = vshrl.u32 %v2522, 7
    %v2524 = vsub.s32 0, %v2523
    %v2525 = vrot.slane %v716, %v2524
    %v2526 = vlaneseq
    %v2527 = vshrl.u32 %v2526, 7
    %v2528 = vsub.s32 1, %v2527
    %v2529 = vrot.slane %v716, %v2528
    %v2530 = vlaneseq
    %v2531 = vshrl.u32 %v2530, 7
    %v2532 = vsub.s32 2, %v2531
    %v2533 = vrot.slane %v716, %v2532
    %v2534 = vlaneseq
    %v2535 = vshrl.u32 %v2534, 7
    %v2536 = vsub.s32 3, %v2535
    %v2537 = vrot.slane %v716, %v2536
    %v2538 = vlaneseq
    %v2539 = vshrl.u32 %v2538, 7
    %v2540 = vsub.s32 4, %v2539
    %v2541 = vrot.slane %v716, %v2540
    %v2542 = vlaneseq
    %v2543 = vshrl.u32 %v2542, 7
    %v2544 = vsub.s32 5, %v2543
    %v2545 = vrot.slane %v716, %v2544
    %v2546 = vlaneseq
    %v2547 = vshrl.u32 %v2546, 7
    %v2548 = vsub.s32 6, %v2547
    %v2549 = vrot.slane %v716, %v2548
    %v2550 = vlaneseq
    %v2551 = vshrl.u32 %v2550, 7
    %v2552 = vsub.s32 7, %v2551
    %v2553 = vrot.slane %v716, %v2552
    %v2554 = vlaneseq
    %v2555 = vshrl.u32 %v2554, 7
    %v2556 = vsub.s32 0, %v2555
    %v2557 = vrot.slane %v717, %v2556
    %v2558 = vlaneseq
    %v2559 = vshrl.u32 %v2558, 7
    %v2560 = vsub.s32 1, %v2559
    %v2561 = vrot.slane %v717, %v2560
    %v2562 = vlaneseq
    %v2563 = vshrl.u32 %v2562, 7
    %v2564 = vsub.s32 2, %v2563
    %v2565 = vrot.slane %v717, %v2564
    %v2566 = vlaneseq
    %v2567 = vshrl.u32 %v2566, 7
    %v2568 = vsub.s32 3, %v2567
    %v2569 = vrot.slane %v717, %v2568
    %v2570 = vlaneseq
    %v2571 = vshrl.u32 %v2570, 7
    %v2572 = vsub.s32 4, %v2571
    %v2573 = vrot.slane %v717, %v2572
    %v2574 = vlaneseq
    %v2575 = vshrl.u32 %v2574, 7
    %v2576 = vsub.s32 5, %v2575
    %v2577 = vrot.slane %v717, %v2576
    %v2578 = vlaneseq
    %v2579 = vshrl.u32 %v2578, 7
    %v2580 = vsub.s32 6, %v2579
    %v2581 = vrot.slane %v717, %v2580
    %v2582 = vlaneseq
    %v2583 = vshrl.u32 %v2582, 7
    %v2584 = vsub.s32 7, %v2583
    %v2585 = vrot.slane %v717, %v2584
    %v2586 = vlaneseq
    %v2587 = vshrl.u32 %v2586, 7
    %v2588 = vsub.s32 0, %v2587
    %v2589 = vrot.slane %v718, %v2588
    %v2590 = vlaneseq
    %v2591 = vshrl.u32 %v2590, 7
    %v2592 = vsub.s32 1, %v2591
    %v2593 = vrot.slane %v718, %v2592
    %v2594 = vlaneseq
    %v2595 = vshrl.u32 %v2594, 7
    %v2596 = vsub.s32 2, %v2595
    %v2597 = vrot.slane %v718, %v2596
    %v2598 = vlaneseq
    %v2599 = vshrl.u32 %v2598, 7
    %v2600 = vsub.s32 3, %v2599
    %v2601 = vrot.slane %v718, %v2600
    %v2602 = vlaneseq
    %v2603 = vshrl.u32 %v2602, 7
    %v2604 = vsub.s32 4, %v2603
    %v2605 = vrot.slane %v718, %v2604
    %v2606 = vlaneseq
    %v2607 = vshrl.u32 %v2606, 7
    %v2608 = vsub.s32 5, %v2607
    %v2609 = vrot.slane %v718, %v2608
    %v2610 = vlaneseq
    %v2611 = vshrl.u32 %v2610, 7
    %v2612 = vsub.s32 6, %v2611
    %v2613 = vrot.slane %v718, %v2612
    %v2614 = vlaneseq
    %v2615 = vshrl.u32 %v2614, 7
    %v2616 = vsub.s32 7, %v2615
    %v2617 = vrot.slane %v718, %v2616
    %v2618 = vlaneseq
    %v2619 = vshrl.u32 %v2618, 7
    %v2620 = vsub.s32 0, %v2619
    %v2621 = vrot.slane %v719, %v2620
    %v2622 = vlaneseq
    %v2623 = vshrl.u32 %v2622, 7
    %v2624 = vsub.s32 1, %v2623
    %v2625 = vrot.slane %v719, %v2624
    %v2626 = vlaneseq
    %v2627 = vshrl.u32 %v2626, 7
    %v2628 = vsub.s32 2, %v2627
    %v2629 = vrot.slane %v719, %v2628
    %v2630 = vlaneseq
    %v2631 = vshrl.u32 %v2630, 7
    %v2632 = vsub.s32 3, %v2631
    %v2633 = vrot.slane %v719, %v2632
    %v2634 = vlaneseq
    %v2635 = vshrl.u32 %v2634, 7
    %v2636 = vsub.s32 4, %v2635
    %v2637 = vrot.slane %v719, %v2636
    %v2638 = vlaneseq
    %v2639 = vshrl.u32 %v2638, 7
    %v2640 = vsub.s32 5, %v2639
    %v2641 = vrot.slane %v719, %v2640
    %v2642 = vlaneseq
    %v2643 = vshrl.u32 %v2642, 7
    %v2644 = vsub.s32 6, %v2643
    %v2645 = vrot.slane %v719, %v2644
    %v2646 = vlaneseq
    %v2647 = vshrl.u32 %v2646, 7
    %v2648 = vsub.s32 7, %v2647
    %v2649 = vrot.slane %v719, %v2648
    %v2650 = vlaneseq
    %v2651 = vshrl.u32 %v2650, 7
    %v2652 = vsub.s32 0, %v2651
    %v2653 = vrot.slane %v720, %v2652
    %v2654 = vlaneseq
    %v2655 = vshrl.u32 %v2654, 7
    %v2656 = vsub.s32 1, %v2655
    %v2657 = vrot.slane %v720, %v2656
    %v2658 = vlaneseq
    %v2659 = vshrl.u32 %v2658, 7
    %v2660 = vsub.s32 2, %v2659
    %v2661 = vrot.slane %v720, %v2660
    %v2662 = vlaneseq
    %v2663 = vshrl.u32 %v2662, 7
    %v2664 = vsub.s32 3, %v2663
    %v2665 = vrot.slane %v720, %v2664
    %v2666 = vlaneseq
    %v2667 = vshrl.u32 %v2666, 7
    %v2668 = vsub.s32 4, %v2667
    %v2669 = vrot.slane %v720, %v2668
    %v2670 = vlaneseq
    %v2671 = vshrl.u32 %v2670, 7
    %v2672 = vsub.s32 5, %v2671
    %v2673 = vrot.slane %v720, %v2672
    %v2674 = vlaneseq
    %v2675 = vshrl.u32 %v2674, 7
    %v2676 = vsub.s32 6, %v2675
    %v2677 = vrot.slane %v720, %v2676
    %v2678 = vlaneseq
    %v2679 = vshrl.u32 %v2678, 7
    %v2680 = vsub.s32 7, %v2679
    %v2681 = vrot.slane %v720, %v2680
    %v2682 = vlaneseq
    %v2683 = vshrl.u32 %v2682, 7
    %v2684 = vsub.s32 0, %v2683
    %v2685 = vrot.slane %v721, %v2684
    %v2686 = vlaneseq
    %v2687 = vshrl.u32 %v2686, 7
    %v2688 = vsub.s32 1, %v2687
    %v2689 = vrot.slane %v721, %v2688
    %v2690 = vlaneseq
    %v2691 = vshrl.u32 %v2690, 7
    %v2692 = vsub.s32 2, %v2691
    %v2693 = vrot.slane %v721, %v2692
    %v2694 = vlaneseq
    %v2695 = vshrl.u32 %v2694, 7
    %v2696 = vsub.s32 3, %v2695
    %v2697 = vrot.slane %v721, %v2696
    %v2698 = vlaneseq
    %v2699 = vshrl.u32 %v2698, 7
    %v2700 = vsub.s32 4, %v2699
    %v2701 = vrot.slane %v721, %v2700
    %v2702 = vlaneseq
    %v2703 = vshrl.u32 %v2702, 7
    %v2704 = vsub.s32 5, %v2703
    %v2705 = vrot.slane %v721, %v2704
    %v2706 = vlaneseq
    %v2707 = vshrl.u32 %v2706, 7
    %v2708 = vsub.s32 6, %v2707
    %v2709 = vrot.slane %v721, %v2708
    %v2710 = vlaneseq
    %v2711 = vshrl.u32 %v2710, 7
    %v2712 = vsub.s32 7, %v2711
    %v2713 = vrot.slane %v721, %v2712
    %v2714 = vlaneseq
    %v2715 = vshrl.u32 %v2714, 7
    %v2716 = vsub.s32 0, %v2715
    %v2717 = vrot.slane %v722, %v2716
    %v2718 = vlaneseq
    %v2719 = vshrl.u32 %v2718, 7
    %v2720 = vsub.s32 1, %v2719
    %v2721 = vrot.slane %v722, %v2720
    %v2722 = vlaneseq
    %v2723 = vshrl.u32 %v2722, 7
    %v2724 = vsub.s32 2, %v2723
    %v2725 = vrot.slane %v722, %v2724
    %v2726 = vlaneseq
    %v2727 = vshrl.u32 %v2726, 7
    %v2728 = vsub.s32 3, %v2727
    %v2729 = vrot.slane %v722, %v2728
    %v2730 = vlaneseq
    %v2731 = vshrl.u32 %v2730, 7
    %v2732 = vsub.s32 4, %v2731
    %v2733 = vrot.slane %v722, %v2732
    %v2734 = vlaneseq
    %v2735 = vshrl.u32 %v2734, 7
    %v2736 = vsub.s32 5, %v2735
    %v2737 = vrot.slane %v722, %v2736
    %v2738 = vlaneseq
    %v2739 = vshrl.u32 %v2738, 7
    %v2740 = vsub.s32 6, %v2739
    %v2741 = vrot.slane %v722, %v2740
    %v2742 = vlaneseq
    %v2743 = vshrl.u32 %v2742, 7
    %v2744 = vsub.s32 7, %v2743
    %v2745 = vrot.slane %v722, %v2744
    %v2746 = vlaneseq
    %v2747 = vshrl.u32 %v2746, 7
    %v2748 = vsub.s32 0, %v2747
    %v2749 = vrot.slane %v723, %v2748
    %v2750 = vlaneseq
    %v2751 = vshrl.u32 %v2750, 7
    %v2752 = vsub.s32 1, %v2751
    %v2753 = vrot.slane %v723, %v2752
    %v2754 = vlaneseq
    %v2755 = vshrl.u32 %v2754, 7
    %v2756 = vsub.s32 2, %v2755
    %v2757 = vrot.slane %v723, %v2756
    %v2758 = vlaneseq
    %v2759 = vshrl.u32 %v2758, 7
    %v2760 = vsub.s32 3, %v2759
    %v2761 = vrot.slane %v723, %v2760
    %v2762 = vlaneseq
    %v2763 = vshrl.u32 %v2762, 7
    %v2764 = vsub.s32 4, %v2763
    %v2765 = vrot.slane %v723, %v2764
    %v2766 = vlaneseq
    %v2767 = vshrl.u32 %v2766, 7
    %v2768 = vsub.s32 5, %v2767
    %v2769 = vrot.slane %v723, %v2768
    %v2770 = vlaneseq
    %v2771 = vshrl.u32 %v2770, 7
    %v2772 = vsub.s32 6, %v2771
    %v2773 = vrot.slane %v723, %v2772
    %v2774 = vlaneseq
    %v2775 = vshrl.u32 %v2774, 7
    %v2776 = vsub.s32 7, %v2775
    %v2777 = vrot.slane %v723, %v2776
    %v2778 = vlaneseq
    %v2779 = vshrl.u32 %v2778, 7
    %v2780 = vsub.s32 0, %v2779
    %v2781 = vrot.slane %v724, %v2780
    %v2782 = vlaneseq
    %v2783 = vshrl.u32 %v2782, 7
    %v2784 = vsub.s32 1, %v2783
    %v2785 = vrot.slane %v724, %v2784
    %v2786 = vlaneseq
    %v2787 = vshrl.u32 %v2786, 7
    %v2788 = vsub.s32 2, %v2787
    %v2789 = vrot.slane %v724, %v2788
    %v2790 = vlaneseq
    %v2791 = vshrl.u32 %v2790, 7
    %v2792 = vsub.s32 3, %v2791
    %v2793 = vrot.slane %v724, %v2792
    %v2794 = vlaneseq
    %v2795 = vshrl.u32 %v2794, 7
    %v2796 = vsub.s32 4, %v2795
    %v2797 = vrot.slane %v724, %v2796
    %v2798 = vlaneseq
    %v2799 = vshrl.u32 %v2798, 7
    %v2800 = vsub.s32 5, %v2799
    %v2801 = vrot.slane %v724, %v2800
    %v2802 = vlaneseq
    %v2803 = vshrl.u32 %v2802, 7
    %v2804 = vsub.s32 6, %v2803
    %v2805 = vrot.slane %v724, %v2804
    %v2806 = vlaneseq
    %v2807 = vshrl.u32 %v2806, 7
    %v2808 = vsub.s32 7, %v2807
    %v2809 = vrot.slane %v724, %v2808
    %v2810 = vlaneseq
    %v2811 = vshrl.u32 %v2810, 7
    %v2812 = vsub.s32 0, %v2811
    %v2813 = vrot.slane %v725, %v2812
    %v2814 = vlaneseq
    %v2815 = vshrl.u32 %v2814, 7
    %v2816 = vsub.s32 1, %v2815
    %v2817 = vrot.slane %v725, %v2816
    %v2818 = vlaneseq
    %v2819 = vshrl.u32 %v2818, 7
    %v2820 = vsub.s32 2, %v2819
    %v2821 = vrot.slane %v725, %v2820
    %v2822 = vlaneseq
    %v2823 = vshrl.u32 %v2822, 7
    %v2824 = vsub.s32 3, %v2823
    %v2825 = vrot.slane %v725, %v2824
    %v2826 = vlaneseq
    %v2827 = vshrl.u32 %v2826, 7
    %v2828 = vsub.s32 4, %v2827
    %v2829 = vrot.slane %v725, %v2828
    %v2830 = vlaneseq
    %v2831 = vshrl.u32 %v2830, 7
    %v2832 = vsub.s32 5, %v2831
    %v2833 = vrot.slane %v725, %v2832
    %v2834 = vlaneseq
    %v2835 = vshrl.u32 %v2834, 7
    %v2836 = vsub.s32 6, %v2835
    %v2837 = vrot.slane %v725, %v2836
    %v2838 = vlaneseq
    %v2839 = vshrl.u32 %v2838, 7
    %v2840 = vsub.s32 7, %v2839
    %v2841 = vrot.slane %v725, %v2840
    %v2842 = vlaneseq
    %v2843 = vshrl.u32 %v2842, 7
    %v2844 = vsub.s32 0, %v2843
    %v2845 = vrot.slane %v726, %v2844
    %v2846 = vlaneseq
    %v2847 = vshrl.u32 %v2846, 7
    %v2848 = vsub.s32 1, %v2847
    %v2849 = vrot.slane %v726, %v2848
    %v2850 = vlaneseq
    %v2851 = vshrl.u32 %v2850, 7
    %v2852 = vsub.s32 2, %v2851
    %v2853 = vrot.slane %v726, %v2852
    %v2854 = vlaneseq
    %v2855 = vshrl.u32 %v2854, 7
    %v2856 = vsub.s32 3, %v2855
    %v2857 = vrot.slane %v726, %v2856
    %v2858 = vlaneseq
    %v2859 = vshrl.u32 %v2858, 7
    %v2860 = vsub.s32 4, %v2859
    %v2861 = vrot.slane %v726, %v2860
    %v2862 = vlaneseq
    %v2863 = vshrl.u32 %v2862, 7
    %v2864 = vsub.s32 5, %v2863
    %v2865 = vrot.slane %v726, %v2864
    %v2866 = vlaneseq
    %v2867 = vshrl.u32 %v2866, 7
    %v2868 = vsub.s32 6, %v2867
    %v2869 = vrot.slane %v726, %v2868
    %v2870 = vlaneseq
    %v2871 = vshrl.u32 %v2870, 7
    %v2872 = vsub.s32 7, %v2871
    %v2873 = vrot.slane %v726, %v2872
    %v2874 = vlaneseq
    %v2875 = vshrl.u32 %v2874, 7
    %v2876 = vsub.s32 0, %v2875
    %v2877 = vrot.slane %v727, %v2876
    %v2878 = vlaneseq
    %v2879 = vshrl.u32 %v2878, 7
    %v2880 = vsub.s32 1, %v2879
    %v2881 = vrot.slane %v727, %v2880
    %v2882 = vlaneseq
    %v2883 = vshrl.u32 %v2882, 7
    %v2884 = vsub.s32 2, %v2883
    %v2885 = vrot.slane %v727, %v2884
    %v2886 = vlaneseq
    %v2887 = vshrl.u32 %v2886, 7
    %v2888 = vsub.s32 3, %v2887
    %v2889 = vrot.slane %v727, %v2888
    %v2890 = vlaneseq
    %v2891 = vshrl.u32 %v2890, 7
    %v2892 = vsub.s32 4, %v2891
    %v2893 = vrot.slane %v727, %v2892
    %v2894 = vlaneseq
    %v2895 = vshrl.u32 %v2894, 7
    %v2896 = vsub.s32 5, %v2895
    %v2897 = vrot.slane %v727, %v2896
    %v2898 = vlaneseq
    %v2899 = vshrl.u32 %v2898, 7
    %v2900 = vsub.s32 6, %v2899
    %v2901 = vrot.slane %v727, %v2900
    %v2902 = vlaneseq
    %v2903 = vshrl.u32 %v2902, 7
    %v2904 = vsub.s32 7, %v2903
    %v2905 = vrot.slane %v727, %v2904
    %v2906 = vlaneseq
    %v2907 = vshrl.u32 %v2906, 7
    %v2908 = vsub.s32 0, %v2907
    %v2909 = vrot.slane %v728, %v2908
    %v2910 = vlaneseq
    %v2911 = vshrl.u32 %v2910, 7
    %v2912 = vsub.s32 1, %v2911
    %v2913 = vrot.slane %v728, %v2912
    %v2914 = vlaneseq
    %v2915 = vshrl.u32 %v2914, 7
    %v2916 = vsub.s32 2, %v2915
    %v2917 = vrot.slane %v728, %v2916
    %v2918 = vlaneseq
    %v2919 = vshrl.u32 %v2918, 7
    %v2920 = vsub.s32 3, %v2919
    %v2921 = vrot.slane %v728, %v2920
    %v2922 = vlaneseq
    %v2923 = vshrl.u32 %v2922, 7
    %v2924 = vsub.s32 4, %v2923
    %v2925 = vrot.slane %v728, %v2924
    %v2926 = vlaneseq
    %v2927 = vshrl.u32 %v2926, 7
    %v2928 = vsub.s32 5, %v2927
    %v2929 = vrot.slane %v728, %v2928
    %v2930 = vlaneseq
    %v2931 = vshrl.u32 %v2930, 7
    %v2932 = vsub.s32 6, %v2931
    %v2933 = vrot.slane %v728, %v2932
    %v2934 = vlaneseq
    %v2935 = vshrl.u32 %v2934, 7
    %v2936 = vsub.s32 7, %v2935
    %v2937 = vrot.slane %v728, %v2936
    %v2938 = vlaneseq
    %v2939 = vshrl.u32 %v2938, 7
    %v2940 = vsub.s32 0, %v2939
    %v2941 = vrot.slane %v729, %v2940
    %v2942 = vlaneseq
    %v2943 = vshrl.u32 %v2942, 7
    %v2944 = vsub.s32 1, %v2943
    %v2945 = vrot.slane %v729, %v2944
    %v2946 = vlaneseq
    %v2947 = vshrl.u32 %v2946, 7
    %v2948 = vsub.s32 2, %v2947
    %v2949 = vrot.slane %v729, %v2948
    %v2950 = vlaneseq
    %v2951 = vshrl.u32 %v2950, 7
    %v2952 = vsub.s32 3, %v2951
    %v2953 = vrot.slane %v729, %v2952
    %v2954 = vlaneseq
    %v2955 = vshrl.u32 %v2954, 7
    %v2956 = vsub.s32 4, %v2955
    %v2957 = vrot.slane %v729, %v2956
    %v2958 = vlaneseq
    %v2959 = vshrl.u32 %v2958, 7
    %v2960 = vsub.s32 5, %v2959
    %v2961 = vrot.slane %v729, %v2960
    %v2962 = vlaneseq
    %v2963 = vshrl.u32 %v2962, 7
    %v2964 = vsub.s32 6, %v2963
    %v2965 = vrot.slane %v729, %v2964
    %v2966 = vlaneseq
    %v2967 = vshrl.u32 %v2966, 7
    %v2968 = vsub.s32 7, %v2967
    %v2969 = vrot.slane %v729, %v2968
    %v2970 = vlaneseq
    %v2971 = vshrl.u32 %v2970, 7
    %v2972 = vsub.s32 0, %v2971
    %v2973 = vrot.slane %v730, %v2972
    %v2974 = vlaneseq
    %v2975 = vshrl.u32 %v2974, 7
    %v2976 = vsub.s32 1, %v2975
    %v2977 = vrot.slane %v730, %v2976
    %v2978 = vlaneseq
    %v2979 = vshrl.u32 %v2978, 7
    %v2980 = vsub.s32 2, %v2979
    %v2981 = vrot.slane %v730, %v2980
    %v2982 = vlaneseq
    %v2983 = vshrl.u32 %v2982, 7
    %v2984 = vsub.s32 3, %v2983
    %v2985 = vrot.slane %v730, %v2984
    %v2986 = vlaneseq
    %v2987 = vshrl.u32 %v2986, 7
    %v2988 = vsub.s32 4, %v2987
    %v2989 = vrot.slane %v730, %v2988
    %v2990 = vlaneseq
    %v2991 = vshrl.u32 %v2990, 7
    %v2992 = vsub.s32 5, %v2991
    %v2993 = vrot.slane %v730, %v2992
    %v2994 = vlaneseq
    %v2995 = vshrl.u32 %v2994, 7
    %v2996 = vsub.s32 6, %v2995
    %v2997 = vrot.slane %v730, %v2996
    %v2998 = vlaneseq
    %v2999 = vshrl.u32 %v2998, 7
    %v3000 = vsub.s32 7, %v2999
    %v3001 = vrot.slane %v730, %v3000
    %v3002 = vlaneseq
    %v3003 = vshrl.u32 %v3002, 7
    %v3004 = vsub.s32 0, %v3003
    %v3005 = vrot.slane %v731, %v3004
    %v3006 = vlaneseq
    %v3007 = vshrl.u32 %v3006, 7
    %v3008 = vsub.s32 1, %v3007
    %v3009 = vrot.slane %v731, %v3008
    %v3010 = vlaneseq
    %v3011 = vshrl.u32 %v3010, 7
    %v3012 = vsub.s32 2, %v3011
    %v3013 = vrot.slane %v731, %v3012
    %v3014 = vlaneseq
    %v3015 = vshrl.u32 %v3014, 7
    %v3016 = vsub.s32 3, %v3015
    %v3017 = vrot.slane %v731, %v3016
    %v3018 = vlaneseq
    %v3019 = vshrl.u32 %v3018, 7
    %v3020 = vsub.s32 4, %v3019
    %v3021 = vrot.slane %v731, %v3020
    %v3022 = vlaneseq
    %v3023 = vshrl.u32 %v3022, 7
    %v3024 = vsub.s32 5, %v3023
    %v3025 = vrot.slane %v731, %v3024
    %v3026 = vlaneseq
    %v3027 = vshrl.u32 %v3026, 7
    %v3028 = vsub.s32 6, %v3027
    %v3029 = vrot.slane %v731, %v3028
    %v3030 = vlaneseq
    %v3031 = vshrl.u32 %v3030, 7
    %v3032 = vsub.s32 7, %v3031
    %v3033 = vrot.slane %v731, %v3032
    %v3034 = vlaneseq
    %v3035 = vshrl.u32 %v3034, 7
    %v3036 = vsub.s32 0, %v3035
    %v3037 = vrot.slane %v732, %v3036
    %v3038 = vlaneseq
    %v3039 = vshrl.u32 %v3038, 7
    %v3040 = vsub.s32 1, %v3039
    %v3041 = vrot.slane %v732, %v3040
    %v3042 = vlaneseq
    %v3043 = vshrl.u32 %v3042, 7
    %v3044 = vsub.s32 2, %v3043
    %v3045 = vrot.slane %v732, %v3044
    %v3046 = vlaneseq
    %v3047 = vshrl.u32 %v3046, 7
    %v3048 = vsub.s32 3, %v3047
    %v3049 = vrot.slane %v732, %v3048
    %v3050 = vlaneseq
    %v3051 = vshrl.u32 %v3050, 7
    %v3052 = vsub.s32 4, %v3051
    %v3053 = vrot.slane %v732, %v3052
    %v3054 = vlaneseq
    %v3055 = vshrl.u32 %v3054, 7
    %v3056 = vsub.s32 5, %v3055
    %v3057 = vrot.slane %v732, %v3056
    %v3058 = vlaneseq
    %v3059 = vshrl.u32 %v3058, 7
    %v3060 = vsub.s32 6, %v3059
    %v3061 = vrot.slane %v732, %v3060
    %v3062 = vlaneseq
    %v3063 = vshrl.u32 %v3062, 7
    %v3064 = vsub.s32 7, %v3063
    %v3065 = vrot.slane %v732, %v3064
    %v3066 = vlaneseq
    %v3067 = vshrl.u32 %v3066, 7
    %v3068 = vsub.s32 0, %v3067
    %v3069 = vrot.slane %v733, %v3068
    %v3070 = vlaneseq
    %v3071 = vshrl.u32 %v3070, 7
    %v3072 = vsub.s32 1, %v3071
    %v3073 = vrot.slane %v733, %v3072
    %v3074 = vlaneseq
    %v3075 = vshrl.u32 %v3074, 7
    %v3076 = vsub.s32 2, %v3075
    %v3077 = vrot.slane %v733, %v3076
    %v3078 = vlaneseq
    %v3079 = vshrl.u32 %v3078, 7
    %v3080 = vsub.s32 3, %v3079
    %v3081 = vrot.slane %v733, %v3080
    %v3082 = vlaneseq
    %v3083 = vshrl.u32 %v3082, 7
    %v3084 = vsub.s32 4, %v3083
    %v3085 = vrot.slane %v733, %v3084
    %v3086 = vlaneseq
    %v3087 = vshrl.u32 %v3086, 7
    %v3088 = vsub.s32 5, %v3087
    %v3089 = vrot.slane %v733, %v3088
    %v3090 = vlaneseq
    %v3091 = vshrl.u32 %v3090, 7
    %v3092 = vsub.s32 6, %v3091
    %v3093 = vrot.slane %v733, %v3092
    %v3094 = vlaneseq
    %v3095 = vshrl.u32 %v3094, 7
    %v3096 = vsub.s32 7, %v3095
    %v3097 = vrot.slane %v733, %v3096
    %v3098 = vlaneseq
    %v3099 = vshrl.u32 %v3098, 7
    %v3100 = vsub.s32 0, %v3099
    %v3101 = vrot.slane %v734, %v3100
    %v3102 = vlaneseq
    %v3103 = vshrl.u32 %v3102, 7
    %v3104 = vsub.s32 1, %v3103
    %v3105 = vrot.slane %v734, %v3104
    %v3106 = vlaneseq
    %v3107 = vshrl.u32 %v3106, 7
    %v3108 = vsub.s32 2, %v3107
    %v3109 = vrot.slane %v734, %v3108
    %v3110 = vlaneseq
    %v3111 = vshrl.u32 %v3110, 7
    %v3112 = vsub.s32 3, %v3111
    %v3113 = vrot.slane %v734, %v3112
    %v3114 = vlaneseq
    %v3115 = vshrl.u32 %v3114, 7
    %v3116 = vsub.s32 4, %v3115
    %v3117 = vrot.slane %v734, %v3116
    %v3118 = vlaneseq
    %v3119 = vshrl.u32 %v3118, 7
    %v3120 = vsub.s32 5, %v3119
    %v3121 = vrot.slane %v734, %v3120
    %v3122 = vlaneseq
    %v3123 = vshrl.u32 %v3122, 7
    %v3124 = vsub.s32 6, %v3123
    %v3125 = vrot.slane %v734, %v3124
    %v3126 = vlaneseq
    %v3127 = vshrl.u32 %v3126, 7
    %v3128 = vsub.s32 7, %v3127
    %v3129 = vrot.slane %v734, %v3128
    %v3130 = vlaneseq
    %v3131 = vshrl.u32 %v3130, 7
    %v3132 = vsub.s32 0, %v3131
    %v3133 = vrot.slane %v735, %v3132
    %v3134 = vlaneseq
    %v3135 = vshrl.u32 %v3134, 7
    %v3136 = vsub.s32 1, %v3135
    %v3137 = vrot.slane %v735, %v3136
    %v3138 = vlaneseq
    %v3139 = vshrl.u32 %v3138, 7
    %v3140 = vsub.s32 2, %v3139
    %v3141 = vrot.slane %v735, %v3140
    %v3142 = vlaneseq
    %v3143 = vshrl.u32 %v3142, 7
    %v3144 = vsub.s32 3, %v3143
    %v3145 = vrot.slane %v735, %v3144
    %v3146 = vlaneseq
    %v3147 = vshrl.u32 %v3146, 7
    %v3148 = vsub.s32 4, %v3147
    %v3149 = vrot.slane %v735, %v3148
    %v3150 = vlaneseq
    %v3151 = vshrl.u32 %v3150, 7
    %v3152 = vsub.s32 5, %v3151
    %v3153 = vrot.slane %v735, %v3152
    %v3154 = vlaneseq
    %v3155 = vshrl.u32 %v3154, 7
    %v3156 = vsub.s32 6, %v3155
    %v3157 = vrot.slane %v735, %v3156
    %v3158 = vlaneseq
    %v3159 = vshrl.u32 %v3158, 7
    %v3160 = vsub.s32 7, %v3159
    %v3161 = vrot.slane %v735, %v3160
    %v3162 = vlaneseq
    %v3163 = vshrl.u32 %v3162, 7
    %v3164 = vsub.s32 0, %v3163
    %v3165 = vrot.slane %v736, %v3164
    %v3166 = vlaneseq
    %v3167 = vshrl.u32 %v3166, 7
    %v3168 = vsub.s32 1, %v3167
    %v3169 = vrot.slane %v736, %v3168
    %v3170 = vlaneseq
    %v3171 = vshrl.u32 %v3170, 7
    %v3172 = vsub.s32 2, %v3171
    %v3173 = vrot.slane %v736, %v3172
    %v3174 = vlaneseq
    %v3175 = vshrl.u32 %v3174, 7
    %v3176 = vsub.s32 3, %v3175
    %v3177 = vrot.slane %v736, %v3176
    %v3178 = vlaneseq
    %v3179 = vshrl.u32 %v3178, 7
    %v3180 = vsub.s32 4, %v3179
    %v3181 = vrot.slane %v736, %v3180
    %v3182 = vlaneseq
    %v3183 = vshrl.u32 %v3182, 7
    %v3184 = vsub.s32 5, %v3183
    %v3185 = vrot.slane %v736, %v3184
    %v3186 = vlaneseq
    %v3187 = vshrl.u32 %v3186, 7
    %v3188 = vsub.s32 6, %v3187
    %v3189 = vrot.slane %v736, %v3188
    %v3190 = vlaneseq
    %v3191 = vshrl.u32 %v3190, 7
    %v3192 = vsub.s32 7, %v3191
    %v3193 = vrot.slane %v736, %v3192
    %v3194 = vlaneseq
    %v3195 = vshrl.u32 %v3194, 7
    %v3196 = vsub.s32 0, %v3195
    %v3197 = vrot.slane %v737, %v3196
    %v3198 = vlaneseq
    %v3199 = vshrl.u32 %v3198, 7
    %v3200 = vsub.s32 1, %v3199
    %v3201 = vrot.slane %v737, %v3200
    %v3202 = vlaneseq
    %v3203 = vshrl.u32 %v3202, 7
    %v3204 = vsub.s32 2, %v3203
    %v3205 = vrot.slane %v737, %v3204
    %v3206 = vlaneseq
    %v3207 = vshrl.u32 %v3206, 7
    %v3208 = vsub.s32 3, %v3207
    %v3209 = vrot.slane %v737, %v3208
    %v3210 = vlaneseq
    %v3211 = vshrl.u32 %v3210, 7
    %v3212 = vsub.s32 4, %v3211
    %v3213 = vrot.slane %v737, %v3212
    %v3214 = vlaneseq
    %v3215 = vshrl.u32 %v3214, 7
    %v3216 = vsub.s32 5, %v3215
    %v3217 = vrot.slane %v737, %v3216
    %v3218 = vlaneseq
    %v3219 = vshrl.u32 %v3218, 7
    %v3220 = vsub.s32 6, %v3219
    %v3221 = vrot.slane %v737, %v3220
    %v3222 = vlaneseq
    %v3223 = vshrl.u32 %v3222, 7
    %v3224 = vsub.s32 7, %v3223
    %v3225 = vrot.slane %v737, %v3224
    %v3226 = vlaneseq
    %v3227 = vshrl.u32 %v3226, 7
    %v3228 = vsub.s32 0, %v3227
    %v3229 = vrot.slane %v738, %v3228
    %v3230 = vlaneseq
    %v3231 = vshrl.u32 %v3230, 7
    %v3232 = vsub.s32 1, %v3231
    %v3233 = vrot.slane %v738, %v3232
    %v3234 = vlaneseq
    %v3235 = vshrl.u32 %v3234, 7
    %v3236 = vsub.s32 2, %v3235
    %v3237 = vrot.slane %v738, %v3236
    %v3238 = vlaneseq
    %v3239 = vshrl.u32 %v3238, 7
    %v3240 = vsub.s32 3, %v3239
    %v3241 = vrot.slane %v738, %v3240
    %v3242 = vlaneseq
    %v3243 = vshrl.u32 %v3242, 7
    %v3244 = vsub.s32 4, %v3243
    %v3245 = vrot.slane %v738, %v3244
    %v3246 = vlaneseq
    %v3247 = vshrl.u32 %v3246, 7
    %v3248 = vsub.s32 5, %v3247
    %v3249 = vrot.slane %v738, %v3248
    %v3250 = vlaneseq
    %v3251 = vshrl.u32 %v3250, 7
    %v3252 = vsub.s32 6, %v3251
    %v3253 = vrot.slane %v738, %v3252
    %v3254 = vlaneseq
    %v3255 = vshrl.u32 %v3254, 7
    %v3256 = vsub.s32 7, %v3255
    %v3257 = vrot.slane %v738, %v3256
    %v3258 = vlaneseq
    %v3259 = vshrl.u32 %v3258, 7
    %v3260 = vsub.s32 0, %v3259
    %v3261 = vrot.slane %v739, %v3260
    %v3262 = vlaneseq
    %v3263 = vshrl.u32 %v3262, 7
    %v3264 = vsub.s32 1, %v3263
    %v3265 = vrot.slane %v739, %v3264
    %v3266 = vlaneseq
    %v3267 = vshrl.u32 %v3266, 7
    %v3268 = vsub.s32 2, %v3267
    %v3269 = vrot.slane %v739, %v3268
    %v3270 = vlaneseq
    %v3271 = vshrl.u32 %v3270, 7
    %v3272 = vsub.s32 3, %v3271
    %v3273 = vrot.slane %v739, %v3272
    %v3274 = vlaneseq
    %v3275 = vshrl.u32 %v3274, 7
    %v3276 = vsub.s32 4, %v3275
    %v3277 = vrot.slane %v739, %v3276
    %v3278 = vlaneseq
    %v3279 = vshrl.u32 %v3278, 7
    %v3280 = vsub.s32 5, %v3279
    %v3281 = vrot.slane %v739, %v3280
    %v3282 = vlaneseq
    %v3283 = vshrl.u32 %v3282, 7
    %v3284 = vsub.s32 6, %v3283
    %v3285 = vrot.slane %v739, %v3284
    %v3286 = vlaneseq
    %v3287 = vshrl.u32 %v3286, 7
    %v3288 = vsub.s32 7, %v3287
    %v3289 = vrot.slane %v739, %v3288
    %v3290 = vlaneseq
    %v3291 = vshrl.u32 %v3290, 7
    %v3292 = vsub.s32 0, %v3291
    %v3293 = vrot.slane %v740, %v3292
    %v3294 = vlaneseq
    %v3295 = vshrl.u32 %v3294, 7
    %v3296 = vsub.s32 1, %v3295
    %v3297 = vrot.slane %v740, %v3296
    %v3298 = vlaneseq
    %v3299 = vshrl.u32 %v3298, 7
    %v3300 = vsub.s32 2, %v3299
    %v3301 = vrot.slane %v740, %v3300
    %v3302 = vlaneseq
    %v3303 = vshrl.u32 %v3302, 7
    %v3304 = vsub.s32 3, %v3303
    %v3305 = vrot.slane %v740, %v3304
    %v3306 = vlaneseq
    %v3307 = vshrl.u32 %v3306, 7
    %v3308 = vsub.s32 4, %v3307
    %v3309 = vrot.slane %v740, %v3308
    %v3310 = vlaneseq
    %v3311 = vshrl.u32 %v3310, 7
    %v3312 = vsub.s32 5, %v3311
    %v3313 = vrot.slane %v740, %v3312
    %v3314 = vlaneseq
    %v3315 = vshrl.u32 %v3314, 7
    %v3316 = vsub.s32 6, %v3315
    %v3317 = vrot.slane %v740, %v3316
    %v3318 = vlaneseq
    %v3319 = vshrl.u32 %v3318, 7
    %v3320 = vsub.s32 7, %v3319
    %v3321 = vrot.slane %v740, %v3320
    %v3322 = vlaneseq
    %v3323 = vshrl.u32 %v3322, 7
    %v3324 = vsub.s32 0, %v3323
    %v3325 = vrot.slane %v741, %v3324
    %v3326 = vlaneseq
    %v3327 = vshrl.u32 %v3326, 7
    %v3328 = vsub.s32 1, %v3327
    %v3329 = vrot.slane %v741, %v3328
    %v3330 = vlaneseq
    %v3331 = vshrl.u32 %v3330, 7
    %v3332 = vsub.s32 2, %v3331
    %v3333 = vrot.slane %v741, %v3332
    %v3334 = vlaneseq
    %v3335 = vshrl.u32 %v3334, 7
    %v3336 = vsub.s32 3, %v3335
    %v3337 = vrot.slane %v741, %v3336
    %v3338 = vlaneseq
    %v3339 = vshrl.u32 %v3338, 7
    %v3340 = vsub.s32 4, %v3339
    %v3341 = vrot.slane %v741, %v3340
    %v3342 = vlaneseq
    %v3343 = vshrl.u32 %v3342, 7
    %v3344 = vsub.s32 5, %v3343
    %v3345 = vrot.slane %v741, %v3344
    %v3346 = vlaneseq
    %v3347 = vshrl.u32 %v3346, 7
    %v3348 = vsub.s32 6, %v3347
    %v3349 = vrot.slane %v741, %v3348
    %v3350 = vlaneseq
    %v3351 = vshrl.u32 %v3350, 7
    %v3352 = vsub.s32 7, %v3351
    %v3353 = vrot.slane %v741, %v3352
    %v3354 = vlaneseq
    %v3355 = vshrl.u32 %v3354, 7
    %v3356 = vsub.s32 0, %v3355
    %v3357 = vrot.slane %v742, %v3356
    %v3358 = vlaneseq
    %v3359 = vshrl.u32 %v3358, 7
    %v3360 = vsub.s32 1, %v3359
    %v3361 = vrot.slane %v742, %v3360
    %v3362 = vlaneseq
    %v3363 = vshrl.u32 %v3362, 7
    %v3364 = vsub.s32 2, %v3363
    %v3365 = vrot.slane %v742, %v3364
    %v3366 = vlaneseq
    %v3367 = vshrl.u32 %v3366, 7
    %v3368 = vsub.s32 3, %v3367
    %v3369 = vrot.slane %v742, %v3368
    %v3370 = vlaneseq
    %v3371 = vshrl.u32 %v3370, 7
    %v3372 = vsub.s32 4, %v3371
    %v3373 = vrot.slane %v742, %v3372
    %v3374 = vlaneseq
    %v3375 = vshrl.u32 %v3374, 7
    %v3376 = vsub.s32 5, %v3375
    %v3377 = vrot.slane %v742, %v3376
    %v3378 = vlaneseq
    %v3379 = vshrl.u32 %v3378, 7
    %v3380 = vsub.s32 6, %v3379
    %v3381 = vrot.slane %v742, %v3380
    %v3382 = vlaneseq
    %v3383 = vshrl.u32 %v3382, 7
    %v3384 = vsub.s32 7, %v3383
    %v3385 = vrot.slane %v742, %v3384
    %v3386 = vlaneseq
    %v3387 = vshrl.u32 %v3386, 7
    %v3388 = vsub.s32 0, %v3387
    %v3389 = vrot.slane %v743, %v3388
    %v3390 = vlaneseq
    %v3391 = vshrl.u32 %v3390, 7
    %v3392 = vsub.s32 1, %v3391
    %v3393 = vrot.slane %v743, %v3392
    %v3394 = vlaneseq
    %v3395 = vshrl.u32 %v3394, 7
    %v3396 = vsub.s32 2, %v3395
    %v3397 = vrot.slane %v743, %v3396
    %v3398 = vlaneseq
    %v3399 = vshrl.u32 %v3398, 7
    %v3400 = vsub.s32 3, %v3399
    %v3401 = vrot.slane %v743, %v3400
    %v3402 = vlaneseq
    %v3403 = vshrl.u32 %v3402, 7
    %v3404 = vsub.s32 4, %v3403
    %v3405 = vrot.slane %v743, %v3404
    %v3406 = vlaneseq
    %v3407 = vshrl.u32 %v3406, 7
    %v3408 = vsub.s32 5, %v3407
    %v3409 = vrot.slane %v743, %v3408
    %v3410 = vlaneseq
    %v3411 = vshrl.u32 %v3410, 7
    %v3412 = vsub.s32 6, %v3411
    %v3413 = vrot.slane %v743, %v3412
    %v3414 = vlaneseq
    %v3415 = vshrl.u32 %v3414, 7
    %v3416 = vsub.s32 7, %v3415
    %v3417 = vrot.slane %v743, %v3416
    %v3418 = vlaneseq
    %v3419 = vshrl.u32 %v3418, 7
    %v3420 = vsub.s32 0, %v3419
    %v3421 = vrot.slane %v744, %v3420
    %v3422 = vlaneseq
    %v3423 = vshrl.u32 %v3422, 7
    %v3424 = vsub.s32 1, %v3423
    %v3425 = vrot.slane %v744, %v3424
    %v3426 = vlaneseq
    %v3427 = vshrl.u32 %v3426, 7
    %v3428 = vsub.s32 2, %v3427
    %v3429 = vrot.slane %v744, %v3428
    %v3430 = vlaneseq
    %v3431 = vshrl.u32 %v3430, 7
    %v3432 = vsub.s32 3, %v3431
    %v3433 = vrot.slane %v744, %v3432
    %v3434 = vlaneseq
    %v3435 = vshrl.u32 %v3434, 7
    %v3436 = vsub.s32 4, %v3435
    %v3437 = vrot.slane %v744, %v3436
    %v3438 = vlaneseq
    %v3439 = vshrl.u32 %v3438, 7
    %v3440 = vsub.s32 5, %v3439
    %v3441 = vrot.slane %v744, %v3440
    %v3442 = vlaneseq
    %v3443 = vshrl.u32 %v3442, 7
    %v3444 = vsub.s32 6, %v3443
    %v3445 = vrot.slane %v744, %v3444
    %v3446 = vlaneseq
    %v3447 = vshrl.u32 %v3446, 7
    %v3448 = vsub.s32 7, %v3447
    %v3449 = vrot.slane %v744, %v3448
    %v3450 = vlaneseq
    %v3451 = vshrl.u32 %v3450, 7
    %v3452 = vsub.s32 0, %v3451
    %v3453 = vrot.slane %v745, %v3452
    %v3454 = vlaneseq
    %v3455 = vshrl.u32 %v3454, 7
    %v3456 = vsub.s32 1, %v3455
    %v3457 = vrot.slane %v745, %v3456
    %v3458 = vlaneseq
    %v3459 = vshrl.u32 %v3458, 7
    %v3460 = vsub.s32 2, %v3459
    %v3461 = vrot.slane %v745, %v3460
    %v3462 = vlaneseq
    %v3463 = vshrl.u32 %v3462, 7
    %v3464 = vsub.s32 3, %v3463
    %v3465 = vrot.slane %v745, %v3464
    %v3466 = vlaneseq
    %v3467 = vshrl.u32 %v3466, 7
    %v3468 = vsub.s32 4, %v3467
    %v3469 = vrot.slane %v745, %v3468
    %v3470 = vlaneseq
    %v3471 = vshrl.u32 %v3470, 7
    %v3472 = vsub.s32 5, %v3471
    %v3473 = vrot.slane %v745, %v3472
    %v3474 = vlaneseq
    %v3475 = vshrl.u32 %v3474, 7
    %v3476 = vsub.s32 6, %v3475
    %v3477 = vrot.slane %v745, %v3476
    %v3478 = vlaneseq
    %v3479 = vshrl.u32 %v3478, 7
    %v3480 = vsub.s32 7, %v3479
    %v3481 = vrot.slane %v745, %v3480
    %v3482 = vlaneseq
    %v3483 = vshrl.u32 %v3482, 7
    %v3484 = vsub.s32 0, %v3483
    %v3485 = vrot.slane %v746, %v3484
    %v3486 = vlaneseq
    %v3487 = vshrl.u32 %v3486, 7
    %v3488 = vsub.s32 1, %v3487
    %v3489 = vrot.slane %v746, %v3488
    %v3490 = vlaneseq
    %v3491 = vshrl.u32 %v3490, 7
    %v3492 = vsub.s32 2, %v3491
    %v3493 = vrot.slane %v746, %v3492
    %v3494 = vlaneseq
    %v3495 = vshrl.u32 %v3494, 7
    %v3496 = vsub.s32 3, %v3495
    %v3497 = vrot.slane %v746, %v3496
    %v3498 = vlaneseq
    %v3499 = vshrl.u32 %v3498, 7
    %v3500 = vsub.s32 4, %v3499
    %v3501 = vrot.slane %v746, %v3500
    %v3502 = vlaneseq
    %v3503 = vshrl.u32 %v3502, 7
    %v3504 = vsub.s32 5, %v3503
    %v3505 = vrot.slane %v746, %v3504
    %v3506 = vlaneseq
    %v3507 = vshrl.u32 %v3506, 7
    %v3508 = vsub.s32 6, %v3507
    %v3509 = vrot.slane %v746, %v3508
    %v3510 = vlaneseq
    %v3511 = vshrl.u32 %v3510, 7
    %v3512 = vsub.s32 7, %v3511
    %v3513 = vrot.slane %v746, %v3512
    %v3514 = vlaneseq
    %v3515 = vshrl.u32 %v3514, 7
    %v3516 = vsub.s32 0, %v3515
    %v3517 = vrot.slane %v747, %v3516
    %v3518 = vlaneseq
    %v3519 = vshrl.u32 %v3518, 7
    %v3520 = vsub.s32 1, %v3519
    %v3521 = vrot.slane %v747, %v3520
    %v3522 = vlaneseq
    %v3523 = vshrl.u32 %v3522, 7
    %v3524 = vsub.s32 2, %v3523
    %v3525 = vrot.slane %v747, %v3524
    %v3526 = vlaneseq
    %v3527 = vshrl.u32 %v3526, 7
    %v3528 = vsub.s32 3, %v3527
    %v3529 = vrot.slane %v747, %v3528
    %v3530 = vlaneseq
    %v3531 = vshrl.u32 %v3530, 7
    %v3532 = vsub.s32 4, %v3531
    %v3533 = vrot.slane %v747, %v3532
    %v3534 = vlaneseq
    %v3535 = vshrl.u32 %v3534, 7
    %v3536 = vsub.s32 5, %v3535
    %v3537 = vrot.slane %v747, %v3536
    %v3538 = vlaneseq
    %v3539 = vshrl.u32 %v3538, 7
    %v3540 = vsub.s32 6, %v3539
    %v3541 = vrot.slane %v747, %v3540
    %v3542 = vlaneseq
    %v3543 = vshrl.u32 %v3542, 7
    %v3544 = vsub.s32 7, %v3543
    %v3545 = vrot.slane %v747, %v3544
    %v3546 = vlaneseq
    %v3547 = vshrl.u32 %v3546, 7
    %v3548 = vsub.s32 0, %v3547
    %v3549 = vrot.slane %v748, %v3548
    %v3550 = vlaneseq
    %v3551 = vshrl.u32 %v3550, 7
    %v3552 = vsub.s32 1, %v3551
    %v3553 = vrot.slane %v748, %v3552
    %v3554 = vlaneseq
    %v3555 = vshrl.u32 %v3554, 7
    %v3556 = vsub.s32 2, %v3555
    %v3557 = vrot.slane %v748, %v3556
    %v3558 = vlaneseq
    %v3559 = vshrl.u32 %v3558, 7
    %v3560 = vsub.s32 3, %v3559
    %v3561 = vrot.slane %v748, %v3560
    %v3562 = vlaneseq
    %v3563 = vshrl.u32 %v3562, 7
    %v3564 = vsub.s32 4, %v3563
    %v3565 = vrot.slane %v748, %v3564
    %v3566 = vlaneseq
    %v3567 = vshrl.u32 %v3566, 7
    %v3568 = vsub.s32 5, %v3567
    %v3569 = vrot.slane %v748, %v3568
    %v3570 = vlaneseq
    %v3571 = vshrl.u32 %v3570, 7
    %v3572 = vsub.s32 6, %v3571
    %v3573 = vrot.slane %v748, %v3572
    %v3574 = vlaneseq
    %v3575 = vshrl.u32 %v3574, 7
    %v3576 = vsub.s32 7, %v3575
    %v3577 = vrot.slane %v748, %v3576
    %v3578 = vlaneseq
    %v3579 = vshrl.u32 %v3578, 7
    %v3580 = vsub.s32 0, %v3579
    %v3581 = vrot.slane %v749, %v3580
    %v3582 = vlaneseq
    %v3583 = vshrl.u32 %v3582, 7
    %v3584 = vsub.s32 1, %v3583
    %v3585 = vrot.slane %v749, %v3584
    %v3586 = vlaneseq
    %v3587 = vshrl.u32 %v3586, 7
    %v3588 = vsub.s32 2, %v3587
    %v3589 = vrot.slane %v749, %v3588
    %v3590 = vlaneseq
    %v3591 = vshrl.u32 %v3590, 7
    %v3592 = vsub.s32 3, %v3591
    %v3593 = vrot.slane %v749, %v3592
    %v3594 = vlaneseq
    %v3595 = vshrl.u32 %v3594, 7
    %v3596 = vsub.s32 4, %v3595
    %v3597 = vrot.slane %v749, %v3596
    %v3598 = vlaneseq
    %v3599 = vshrl.u32 %v3598, 7
    %v3600 = vsub.s32 5, %v3599
    %v3601 = vrot.slane %v749, %v3600
    %v3602 = vlaneseq
    %v3603 = vshrl.u32 %v3602, 7
    %v3604 = vsub.s32 6, %v3603
    %v3605 = vrot.slane %v749, %v3604
    %v3606 = vlaneseq
    %v3607 = vshrl.u32 %v3606, 7
    %v3608 = vsub.s32 7, %v3607
    %v3609 = vrot.slane %v749, %v3608
    %v3610 = vlaneseq
    %v3611 = vshrl.u32 %v3610, 7
    %v3612 = vsub.s32 0, %v3611
    %v3613 = vrot.slane %v750, %v3612
    %v3614 = vlaneseq
    %v3615 = vshrl.u32 %v3614, 7
    %v3616 = vsub.s32 1, %v3615
    %v3617 = vrot.slane %v750, %v3616
    %v3618 = vlaneseq
    %v3619 = vshrl.u32 %v3618, 7
    %v3620 = vsub.s32 2, %v3619
    %v3621 = vrot.slane %v750, %v3620
    %v3622 = vlaneseq
    %v3623 = vshrl.u32 %v3622, 7
    %v3624 = vsub.s32 3, %v3623
    %v3625 = vrot.slane %v750, %v3624
    %v3626 = vlaneseq
    %v3627 = vshrl.u32 %v3626, 7
    %v3628 = vsub.s32 4, %v3627
    %v3629 = vrot.slane %v750, %v3628
    %v3630 = vlaneseq
    %v3631 = vshrl.u32 %v3630, 7
    %v3632 = vsub.s32 5, %v3631
    %v3633 = vrot.slane %v750, %v3632
    %v3634 = vlaneseq
    %v3635 = vshrl.u32 %v3634, 7
    %v3636 = vsub.s32 6, %v3635
    %v3637 = vrot.slane %v750, %v3636
    %v3638 = vlaneseq
    %v3639 = vshrl.u32 %v3638, 7
    %v3640 = vsub.s32 7, %v3639
    %v3641 = vrot.slane %v750, %v3640
    %v3642 = vlaneseq
    %v3643 = vshrl.u32 %v3642, 7
    %v3644 = vsub.s32 0, %v3643
    %v3645 = vrot.slane %v751, %v3644
    %v3646 = vlaneseq
    %v3647 = vshrl.u32 %v3646, 7
    %v3648 = vsub.s32 1, %v3647
    %v3649 = vrot.slane %v751, %v3648
    %v3650 = vlaneseq
    %v3651 = vshrl.u32 %v3650, 7
    %v3652 = vsub.s32 2, %v3651
    %v3653 = vrot.slane %v751, %v3652
    %v3654 = vlaneseq
    %v3655 = vshrl.u32 %v3654, 7
    %v3656 = vsub.s32 3, %v3655
    %v3657 = vrot.slane %v751, %v3656
    %v3658 = vlaneseq
    %v3659 = vshrl.u32 %v3658, 7
    %v3660 = vsub.s32 4, %v3659
    %v3661 = vrot.slane %v751, %v3660
    %v3662 = vlaneseq
    %v3663 = vshrl.u32 %v3662, 7
    %v3664 = vsub.s32 5, %v3663
    %v3665 = vrot.slane %v751, %v3664
    %v3666 = vlaneseq
    %v3667 = vshrl.u32 %v3666, 7
    %v3668 = vsub.s32 6, %v3667
    %v3669 = vrot.slane %v751, %v3668
    %v3670 = vlaneseq
    %v3671 = vshrl.u32 %v3670, 7
    %v3672 = vsub.s32 7, %v3671
    %v3673 = vrot.slane %v751, %v3672
    %v3674 = vlaneseq
    %v3675 = vshrl.u32 %v3674, 7
    %v3676 = vsub.s32 0, %v3675
    %v3677 = vrot.slane %v752, %v3676
    %v3678 = vlaneseq
    %v3679 = vshrl.u32 %v3678, 7
    %v3680 = vsub.s32 1, %v3679
    %v3681 = vrot.slane %v752, %v3680
    %v3682 = vlaneseq
    %v3683 = vshrl.u32 %v3682, 7
    %v3684 = vsub.s32 2, %v3683
    %v3685 = vrot.slane %v752, %v3684
    %v3686 = vlaneseq
    %v3687 = vshrl.u32 %v3686, 7
    %v3688 = vsub.s32 3, %v3687
    %v3689 = vrot.slane %v752, %v3688
    %v3690 = vlaneseq
    %v3691 = vshrl.u32 %v3690, 7
    %v3692 = vsub.s32 4, %v3691
    %v3693 = vrot.slane %v752, %v3692
    %v3694 = vlaneseq
    %v3695 = vshrl.u32 %v3694, 7
    %v3696 = vsub.s32 5, %v3695
    %v3697 = vrot.slane %v752, %v3696
    %v3698 = vlaneseq
    %v3699 = vshrl.u32 %v3698, 7
    %v3700 = vsub.s32 6, %v3699
    %v3701 = vrot.slane %v752, %v3700
    %v3702 = vlaneseq
    %v3703 = vshrl.u32 %v3702, 7
    %v3704 = vsub.s32 7, %v3703
    %v3705 = vrot.slane %v752, %v3704
    %v3706 = vlaneseq
    %v3707 = vshrl.u32 %v3706, 7
    %v3708 = vsub.s32 0, %v3707
    %v3709 = vrot.slane %v753, %v3708
    %v3710 = vlaneseq
    %v3711 = vshrl.u32 %v3710, 7
    %v3712 = vsub.s32 1, %v3711
    %v3713 = vrot.slane %v753, %v3712
    %v3714 = vlaneseq
    %v3715 = vshrl.u32 %v3714, 7
    %v3716 = vsub.s32 2, %v3715
    %v3717 = vrot.slane %v753, %v3716
    %v3718 = vlaneseq
    %v3719 = vshrl.u32 %v3718, 7
    %v3720 = vsub.s32 3, %v3719
    %v3721 = vrot.slane %v753, %v3720
    %v3722 = vlaneseq
    %v3723 = vshrl.u32 %v3722, 7
    %v3724 = vsub.s32 4, %v3723
    %v3725 = vrot.slane %v753, %v3724
    %v3726 = vlaneseq
    %v3727 = vshrl.u32 %v3726, 7
    %v3728 = vsub.s32 5, %v3727
    %v3729 = vrot.slane %v753, %v3728
    %v3730 = vlaneseq
    %v3731 = vshrl.u32 %v3730, 7
    %v3732 = vsub.s32 6, %v3731
    %v3733 = vrot.slane %v753, %v3732
    %v3734 = vlaneseq
    %v3735 = vshrl.u32 %v3734, 7
    %v3736 = vsub.s32 7, %v3735
    %v3737 = vrot.slane %v753, %v3736
    %v3738 = vlaneseq
    %v3739 = vshrl.u32 %v3738, 7
    %v3740 = vsub.s32 0, %v3739
    %v3741 = vrot.slane %v754, %v3740
    %v3742 = vlaneseq
    %v3743 = vshrl.u32 %v3742, 7
    %v3744 = vsub.s32 1, %v3743
    %v3745 = vrot.slane %v754, %v3744
    %v3746 = vlaneseq
    %v3747 = vshrl.u32 %v3746, 7
    %v3748 = vsub.s32 2, %v3747
    %v3749 = vrot.slane %v754, %v3748
    %v3750 = vlaneseq
    %v3751 = vshrl.u32 %v3750, 7
    %v3752 = vsub.s32 3, %v3751
    %v3753 = vrot.slane %v754, %v3752
    %v3754 = vlaneseq
    %v3755 = vshrl.u32 %v3754, 7
    %v3756 = vsub.s32 4, %v3755
    %v3757 = vrot.slane %v754, %v3756
    %v3758 = vlaneseq
    %v3759 = vshrl.u32 %v3758, 7
    %v3760 = vsub.s32 5, %v3759
    %v3761 = vrot.slane %v754, %v3760
    %v3762 = vlaneseq
    %v3763 = vshrl.u32 %v3762, 7
    %v3764 = vsub.s32 6, %v3763
    %v3765 = vrot.slane %v754, %v3764
    %v3766 = vlaneseq
    %v3767 = vshrl.u32 %v3766, 7
    %v3768 = vsub.s32 7, %v3767
    %v3769 = vrot.slane %v754, %v3768
    %v3770 = vlaneseq
    %v3771 = vshrl.u32 %v3770, 7
    %v3772 = vsub.s32 0, %v3771
    %v3773 = vrot.slane %v755, %v3772
    %v3774 = vlaneseq
    %v3775 = vshrl.u32 %v3774, 7
    %v3776 = vsub.s32 1, %v3775
    %v3777 = vrot.slane %v755, %v3776
    %v3778 = vlaneseq
    %v3779 = vshrl.u32 %v3778, 7
    %v3780 = vsub.s32 2, %v3779
    %v3781 = vrot.slane %v755, %v3780
    %v3782 = vlaneseq
    %v3783 = vshrl.u32 %v3782, 7
    %v3784 = vsub.s32 3, %v3783
    %v3785 = vrot.slane %v755, %v3784
    %v3786 = vlaneseq
    %v3787 = vshrl.u32 %v3786, 7
    %v3788 = vsub.s32 4, %v3787
    %v3789 = vrot.slane %v755, %v3788
    %v3790 = vlaneseq
    %v3791 = vshrl.u32 %v3790, 7
    %v3792 = vsub.s32 5, %v3791
    %v3793 = vrot.slane %v755, %v3792
    %v3794 = vlaneseq
    %v3795 = vshrl.u32 %v3794, 7
    %v3796 = vsub.s32 6, %v3795
    %v3797 = vrot.slane %v755, %v3796
    %v3798 = vlaneseq
    %v3799 = vshrl.u32 %v3798, 7
    %v3800 = vsub.s32 7, %v3799
    %v3801 = vrot.slane %v755, %v3800
    %v3802 = vlaneseq
    %v3803 = vshrl.u32 %v3802, 7
    %v3804 = vsub.s32 0, %v3803
    %v3805 = vrot.slane %v756, %v3804
    %v3806 = vlaneseq
    %v3807 = vshrl.u32 %v3806, 7
    %v3808 = vsub.s32 1, %v3807
    %v3809 = vrot.slane %v756, %v3808
    %v3810 = vlaneseq
    %v3811 = vshrl.u32 %v3810, 7
    %v3812 = vsub.s32 2, %v3811
    %v3813 = vrot.slane %v756, %v3812
    %v3814 = vlaneseq
    %v3815 = vshrl.u32 %v3814, 7
    %v3816 = vsub.s32 3, %v3815
    %v3817 = vrot.slane %v756, %v3816
    %v3818 = vlaneseq
    %v3819 = vshrl.u32 %v3818, 7
    %v3820 = vsub.s32 4, %v3819
    %v3821 = vrot.slane %v756, %v3820
    %v3822 = vlaneseq
    %v3823 = vshrl.u32 %v3822, 7
    %v3824 = vsub.s32 5, %v3823
    %v3825 = vrot.slane %v756, %v3824
    %v3826 = vlaneseq
    %v3827 = vshrl.u32 %v3826, 7
    %v3828 = vsub.s32 6, %v3827
    %v3829 = vrot.slane %v756, %v3828
    %v3830 = vlaneseq
    %v3831 = vshrl.u32 %v3830, 7
    %v3832 = vsub.s32 7, %v3831
    %v3833 = vrot.slane %v756, %v3832
    %v3834 = vlaneseq
    %v3835 = vshrl.u32 %v3834, 7
    %v3836 = vsub.s32 0, %v3835
    %v3837 = vrot.slane %v757, %v3836
    %v3838 = vlaneseq
    %v3839 = vshrl.u32 %v3838, 7
    %v3840 = vsub.s32 1, %v3839
    %v3841 = vrot.slane %v757, %v3840
    %v3842 = vlaneseq
    %v3843 = vshrl.u32 %v3842, 7
    %v3844 = vsub.s32 2, %v3843
    %v3845 = vrot.slane %v757, %v3844
    %v3846 = vlaneseq
    %v3847 = vshrl.u32 %v3846, 7
    %v3848 = vsub.s32 3, %v3847
    %v3849 = vrot.slane %v757, %v3848
    %v3850 = vlaneseq
    %v3851 = vshrl.u32 %v3850, 7
    %v3852 = vsub.s32 4, %v3851
    %v3853 = vrot.slane %v757, %v3852
    %v3854 = vlaneseq
    %v3855 = vshrl.u32 %v3854, 7
    %v3856 = vsub.s32 5, %v3855
    %v3857 = vrot.slane %v757, %v3856
    %v3858 = vlaneseq
    %v3859 = vshrl.u32 %v3858, 7
    %v3860 = vsub.s32 6, %v3859
    %v3861 = vrot.slane %v757, %v3860
    %v3862 = vlaneseq
    %v3863 = vshrl.u32 %v3862, 7
    %v3864 = vsub.s32 7, %v3863
    %v3865 = vrot.slane %v757, %v3864
    %v3866 = vlaneseq
    %v3867 = vshrl.u32 %v3866, 7
    %v3868 = vsub.s32 0, %v3867
    %v3869 = vrot.slane %v758, %v3868
    %v3870 = vlaneseq
    %v3871 = vshrl.u32 %v3870, 7
    %v3872 = vsub.s32 1, %v3871
    %v3873 = vrot.slane %v758, %v3872
    %v3874 = vlaneseq
    %v3875 = vshrl.u32 %v3874, 7
    %v3876 = vsub.s32 2, %v3875
    %v3877 = vrot.slane %v758, %v3876
    %v3878 = vlaneseq
    %v3879 = vshrl.u32 %v3878, 7
    %v3880 = vsub.s32 3, %v3879
    %v3881 = vrot.slane %v758, %v3880
    %v3882 = vlaneseq
    %v3883 = vshrl.u32 %v3882, 7
    %v3884 = vsub.s32 4, %v3883
    %v3885 = vrot.slane %v758, %v3884
    %v3886 = vlaneseq
    %v3887 = vshrl.u32 %v3886, 7
    %v3888 = vsub.s32 5, %v3887
    %v3889 = vrot.slane %v758, %v3888
    %v3890 = vlaneseq
    %v3891 = vshrl.u32 %v3890, 7
    %v3892 = vsub.s32 6, %v3891
    %v3893 = vrot.slane %v758, %v3892
    %v3894 = vlaneseq
    %v3895 = vshrl.u32 %v3894, 7
    %v3896 = vsub.s32 7, %v3895
    %v3897 = vrot.slane %v758, %v3896
    %v3898 = vlaneseq
    %v3899 = vshrl.u32 %v3898, 7
    %v3900 = vsub.s32 0, %v3899
    %v3901 = vrot.slane %v759, %v3900
    %v3902 = vlaneseq
    %v3903 = vshrl.u32 %v3902, 7
    %v3904 = vsub.s32 1, %v3903
    %v3905 = vrot.slane %v759, %v3904
    %v3906 = vlaneseq
    %v3907 = vshrl.u32 %v3906, 7
    %v3908 = vsub.s32 2, %v3907
    %v3909 = vrot.slane %v759, %v3908
    %v3910 = vlaneseq
    %v3911 = vshrl.u32 %v3910, 7
    %v3912 = vsub.s32 3, %v3911
    %v3913 = vrot.slane %v759, %v3912
    %v3914 = vlaneseq
    %v3915 = vshrl.u32 %v3914, 7
    %v3916 = vsub.s32 4, %v3915
    %v3917 = vrot.slane %v759, %v3916
    %v3918 = vlaneseq
    %v3919 = vshrl.u32 %v3918, 7
    %v3920 = vsub.s32 5, %v3919
    %v3921 = vrot.slane %v759, %v3920
    %v3922 = vlaneseq
    %v3923 = vshrl.u32 %v3922, 7
    %v3924 = vsub.s32 6, %v3923
    %v3925 = vrot.slane %v759, %v3924
    %v3926 = vlaneseq
    %v3927 = vshrl.u32 %v3926, 7
    %v3928 = vsub.s32 7, %v3927
    %v3929 = vrot.slane %v759, %v3928
    %v3930 = vlaneseq
    %v3931 = vshrl.u32 %v3930, 7
    %v3932 = vsub.s32 0, %v3931
    %v3933 = vrot.slane %v760, %v3932
    %v3934 = vlaneseq
    %v3935 = vshrl.u32 %v3934, 7
    %v3936 = vsub.s32 1, %v3935
    %v3937 = vrot.slane %v760, %v3936
    %v3938 = vlaneseq
    %v3939 = vshrl.u32 %v3938, 7
    %v3940 = vsub.s32 2, %v3939
    %v3941 = vrot.slane %v760, %v3940
    %v3942 = vlaneseq
    %v3943 = vshrl.u32 %v3942, 7
    %v3944 = vsub.s32 3, %v3943
    %v3945 = vrot.slane %v760, %v3944
    %v3946 = vlaneseq
    %v3947 = vshrl.u32 %v3946, 7
    %v3948 = vsub.s32 4, %v3947
    %v3949 = vrot.slane %v760, %v3948
    %v3950 = vlaneseq
    %v3951 = vshrl.u32 %v3950, 7
    %v3952 = vsub.s32 5, %v3951
    %v3953 = vrot.slane %v760, %v3952
    %v3954 = vlaneseq
    %v3955 = vshrl.u32 %v3954, 7
    %v3956 = vsub.s32 6, %v3955
    %v3957 = vrot.slane %v760, %v3956
    %v3958 = vlaneseq
    %v3959 = vshrl.u32 %v3958, 7
    %v3960 = vsub.s32 7, %v3959
    %v3961 = vrot.slane %v760, %v3960
    %v3962 = vlaneseq
    %v3963 = vshrl.u32 %v3962, 7
    %v3964 = vsub.s32 0, %v3963
    %v3965 = vrot.slane %v761, %v3964
    %v3966 = vlaneseq
    %v3967 = vshrl.u32 %v3966, 7
    %v3968 = vsub.s32 1, %v3967
    %v3969 = vrot.slane %v761, %v3968
    %v3970 = vlaneseq
    %v3971 = vshrl.u32 %v3970, 7
    %v3972 = vsub.s32 2, %v3971
    %v3973 = vrot.slane %v761, %v3972
    %v3974 = vlaneseq
    %v3975 = vshrl.u32 %v3974, 7
    %v3976 = vsub.s32 3, %v3975
    %v3977 = vrot.slane %v761, %v3976
    %v3978 = vlaneseq
    %v3979 = vshrl.u32 %v3978, 7
    %v3980 = vsub.s32 4, %v3979
    %v3981 = vrot.slane %v761, %v3980
    %v3982 = vlaneseq
    %v3983 = vshrl.u32 %v3982, 7
    %v3984 = vsub.s32 5, %v3983
    %v3985 = vrot.slane %v761, %v3984
    %v3986 = vlaneseq
    %v3987 = vshrl.u32 %v3986, 7
    %v3988 = vsub.s32 6, %v3987
    %v3989 = vrot.slane %v761, %v3988
    %v3990 = vlaneseq
    %v3991 = vshrl.u32 %v3990, 7
    %v3992 = vsub.s32 7, %v3991
    %v3993 = vrot.slane %v761, %v3992
    %v3994 = vlaneseq
    %v3995 = vshrl.u32 %v3994, 7
    %v3996 = vsub.s32 0, %v3995
    %v3997 = vrot.slane %v762, %v3996
    %v3998 = vlaneseq
    %v3999 = vshrl.u32 %v3998, 7
    %v4000 = vsub.s32 1, %v3999
    %v4001 = vrot.slane %v762, %v4000
    %v4002 = vlaneseq
    %v4003 = vshrl.u32 %v4002, 7
    %v4004 = vsub.s32 2, %v4003
    %v4005 = vrot.slane %v762, %v4004
    %v4006 = vlaneseq
    %v4007 = vshrl.u32 %v4006, 7
    %v4008 = vsub.s32 3, %v4007
    %v4009 = vrot.slane %v762, %v4008
    %v4010 = vlaneseq
    %v4011 = vshrl.u32 %v4010, 7
    %v4012 = vsub.s32 4, %v4011
    %v4013 = vrot.slane %v762, %v4012
    %v4014 = vlaneseq
    %v4015 = vshrl.u32 %v4014, 7
    %v4016 = vsub.s32 5, %v4015
    %v4017 = vrot.slane %v762, %v4016
    %v4018 = vlaneseq
    %v4019 = vshrl.u32 %v4018, 7
    %v4020 = vsub.s32 6, %v4019
    %v4021 = vrot.slane %v762, %v4020
    %v4022 = vlaneseq
    %v4023 = vshrl.u32 %v4022, 7
    %v4024 = vsub.s32 7, %v4023
    %v4025 = vrot.slane %v762, %v4024
    %v4026 = vlaneseq
    %v4027 = vshrl.u32 %v4026, 7
    %v4028 = vsub.s32 0, %v4027
    %v4029 = vrot.slane %v763, %v4028
    %v4030 = vlaneseq
    %v4031 = vshrl.u32 %v4030, 7
    %v4032 = vsub.s32 1, %v4031
    %v4033 = vrot.slane %v763, %v4032
    %v4034 = vlaneseq
    %v4035 = vshrl.u32 %v4034, 7
    %v4036 = vsub.s32 2, %v4035
    %v4037 = vrot.slane %v763, %v4036
    %v4038 = vlaneseq
    %v4039 = vshrl.u32 %v4038, 7
    %v4040 = vsub.s32 3, %v4039
    %v4041 = vrot.slane %v763, %v4040
    %v4042 = vlaneseq
    %v4043 = vshrl.u32 %v4042, 7
    %v4044 = vsub.s32 4, %v4043
    %v4045 = vrot.slane %v763, %v4044
    %v4046 = vlaneseq
    %v4047 = vshrl.u32 %v4046, 7
    %v4048 = vsub.s32 5, %v4047
    %v4049 = vrot.slane %v763, %v4048
    %v4050 = vlaneseq
    %v4051 = vshrl.u32 %v4050, 7
    %v4052 = vsub.s32 6, %v4051
    %v4053 = vrot.slane %v763, %v4052
    %v4054 = vlaneseq
    %v4055 = vshrl.u32 %v4054, 7
    %v4056 = vsub.s32 7, %v4055
    %v4057 = vrot.slane %v763, %v4056
    %v4058 = vlaneseq
    %v4059 = vshrl.u32 %v4058, 7
    %v4060 = vsub.s32 0, %v4059
    %v4061 = vrot.slane %v764, %v4060
    %v4062 = vlaneseq
    %v4063 = vshrl.u32 %v4062, 7
    %v4064 = vsub.s32 1, %v4063
    %v4065 = vrot.slane %v764, %v4064
    %v4066 = vlaneseq
    %v4067 = vshrl.u32 %v4066, 7
    %v4068 = vsub.s32 2, %v4067
    %v4069 = vrot.slane %v764, %v4068
    %v4070 = vlaneseq
    %v4071 = vshrl.u32 %v4070, 7
    %v4072 = vsub.s32 3, %v4071
    %v4073 = vrot.slane %v764, %v4072
    %v4074 = vlaneseq
    %v4075 = vshrl.u32 %v4074, 7
    %v4076 = vsub.s32 4, %v4075
    %v4077 = vrot.slane %v764, %v4076
    %v4078 = vlaneseq
    %v4079 = vshrl.u32 %v4078, 7
    %v4080 = vsub.s32 5, %v4079
    %v4081 = vrot.slane %v764, %v4080
    %v4082 = vlaneseq
    %v4083 = vshrl.u32 %v4082, 7
    %v4084 = vsub.s32 6, %v4083
    %v4085 = vrot.slane %v764, %v4084
    %v4086 = vlaneseq
    %v4087 = vshrl.u32 %v4086, 7
    %v4088 = vsub.s32 7, %v4087
    %v4089 = vrot.slane %v764, %v4088
    %v4090 = vlaneseq
    %v4091 = vshrl.u32 %v4090, 7
    %v4092 = vsub.s32 0, %v4091
    %v4093 = vrot.slane %v765, %v4092
    %v4094 = vlaneseq
    %v4095 = vshrl.u32 %v4094, 7
    %v4096 = vsub.s32 1, %v4095
    %v4097 = vrot.slane %v765, %v4096
    %v4098 = vlaneseq
    %v4099 = vshrl.u32 %v4098, 7
    %v4100 = vsub.s32 2, %v4099
    %v4101 = vrot.slane %v765, %v4100
    %v4102 = vlaneseq
    %v4103 = vshrl.u32 %v4102, 7
    %v4104 = vsub.s32 3, %v4103
    %v4105 = vrot.slane %v765, %v4104
    %v4106 = vlaneseq
    %v4107 = vshrl.u32 %v4106, 7
    %v4108 = vsub.s32 4, %v4107
    %v4109 = vrot.slane %v765, %v4108
    %v4110 = vlaneseq
    %v4111 = vshrl.u32 %v4110, 7
    %v4112 = vsub.s32 5, %v4111
    %v4113 = vrot.slane %v765, %v4112
    %v4114 = vlaneseq
    %v4115 = vshrl.u32 %v4114, 7
    %v4116 = vsub.s32 6, %v4115
    %v4117 = vrot.slane %v765, %v4116
    %v4118 = vlaneseq
    %v4119 = vshrl.u32 %v4118, 7
    %v4120 = vsub.s32 7, %v4119
    %v4121 = vrot.slane %v765, %v4120
    %v4122 = vlaneseq
    %v4123 = vshrl.u32 %v4122, 7
    %v4124 = vsub.s32 0, %v4123
    %v4125 = vrot.slane %v766, %v4124
    %v4126 = vlaneseq
    %v4127 = vshrl.u32 %v4126, 7
    %v4128 = vsub.s32 1, %v4127
    %v4129 = vrot.slane %v766, %v4128
    %v4130 = vlaneseq
    %v4131 = vshrl.u32 %v4130, 7
    %v4132 = vsub.s32 2, %v4131
    %v4133 = vrot.slane %v766, %v4132
    %v4134 = vlaneseq
    %v4135 = vshrl.u32 %v4134, 7
    %v4136 = vsub.s32 3, %v4135
    %v4137 = vrot.slane %v766, %v4136
    %v4138 = vlaneseq
    %v4139 = vshrl.u32 %v4138, 7
    %v4140 = vsub.s32 4, %v4139
    %v4141 = vrot.slane %v766, %v4140
    %v4142 = vlaneseq
    %v4143 = vshrl.u32 %v4142, 7
    %v4144 = vsub.s32 5, %v4143
    %v4145 = vrot.slane %v766, %v4144
    %v4146 = vlaneseq
    %v4147 = vshrl.u32 %v4146, 7
    %v4148 = vsub.s32 6, %v4147
    %v4149 = vrot.slane %v766, %v4148
    %v4150 = vlaneseq
    %v4151 = vshrl.u32 %v4150, 7
    %v4152 = vsub.s32 7, %v4151
    %v4153 = vrot.slane %v766, %v4152
    %v4154 = vlaneseq
    %v4155 = vshrl.u32 %v4154, 7
    %v4156 = vsub.s32 0, %v4155
    %v4157 = vrot.slane %v767, %v4156
    %v4158 = vlaneseq
    %v4159 = vshrl.u32 %v4158, 7
    %v4160 = vsub.s32 1, %v4159
    %v4161 = vrot.slane %v767, %v4160
    %v4162 = vlaneseq
    %v4163 = vshrl.u32 %v4162, 7
    %v4164 = vsub.s32 2, %v4163
    %v4165 = vrot.slane %v767, %v4164
    %v4166 = vlaneseq
    %v4167 = vshrl.u32 %v4166, 7
    %v4168 = vsub.s32 3, %v4167
    %v4169 = vrot.slane %v767, %v4168
    %v4170 = vlaneseq
    %v4171 = vshrl.u32 %v4170, 7
    %v4172 = vsub.s32 4, %v4171
    %v4173 = vrot.slane %v767, %v4172
    %v4174 = vlaneseq
    %v4175 = vshrl.u32 %v4174, 7
    %v4176 = vsub.s32 5, %v4175
    %v4177 = vrot.slane %v767, %v4176
    %v4178 = vlaneseq
    %v4179 = vshrl.u32 %v4178, 7
    %v4180 = vsub.s32 6, %v4179
    %v4181 = vrot.slane %v767, %v4180
    %v4182 = vlaneseq
    %v4183 = vshrl.u32 %v4182, 7
    %v4184 = vsub.s32 7, %v4183
    %v4185 = vrot.slane %v767, %v4184
    %v4186 = vlaneseq
    %v4187 = vshrl.u32 %v4186, 7
    %v4188 = vsub.s32 0, %v4187
    %v4189 = vrot.slane %v768, %v4188
    %v4190 = vlaneseq
    %v4191 = vshrl.u32 %v4190, 7
    %v4192 = vsub.s32 1, %v4191
    %v4193 = vrot.slane %v768, %v4192
    %v4194 = vlaneseq
    %v4195 = vshrl.u32 %v4194, 7
    %v4196 = vsub.s32 2, %v4195
    %v4197 = vrot.slane %v768, %v4196
    %v4198 = vlaneseq
    %v4199 = vshrl.u32 %v4198, 7
    %v4200 = vsub.s32 3, %v4199
    %v4201 = vrot.slane %v768, %v4200
    %v4202 = vlaneseq
    %v4203 = vshrl.u32 %v4202, 7
    %v4204 = vsub.s32 4, %v4203
    %v4205 = vrot.slane %v768, %v4204
    %v4206 = vlaneseq
    %v4207 = vshrl.u32 %v4206, 7
    %v4208 = vsub.s32 5, %v4207
    %v4209 = vrot.slane %v768, %v4208
    %v4210 = vlaneseq
    %v4211 = vshrl.u32 %v4210, 7
    %v4212 = vsub.s32 6, %v4211
    %v4213 = vrot.slane %v768, %v4212
    %v4214 = vlaneseq
    %v4215 = vshrl.u32 %v4214, 7
    %v4216 = vsub.s32 7, %v4215
    %v4217 = vrot.slane %v768, %v4216
    %v4218 = vlaneseq
    %v4219 = vshrl.u32 %v4218, 7
    %v4220 = vsub.s32 0, %v4219
    %v4221 = vrot.slane %v769, %v4220
    %v4222 = vlaneseq
    %v4223 = vshrl.u32 %v4222, 7
    %v4224 = vsub.s32 1, %v4223
    %v4225 = vrot.slane %v769, %v4224
    %v4226 = vlaneseq
    %v4227 = vshrl.u32 %v4226, 7
    %v4228 = vsub.s32 2, %v4227
    %v4229 = vrot.slane %v769, %v4228
    %v4230 = vlaneseq
    %v4231 = vshrl.u32 %v4230, 7
    %v4232 = vsub.s32 3, %v4231
    %v4233 = vrot.slane %v769, %v4232
    %v4234 = vlaneseq
    %v4235 = vshrl.u32 %v4234, 7
    %v4236 = vsub.s32 4, %v4235
    %v4237 = vrot.slane %v769, %v4236
    %v4238 = vlaneseq
    %v4239 = vshrl.u32 %v4238, 7
    %v4240 = vsub.s32 5, %v4239
    %v4241 = vrot.slane %v769, %v4240
    %v4242 = vlaneseq
    %v4243 = vshrl.u32 %v4242, 7
    %v4244 = vsub.s32 6, %v4243
    %v4245 = vrot.slane %v769, %v4244
    %v4246 = vlaneseq
    %v4247 = vshrl.u32 %v4246, 7
    %v4248 = vsub.s32 7, %v4247
    %v4249 = vrot.slane %v769, %v4248
    %v4250 = vlaneseq
    %v4251 = vshrl.u32 %v4250, 7
    %v4252 = vsub.s32 0, %v4251
    %v4253 = vrot.slane %v770, %v4252
    %v4254 = vlaneseq
    %v4255 = vshrl.u32 %v4254, 7
    %v4256 = vsub.s32 1, %v4255
    %v4257 = vrot.slane %v770, %v4256
    %v4258 = vlaneseq
    %v4259 = vshrl.u32 %v4258, 7
    %v4260 = vsub.s32 2, %v4259
    %v4261 = vrot.slane %v770, %v4260
    %v4262 = vlaneseq
    %v4263 = vshrl.u32 %v4262, 7
    %v4264 = vsub.s32 3, %v4263
    %v4265 = vrot.slane %v770, %v4264
    %v4266 = vlaneseq
    %v4267 = vshrl.u32 %v4266, 7
    %v4268 = vsub.s32 4, %v4267
    %v4269 = vrot.slane %v770, %v4268
    %v4270 = vlaneseq
    %v4271 = vshrl.u32 %v4270, 7
    %v4272 = vsub.s32 5, %v4271
    %v4273 = vrot.slane %v770, %v4272
    %v4274 = vlaneseq
    %v4275 = vshrl.u32 %v4274, 7
    %v4276 = vsub.s32 6, %v4275
    %v4277 = vrot.slane %v770, %v4276
    %v4278 = vlaneseq
    %v4279 = vshrl.u32 %v4278, 7
    %v4280 = vsub.s32 7, %v4279
    %v4281 = vrot.slane %v770, %v4280
    %v4282 = vlaneseq
    %v4283 = vshrl.u32 %v4282, 7
    %v4284 = vsub.s32 0, %v4283
    %v4285 = vrot.slane %v771, %v4284
    %v4286 = vlaneseq
    %v4287 = vshrl.u32 %v4286, 7
    %v4288 = vsub.s32 1, %v4287
    %v4289 = vrot.slane %v771, %v4288
    %v4290 = vlaneseq
    %v4291 = vshrl.u32 %v4290, 7
    %v4292 = vsub.s32 2, %v4291
    %v4293 = vrot.slane %v771, %v4292
    %v4294 = vlaneseq
    %v4295 = vshrl.u32 %v4294, 7
    %v4296 = vsub.s32 3, %v4295
    %v4297 = vrot.slane %v771, %v4296
    %v4298 = vlaneseq
    %v4299 = vshrl.u32 %v4298, 7
    %v4300 = vsub.s32 4, %v4299
    %v4301 = vrot.slane %v771, %v4300
    %v4302 = vlaneseq
    %v4303 = vshrl.u32 %v4302, 7
    %v4304 = vsub.s32 5, %v4303
    %v4305 = vrot.slane %v771, %v4304
    %v4306 = vlaneseq
    %v4307 = vshrl.u32 %v4306, 7
    %v4308 = vsub.s32 6, %v4307
    %v4309 = vrot.slane %v771, %v4308
    %v4310 = vlaneseq
    %v4311 = vshrl.u32 %v4310, 7
    %v4312 = vsub.s32 7, %v4311
    %v4313 = vrot.slane %v771, %v4312
    %v4314 = vlaneseq
    %v4315 = vshrl.u32 %v4314, 7
    %v4316 = vsub.s32 0, %v4315
    %v4317 = vrot.slane %v772, %v4316
    %v4318 = vlaneseq
    %v4319 = vshrl.u32 %v4318, 7
    %v4320 = vsub.s32 1, %v4319
    %v4321 = vrot.slane %v772, %v4320
    %v4322 = vlaneseq
    %v4323 = vshrl.u32 %v4322, 7
    %v4324 = vsub.s32 2, %v4323
    %v4325 = vrot.slane %v772, %v4324
    %v4326 = vlaneseq
    %v4327 = vshrl.u32 %v4326, 7
    %v4328 = vsub.s32 3, %v4327
    %v4329 = vrot.slane %v772, %v4328
    %v4330 = vlaneseq
    %v4331 = vshrl.u32 %v4330, 7
    %v4332 = vsub.s32 4, %v4331
    %v4333 = vrot.slane %v772, %v4332
    %v4334 = vlaneseq
    %v4335 = vshrl.u32 %v4334, 7
    %v4336 = vsub.s32 5, %v4335
    %v4337 = vrot.slane %v772, %v4336
    %v4338 = vlaneseq
    %v4339 = vshrl.u32 %v4338, 7
    %v4340 = vsub.s32 6, %v4339
    %v4341 = vrot.slane %v772, %v4340
    %v4342 = vlaneseq
    %v4343 = vshrl.u32 %v4342, 7
    %v4344 = vsub.s32 7, %v4343
    %v4345 = vrot.slane %v772, %v4344
    %v4346 = vlaneseq
    %v4347 = vshrl.u32 %v4346, 7
    %v4348 = vsub.s32 0, %v4347
    %v4349 = vrot.slane %v773, %v4348
    %v4350 = vlaneseq
    %v4351 = vshrl.u32 %v4350, 7
    %v4352 = vsub.s32 1, %v4351
    %v4353 = vrot.slane %v773, %v4352
    %v4354 = vlaneseq
    %v4355 = vshrl.u32 %v4354, 7
    %v4356 = vsub.s32 2, %v4355
    %v4357 = vrot.slane %v773, %v4356
    %v4358 = vlaneseq
    %v4359 = vshrl.u32 %v4358, 7
    %v4360 = vsub.s32 3, %v4359
    %v4361 = vrot.slane %v773, %v4360
    %v4362 = vlaneseq
    %v4363 = vshrl.u32 %v4362, 7
    %v4364 = vsub.s32 4, %v4363
    %v4365 = vrot.slane %v773, %v4364
    %v4366 = vlaneseq
    %v4367 = vshrl.u32 %v4366, 7
    %v4368 = vsub.s32 5, %v4367
    %v4369 = vrot.slane %v773, %v4368
    %v4370 = vlaneseq
    %v4371 = vshrl.u32 %v4370, 7
    %v4372 = vsub.s32 6, %v4371
    %v4373 = vrot.slane %v773, %v4372
    %v4374 = vlaneseq
    %v4375 = vshrl.u32 %v4374, 7
    %v4376 = vsub.s32 7, %v4375
    %v4377 = vrot.slane %v773, %v4376
    %v4378 = vlaneseq
    %v4379 = vshrl.u32 %v4378, 7
    %v4380 = vsub.s32 0, %v4379
    %v4381 = vrot.slane %v774, %v4380
    %v4382 = vlaneseq
    %v4383 = vshrl.u32 %v4382, 7
    %v4384 = vsub.s32 1, %v4383
    %v4385 = vrot.slane %v774, %v4384
    %v4386 = vlaneseq
    %v4387 = vshrl.u32 %v4386, 7
    %v4388 = vsub.s32 2, %v4387
    %v4389 = vrot.slane %v774, %v4388
    %v4390 = vlaneseq
    %v4391 = vshrl.u32 %v4390, 7
    %v4392 = vsub.s32 3, %v4391
    %v4393 = vrot.slane %v774, %v4392
    %v4394 = vlaneseq
    %v4395 = vshrl.u32 %v4394, 7
    %v4396 = vsub.s32 4, %v4395
    %v4397 = vrot.slane %v774, %v4396
    %v4398 = vlaneseq
    %v4399 = vshrl.u32 %v4398, 7
    %v4400 = vsub.s32 5, %v4399
    %v4401 = vrot.slane %v774, %v4400
    %v4402 = vlaneseq
    %v4403 = vshrl.u32 %v4402, 7
    %v4404 = vsub.s32 6, %v4403
    %v4405 = vrot.slane %v774, %v4404
    %v4406 = vlaneseq
    %v4407 = vshrl.u32 %v4406, 7
    %v4408 = vsub.s32 7, %v4407
    %v4409 = vrot.slane %v774, %v4408
    %v4410 = vlaneseq
    %v4411 = vshrl.u32 %v4410, 7
    %v4412 = vsub.s32 0, %v4411
    %v4413 = vrot.slane %v775, %v4412
    %v4414 = vlaneseq
    %v4415 = vshrl.u32 %v4414, 7
    %v4416 = vsub.s32 1, %v4415
    %v4417 = vrot.slane %v775, %v4416
    %v4418 = vlaneseq
    %v4419 = vshrl.u32 %v4418, 7
    %v4420 = vsub.s32 2, %v4419
    %v4421 = vrot.slane %v775, %v4420
    %v4422 = vlaneseq
    %v4423 = vshrl.u32 %v4422, 7
    %v4424 = vsub.s32 3, %v4423
    %v4425 = vrot.slane %v775, %v4424
    %v4426 = vlaneseq
    %v4427 = vshrl.u32 %v4426, 7
    %v4428 = vsub.s32 4, %v4427
    %v4429 = vrot.slane %v775, %v4428
    %v4430 = vlaneseq
    %v4431 = vshrl.u32 %v4430, 7
    %v4432 = vsub.s32 5, %v4431
    %v4433 = vrot.slane %v775, %v4432
    %v4434 = vlaneseq
    %v4435 = vshrl.u32 %v4434, 7
    %v4436 = vsub.s32 6, %v4435
    %v4437 = vrot.slane %v775, %v4436
    %v4438 = vlaneseq
    %v4439 = vshrl.u32 %v4438, 7
    %v4440 = vsub.s32 7, %v4439
    %v4441 = vrot.slane %v775, %v4440
    %v4442 = vlaneseq
    %v4443 = vshrl.u32 %v4442, 7
    %v4444 = vsub.s32 0, %v4443
    %v4445 = vrot.slane %v776, %v4444
    %v4446 = vlaneseq
    %v4447 = vshrl.u32 %v4446, 7
    %v4448 = vsub.s32 1, %v4447
    %v4449 = vrot.slane %v776, %v4448
    %v4450 = vlaneseq
    %v4451 = vshrl.u32 %v4450, 7
    %v4452 = vsub.s32 2, %v4451
    %v4453 = vrot.slane %v776, %v4452
    %v4454 = vlaneseq
    %v4455 = vshrl.u32 %v4454, 7
    %v4456 = vsub.s32 3, %v4455
    %v4457 = vrot.slane %v776, %v4456
    %v4458 = vlaneseq
    %v4459 = vshrl.u32 %v4458, 7
    %v4460 = vsub.s32 4, %v4459
    %v4461 = vrot.slane %v776, %v4460
    %v4462 = vlaneseq
    %v4463 = vshrl.u32 %v4462, 7
    %v4464 = vsub.s32 5, %v4463
    %v4465 = vrot.slane %v776, %v4464
    %v4466 = vlaneseq
    %v4467 = vshrl.u32 %v4466, 7
    %v4468 = vsub.s32 6, %v4467
    %v4469 = vrot.slane %v776, %v4468
    %v4470 = vlaneseq
    %v4471 = vshrl.u32 %v4470, 7
    %v4472 = vsub.s32 7, %v4471
    %v4473 = vrot.slane %v776, %v4472
    %v4474 = vlaneseq
    %v4475 = vshrl.u32 %v4474, 7
    %v4476 = vsub.s32 0, %v4475
    %v4477 = vrot.slane %v777, %v4476
    %v4478 = vlaneseq
    %v4479 = vshrl.u32 %v4478, 7
    %v4480 = vsub.s32 1, %v4479
    %v4481 = vrot.slane %v777, %v4480
    %v4482 = vlaneseq
    %v4483 = vshrl.u32 %v4482, 7
    %v4484 = vsub.s32 2, %v4483
    %v4485 = vrot.slane %v777, %v4484
    %v4486 = vlaneseq
    %v4487 = vshrl.u32 %v4486, 7
    %v4488 = vsub.s32 3, %v4487
    %v4489 = vrot.slane %v777, %v4488
    %v4490 = vlaneseq
    %v4491 = vshrl.u32 %v4490, 7
    %v4492 = vsub.s32 4, %v4491
    %v4493 = vrot.slane %v777, %v4492
    %v4494 = vlaneseq
    %v4495 = vshrl.u32 %v4494, 7
    %v4496 = vsub.s32 5, %v4495
    %v4497 = vrot.slane %v777, %v4496
    %v4498 = vlaneseq
    %v4499 = vshrl.u32 %v4498, 7
    %v4500 = vsub.s32 6, %v4499
    %v4501 = vrot.slane %v777, %v4500
    %v4502 = vlaneseq
    %v4503 = vshrl.u32 %v4502, 7
    %v4504 = vsub.s32 7, %v4503
    %v4505 = vrot.slane %v777, %v4504
    %v4506 = vlaneseq
    %v4507 = vshrl.u32 %v4506, 7
    %v4508 = vsub.s32 0, %v4507
    %v4509 = vrot.slane %v778, %v4508
    %v4510 = vlaneseq
    %v4511 = vshrl.u32 %v4510, 7
    %v4512 = vsub.s32 1, %v4511
    %v4513 = vrot.slane %v778, %v4512
    %v4514 = vlaneseq
    %v4515 = vshrl.u32 %v4514, 7
    %v4516 = vsub.s32 2, %v4515
    %v4517 = vrot.slane %v778, %v4516
    %v4518 = vlaneseq
    %v4519 = vshrl.u32 %v4518, 7
    %v4520 = vsub.s32 3, %v4519
    %v4521 = vrot.slane %v778, %v4520
    %v4522 = vlaneseq
    %v4523 = vshrl.u32 %v4522, 7
    %v4524 = vsub.s32 4, %v4523
    %v4525 = vrot.slane %v778, %v4524
    %v4526 = vlaneseq
    %v4527 = vshrl.u32 %v4526, 7
    %v4528 = vsub.s32 5, %v4527
    %v4529 = vrot.slane %v778, %v4528
    %v4530 = vlaneseq
    %v4531 = vshrl.u32 %v4530, 7
    %v4532 = vsub.s32 6, %v4531
    %v4533 = vrot.slane %v778, %v4532
    %v4534 = vlaneseq
    %v4535 = vshrl.u32 %v4534, 7
    %v4536 = vsub.s32 7, %v4535
    %v4537 = vrot.slane %v778, %v4536
    %v4538 = vlaneseq
    %v4539 = vshrl.u32 %v4538, 7
    %v4540 = vsub.s32 0, %v4539
    %v4541 = vrot.slane %v779, %v4540
    %v4542 = vlaneseq
    %v4543 = vshrl.u32 %v4542, 7
    %v4544 = vsub.s32 1, %v4543
    %v4545 = vrot.slane %v779, %v4544
    %v4546 = vlaneseq
    %v4547 = vshrl.u32 %v4546, 7
    %v4548 = vsub.s32 2, %v4547
    %v4549 = vrot.slane %v779, %v4548
    %v4550 = vlaneseq
    %v4551 = vshrl.u32 %v4550, 7
    %v4552 = vsub.s32 3, %v4551
    %v4553 = vrot.slane %v779, %v4552
    %v4554 = vlaneseq
    %v4555 = vshrl.u32 %v4554, 7
    %v4556 = vsub.s32 4, %v4555
    %v4557 = vrot.slane %v779, %v4556
    %v4558 = vlaneseq
    %v4559 = vshrl.u32 %v4558, 7
    %v4560 = vsub.s32 5, %v4559
    %v4561 = vrot.slane %v779, %v4560
    %v4562 = vlaneseq
    %v4563 = vshrl.u32 %v4562, 7
    %v4564 = vsub.s32 6, %v4563
    %v4565 = vrot.slane %v779, %v4564
    %v4566 = vlaneseq
    %v4567 = vshrl.u32 %v4566, 7
    %v4568 = vsub.s32 7, %v4567
    %v4569 = vrot.slane %v779, %v4568
    %v4570 = vlaneseq
    %v4571 = vshrl.u32 %v4570, 7
    %v4572 = vsub.s32 0, %v4571
    %v4573 = vrot.slane %v780, %v4572
    %v4574 = vlaneseq
    %v4575 = vshrl.u32 %v4574, 7
    %v4576 = vsub.s32 1, %v4575
    %v4577 = vrot.slane %v780, %v4576
    %v4578 = vlaneseq
    %v4579 = vshrl.u32 %v4578, 7
    %v4580 = vsub.s32 2, %v4579
    %v4581 = vrot.slane %v780, %v4580
    %v4582 = vlaneseq
    %v4583 = vshrl.u32 %v4582, 7
    %v4584 = vsub.s32 3, %v4583
    %v4585 = vrot.slane %v780, %v4584
    %v4586 = vlaneseq
    %v4587 = vshrl.u32 %v4586, 7
    %v4588 = vsub.s32 4, %v4587
    %v4589 = vrot.slane %v780, %v4588
    %v4590 = vlaneseq
    %v4591 = vshrl.u32 %v4590, 7
    %v4592 = vsub.s32 5, %v4591
    %v4593 = vrot.slane %v780, %v4592
    %v4594 = vlaneseq
    %v4595 = vshrl.u32 %v4594, 7
    %v4596 = vsub.s32 6, %v4595
    %v4597 = vrot.slane %v780, %v4596
    %v4598 = vlaneseq
    %v4599 = vshrl.u32 %v4598, 7
    %v4600 = vsub.s32 7, %v4599
    %v4601 = vrot.slane %v780, %v4600
    %v4602 = vlaneseq
    %v4603 = vshrl.u32 %v4602, 7
    %v4604 = vsub.s32 0, %v4603
    %v4605 = vrot.slane %v781, %v4604
    %v4606 = vlaneseq
    %v4607 = vshrl.u32 %v4606, 7
    %v4608 = vsub.s32 1, %v4607
    %v4609 = vrot.slane %v781, %v4608
    %v4610 = vlaneseq
    %v4611 = vshrl.u32 %v4610, 7
    %v4612 = vsub.s32 2, %v4611
    %v4613 = vrot.slane %v781, %v4612
    %v4614 = vlaneseq
    %v4615 = vshrl.u32 %v4614, 7
    %v4616 = vsub.s32 3, %v4615
    %v4617 = vrot.slane %v781, %v4616
    %v4618 = vlaneseq
    %v4619 = vshrl.u32 %v4618, 7
    %v4620 = vsub.s32 4, %v4619
    %v4621 = vrot.slane %v781, %v4620
    %v4622 = vlaneseq
    %v4623 = vshrl.u32 %v4622, 7
    %v4624 = vsub.s32 5, %v4623
    %v4625 = vrot.slane %v781, %v4624
    %v4626 = vlaneseq
    %v4627 = vshrl.u32 %v4626, 7
    %v4628 = vsub.s32 6, %v4627
    %v4629 = vrot.slane %v781, %v4628
    %v4630 = vlaneseq
    %v4631 = vshrl.u32 %v4630, 7
    %v4632 = vsub.s32 7, %v4631
    %v4633 = vrot.slane %v781, %v4632
    %v4634 = vlaneseq
    %v4635 = vshrl.u32 %v4634, 7
    %v4636 = vsub.s32 0, %v4635
    %v4637 = vrot.slane %v782, %v4636
    %v4638 = vlaneseq
    %v4639 = vshrl.u32 %v4638, 7
    %v4640 = vsub.s32 1, %v4639
    %v4641 = vrot.slane %v782, %v4640
    %v4642 = vlaneseq
    %v4643 = vshrl.u32 %v4642, 7
    %v4644 = vsub.s32 2, %v4643
    %v4645 = vrot.slane %v782, %v4644
    %v4646 = vlaneseq
    %v4647 = vshrl.u32 %v4646, 7
    %v4648 = vsub.s32 3, %v4647
    %v4649 = vrot.slane %v782, %v4648
    %v4650 = vlaneseq
    %v4651 = vshrl.u32 %v4650, 7
    %v4652 = vsub.s32 4, %v4651
    %v4653 = vrot.slane %v782, %v4652
    %v4654 = vlaneseq
    %v4655 = vshrl.u32 %v4654, 7
    %v4656 = vsub.s32 5, %v4655
    %v4657 = vrot.slane %v782, %v4656
    %v4658 = vlaneseq
    %v4659 = vshrl.u32 %v4658, 7
    %v4660 = vsub.s32 6, %v4659
    %v4661 = vrot.slane %v782, %v4660
    %v4662 = vlaneseq
    %v4663 = vshrl.u32 %v4662, 7
    %v4664 = vsub.s32 7, %v4663
    %v4665 = vrot.slane %v782, %v4664
    %v4666 = vlaneseq
    %v4667 = vshrl.u32 %v4666, 7
    %v4668 = vsub.s32 0, %v4667
    %v4669 = vrot.slane %v783, %v4668
    %v4670 = vlaneseq
    %v4671 = vshrl.u32 %v4670, 7
    %v4672 = vsub.s32 1, %v4671
    %v4673 = vrot.slane %v783, %v4672
    %v4674 = vlaneseq
    %v4675 = vshrl.u32 %v4674, 7
    %v4676 = vsub.s32 2, %v4675
    %v4677 = vrot.slane %v783, %v4676
    %v4678 = vlaneseq
    %v4679 = vshrl.u32 %v4678, 7
    %v4680 = vsub.s32 3, %v4679
    %v4681 = vrot.slane %v783, %v4680
    %v4682 = vlaneseq
    %v4683 = vshrl.u32 %v4682, 7
    %v4684 = vsub.s32 4, %v4683
    %v4685 = vrot.slane %v783, %v4684
    %v4686 = vlaneseq
    %v4687 = vshrl.u32 %v4686, 7
    %v4688 = vsub.s32 5, %v4687
    %v4689 = vrot.slane %v783, %v4688
    %v4690 = vlaneseq
    %v4691 = vshrl.u32 %v4690, 7
    %v4692 = vsub.s32 6, %v4691
    %v4693 = vrot.slane %v783, %v4692
    %v4694 = vlaneseq
    %v4695 = vshrl.u32 %v4694, 7
    %v4696 = vsub.s32 7, %v4695
    %v4697 = vrot.slane %v783, %v4696
    %v4698 = vlaneseq
    %v4699 = vshrl.u32 %v4698, 7
    %v4700 = vsub.s32 0, %v4699
    %v4701 = vrot.slane %v784, %v4700
    %v4702 = vlaneseq
    %v4703 = vshrl.u32 %v4702, 7
    %v4704 = vsub.s32 1, %v4703
    %v4705 = vrot.slane %v784, %v4704
    %v4706 = vlaneseq
    %v4707 = vshrl.u32 %v4706, 7
    %v4708 = vsub.s32 2, %v4707
    %v4709 = vrot.slane %v784, %v4708
    %v4710 = vlaneseq
    %v4711 = vshrl.u32 %v4710, 7
    %v4712 = vsub.s32 3, %v4711
    %v4713 = vrot.slane %v784, %v4712
    %v4714 = vlaneseq
    %v4715 = vshrl.u32 %v4714, 7
    %v4716 = vsub.s32 4, %v4715
    %v4717 = vrot.slane %v784, %v4716
    %v4718 = vlaneseq
    %v4719 = vshrl.u32 %v4718, 7
    %v4720 = vsub.s32 5, %v4719
    %v4721 = vrot.slane %v784, %v4720
    %v4722 = vlaneseq
    %v4723 = vshrl.u32 %v4722, 7
    %v4724 = vsub.s32 6, %v4723
    %v4725 = vrot.slane %v784, %v4724
    %v4726 = vlaneseq
    %v4727 = vshrl.u32 %v4726, 7
    %v4728 = vsub.s32 7, %v4727
    %v4729 = vrot.slane %v784, %v4728
    %v4730 = vlaneseq
    %v4731 = vshrl.u32 %v4730, 7
    %v4732 = vsub.s32 0, %v4731
    %v4733 = vrot.slane %v785, %v4732
    %v4734 = vlaneseq
    %v4735 = vshrl.u32 %v4734, 7
    %v4736 = vsub.s32 1, %v4735
    %v4737 = vrot.slane %v785, %v4736
    %v4738 = vlaneseq
    %v4739 = vshrl.u32 %v4738, 7
    %v4740 = vsub.s32 2, %v4739
    %v4741 = vrot.slane %v785, %v4740
    %v4742 = vlaneseq
    %v4743 = vshrl.u32 %v4742, 7
    %v4744 = vsub.s32 3, %v4743
    %v4745 = vrot.slane %v785, %v4744
    %v4746 = vlaneseq
    %v4747 = vshrl.u32 %v4746, 7
    %v4748 = vsub.s32 4, %v4747
    %v4749 = vrot.slane %v785, %v4748
    %v4750 = vlaneseq
    %v4751 = vshrl.u32 %v4750, 7
    %v4752 = vsub.s32 5, %v4751
    %v4753 = vrot.slane %v785, %v4752
    %v4754 = vlaneseq
    %v4755 = vshrl.u32 %v4754, 7
    %v4756 = vsub.s32 6, %v4755
    %v4757 = vrot.slane %v785, %v4756
    %v4758 = vlaneseq
    %v4759 = vshrl.u32 %v4758, 7
    %v4760 = vsub.s32 7, %v4759
    %v4761 = vrot.slane %v785, %v4760
    %v4762 = vlaneseq
    %v4763 = vshrl.u32 %v4762, 7
    %v4764 = vsub.s32 0, %v4763
    %v4765 = vrot.slane %v786, %v4764
    %v4766 = vlaneseq
    %v4767 = vshrl.u32 %v4766, 7
    %v4768 = vsub.s32 1, %v4767
    %v4769 = vrot.slane %v786, %v4768
    %v4770 = vlaneseq
    %v4771 = vshrl.u32 %v4770, 7
    %v4772 = vsub.s32 2, %v4771
    %v4773 = vrot.slane %v786, %v4772
    %v4774 = vlaneseq
    %v4775 = vshrl.u32 %v4774, 7
    %v4776 = vsub.s32 3, %v4775
    %v4777 = vrot.slane %v786, %v4776
    %v4778 = vlaneseq
    %v4779 = vshrl.u32 %v4778, 7
    %v4780 = vsub.s32 4, %v4779
    %v4781 = vrot.slane %v786, %v4780
    %v4782 = vlaneseq
    %v4783 = vshrl.u32 %v4782, 7
    %v4784 = vsub.s32 5, %v4783
    %v4785 = vrot.slane %v786, %v4784
    %v4786 = vlaneseq
    %v4787 = vshrl.u32 %v4786, 7
    %v4788 = vsub.s32 6, %v4787
    %v4789 = vrot.slane %v786, %v4788
    %v4790 = vlaneseq
    %v4791 = vshrl.u32 %v4790, 7
    %v4792 = vsub.s32 7, %v4791
    %v4793 = vrot.slane %v786, %v4792
    %v4794 = vlaneseq
    %v4795 = vshrl.u32 %v4794, 7
    %v4796 = vsub.s32 0, %v4795
    %v4797 = vrot.slane %v787, %v4796
    %v4798 = vlaneseq
    %v4799 = vshrl.u32 %v4798, 7
    %v4800 = vsub.s32 1, %v4799
    %v4801 = vrot.slane %v787, %v4800
    %v4802 = vlaneseq
    %v4803 = vshrl.u32 %v4802, 7
    %v4804 = vsub.s32 2, %v4803
    %v4805 = vrot.slane %v787, %v4804
    %v4806 = vlaneseq
    %v4807 = vshrl.u32 %v4806, 7
    %v4808 = vsub.s32 3, %v4807
    %v4809 = vrot.slane %v787, %v4808
    %v4810 = vlaneseq
    %v4811 = vshrl.u32 %v4810, 7
    %v4812 = vsub.s32 4, %v4811
    %v4813 = vrot.slane %v787, %v4812
    %v4814 = vlaneseq
    %v4815 = vshrl.u32 %v4814, 7
    %v4816 = vsub.s32 5, %v4815
    %v4817 = vrot.slane %v787, %v4816
    %v4818 = vlaneseq
    %v4819 = vshrl.u32 %v4818, 7
    %v4820 = vsub.s32 6, %v4819
    %v4821 = vrot.slane %v787, %v4820
    %v4822 = vlaneseq
    %v4823 = vshrl.u32 %v4822, 7
    %v4824 = vsub.s32 7, %v4823
    %v4825 = vrot.slane %v787, %v4824
    %v4826 = vlaneseq
    %v4827 = vshrl.u32 %v4826, 7
    %v4828 = vsub.s32 0, %v4827
    %v4829 = vrot.slane %v788, %v4828
    %v4830 = vlaneseq
    %v4831 = vshrl.u32 %v4830, 7
    %v4832 = vsub.s32 1, %v4831
    %v4833 = vrot.slane %v788, %v4832
    %v4834 = vlaneseq
    %v4835 = vshrl.u32 %v4834, 7
    %v4836 = vsub.s32 2, %v4835
    %v4837 = vrot.slane %v788, %v4836
    %v4838 = vlaneseq
    %v4839 = vshrl.u32 %v4838, 7
    %v4840 = vsub.s32 3, %v4839
    %v4841 = vrot.slane %v788, %v4840
    %v4842 = vlaneseq
    %v4843 = vshrl.u32 %v4842, 7
    %v4844 = vsub.s32 4, %v4843
    %v4845 = vrot.slane %v788, %v4844
    %v4846 = vlaneseq
    %v4847 = vshrl.u32 %v4846, 7
    %v4848 = vsub.s32 5, %v4847
    %v4849 = vrot.slane %v788, %v4848
    %v4850 = vlaneseq
    %v4851 = vshrl.u32 %v4850, 7
    %v4852 = vsub.s32 6, %v4851
    %v4853 = vrot.slane %v788, %v4852
    %v4854 = vlaneseq
    %v4855 = vshrl.u32 %v4854, 7
    %v4856 = vsub.s32 7, %v4855
    %v4857 = vrot.slane %v788, %v4856
    %v4858 = vlaneseq
    %v4859 = vshrl.u32 %v4858, 7
    %v4860 = vsub.s32 0, %v4859
    %v4861 = vrot.slane %v789, %v4860
    %v4862 = vlaneseq
    %v4863 = vshrl.u32 %v4862, 7
    %v4864 = vsub.s32 1, %v4863
    %v4865 = vrot.slane %v789, %v4864
    %v4866 = vlaneseq
    %v4867 = vshrl.u32 %v4866, 7
    %v4868 = vsub.s32 2, %v4867
    %v4869 = vrot.slane %v789, %v4868
    %v4870 = vlaneseq
    %v4871 = vshrl.u32 %v4870, 7
    %v4872 = vsub.s32 3, %v4871
    %v4873 = vrot.slane %v789, %v4872
    %v4874 = vlaneseq
    %v4875 = vshrl.u32 %v4874, 7
    %v4876 = vsub.s32 4, %v4875
    %v4877 = vrot.slane %v789, %v4876
    %v4878 = vlaneseq
    %v4879 = vshrl.u32 %v4878, 7
    %v4880 = vsub.s32 5, %v4879
    %v4881 = vrot.slane %v789, %v4880
    %v4882 = vlaneseq
    %v4883 = vshrl.u32 %v4882, 7
    %v4884 = vsub.s32 6, %v4883
    %v4885 = vrot.slane %v789, %v4884
    %v4886 = vlaneseq
    %v4887 = vshrl.u32 %v4886, 7
    %v4888 = vsub.s32 7, %v4887
    %v4889 = vrot.slane %v789, %v4888
    %v4890 = vlaneseq
    %v4891 = vshrl.u32 %v4890, 7
    %v4892 = vsub.s32 0, %v4891
    %v4893 = vrot.slane %v790, %v4892
    %v4894 = vlaneseq
    %v4895 = vshrl.u32 %v4894, 7
    %v4896 = vsub.s32 1, %v4895
    %v4897 = vrot.slane %v790, %v4896
    %v4898 = vlaneseq
    %v4899 = vshrl.u32 %v4898, 7
    %v4900 = vsub.s32 2, %v4899
    %v4901 = vrot.slane %v790, %v4900
    %v4902 = vlaneseq
    %v4903 = vshrl.u32 %v4902, 7
    %v4904 = vsub.s32 3, %v4903
    %v4905 = vrot.slane %v790, %v4904
    %v4906 = vlaneseq
    %v4907 = vshrl.u32 %v4906, 7
    %v4908 = vsub.s32 4, %v4907
    %v4909 = vrot.slane %v790, %v4908
    %v4910 = vlaneseq
    %v4911 = vshrl.u32 %v4910, 7
    %v4912 = vsub.s32 5, %v4911
    %v4913 = vrot.slane %v790, %v4912
    %v4914 = vlaneseq
    %v4915 = vshrl.u32 %v4914, 7
    %v4916 = vsub.s32 6, %v4915
    %v4917 = vrot.slane %v790, %v4916
    %v4918 = vlaneseq
    %v4919 = vshrl.u32 %v4918, 7
    %v4920 = vsub.s32 7, %v4919
    %v4921 = vrot.slane %v790, %v4920
    %v4922 = vlaneseq
    %v4923 = vshrl.u32 %v4922, 7
    %v4924 = vsub.s32 0, %v4923
    %v4925 = vrot.slane %v791, %v4924
    %v4926 = vlaneseq
    %v4927 = vshrl.u32 %v4926, 7
    %v4928 = vsub.s32 1, %v4927
    %v4929 = vrot.slane %v791, %v4928
    %v4930 = vlaneseq
    %v4931 = vshrl.u32 %v4930, 7
    %v4932 = vsub.s32 2, %v4931
    %v4933 = vrot.slane %v791, %v4932
    %v4934 = vlaneseq
    %v4935 = vshrl.u32 %v4934, 7
    %v4936 = vsub.s32 3, %v4935
    %v4937 = vrot.slane %v791, %v4936
    %v4938 = vlaneseq
    %v4939 = vshrl.u32 %v4938, 7
    %v4940 = vsub.s32 4, %v4939
    %v4941 = vrot.slane %v791, %v4940
    %v4942 = vlaneseq
    %v4943 = vshrl.u32 %v4942, 7
    %v4944 = vsub.s32 5, %v4943
    %v4945 = vrot.slane %v791, %v4944
    %v4946 = vlaneseq
    %v4947 = vshrl.u32 %v4946, 7
    %v4948 = vsub.s32 6, %v4947
    %v4949 = vrot.slane %v791, %v4948
    %v4950 = vlaneseq
    %v4951 = vshrl.u32 %v4950, 7
    %v4952 = vsub.s32 7, %v4951
    %v4953 = vrot.slane %v791, %v4952
    %v4954 = vlaneseq
    %v4955 = vshrl.u32 %v4954, 7
    %v4956 = vsub.s32 0, %v4955
    %v4957 = vrot.slane %v792, %v4956
    %v4958 = vlaneseq
    %v4959 = vshrl.u32 %v4958, 7
    %v4960 = vsub.s32 1, %v4959
    %v4961 = vrot.slane %v792, %v4960
    %v4962 = vlaneseq
    %v4963 = vshrl.u32 %v4962, 7
    %v4964 = vsub.s32 2, %v4963
    %v4965 = vrot.slane %v792, %v4964
    %v4966 = vlaneseq
    %v4967 = vshrl.u32 %v4966, 7
    %v4968 = vsub.s32 3, %v4967
    %v4969 = vrot.slane %v792, %v4968
    %v4970 = vlaneseq
    %v4971 = vshrl.u32 %v4970, 7
    %v4972 = vsub.s32 4, %v4971
    %v4973 = vrot.slane %v792, %v4972
    %v4974 = vlaneseq
    %v4975 = vshrl.u32 %v4974, 7
    %v4976 = vsub.s32 5, %v4975
    %v4977 = vrot.slane %v792, %v4976
    %v4978 = vlaneseq
    %v4979 = vshrl.u32 %v4978, 7
    %v4980 = vsub.s32 6, %v4979
    %v4981 = vrot.slane %v792, %v4980
    %v4982 = vlaneseq
    %v4983 = vshrl.u32 %v4982, 7
    %v4984 = vsub.s32 7, %v4983
    %v4985 = vrot.slane %v792, %v4984
    %v4986 = vlaneseq
    %v4987 = vshrl.u32 %v4986, 7
    %v4988 = vsub.s32 0, %v4987
    %v4989 = vrot.slane %v793, %v4988
    %v4990 = vlaneseq
    %v4991 = vshrl.u32 %v4990, 7
    %v4992 = vsub.s32 1, %v4991
    %v4993 = vrot.slane %v793, %v4992
    %v4994 = vlaneseq
    %v4995 = vshrl.u32 %v4994, 7
    %v4996 = vsub.s32 2, %v4995
    %v4997 = vrot.slane %v793, %v4996
    %v4998 = vlaneseq
    %v4999 = vshrl.u32 %v4998, 7
    %v5000 = vsub.s32 3, %v4999
    %v5001 = vrot.slane %v793, %v5000
    %v5002 = vlaneseq
    %v5003 = vshrl.u32 %v5002, 7
    %v5004 = vsub.s32 4, %v5003
    %v5005 = vrot.slane %v793, %v5004
    %v5006 = vlaneseq
    %v5007 = vshrl.u32 %v5006, 7
    %v5008 = vsub.s32 5, %v5007
    %v5009 = vrot.slane %v793, %v5008
    %v5010 = vlaneseq
    %v5011 = vshrl.u32 %v5010, 7
    %v5012 = vsub.s32 6, %v5011
    %v5013 = vrot.slane %v793, %v5012
    %v5014 = vlaneseq
    %v5015 = vshrl.u32 %v5014, 7
    %v5016 = vsub.s32 7, %v5015
    %v5017 = vrot.slane %v793, %v5016
    %v5018 = vcombine.low %v925, %v929
    %v5019 = vcombine.low %v933, %v937
    %v5020 = vcombine.low %v941, %v945
    %v5021 = vcombine.low %v949, %v953
    %v5023 = vunpack.c.l.s4 1966171168
    %v5024 = vunpack.c.0.s8 %v5023
    %v5025 = vlaneseq
    %v5026 = vshrl.u32 %v5025, 7
    %v5027 = vsub.s32 %v5024, %v5026
    %v5028 = vrot.slane %v5018, %v5027
    %v5030 = vunpack.c.l.s4 1966171168
    %v5031 = vunpack.c.0.s8 %v5030
    %v5032 = vlaneseq
    %v5033 = vshrl.u32 %v5032, 7
    %v5034 = vsub.s32 %v5031, %v5033
    %v5035 = vrot.slane %v5019, %v5034
    %v5037 = vunpack.c.l.s4 1966171168
    %v5038 = vunpack.c.0.s8 %v5037
    %v5039 = vlaneseq
    %v5040 = vshrl.u32 %v5039, 7
    %v5041 = vsub.s32 %v5038, %v5040
    %v5042 = vrot.slane %v5020, %v5041
    %v5044 = vunpack.c.l.s4 1966171168
    %v5045 = vunpack.c.0.s8 %v5044
    %v5046 = vlaneseq
    %v5047 = vshrl.u32 %v5046, 7
    %v5048 = vsub.s32 %v5045, %v5047
    %v5049 = vrot.slane %v5021, %v5048
    %v5050 = vcombine.low %v5028, %v5035
    %v5051 = vcombine.low %v5042, %v5049
    %v5053 = vunpack.c.l.s4 1966171168
    %v5054 = vunpack.c.0.s8 %v5053
    %v5055 = vlaneseq
    %v5056 = vshrl.u32 %v5055, 7
    %v5057 = vsub.s32 %v5054, %v5056
    %v5058 = vrot.slane %v5050, %v5057
    %v5060 = vunpack.c.l.s4 1966171168
    %v5061 = vunpack.c.0.s8 %v5060
    %v5062 = vlaneseq
    %v5063 = vshrl.u32 %v5062, 7
    %v5064 = vsub.s32 %v5061, %v5063
    %v5065 = vrot.slane %v5051, %v5064
    %v5066 = vcombine.low %v5058, %v5065
    %v5067 = vcombine.low %v957, %v961
    %v5068 = vcombine.low %v965, %v969
    %v5069 = vcombine.low %v973, %v977
    %v5070 = vcombine.low %v981, %v985
    %v5072 = vunpack.c.l.s4 1966171168
    %v5073 = vunpack.c.0.s8 %v5072
    %v5074 = vlaneseq
    %v5075 = vshrl.u32 %v5074, 7
    %v5076 = vsub.s32 %v5073, %v5075
    %v5077 = vrot.slane %v5067, %v5076
    %v5079 = vunpack.c.l.s4 1966171168
    %v5080 = vunpack.c.0.s8 %v5079
    %v5081 = vlaneseq
    %v5082 = vshrl.u32 %v5081, 7
    %v5083 = vsub.s32 %v5080, %v5082
    %v5084 = vrot.slane %v5068, %v5083
    %v5086 = vunpack.c.l.s4 1966171168
    %v5087 = vunpack.c.0.s8 %v5086
    %v5088 = vlaneseq
    %v5089 = vshrl.u32 %v5088, 7
    %v5090 = vsub.s32 %v5087, %v5089
    %v5091 = vrot.slane %v5069, %v5090
    %v5093 = vunpack.c.l.s4 1966171168
    %v5094 = vunpack.c.0.s8 %v5093
    %v5095 = vlaneseq
    %v5096 = vshrl.u32 %v5095, 7
    %v5097 = vsub.s32 %v5094, %v5096
    %v5098 = vrot.slane %v5070, %v5097
    %v5099 = vcombine.low %v5077, %v5084
    %v5100 = vcombine.low %v5091, %v5098
    %v5102 = vunpack.c.l.s4 1966171168
    %v5103 = vunpack.c.0.s8 %v5102
    %v5104 = vlaneseq
    %v5105 = vshrl.u32 %v5104, 7
    %v5106 = vsub.s32 %v5103, %v5105
    %v5107 = vrot.slane %v5099, %v5106
    %v5109 = vunpack.c.l.s4 1966171168
    %v5110 = vunpack.c.0.s8 %v5109
    %v5111 = vlaneseq
    %v5112 = vshrl.u32 %v5111, 7
    %v5113 = vsub.s32 %v5110, %v5112
    %v5114 = vrot.slane %v5100, %v5113
    %v5115 = vcombine.low %v5107, %v5114
    %v5116 = vcombine.low %v989, %v993
    %v5117 = vcombine.low %v997, %v1001
    %v5118 = vcombine.low %v1005, %v1009
    %v5119 = vcombine.low %v1013, %v1017
    %v5121 = vunpack.c.l.s4 1966171168
    %v5122 = vunpack.c.0.s8 %v5121
    %v5123 = vlaneseq
    %v5124 = vshrl.u32 %v5123, 7
    %v5125 = vsub.s32 %v5122, %v5124
    %v5126 = vrot.slane %v5116, %v5125
    %v5128 = vunpack.c.l.s4 1966171168
    %v5129 = vunpack.c.0.s8 %v5128
    %v5130 = vlaneseq
    %v5131 = vshrl.u32 %v5130, 7
    %v5132 = vsub.s32 %v5129, %v5131
    %v5133 = vrot.slane %v5117, %v5132
    %v5135 = vunpack.c.l.s4 1966171168
    %v5136 = vunpack.c.0.s8 %v5135
    %v5137 = vlaneseq
    %v5138 = vshrl.u32 %v5137, 7
    %v5139 = vsub.s32 %v5136, %v5138
    %v5140 = vrot.slane %v5118, %v5139
    %v5142 = vunpack.c.l.s4 1966171168
    %v5143 = vunpack.c.0.s8 %v5142
    %v5144 = vlaneseq
    %v5145 = vshrl.u32 %v5144, 7
    %v5146 = vsub.s32 %v5143, %v5145
    %v5147 = vrot.slane %v5119, %v5146
    %v5148 = vcombine.low %v5126, %v5133
    %v5149 = vcombine.low %v5140, %v5147
    %v5151 = vunpack.c.l.s4 1966171168
    %v5152 = vunpack.c.0.s8 %v5151
    %v5153 = vlaneseq
    %v5154 = vshrl.u32 %v5153, 7
    %v5155 = vsub.s32 %v5152, %v5154
    %v5156 = vrot.slane %v5148, %v5155
    %v5158 = vunpack.c.l.s4 1966171168
    %v5159 = vunpack.c.0.s8 %v5158
    %v5160 = vlaneseq
    %v5161 = vshrl.u32 %v5160, 7
    %v5162 = vsub.s32 %v5159, %v5161
    %v5163 = vrot.slane %v5149, %v5162
    %v5164 = vcombine.low %v5156, %v5163
    %v5165 = vcombine.low %v1021, %v1025
    %v5166 = vcombine.low %v1029, %v1033
    %v5167 = vcombine.low %v1037, %v1041
    %v5168 = vcombine.low %v1045, %v1049
    %v5170 = vunpack.c.l.s4 1966171168
    %v5171 = vunpack.c.0.s8 %v5170
    %v5172 = vlaneseq
    %v5173 = vshrl.u32 %v5172, 7
    %v5174 = vsub.s32 %v5171, %v5173
    %v5175 = vrot.slane %v5165, %v5174
    %v5177 = vunpack.c.l.s4 1966171168
    %v5178 = vunpack.c.0.s8 %v5177
    %v5179 = vlaneseq
    %v5180 = vshrl.u32 %v5179, 7
    %v5181 = vsub.s32 %v5178, %v5180
    %v5182 = vrot.slane %v5166, %v5181
    %v5184 = vunpack.c.l.s4 1966171168
    %v5185 = vunpack.c.0.s8 %v5184
    %v5186 = vlaneseq
    %v5187 = vshrl.u32 %v5186, 7
    %v5188 = vsub.s32 %v5185, %v5187
    %v5189 = vrot.slane %v5167, %v5188
    %v5191 = vunpack.c.l.s4 1966171168
    %v5192 = vunpack.c.0.s8 %v5191
    %v5193 = vlaneseq
    %v5194 = vshrl.u32 %v5193, 7
    %v5195 = vsub.s32 %v5192, %v5194
    %v5196 = vrot.slane %v5168, %v5195
    %v5197 = vcombine.low %v5175, %v5182
    %v5198 = vcombine.low %v5189, %v5196
    %v5200 = vunpack.c.l.s4 1966171168
    %v5201 = vunpack.c.0.s8 %v5200
    %v5202 = vlaneseq
    %v5203 = vshrl.u32 %v5202, 7
    %v5204 = vsub.s32 %v5201, %v5203
    %v5205 = vrot.slane %v5197, %v5204
    %v5207 = vunpack.c.l.s4 1966171168
    %v5208 = vunpack.c.0.s8 %v5207
    %v5209 = vlaneseq
    %v5210 = vshrl.u32 %v5209, 7
    %v5211 = vsub.s32 %v5208, %v5210
    %v5212 = vrot.slane %v5198, %v5211
    %v5213 = vcombine.low %v5205, %v5212
    %v5214 = vcombine.low %v1053, %v1057
    %v5215 = vcombine.low %v1061, %v1065
    %v5216 = vcombine.low %v1069, %v1073
    %v5217 = vcombine.low %v1077, %v1081
    %v5219 = vunpack.c.l.s4 1966171168
    %v5220 = vunpack.c.0.s8 %v5219
    %v5221 = vlaneseq
    %v5222 = vshrl.u32 %v5221, 7
    %v5223 = vsub.s32 %v5220, %v5222
    %v5224 = vrot.slane %v5214, %v5223
    %v5226 = vunpack.c.l.s4 1966171168
    %v5227 = vunpack.c.0.s8 %v5226
    %v5228 = vlaneseq
    %v5229 = vshrl.u32 %v5228, 7
    %v5230 = vsub.s32 %v5227, %v5229
    %v5231 = vrot.slane %v5215, %v5230
    %v5233 = vunpack.c.l.s4 1966171168
    %v5234 = vunpack.c.0.s8 %v5233
    %v5235 = vlaneseq
    %v5236 = vshrl.u32 %v5235, 7
    %v5237 = vsub.s32 %v5234, %v5236
    %v5238 = vrot.slane %v5216, %v5237
    %v5240 = vunpack.c.l.s4 1966171168
    %v5241 = vunpack.c.0.s8 %v5240
    %v5242 = vlaneseq
    %v5243 = vshrl.u32 %v5242, 7
    %v5244 = vsub.s32 %v5241, %v5243
    %v5245 = vrot.slane %v5217, %v5244
    %v5246 = vcombine.low %v5224, %v5231
    %v5247 = vcombine.low %v5238, %v5245
    %v5249 = vunpack.c.l.s4 1966171168
    %v5250 = vunpack.c.0.s8 %v5249
    %v5251 = vlaneseq
    %v5252 = vshrl.u32 %v5251, 7
    %v5253 = vsub.s32 %v5250, %v5252
    %v5254 = vrot.slane %v5246, %v5253
    %v5256 = vunpack.c.l.s4 1966171168
    %v5257 = vunpack.c.0.s8 %v5256
    %v5258 = vlaneseq
    %v5259 = vshrl.u32 %v5258, 7
    %v5260 = vsub.s32 %v5257, %v5259
    %v5261 = vrot.slane %v5247, %v5260
    %v5262 = vcombine.low %v5254, %v5261
    %v5263 = vcombine.low %v1085, %v1089
    %v5264 = vcombine.low %v1093, %v1097
    %v5265 = vcombine.low %v1101, %v1105
    %v5266 = vcombine.low %v1109, %v1113
    %v5268 = vunpack.c.l.s4 1966171168
    %v5269 = vunpack.c.0.s8 %v5268
    %v5270 = vlaneseq
    %v5271 = vshrl.u32 %v5270, 7
    %v5272 = vsub.s32 %v5269, %v5271
    %v5273 = vrot.slane %v5263, %v5272
    %v5275 = vunpack.c.l.s4 1966171168
    %v5276 = vunpack.c.0.s8 %v5275
    %v5277 = vlaneseq
    %v5278 = vshrl.u32 %v5277, 7
    %v5279 = vsub.s32 %v5276, %v5278
    %v5280 = vrot.slane %v5264, %v5279
    %v5282 = vunpack.c.l.s4 1966171168
    %v5283 = vunpack.c.0.s8 %v5282
    %v5284 = vlaneseq
    %v5285 = vshrl.u32 %v5284, 7
    %v5286 = vsub.s32 %v5283, %v5285
    %v5287 = vrot.slane %v5265, %v5286
    %v5289 = vunpack.c.l.s4 1966171168
    %v5290 = vunpack.c.0.s8 %v5289
    %v5291 = vlaneseq
    %v5292 = vshrl.u32 %v5291, 7
    %v5293 = vsub.s32 %v5290, %v5292
    %v5294 = vrot.slane %v5266, %v5293
    %v5295 = vcombine.low %v5273, %v5280
    %v5296 = vcombine.low %v5287, %v5294
    %v5298 = vunpack.c.l.s4 1966171168
    %v5299 = vunpack.c.0.s8 %v5298
    %v5300 = vlaneseq
    %v5301 = vshrl.u32 %v5300, 7
    %v5302 = vsub.s32 %v5299, %v5301
    %v5303 = vrot.slane %v5295, %v5302
    %v5305 = vunpack.c.l.s4 1966171168
    %v5306 = vunpack.c.0.s8 %v5305
    %v5307 = vlaneseq
    %v5308 = vshrl.u32 %v5307, 7
    %v5309 = vsub.s32 %v5306, %v5308
    %v5310 = vrot.slane %v5296, %v5309
    %v5311 = vcombine.low %v5303, %v5310
    %v5312 = vcombine.low %v1117, %v1121
    %v5313 = vcombine.low %v1125, %v1129
    %v5314 = vcombine.low %v1133, %v1137
    %v5315 = vcombine.low %v1141, %v1145
    %v5317 = vunpack.c.l.s4 1966171168
    %v5318 = vunpack.c.0.s8 %v5317
    %v5319 = vlaneseq
    %v5320 = vshrl.u32 %v5319, 7
    %v5321 = vsub.s32 %v5318, %v5320
    %v5322 = vrot.slane %v5312, %v5321
    %v5324 = vunpack.c.l.s4 1966171168
    %v5325 = vunpack.c.0.s8 %v5324
    %v5326 = vlaneseq
    %v5327 = vshrl.u32 %v5326, 7
    %v5328 = vsub.s32 %v5325, %v5327
    %v5329 = vrot.slane %v5313, %v5328
    %v5331 = vunpack.c.l.s4 1966171168
    %v5332 = vunpack.c.0.s8 %v5331
    %v5333 = vlaneseq
    %v5334 = vshrl.u32 %v5333, 7
    %v5335 = vsub.s32 %v5332, %v5334
    %v5336 = vrot.slane %v5314, %v5335
    %v5338 = vunpack.c.l.s4 1966171168
    %v5339 = vunpack.c.0.s8 %v5338
    %v5340 = vlaneseq
    %v5341 = vshrl.u32 %v5340, 7
    %v5342 = vsub.s32 %v5339, %v5341
    %v5343 = vrot.slane %v5315, %v5342
    %v5344 = vcombine.low %v5322, %v5329
    %v5345 = vcombine.low %v5336, %v5343
    %v5347 = vunpack.c.l.s4 1966171168
    %v5348 = vunpack.c.0.s8 %v5347
    %v5349 = vlaneseq
    %v5350 = vshrl.u32 %v5349, 7
    %v5351 = vsub.s32 %v5348, %v5350
    %v5352 = vrot.slane %v5344, %v5351
    %v5354 = vunpack.c.l.s4 1966171168
    %v5355 = vunpack.c.0.s8 %v5354
    %v5356 = vlaneseq
    %v5357 = vshrl.u32 %v5356, 7
    %v5358 = vsub.s32 %v5355, %v5357
    %v5359 = vrot.slane %v5345, %v5358
    %v5360 = vcombine.low %v5352, %v5359
    %v5361 = vcombine.low %v1149, %v1153
    %v5362 = vcombine.low %v1157, %v1161
    %v5363 = vcombine.low %v1165, %v1169
    %v5364 = vcombine.low %v1173, %v1177
    %v5366 = vunpack.c.l.s4 1966171168
    %v5367 = vunpack.c.0.s8 %v5366
    %v5368 = vlaneseq
    %v5369 = vshrl.u32 %v5368, 7
    %v5370 = vsub.s32 %v5367, %v5369
    %v5371 = vrot.slane %v5361, %v5370
    %v5373 = vunpack.c.l.s4 1966171168
    %v5374 = vunpack.c.0.s8 %v5373
    %v5375 = vlaneseq
    %v5376 = vshrl.u32 %v5375, 7
    %v5377 = vsub.s32 %v5374, %v5376
    %v5378 = vrot.slane %v5362, %v5377
    %v5380 = vunpack.c.l.s4 1966171168
    %v5381 = vunpack.c.0.s8 %v5380
    %v5382 = vlaneseq
    %v5383 = vshrl.u32 %v5382, 7
    %v5384 = vsub.s32 %v5381, %v5383
    %v5385 = vrot.slane %v5363, %v5384
    %v5387 = vunpack.c.l.s4 1966171168
    %v5388 = vunpack.c.0.s8 %v5387
    %v5389 = vlaneseq
    %v5390 = vshrl.u32 %v5389, 7
    %v5391 = vsub.s32 %v5388, %v5390
    %v5392 = vrot.slane %v5364, %v5391
    %v5393 = vcombine.low %v5371, %v5378
    %v5394 = vcombine.low %v5385, %v5392
    %v5396 = vunpack.c.l.s4 1966171168
    %v5397 = vunpack.c.0.s8 %v5396
    %v5398 = vlaneseq
    %v5399 = vshrl.u32 %v5398, 7
    %v5400 = vsub.s32 %v5397, %v5399
    %v5401 = vrot.slane %v5393, %v5400
    %v5403 = vunpack.c.l.s4 1966171168
    %v5404 = vunpack.c.0.s8 %v5403
    %v5405 = vlaneseq
    %v5406 = vshrl.u32 %v5405, 7
    %v5407 = vsub.s32 %v5404, %v5406
    %v5408 = vrot.slane %v5394, %v5407
    %v5409 = vcombine.low %v5401, %v5408
    %v5410 = vcombine.low %v1181, %v1185
    %v5411 = vcombine.low %v1189, %v1193
    %v5412 = vcombine.low %v1197, %v1201
    %v5413 = vcombine.low %v1205, %v1209
    %v5415 = vunpack.c.l.s4 1966171168
    %v5416 = vunpack.c.0.s8 %v5415
    %v5417 = vlaneseq
    %v5418 = vshrl.u32 %v5417, 7
    %v5419 = vsub.s32 %v5416, %v5418
    %v5420 = vrot.slane %v5410, %v5419
    %v5422 = vunpack.c.l.s4 1966171168
    %v5423 = vunpack.c.0.s8 %v5422
    %v5424 = vlaneseq
    %v5425 = vshrl.u32 %v5424, 7
    %v5426 = vsub.s32 %v5423, %v5425
    %v5427 = vrot.slane %v5411, %v5426
    %v5429 = vunpack.c.l.s4 1966171168
    %v5430 = vunpack.c.0.s8 %v5429
    %v5431 = vlaneseq
    %v5432 = vshrl.u32 %v5431, 7
    %v5433 = vsub.s32 %v5430, %v5432
    %v5434 = vrot.slane %v5412, %v5433
    %v5436 = vunpack.c.l.s4 1966171168
    %v5437 = vunpack.c.0.s8 %v5436
    %v5438 = vlaneseq
    %v5439 = vshrl.u32 %v5438, 7
    %v5440 = vsub.s32 %v5437, %v5439
    %v5441 = vrot.slane %v5413, %v5440
    %v5442 = vcombine.low %v5420, %v5427
    %v5443 = vcombine.low %v5434, %v5441
    %v5445 = vunpack.c.l.s4 1966171168
    %v5446 = vunpack.c.0.s8 %v5445
    %v5447 = vlaneseq
    %v5448 = vshrl.u32 %v5447, 7
    %v5449 = vsub.s32 %v5446, %v5448
    %v5450 = vrot.slane %v5442, %v5449
    %v5452 = vunpack.c.l.s4 1966171168
    %v5453 = vunpack.c.0.s8 %v5452
    %v5454 = vlaneseq
    %v5455 = vshrl.u32 %v5454, 7
    %v5456 = vsub.s32 %v5453, %v5455
    %v5457 = vrot.slane %v5443, %v5456
    %v5458 = vcombine.low %v5450, %v5457
    %v5459 = vcombine.low %v1213, %v1217
    %v5460 = vcombine.low %v1221, %v1225
    %v5461 = vcombine.low %v1229, %v1233
    %v5462 = vcombine.low %v1237, %v1241
    %v5464 = vunpack.c.l.s4 1966171168
    %v5465 = vunpack.c.0.s8 %v5464
    %v5466 = vlaneseq
    %v5467 = vshrl.u32 %v5466, 7
    %v5468 = vsub.s32 %v5465, %v5467
    %v5469 = vrot.slane %v5459, %v5468
    %v5471 = vunpack.c.l.s4 1966171168
    %v5472 = vunpack.c.0.s8 %v5471
    %v5473 = vlaneseq
    %v5474 = vshrl.u32 %v5473, 7
    %v5475 = vsub.s32 %v5472, %v5474
    %v5476 = vrot.slane %v5460, %v5475
    %v5478 = vunpack.c.l.s4 1966171168
    %v5479 = vunpack.c.0.s8 %v5478
    %v5480 = vlaneseq
    %v5481 = vshrl.u32 %v5480, 7
    %v5482 = vsub.s32 %v5479, %v5481
    %v5483 = vrot.slane %v5461, %v5482
    %v5485 = vunpack.c.l.s4 1966171168
    %v5486 = vunpack.c.0.s8 %v5485
    %v5487 = vlaneseq
    %v5488 = vshrl.u32 %v5487, 7
    %v5489 = vsub.s32 %v5486, %v5488
    %v5490 = vrot.slane %v5462, %v5489
    %v5491 = vcombine.low %v5469, %v5476
    %v5492 = vcombine.low %v5483, %v5490
    %v5494 = vunpack.c.l.s4 1966171168
    %v5495 = vunpack.c.0.s8 %v5494
    %v5496 = vlaneseq
    %v5497 = vshrl.u32 %v5496, 7
    %v5498 = vsub.s32 %v5495, %v5497
    %v5499 = vrot.slane %v5491, %v5498
    %v5501 = vunpack.c.l.s4 1966171168
    %v5502 = vunpack.c.0.s8 %v5501
    %v5503 = vlaneseq
    %v5504 = vshrl.u32 %v5503, 7
    %v5505 = vsub.s32 %v5502, %v5504
    %v5506 = vrot.slane %v5492, %v5505
    %v5507 = vcombine.low %v5499, %v5506
    %v5508 = vcombine.low %v1245, %v1249
    %v5509 = vcombine.low %v1253, %v1257
    %v5510 = vcombine.low %v1261, %v1265
    %v5511 = vcombine.low %v1269, %v1273
    %v5513 = vunpack.c.l.s4 1966171168
    %v5514 = vunpack.c.0.s8 %v5513
    %v5515 = vlaneseq
    %v5516 = vshrl.u32 %v5515, 7
    %v5517 = vsub.s32 %v5514, %v5516
    %v5518 = vrot.slane %v5508, %v5517
    %v5520 = vunpack.c.l.s4 1966171168
    %v5521 = vunpack.c.0.s8 %v5520
    %v5522 = vlaneseq
    %v5523 = vshrl.u32 %v5522, 7
    %v5524 = vsub.s32 %v5521, %v5523
    %v5525 = vrot.slane %v5509, %v5524
    %v5527 = vunpack.c.l.s4 1966171168
    %v5528 = vunpack.c.0.s8 %v5527
    %v5529 = vlaneseq
    %v5530 = vshrl.u32 %v5529, 7
    %v5531 = vsub.s32 %v5528, %v5530
    %v5532 = vrot.slane %v5510, %v5531
    %v5534 = vunpack.c.l.s4 1966171168
    %v5535 = vunpack.c.0.s8 %v5534
    %v5536 = vlaneseq
    %v5537 = vshrl.u32 %v5536, 7
    %v5538 = vsub.s32 %v5535, %v5537
    %v5539 = vrot.slane %v5511, %v5538
    %v5540 = vcombine.low %v5518, %v5525
    %v5541 = vcombine.low %v5532, %v5539
    %v5543 = vunpack.c.l.s4 1966171168
    %v5544 = vunpack.c.0.s8 %v5543
    %v5545 = vlaneseq
    %v5546 = vshrl.u32 %v5545, 7
    %v5547 = vsub.s32 %v5544, %v5546
    %v5548 = vrot.slane %v5540, %v5547
    %v5550 = vunpack.c.l.s4 1966171168
    %v5551 = vunpack.c.0.s8 %v5550
    %v5552 = vlaneseq
    %v5553 = vshrl.u32 %v5552, 7
    %v5554 = vsub.s32 %v5551, %v5553
    %v5555 = vrot.slane %v5541, %v5554
    %v5556 = vcombine.low %v5548, %v5555
    %v5557 = vcombine.low %v1277, %v1281
    %v5558 = vcombine.low %v1285, %v1289
    %v5559 = vcombine.low %v1293, %v1297
    %v5560 = vcombine.low %v1301, %v1305
    %v5562 = vunpack.c.l.s4 1966171168
    %v5563 = vunpack.c.0.s8 %v5562
    %v5564 = vlaneseq
    %v5565 = vshrl.u32 %v5564, 7
    %v5566 = vsub.s32 %v5563, %v5565
    %v5567 = vrot.slane %v5557, %v5566
    %v5569 = vunpack.c.l.s4 1966171168
    %v5570 = vunpack.c.0.s8 %v5569
    %v5571 = vlaneseq
    %v5572 = vshrl.u32 %v5571, 7
    %v5573 = vsub.s32 %v5570, %v5572
    %v5574 = vrot.slane %v5558, %v5573
    %v5576 = vunpack.c.l.s4 1966171168
    %v5577 = vunpack.c.0.s8 %v5576
    %v5578 = vlaneseq
    %v5579 = vshrl.u32 %v5578, 7
    %v5580 = vsub.s32 %v5577, %v5579
    %v5581 = vrot.slane %v5559, %v5580
    %v5583 = vunpack.c.l.s4 1966171168
    %v5584 = vunpack.c.0.s8 %v5583
    %v5585 = vlaneseq
    %v5586 = vshrl.u32 %v5585, 7
    %v5587 = vsub.s32 %v5584, %v5586
    %v5588 = vrot.slane %v5560, %v5587
    %v5589 = vcombine.low %v5567, %v5574
    %v5590 = vcombine.low %v5581, %v5588
    %v5592 = vunpack.c.l.s4 1966171168
    %v5593 = vunpack.c.0.s8 %v5592
    %v5594 = vlaneseq
    %v5595 = vshrl.u32 %v5594, 7
    %v5596 = vsub.s32 %v5593, %v5595
    %v5597 = vrot.slane %v5589, %v5596
    %v5599 = vunpack.c.l.s4 1966171168
    %v5600 = vunpack.c.0.s8 %v5599
    %v5601 = vlaneseq
    %v5602 = vshrl.u32 %v5601, 7
    %v5603 = vsub.s32 %v5600, %v5602
    %v5604 = vrot.slane %v5590, %v5603
    %v5605 = vcombine.low %v5597, %v5604
    %v5606 = vcombine.low %v1309, %v1313
    %v5607 = vcombine.low %v1317, %v1321
    %v5608 = vcombine.low %v1325, %v1329
    %v5609 = vcombine.low %v1333, %v1337
    %v5611 = vunpack.c.l.s4 1966171168
    %v5612 = vunpack.c.0.s8 %v5611
    %v5613 = vlaneseq
    %v5614 = vshrl.u32 %v5613, 7
    %v5615 = vsub.s32 %v5612, %v5614
    %v5616 = vrot.slane %v5606, %v5615
    %v5618 = vunpack.c.l.s4 1966171168
    %v5619 = vunpack.c.0.s8 %v5618
    %v5620 = vlaneseq
    %v5621 = vshrl.u32 %v5620, 7
    %v5622 = vsub.s32 %v5619, %v5621
    %v5623 = vrot.slane %v5607, %v5622
    %v5625 = vunpack.c.l.s4 1966171168
    %v5626 = vunpack.c.0.s8 %v5625
    %v5627 = vlaneseq
    %v5628 = vshrl.u32 %v5627, 7
    %v5629 = vsub.s32 %v5626, %v5628
    %v5630 = vrot.slane %v5608, %v5629
    %v5632 = vunpack.c.l.s4 1966171168
    %v5633 = vunpack.c.0.s8 %v5632
    %v5634 = vlaneseq
    %v5635 = vshrl.u32 %v5634, 7
    %v5636 = vsub.s32 %v5633, %v5635
    %v5637 = vrot.slane %v5609, %v5636
    %v5638 = vcombine.low %v5616, %v5623
    %v5639 = vcombine.low %v5630, %v5637
    %v5641 = vunpack.c.l.s4 1966171168
    %v5642 = vunpack.c.0.s8 %v5641
    %v5643 = vlaneseq
    %v5644 = vshrl.u32 %v5643, 7
    %v5645 = vsub.s32 %v5642, %v5644
    %v5646 = vrot.slane %v5638, %v5645
    %v5648 = vunpack.c.l.s4 1966171168
    %v5649 = vunpack.c.0.s8 %v5648
    %v5650 = vlaneseq
    %v5651 = vshrl.u32 %v5650, 7
    %v5652 = vsub.s32 %v5649, %v5651
    %v5653 = vrot.slane %v5639, %v5652
    %v5654 = vcombine.low %v5646, %v5653
    %v5655 = vcombine.low %v1341, %v1345
    %v5656 = vcombine.low %v1349, %v1353
    %v5657 = vcombine.low %v1357, %v1361
    %v5658 = vcombine.low %v1365, %v1369
    %v5660 = vunpack.c.l.s4 1966171168
    %v5661 = vunpack.c.0.s8 %v5660
    %v5662 = vlaneseq
    %v5663 = vshrl.u32 %v5662, 7
    %v5664 = vsub.s32 %v5661, %v5663
    %v5665 = vrot.slane %v5655, %v5664
    %v5667 = vunpack.c.l.s4 1966171168
    %v5668 = vunpack.c.0.s8 %v5667
    %v5669 = vlaneseq
    %v5670 = vshrl.u32 %v5669, 7
    %v5671 = vsub.s32 %v5668, %v5670
    %v5672 = vrot.slane %v5656, %v5671
    %v5674 = vunpack.c.l.s4 1966171168
    %v5675 = vunpack.c.0.s8 %v5674
    %v5676 = vlaneseq
    %v5677 = vshrl.u32 %v5676, 7
    %v5678 = vsub.s32 %v5675, %v5677
    %v5679 = vrot.slane %v5657, %v5678
    %v5681 = vunpack.c.l.s4 1966171168
    %v5682 = vunpack.c.0.s8 %v5681
    %v5683 = vlaneseq
    %v5684 = vshrl.u32 %v5683, 7
    %v5685 = vsub.s32 %v5682, %v5684
    %v5686 = vrot.slane %v5658, %v5685
    %v5687 = vcombine.low %v5665, %v5672
    %v5688 = vcombine.low %v5679, %v5686
    %v5690 = vunpack.c.l.s4 1966171168
    %v5691 = vunpack.c.0.s8 %v5690
    %v5692 = vlaneseq
    %v5693 = vshrl.u32 %v5692, 7
    %v5694 = vsub.s32 %v5691, %v5693
    %v5695 = vrot.slane %v5687, %v5694
    %v5697 = vunpack.c.l.s4 1966171168
    %v5698 = vunpack.c.0.s8 %v5697
    %v5699 = vlaneseq
    %v5700 = vshrl.u32 %v5699, 7
    %v5701 = vsub.s32 %v5698, %v5700
    %v5702 = vrot.slane %v5688, %v5701
    %v5703 = vcombine.low %v5695, %v5702
    %v5704 = vcombine.low %v1373, %v1377
    %v5705 = vcombine.low %v1381, %v1385
    %v5706 = vcombine.low %v1389, %v1393
    %v5707 = vcombine.low %v1397, %v1401
    %v5709 = vunpack.c.l.s4 1966171168
    %v5710 = vunpack.c.0.s8 %v5709
    %v5711 = vlaneseq
    %v5712 = vshrl.u32 %v5711, 7
    %v5713 = vsub.s32 %v5710, %v5712
    %v5714 = vrot.slane %v5704, %v5713
    %v5716 = vunpack.c.l.s4 1966171168
    %v5717 = vunpack.c.0.s8 %v5716
    %v5718 = vlaneseq
    %v5719 = vshrl.u32 %v5718, 7
    %v5720 = vsub.s32 %v5717, %v5719
    %v5721 = vrot.slane %v5705, %v5720
    %v5723 = vunpack.c.l.s4 1966171168
    %v5724 = vunpack.c.0.s8 %v5723
    %v5725 = vlaneseq
    %v5726 = vshrl.u32 %v5725, 7
    %v5727 = vsub.s32 %v5724, %v5726
    %v5728 = vrot.slane %v5706, %v5727
    %v5730 = vunpack.c.l.s4 1966171168
    %v5731 = vunpack.c.0.s8 %v5730
    %v5732 = vlaneseq
    %v5733 = vshrl.u32 %v5732, 7
    %v5734 = vsub.s32 %v5731, %v5733
    %v5735 = vrot.slane %v5707, %v5734
    %v5736 = vcombine.low %v5714, %v5721
    %v5737 = vcombine.low %v5728, %v5735
    %v5739 = vunpack.c.l.s4 1966171168
    %v5740 = vunpack.c.0.s8 %v5739
    %v5741 = vlaneseq
    %v5742 = vshrl.u32 %v5741, 7
    %v5743 = vsub.s32 %v5740, %v5742
    %v5744 = vrot.slane %v5736, %v5743
    %v5746 = vunpack.c.l.s4 1966171168
    %v5747 = vunpack.c.0.s8 %v5746
    %v5748 = vlaneseq
    %v5749 = vshrl.u32 %v5748, 7
    %v5750 = vsub.s32 %v5747, %v5749
    %v5751 = vrot.slane %v5737, %v5750
    %v5752 = vcombine.low %v5744, %v5751
    %v5753 = vcombine.low %v1405, %v1409
    %v5754 = vcombine.low %v1413, %v1417
    %v5755 = vcombine.low %v1421, %v1425
    %v5756 = vcombine.low %v1429, %v1433
    %v5758 = vunpack.c.l.s4 1966171168
    %v5759 = vunpack.c.0.s8 %v5758
    %v5760 = vlaneseq
    %v5761 = vshrl.u32 %v5760, 7
    %v5762 = vsub.s32 %v5759, %v5761
    %v5763 = vrot.slane %v5753, %v5762
    %v5765 = vunpack.c.l.s4 1966171168
    %v5766 = vunpack.c.0.s8 %v5765
    %v5767 = vlaneseq
    %v5768 = vshrl.u32 %v5767, 7
    %v5769 = vsub.s32 %v5766, %v5768
    %v5770 = vrot.slane %v5754, %v5769
    %v5772 = vunpack.c.l.s4 1966171168
    %v5773 = vunpack.c.0.s8 %v5772
    %v5774 = vlaneseq
    %v5775 = vshrl.u32 %v5774, 7
    %v5776 = vsub.s32 %v5773, %v5775
    %v5777 = vrot.slane %v5755, %v5776
    %v5779 = vunpack.c.l.s4 1966171168
    %v5780 = vunpack.c.0.s8 %v5779
    %v5781 = vlaneseq
    %v5782 = vshrl.u32 %v5781, 7
    %v5783 = vsub.s32 %v5780, %v5782
    %v5784 = vrot.slane %v5756, %v5783
    %v5785 = vcombine.low %v5763, %v5770
    %v5786 = vcombine.low %v5777, %v5784
    %v5788 = vunpack.c.l.s4 1966171168
    %v5789 = vunpack.c.0.s8 %v5788
    %v5790 = vlaneseq
    %v5791 = vshrl.u32 %v5790, 7
    %v5792 = vsub.s32 %v5789, %v5791
    %v5793 = vrot.slane %v5785, %v5792
    %v5795 = vunpack.c.l.s4 1966171168
    %v5796 = vunpack.c.0.s8 %v5795
    %v5797 = vlaneseq
    %v5798 = vshrl.u32 %v5797, 7
    %v5799 = vsub.s32 %v5796, %v5798
    %v5800 = vrot.slane %v5786, %v5799
    %v5801 = vcombine.low %v5793, %v5800
    %v5802 = vcombine.low %v1437, %v1441
    %v5803 = vcombine.low %v1445, %v1449
    %v5804 = vcombine.low %v1453, %v1457
    %v5805 = vcombine.low %v1461, %v1465
    %v5807 = vunpack.c.l.s4 1966171168
    %v5808 = vunpack.c.0.s8 %v5807
    %v5809 = vlaneseq
    %v5810 = vshrl.u32 %v5809, 7
    %v5811 = vsub.s32 %v5808, %v5810
    %v5812 = vrot.slane %v5802, %v5811
    %v5814 = vunpack.c.l.s4 1966171168
    %v5815 = vunpack.c.0.s8 %v5814
    %v5816 = vlaneseq
    %v5817 = vshrl.u32 %v5816, 7
    %v5818 = vsub.s32 %v5815, %v5817
    %v5819 = vrot.slane %v5803, %v5818
    %v5821 = vunpack.c.l.s4 1966171168
    %v5822 = vunpack.c.0.s8 %v5821
    %v5823 = vlaneseq
    %v5824 = vshrl.u32 %v5823, 7
    %v5825 = vsub.s32 %v5822, %v5824
    %v5826 = vrot.slane %v5804, %v5825
    %v5828 = vunpack.c.l.s4 1966171168
    %v5829 = vunpack.c.0.s8 %v5828
    %v5830 = vlaneseq
    %v5831 = vshrl.u32 %v5830, 7
    %v5832 = vsub.s32 %v5829, %v5831
    %v5833 = vrot.slane %v5805, %v5832
    %v5834 = vcombine.low %v5812, %v5819
    %v5835 = vcombine.low %v5826, %v5833
    %v5837 = vunpack.c.l.s4 1966171168
    %v5838 = vunpack.c.0.s8 %v5837
    %v5839 = vlaneseq
    %v5840 = vshrl.u32 %v5839, 7
    %v5841 = vsub.s32 %v5838, %v5840
    %v5842 = vrot.slane %v5834, %v5841
    %v5844 = vunpack.c.l.s4 1966171168
    %v5845 = vunpack.c.0.s8 %v5844
    %v5846 = vlaneseq
    %v5847 = vshrl.u32 %v5846, 7
    %v5848 = vsub.s32 %v5845, %v5847
    %v5849 = vrot.slane %v5835, %v5848
    %v5850 = vcombine.low %v5842, %v5849
    %v5851 = vcombine.low %v1469, %v1473
    %v5852 = vcombine.low %v1477, %v1481
    %v5853 = vcombine.low %v1485, %v1489
    %v5854 = vcombine.low %v1493, %v1497
    %v5856 = vunpack.c.l.s4 1966171168
    %v5857 = vunpack.c.0.s8 %v5856
    %v5858 = vlaneseq
    %v5859 = vshrl.u32 %v5858, 7
    %v5860 = vsub.s32 %v5857, %v5859
    %v5861 = vrot.slane %v5851, %v5860
    %v5863 = vunpack.c.l.s4 1966171168
    %v5864 = vunpack.c.0.s8 %v5863
    %v5865 = vlaneseq
    %v5866 = vshrl.u32 %v5865, 7
    %v5867 = vsub.s32 %v5864, %v5866
    %v5868 = vrot.slane %v5852, %v5867
    %v5870 = vunpack.c.l.s4 1966171168
    %v5871 = vunpack.c.0.s8 %v5870
    %v5872 = vlaneseq
    %v5873 = vshrl.u32 %v5872, 7
    %v5874 = vsub.s32 %v5871, %v5873
    %v5875 = vrot.slane %v5853, %v5874
    %v5877 = vunpack.c.l.s4 1966171168
    %v5878 = vunpack.c.0.s8 %v5877
    %v5879 = vlaneseq
    %v5880 = vshrl.u32 %v5879, 7
    %v5881 = vsub.s32 %v5878, %v5880
    %v5882 = vrot.slane %v5854, %v5881
    %v5883 = vcombine.low %v5861, %v5868
    %v5884 = vcombine.low %v5875, %v5882
    %v5886 = vunpack.c.l.s4 1966171168
    %v5887 = vunpack.c.0.s8 %v5886
    %v5888 = vlaneseq
    %v5889 = vshrl.u32 %v5888, 7
    %v5890 = vsub.s32 %v5887, %v5889
    %v5891 = vrot.slane %v5883, %v5890
    %v5893 = vunpack.c.l.s4 1966171168
    %v5894 = vunpack.c.0.s8 %v5893
    %v5895 = vlaneseq
    %v5896 = vshrl.u32 %v5895, 7
    %v5897 = vsub.s32 %v5894, %v5896
    %v5898 = vrot.slane %v5884, %v5897
    %v5899 = vcombine.low %v5891, %v5898
    %v5900 = vcombine.low %v1501, %v1505
    %v5901 = vcombine.low %v1509, %v1513
    %v5902 = vcombine.low %v1517, %v1521
    %v5903 = vcombine.low %v1525, %v1529
    %v5905 = vunpack.c.l.s4 1966171168
    %v5906 = vunpack.c.0.s8 %v5905
    %v5907 = vlaneseq
    %v5908 = vshrl.u32 %v5907, 7
    %v5909 = vsub.s32 %v5906, %v5908
    %v5910 = vrot.slane %v5900, %v5909
    %v5912 = vunpack.c.l.s4 1966171168
    %v5913 = vunpack.c.0.s8 %v5912
    %v5914 = vlaneseq
    %v5915 = vshrl.u32 %v5914, 7
    %v5916 = vsub.s32 %v5913, %v5915
    %v5917 = vrot.slane %v5901, %v5916
    %v5919 = vunpack.c.l.s4 1966171168
    %v5920 = vunpack.c.0.s8 %v5919
    %v5921 = vlaneseq
    %v5922 = vshrl.u32 %v5921, 7
    %v5923 = vsub.s32 %v5920, %v5922
    %v5924 = vrot.slane %v5902, %v5923
    %v5926 = vunpack.c.l.s4 1966171168
    %v5927 = vunpack.c.0.s8 %v5926
    %v5928 = vlaneseq
    %v5929 = vshrl.u32 %v5928, 7
    %v5930 = vsub.s32 %v5927, %v5929
    %v5931 = vrot.slane %v5903, %v5930
    %v5932 = vcombine.low %v5910, %v5917
    %v5933 = vcombine.low %v5924, %v5931
    %v5935 = vunpack.c.l.s4 1966171168
    %v5936 = vunpack.c.0.s8 %v5935
    %v5937 = vlaneseq
    %v5938 = vshrl.u32 %v5937, 7
    %v5939 = vsub.s32 %v5936, %v5938
    %v5940 = vrot.slane %v5932, %v5939
    %v5942 = vunpack.c.l.s4 1966171168
    %v5943 = vunpack.c.0.s8 %v5942
    %v5944 = vlaneseq
    %v5945 = vshrl.u32 %v5944, 7
    %v5946 = vsub.s32 %v5943, %v5945
    %v5947 = vrot.slane %v5933, %v5946
    %v5948 = vcombine.low %v5940, %v5947
    %v5949 = vcombine.low %v1533, %v1537
    %v5950 = vcombine.low %v1541, %v1545
    %v5951 = vcombine.low %v1549, %v1553
    %v5952 = vcombine.low %v1557, %v1561
    %v5954 = vunpack.c.l.s4 1966171168
    %v5955 = vunpack.c.0.s8 %v5954
    %v5956 = vlaneseq
    %v5957 = vshrl.u32 %v5956, 7
    %v5958 = vsub.s32 %v5955, %v5957
    %v5959 = vrot.slane %v5949, %v5958
    %v5961 = vunpack.c.l.s4 1966171168
    %v5962 = vunpack.c.0.s8 %v5961
    %v5963 = vlaneseq
    %v5964 = vshrl.u32 %v5963, 7
    %v5965 = vsub.s32 %v5962, %v5964
    %v5966 = vrot.slane %v5950, %v5965
    %v5968 = vunpack.c.l.s4 1966171168
    %v5969 = vunpack.c.0.s8 %v5968
    %v5970 = vlaneseq
    %v5971 = vshrl.u32 %v5970, 7
    %v5972 = vsub.s32 %v5969, %v5971
    %v5973 = vrot.slane %v5951, %v5972
    %v5975 = vunpack.c.l.s4 1966171168
    %v5976 = vunpack.c.0.s8 %v5975
    %v5977 = vlaneseq
    %v5978 = vshrl.u32 %v5977, 7
    %v5979 = vsub.s32 %v5976, %v5978
    %v5980 = vrot.slane %v5952, %v5979
    %v5981 = vcombine.low %v5959, %v5966
    %v5982 = vcombine.low %v5973, %v5980
    %v5984 = vunpack.c.l.s4 1966171168
    %v5985 = vunpack.c.0.s8 %v5984
    %v5986 = vlaneseq
    %v5987 = vshrl.u32 %v5986, 7
    %v5988 = vsub.s32 %v5985, %v5987
    %v5989 = vrot.slane %v5981, %v5988
    %v5991 = vunpack.c.l.s4 1966171168
    %v5992 = vunpack.c.0.s8 %v5991
    %v5993 = vlaneseq
    %v5994 = vshrl.u32 %v5993, 7
    %v5995 = vsub.s32 %v5992, %v5994
    %v5996 = vrot.slane %v5982, %v5995
    %v5997 = vcombine.low %v5989, %v5996
    %v5998 = vcombine.low %v1565, %v1569
    %v5999 = vcombine.low %v1573, %v1577
    %v6000 = vcombine.low %v1581, %v1585
    %v6001 = vcombine.low %v1589, %v1593
    %v6003 = vunpack.c.l.s4 1966171168
    %v6004 = vunpack.c.0.s8 %v6003
    %v6005 = vlaneseq
    %v6006 = vshrl.u32 %v6005, 7
    %v6007 = vsub.s32 %v6004, %v6006
    %v6008 = vrot.slane %v5998, %v6007
    %v6010 = vunpack.c.l.s4 1966171168
    %v6011 = vunpack.c.0.s8 %v6010
    %v6012 = vlaneseq
    %v6013 = vshrl.u32 %v6012, 7
    %v6014 = vsub.s32 %v6011, %v6013
    %v6015 = vrot.slane %v5999, %v6014
    %v6017 = vunpack.c.l.s4 1966171168
    %v6018 = vunpack.c.0.s8 %v6017
    %v6019 = vlaneseq
    %v6020 = vshrl.u32 %v6019, 7
    %v6021 = vsub.s32 %v6018, %v6020
    %v6022 = vrot.slane %v6000, %v6021
    %v6024 = vunpack.c.l.s4 1966171168
    %v6025 = vunpack.c.0.s8 %v6024
    %v6026 = vlaneseq
    %v6027 = vshrl.u32 %v6026, 7
    %v6028 = vsub.s32 %v6025, %v6027
    %v6029 = vrot.slane %v6001, %v6028
    %v6030 = vcombine.low %v6008, %v6015
    %v6031 = vcombine.low %v6022, %v6029
    %v6033 = vunpack.c.l.s4 1966171168
    %v6034 = vunpack.c.0.s8 %v6033
    %v6035 = vlaneseq
    %v6036 = vshrl.u32 %v6035, 7
    %v6037 = vsub.s32 %v6034, %v6036
    %v6038 = vrot.slane %v6030, %v6037
    %v6040 = vunpack.c.l.s4 1966171168
    %v6041 = vunpack.c.0.s8 %v6040
    %v6042 = vlaneseq
    %v6043 = vshrl.u32 %v6042, 7
    %v6044 = vsub.s32 %v6041, %v6043
    %v6045 = vrot.slane %v6031, %v6044
    %v6046 = vcombine.low %v6038, %v6045
    %v6047 = vcombine.low %v1597, %v1601
    %v6048 = vcombine.low %v1605, %v1609
    %v6049 = vcombine.low %v1613, %v1617
    %v6050 = vcombine.low %v1621, %v1625
    %v6052 = vunpack.c.l.s4 1966171168
    %v6053 = vunpack.c.0.s8 %v6052
    %v6054 = vlaneseq
    %v6055 = vshrl.u32 %v6054, 7
    %v6056 = vsub.s32 %v6053, %v6055
    %v6057 = vrot.slane %v6047, %v6056
    %v6059 = vunpack.c.l.s4 1966171168
    %v6060 = vunpack.c.0.s8 %v6059
    %v6061 = vlaneseq
    %v6062 = vshrl.u32 %v6061, 7
    %v6063 = vsub.s32 %v6060, %v6062
    %v6064 = vrot.slane %v6048, %v6063
    %v6066 = vunpack.c.l.s4 1966171168
    %v6067 = vunpack.c.0.s8 %v6066
    %v6068 = vlaneseq
    %v6069 = vshrl.u32 %v6068, 7
    %v6070 = vsub.s32 %v6067, %v6069
    %v6071 = vrot.slane %v6049, %v6070
    %v6073 = vunpack.c.l.s4 1966171168
    %v6074 = vunpack.c.0.s8 %v6073
    %v6075 = vlaneseq
    %v6076 = vshrl.u32 %v6075, 7
    %v6077 = vsub.s32 %v6074, %v6076
    %v6078 = vrot.slane %v6050, %v6077
    %v6079 = vcombine.low %v6057, %v6064
    %v6080 = vcombine.low %v6071, %v6078
    %v6082 = vunpack.c.l.s4 1966171168
    %v6083 = vunpack.c.0.s8 %v6082
    %v6084 = vlaneseq
    %v6085 = vshrl.u32 %v6084, 7
    %v6086 = vsub.s32 %v6083, %v6085
    %v6087 = vrot.slane %v6079, %v6086
    %v6089 = vunpack.c.l.s4 1966171168
    %v6090 = vunpack.c.0.s8 %v6089
    %v6091 = vlaneseq
    %v6092 = vshrl.u32 %v6091, 7
    %v6093 = vsub.s32 %v6090, %v6092
    %v6094 = vrot.slane %v6080, %v6093
    %v6095 = vcombine.low %v6087, %v6094
    %v6096 = vcombine.low %v1629, %v1633
    %v6097 = vcombine.low %v1637, %v1641
    %v6098 = vcombine.low %v1645, %v1649
    %v6099 = vcombine.low %v1653, %v1657
    %v6101 = vunpack.c.l.s4 1966171168
    %v6102 = vunpack.c.0.s8 %v6101
    %v6103 = vlaneseq
    %v6104 = vshrl.u32 %v6103, 7
    %v6105 = vsub.s32 %v6102, %v6104
    %v6106 = vrot.slane %v6096, %v6105
    %v6108 = vunpack.c.l.s4 1966171168
    %v6109 = vunpack.c.0.s8 %v6108
    %v6110 = vlaneseq
    %v6111 = vshrl.u32 %v6110, 7
    %v6112 = vsub.s32 %v6109, %v6111
    %v6113 = vrot.slane %v6097, %v6112
    %v6115 = vunpack.c.l.s4 1966171168
    %v6116 = vunpack.c.0.s8 %v6115
    %v6117 = vlaneseq
    %v6118 = vshrl.u32 %v6117, 7
    %v6119 = vsub.s32 %v6116, %v6118
    %v6120 = vrot.slane %v6098, %v6119
    %v6122 = vunpack.c.l.s4 1966171168
    %v6123 = vunpack.c.0.s8 %v6122
    %v6124 = vlaneseq
    %v6125 = vshrl.u32 %v6124, 7
    %v6126 = vsub.s32 %v6123, %v6125
    %v6127 = vrot.slane %v6099, %v6126
    %v6128 = vcombine.low %v6106, %v6113
    %v6129 = vcombine.low %v6120, %v6127
    %v6131 = vunpack.c.l.s4 1966171168
    %v6132 = vunpack.c.0.s8 %v6131
    %v6133 = vlaneseq
    %v6134 = vshrl.u32 %v6133, 7
    %v6135 = vsub.s32 %v6132, %v6134
    %v6136 = vrot.slane %v6128, %v6135
    %v6138 = vunpack.c.l.s4 1966171168
    %v6139 = vunpack.c.0.s8 %v6138
    %v6140 = vlaneseq
    %v6141 = vshrl.u32 %v6140, 7
    %v6142 = vsub.s32 %v6139, %v6141
    %v6143 = vrot.slane %v6129, %v6142
    %v6144 = vcombine.low %v6136, %v6143
    %v6145 = vcombine.low %v1661, %v1665
    %v6146 = vcombine.low %v1669, %v1673
    %v6147 = vcombine.low %v1677, %v1681
    %v6148 = vcombine.low %v1685, %v1689
    %v6150 = vunpack.c.l.s4 1966171168
    %v6151 = vunpack.c.0.s8 %v6150
    %v6152 = vlaneseq
    %v6153 = vshrl.u32 %v6152, 7
    %v6154 = vsub.s32 %v6151, %v6153
    %v6155 = vrot.slane %v6145, %v6154
    %v6157 = vunpack.c.l.s4 1966171168
    %v6158 = vunpack.c.0.s8 %v6157
    %v6159 = vlaneseq
    %v6160 = vshrl.u32 %v6159, 7
    %v6161 = vsub.s32 %v6158, %v6160
    %v6162 = vrot.slane %v6146, %v6161
    %v6164 = vunpack.c.l.s4 1966171168
    %v6165 = vunpack.c.0.s8 %v6164
    %v6166 = vlaneseq
    %v6167 = vshrl.u32 %v6166, 7
    %v6168 = vsub.s32 %v6165, %v6167
    %v6169 = vrot.slane %v6147, %v6168
    %v6171 = vunpack.c.l.s4 1966171168
    %v6172 = vunpack.c.0.s8 %v6171
    %v6173 = vlaneseq
    %v6174 = vshrl.u32 %v6173, 7
    %v6175 = vsub.s32 %v6172, %v6174
    %v6176 = vrot.slane %v6148, %v6175
    %v6177 = vcombine.low %v6155, %v6162
    %v6178 = vcombine.low %v6169, %v6176
    %v6180 = vunpack.c.l.s4 1966171168
    %v6181 = vunpack.c.0.s8 %v6180
    %v6182 = vlaneseq
    %v6183 = vshrl.u32 %v6182, 7
    %v6184 = vsub.s32 %v6181, %v6183
    %v6185 = vrot.slane %v6177, %v6184
    %v6187 = vunpack.c.l.s4 1966171168
    %v6188 = vunpack.c.0.s8 %v6187
    %v6189 = vlaneseq
    %v6190 = vshrl.u32 %v6189, 7
    %v6191 = vsub.s32 %v6188, %v6190
    %v6192 = vrot.slane %v6178, %v6191
    %v6193 = vcombine.low %v6185, %v6192
    %v6194 = vcombine.low %v1693, %v1697
    %v6195 = vcombine.low %v1701, %v1705
    %v6196 = vcombine.low %v1709, %v1713
    %v6197 = vcombine.low %v1717, %v1721
    %v6199 = vunpack.c.l.s4 1966171168
    %v6200 = vunpack.c.0.s8 %v6199
    %v6201 = vlaneseq
    %v6202 = vshrl.u32 %v6201, 7
    %v6203 = vsub.s32 %v6200, %v6202
    %v6204 = vrot.slane %v6194, %v6203
    %v6206 = vunpack.c.l.s4 1966171168
    %v6207 = vunpack.c.0.s8 %v6206
    %v6208 = vlaneseq
    %v6209 = vshrl.u32 %v6208, 7
    %v6210 = vsub.s32 %v6207, %v6209
    %v6211 = vrot.slane %v6195, %v6210
    %v6213 = vunpack.c.l.s4 1966171168
    %v6214 = vunpack.c.0.s8 %v6213
    %v6215 = vlaneseq
    %v6216 = vshrl.u32 %v6215, 7
    %v6217 = vsub.s32 %v6214, %v6216
    %v6218 = vrot.slane %v6196, %v6217
    %v6220 = vunpack.c.l.s4 1966171168
    %v6221 = vunpack.c.0.s8 %v6220
    %v6222 = vlaneseq
    %v6223 = vshrl.u32 %v6222, 7
    %v6224 = vsub.s32 %v6221, %v6223
    %v6225 = vrot.slane %v6197, %v6224
    %v6226 = vcombine.low %v6204, %v6211
    %v6227 = vcombine.low %v6218, %v6225
    %v6229 = vunpack.c.l.s4 1966171168
    %v6230 = vunpack.c.0.s8 %v6229
    %v6231 = vlaneseq
    %v6232 = vshrl.u32 %v6231, 7
    %v6233 = vsub.s32 %v6230, %v6232
    %v6234 = vrot.slane %v6226, %v6233
    %v6236 = vunpack.c.l.s4 1966171168
    %v6237 = vunpack.c.0.s8 %v6236
    %v6238 = vlaneseq
    %v6239 = vshrl.u32 %v6238, 7
    %v6240 = vsub.s32 %v6237, %v6239
    %v6241 = vrot.slane %v6227, %v6240
    %v6242 = vcombine.low %v6234, %v6241
    %v6243 = vcombine.low %v1725, %v1729
    %v6244 = vcombine.low %v1733, %v1737
    %v6245 = vcombine.low %v1741, %v1745
    %v6246 = vcombine.low %v1749, %v1753
    %v6248 = vunpack.c.l.s4 1966171168
    %v6249 = vunpack.c.0.s8 %v6248
    %v6250 = vlaneseq
    %v6251 = vshrl.u32 %v6250, 7
    %v6252 = vsub.s32 %v6249, %v6251
    %v6253 = vrot.slane %v6243, %v6252
    %v6255 = vunpack.c.l.s4 1966171168
    %v6256 = vunpack.c.0.s8 %v6255
    %v6257 = vlaneseq
    %v6258 = vshrl.u32 %v6257, 7
    %v6259 = vsub.s32 %v6256, %v6258
    %v6260 = vrot.slane %v6244, %v6259
    %v6262 = vunpack.c.l.s4 1966171168
    %v6263 = vunpack.c.0.s8 %v6262
    %v6264 = vlaneseq
    %v6265 = vshrl.u32 %v6264, 7
    %v6266 = vsub.s32 %v6263, %v6265
    %v6267 = vrot.slane %v6245, %v6266
    %v6269 = vunpack.c.l.s4 1966171168
    %v6270 = vunpack.c.0.s8 %v6269
    %v6271 = vlaneseq
    %v6272 = vshrl.u32 %v6271, 7
    %v6273 = vsub.s32 %v6270, %v6272
    %v6274 = vrot.slane %v6246, %v6273
    %v6275 = vcombine.low %v6253, %v6260
    %v6276 = vcombine.low %v6267, %v6274
    %v6278 = vunpack.c.l.s4 1966171168
    %v6279 = vunpack.c.0.s8 %v6278
    %v6280 = vlaneseq
    %v6281 = vshrl.u32 %v6280, 7
    %v6282 = vsub.s32 %v6279, %v6281
    %v6283 = vrot.slane %v6275, %v6282
    %v6285 = vunpack.c.l.s4 1966171168
    %v6286 = vunpack.c.0.s8 %v6285
    %v6287 = vlaneseq
    %v6288 = vshrl.u32 %v6287, 7
    %v6289 = vsub.s32 %v6286, %v6288
    %v6290 = vrot.slane %v6276, %v6289
    %v6291 = vcombine.low %v6283, %v6290
    %v6292 = vcombine.low %v1757, %v1761
    %v6293 = vcombine.low %v1765, %v1769
    %v6294 = vcombine.low %v1773, %v1777
    %v6295 = vcombine.low %v1781, %v1785
    %v6297 = vunpack.c.l.s4 1966171168
    %v6298 = vunpack.c.0.s8 %v6297
    %v6299 = vlaneseq
    %v6300 = vshrl.u32 %v6299, 7
    %v6301 = vsub.s32 %v6298, %v6300
    %v6302 = vrot.slane %v6292, %v6301
    %v6304 = vunpack.c.l.s4 1966171168
    %v6305 = vunpack.c.0.s8 %v6304
    %v6306 = vlaneseq
    %v6307 = vshrl.u32 %v6306, 7
    %v6308 = vsub.s32 %v6305, %v6307
    %v6309 = vrot.slane %v6293, %v6308
    %v6311 = vunpack.c.l.s4 1966171168
    %v6312 = vunpack.c.0.s8 %v6311
    %v6313 = vlaneseq
    %v6314 = vshrl.u32 %v6313, 7
    %v6315 = vsub.s32 %v6312, %v6314
    %v6316 = vrot.slane %v6294, %v6315
    %v6318 = vunpack.c.l.s4 1966171168
    %v6319 = vunpack.c.0.s8 %v6318
    %v6320 = vlaneseq
    %v6321 = vshrl.u32 %v6320, 7
    %v6322 = vsub.s32 %v6319, %v6321
    %v6323 = vrot.slane %v6295, %v6322
    %v6324 = vcombine.low %v6302, %v6309
    %v6325 = vcombine.low %v6316, %v6323
    %v6327 = vunpack.c.l.s4 1966171168
    %v6328 = vunpack.c.0.s8 %v6327
    %v6329 = vlaneseq
    %v6330 = vshrl.u32 %v6329, 7
    %v6331 = vsub.s32 %v6328, %v6330
    %v6332 = vrot.slane %v6324, %v6331
    %v6334 = vunpack.c.l.s4 1966171168
    %v6335 = vunpack.c.0.s8 %v6334
    %v6336 = vlaneseq
    %v6337 = vshrl.u32 %v6336, 7
    %v6338 = vsub.s32 %v6335, %v6337
    %v6339 = vrot.slane %v6325, %v6338
    %v6340 = vcombine.low %v6332, %v6339
    %v6341 = vcombine.low %v1789, %v1793
    %v6342 = vcombine.low %v1797, %v1801
    %v6343 = vcombine.low %v1805, %v1809
    %v6344 = vcombine.low %v1813, %v1817
    %v6346 = vunpack.c.l.s4 1966171168
    %v6347 = vunpack.c.0.s8 %v6346
    %v6348 = vlaneseq
    %v6349 = vshrl.u32 %v6348, 7
    %v6350 = vsub.s32 %v6347, %v6349
    %v6351 = vrot.slane %v6341, %v6350
    %v6353 = vunpack.c.l.s4 1966171168
    %v6354 = vunpack.c.0.s8 %v6353
    %v6355 = vlaneseq
    %v6356 = vshrl.u32 %v6355, 7
    %v6357 = vsub.s32 %v6354, %v6356
    %v6358 = vrot.slane %v6342, %v6357
    %v6360 = vunpack.c.l.s4 1966171168
    %v6361 = vunpack.c.0.s8 %v6360
    %v6362 = vlaneseq
    %v6363 = vshrl.u32 %v6362, 7
    %v6364 = vsub.s32 %v6361, %v6363
    %v6365 = vrot.slane %v6343, %v6364
    %v6367 = vunpack.c.l.s4 1966171168
    %v6368 = vunpack.c.0.s8 %v6367
    %v6369 = vlaneseq
    %v6370 = vshrl.u32 %v6369, 7
    %v6371 = vsub.s32 %v6368, %v6370
    %v6372 = vrot.slane %v6344, %v6371
    %v6373 = vcombine.low %v6351, %v6358
    %v6374 = vcombine.low %v6365, %v6372
    %v6376 = vunpack.c.l.s4 1966171168
    %v6377 = vunpack.c.0.s8 %v6376
    %v6378 = vlaneseq
    %v6379 = vshrl.u32 %v6378, 7
    %v6380 = vsub.s32 %v6377, %v6379
    %v6381 = vrot.slane %v6373, %v6380
    %v6383 = vunpack.c.l.s4 1966171168
    %v6384 = vunpack.c.0.s8 %v6383
    %v6385 = vlaneseq
    %v6386 = vshrl.u32 %v6385, 7
    %v6387 = vsub.s32 %v6384, %v6386
    %v6388 = vrot.slane %v6374, %v6387
    %v6389 = vcombine.low %v6381, %v6388
    %v6390 = vcombine.low %v1821, %v1825
    %v6391 = vcombine.low %v1829, %v1833
    %v6392 = vcombine.low %v1837, %v1841
    %v6393 = vcombine.low %v1845, %v1849
    %v6395 = vunpack.c.l.s4 1966171168
    %v6396 = vunpack.c.0.s8 %v6395
    %v6397 = vlaneseq
    %v6398 = vshrl.u32 %v6397, 7
    %v6399 = vsub.s32 %v6396, %v6398
    %v6400 = vrot.slane %v6390, %v6399
    %v6402 = vunpack.c.l.s4 1966171168
    %v6403 = vunpack.c.0.s8 %v6402
    %v6404 = vlaneseq
    %v6405 = vshrl.u32 %v6404, 7
    %v6406 = vsub.s32 %v6403, %v6405
    %v6407 = vrot.slane %v6391, %v6406
    %v6409 = vunpack.c.l.s4 1966171168
    %v6410 = vunpack.c.0.s8 %v6409
    %v6411 = vlaneseq
    %v6412 = vshrl.u32 %v6411, 7
    %v6413 = vsub.s32 %v6410, %v6412
    %v6414 = vrot.slane %v6392, %v6413
    %v6416 = vunpack.c.l.s4 1966171168
    %v6417 = vunpack.c.0.s8 %v6416
    %v6418 = vlaneseq
    %v6419 = vshrl.u32 %v6418, 7
    %v6420 = vsub.s32 %v6417, %v6419
    %v6421 = vrot.slane %v6393, %v6420
    %v6422 = vcombine.low %v6400, %v6407
    %v6423 = vcombine.low %v6414, %v6421
    %v6425 = vunpack.c.l.s4 1966171168
    %v6426 = vunpack.c.0.s8 %v6425
    %v6427 = vlaneseq
    %v6428 = vshrl.u32 %v6427, 7
    %v6429 = vsub.s32 %v6426, %v6428
    %v6430 = vrot.slane %v6422, %v6429
    %v6432 = vunpack.c.l.s4 1966171168
    %v6433 = vunpack.c.0.s8 %v6432
    %v6434 = vlaneseq
    %v6435 = vshrl.u32 %v6434, 7
    %v6436 = vsub.s32 %v6433, %v6435
    %v6437 = vrot.slane %v6423, %v6436
    %v6438 = vcombine.low %v6430, %v6437
    %v6439 = vcombine.low %v1853, %v1857
    %v6440 = vcombine.low %v1861, %v1865
    %v6441 = vcombine.low %v1869, %v1873
    %v6442 = vcombine.low %v1877, %v1881
    %v6444 = vunpack.c.l.s4 1966171168
    %v6445 = vunpack.c.0.s8 %v6444
    %v6446 = vlaneseq
    %v6447 = vshrl.u32 %v6446, 7
    %v6448 = vsub.s32 %v6445, %v6447
    %v6449 = vrot.slane %v6439, %v6448
    %v6451 = vunpack.c.l.s4 1966171168
    %v6452 = vunpack.c.0.s8 %v6451
    %v6453 = vlaneseq
    %v6454 = vshrl.u32 %v6453, 7
    %v6455 = vsub.s32 %v6452, %v6454
    %v6456 = vrot.slane %v6440, %v6455
    %v6458 = vunpack.c.l.s4 1966171168
    %v6459 = vunpack.c.0.s8 %v6458
    %v6460 = vlaneseq
    %v6461 = vshrl.u32 %v6460, 7
    %v6462 = vsub.s32 %v6459, %v6461
    %v6463 = vrot.slane %v6441, %v6462
    %v6465 = vunpack.c.l.s4 1966171168
    %v6466 = vunpack.c.0.s8 %v6465
    %v6467 = vlaneseq
    %v6468 = vshrl.u32 %v6467, 7
    %v6469 = vsub.s32 %v6466, %v6468
    %v6470 = vrot.slane %v6442, %v6469
    %v6471 = vcombine.low %v6449, %v6456
    %v6472 = vcombine.low %v6463, %v6470
    %v6474 = vunpack.c.l.s4 1966171168
    %v6475 = vunpack.c.0.s8 %v6474
    %v6476 = vlaneseq
    %v6477 = vshrl.u32 %v6476, 7
    %v6478 = vsub.s32 %v6475, %v6477
    %v6479 = vrot.slane %v6471, %v6478
    %v6481 = vunpack.c.l.s4 1966171168
    %v6482 = vunpack.c.0.s8 %v6481
    %v6483 = vlaneseq
    %v6484 = vshrl.u32 %v6483, 7
    %v6485 = vsub.s32 %v6482, %v6484
    %v6486 = vrot.slane %v6472, %v6485
    %v6487 = vcombine.low %v6479, %v6486
    %v6488 = vcombine.low %v1885, %v1889
    %v6489 = vcombine.low %v1893, %v1897
    %v6490 = vcombine.low %v1901, %v1905
    %v6491 = vcombine.low %v1909, %v1913
    %v6493 = vunpack.c.l.s4 1966171168
    %v6494 = vunpack.c.0.s8 %v6493
    %v6495 = vlaneseq
    %v6496 = vshrl.u32 %v6495, 7
    %v6497 = vsub.s32 %v6494, %v6496
    %v6498 = vrot.slane %v6488, %v6497
    %v6500 = vunpack.c.l.s4 1966171168
    %v6501 = vunpack.c.0.s8 %v6500
    %v6502 = vlaneseq
    %v6503 = vshrl.u32 %v6502, 7
    %v6504 = vsub.s32 %v6501, %v6503
    %v6505 = vrot.slane %v6489, %v6504
    %v6507 = vunpack.c.l.s4 1966171168
    %v6508 = vunpack.c.0.s8 %v6507
    %v6509 = vlaneseq
    %v6510 = vshrl.u32 %v6509, 7
    %v6511 = vsub.s32 %v6508, %v6510
    %v6512 = vrot.slane %v6490, %v6511
    %v6514 = vunpack.c.l.s4 1966171168
    %v6515 = vunpack.c.0.s8 %v6514
    %v6516 = vlaneseq
    %v6517 = vshrl.u32 %v6516, 7
    %v6518 = vsub.s32 %v6515, %v6517
    %v6519 = vrot.slane %v6491, %v6518
    %v6520 = vcombine.low %v6498, %v6505
    %v6521 = vcombine.low %v6512, %v6519
    %v6523 = vunpack.c.l.s4 1966171168
    %v6524 = vunpack.c.0.s8 %v6523
    %v6525 = vlaneseq
    %v6526 = vshrl.u32 %v6525, 7
    %v6527 = vsub.s32 %v6524, %v6526
    %v6528 = vrot.slane %v6520, %v6527
    %v6530 = vunpack.c.l.s4 1966171168
    %v6531 = vunpack.c.0.s8 %v6530
    %v6532 = vlaneseq
    %v6533 = vshrl.u32 %v6532, 7
    %v6534 = vsub.s32 %v6531, %v6533
    %v6535 = vrot.slane %v6521, %v6534
    %v6536 = vcombine.low %v6528, %v6535
    %v6537 = vcombine.low %v1917, %v1921
    %v6538 = vcombine.low %v1925, %v1929
    %v6539 = vcombine.low %v1933, %v1937
    %v6540 = vcombine.low %v1941, %v1945
    %v6542 = vunpack.c.l.s4 1966171168
    %v6543 = vunpack.c.0.s8 %v6542
    %v6544 = vlaneseq
    %v6545 = vshrl.u32 %v6544, 7
    %v6546 = vsub.s32 %v6543, %v6545
    %v6547 = vrot.slane %v6537, %v6546
    %v6549 = vunpack.c.l.s4 1966171168
    %v6550 = vunpack.c.0.s8 %v6549
    %v6551 = vlaneseq
    %v6552 = vshrl.u32 %v6551, 7
    %v6553 = vsub.s32 %v6550, %v6552
    %v6554 = vrot.slane %v6538, %v6553
    %v6556 = vunpack.c.l.s4 1966171168
    %v6557 = vunpack.c.0.s8 %v6556
    %v6558 = vlaneseq
    %v6559 = vshrl.u32 %v6558, 7
    %v6560 = vsub.s32 %v6557, %v6559
    %v6561 = vrot.slane %v6539, %v6560
    %v6563 = vunpack.c.l.s4 1966171168
    %v6564 = vunpack.c.0.s8 %v6563
    %v6565 = vlaneseq
    %v6566 = vshrl.u32 %v6565, 7
    %v6567 = vsub.s32 %v6564, %v6566
    %v6568 = vrot.slane %v6540, %v6567
    %v6569 = vcombine.low %v6547, %v6554
    %v6570 = vcombine.low %v6561, %v6568
    %v6572 = vunpack.c.l.s4 1966171168
    %v6573 = vunpack.c.0.s8 %v6572
    %v6574 = vlaneseq
    %v6575 = vshrl.u32 %v6574, 7
    %v6576 = vsub.s32 %v6573, %v6575
    %v6577 = vrot.slane %v6569, %v6576
    %v6579 = vunpack.c.l.s4 1966171168
    %v6580 = vunpack.c.0.s8 %v6579
    %v6581 = vlaneseq
    %v6582 = vshrl.u32 %v6581, 7
    %v6583 = vsub.s32 %v6580, %v6582
    %v6584 = vrot.slane %v6570, %v6583
    %v6585 = vcombine.low %v6577, %v6584
    %v6586 = vcombine.low %v1949, %v1953
    %v6587 = vcombine.low %v1957, %v1961
    %v6588 = vcombine.low %v1965, %v1969
    %v6589 = vcombine.low %v1973, %v1977
    %v6591 = vunpack.c.l.s4 1966171168
    %v6592 = vunpack.c.0.s8 %v6591
    %v6593 = vlaneseq
    %v6594 = vshrl.u32 %v6593, 7
    %v6595 = vsub.s32 %v6592, %v6594
    %v6596 = vrot.slane %v6586, %v6595
    %v6598 = vunpack.c.l.s4 1966171168
    %v6599 = vunpack.c.0.s8 %v6598
    %v6600 = vlaneseq
    %v6601 = vshrl.u32 %v6600, 7
    %v6602 = vsub.s32 %v6599, %v6601
    %v6603 = vrot.slane %v6587, %v6602
    %v6605 = vunpack.c.l.s4 1966171168
    %v6606 = vunpack.c.0.s8 %v6605
    %v6607 = vlaneseq
    %v6608 = vshrl.u32 %v6607, 7
    %v6609 = vsub.s32 %v6606, %v6608
    %v6610 = vrot.slane %v6588, %v6609
    %v6612 = vunpack.c.l.s4 1966171168
    %v6613 = vunpack.c.0.s8 %v6612
    %v6614 = vlaneseq
    %v6615 = vshrl.u32 %v6614, 7
    %v6616 = vsub.s32 %v6613, %v6615
    %v6617 = vrot.slane %v6589, %v6616
    %v6618 = vcombine.low %v6596, %v6603
    %v6619 = vcombine.low %v6610, %v6617
    %v6621 = vunpack.c.l.s4 1966171168
    %v6622 = vunpack.c.0.s8 %v6621
    %v6623 = vlaneseq
    %v6624 = vshrl.u32 %v6623, 7
    %v6625 = vsub.s32 %v6622, %v6624
    %v6626 = vrot.slane %v6618, %v6625
    %v6628 = vunpack.c.l.s4 1966171168
    %v6629 = vunpack.c.0.s8 %v6628
    %v6630 = vlaneseq
    %v6631 = vshrl.u32 %v6630, 7
    %v6632 = vsub.s32 %v6629, %v6631
    %v6633 = vrot.slane %v6619, %v6632
    %v6634 = vcombine.low %v6626, %v6633
    %v6635 = vcombine.low %v1981, %v1985
    %v6636 = vcombine.low %v1989, %v1993
    %v6637 = vcombine.low %v1997, %v2001
    %v6638 = vcombine.low %v2005, %v2009
    %v6640 = vunpack.c.l.s4 1966171168
    %v6641 = vunpack.c.0.s8 %v6640
    %v6642 = vlaneseq
    %v6643 = vshrl.u32 %v6642, 7
    %v6644 = vsub.s32 %v6641, %v6643
    %v6645 = vrot.slane %v6635, %v6644
    %v6647 = vunpack.c.l.s4 1966171168
    %v6648 = vunpack.c.0.s8 %v6647
    %v6649 = vlaneseq
    %v6650 = vshrl.u32 %v6649, 7
    %v6651 = vsub.s32 %v6648, %v6650
    %v6652 = vrot.slane %v6636, %v6651
    %v6654 = vunpack.c.l.s4 1966171168
    %v6655 = vunpack.c.0.s8 %v6654
    %v6656 = vlaneseq
    %v6657 = vshrl.u32 %v6656, 7
    %v6658 = vsub.s32 %v6655, %v6657
    %v6659 = vrot.slane %v6637, %v6658
    %v6661 = vunpack.c.l.s4 1966171168
    %v6662 = vunpack.c.0.s8 %v6661
    %v6663 = vlaneseq
    %v6664 = vshrl.u32 %v6663, 7
    %v6665 = vsub.s32 %v6662, %v6664
    %v6666 = vrot.slane %v6638, %v6665
    %v6667 = vcombine.low %v6645, %v6652
    %v6668 = vcombine.low %v6659, %v6666
    %v6670 = vunpack.c.l.s4 1966171168
    %v6671 = vunpack.c.0.s8 %v6670
    %v6672 = vlaneseq
    %v6673 = vshrl.u32 %v6672, 7
    %v6674 = vsub.s32 %v6671, %v6673
    %v6675 = vrot.slane %v6667, %v6674
    %v6677 = vunpack.c.l.s4 1966171168
    %v6678 = vunpack.c.0.s8 %v6677
    %v6679 = vlaneseq
    %v6680 = vshrl.u32 %v6679, 7
    %v6681 = vsub.s32 %v6678, %v6680
    %v6682 = vrot.slane %v6668, %v6681
    %v6683 = vcombine.low %v6675, %v6682
    %v6684 = vcombine.low %v2013, %v2017
    %v6685 = vcombine.low %v2021, %v2025
    %v6686 = vcombine.low %v2029, %v2033
    %v6687 = vcombine.low %v2037, %v2041
    %v6689 = vunpack.c.l.s4 1966171168
    %v6690 = vunpack.c.0.s8 %v6689
    %v6691 = vlaneseq
    %v6692 = vshrl.u32 %v6691, 7
    %v6693 = vsub.s32 %v6690, %v6692
    %v6694 = vrot.slane %v6684, %v6693
    %v6696 = vunpack.c.l.s4 1966171168
    %v6697 = vunpack.c.0.s8 %v6696
    %v6698 = vlaneseq
    %v6699 = vshrl.u32 %v6698, 7
    %v6700 = vsub.s32 %v6697, %v6699
    %v6701 = vrot.slane %v6685, %v6700
    %v6703 = vunpack.c.l.s4 1966171168
    %v6704 = vunpack.c.0.s8 %v6703
    %v6705 = vlaneseq
    %v6706 = vshrl.u32 %v6705, 7
    %v6707 = vsub.s32 %v6704, %v6706
    %v6708 = vrot.slane %v6686, %v6707
    %v6710 = vunpack.c.l.s4 1966171168
    %v6711 = vunpack.c.0.s8 %v6710
    %v6712 = vlaneseq
    %v6713 = vshrl.u32 %v6712, 7
    %v6714 = vsub.s32 %v6711, %v6713
    %v6715 = vrot.slane %v6687, %v6714
    %v6716 = vcombine.low %v6694, %v6701
    %v6717 = vcombine.low %v6708, %v6715
    %v6719 = vunpack.c.l.s4 1966171168
    %v6720 = vunpack.c.0.s8 %v6719
    %v6721 = vlaneseq
    %v6722 = vshrl.u32 %v6721, 7
    %v6723 = vsub.s32 %v6720, %v6722
    %v6724 = vrot.slane %v6716, %v6723
    %v6726 = vunpack.c.l.s4 1966171168
    %v6727 = vunpack.c.0.s8 %v6726
    %v6728 = vlaneseq
    %v6729 = vshrl.u32 %v6728, 7
    %v6730 = vsub.s32 %v6727, %v6729
    %v6731 = vrot.slane %v6717, %v6730
    %v6732 = vcombine.low %v6724, %v6731
    %v6733 = vcombine.low %v2045, %v2049
    %v6734 = vcombine.low %v2053, %v2057
    %v6735 = vcombine.low %v2061, %v2065
    %v6736 = vcombine.low %v2069, %v2073
    %v6738 = vunpack.c.l.s4 1966171168
    %v6739 = vunpack.c.0.s8 %v6738
    %v6740 = vlaneseq
    %v6741 = vshrl.u32 %v6740, 7
    %v6742 = vsub.s32 %v6739, %v6741
    %v6743 = vrot.slane %v6733, %v6742
    %v6745 = vunpack.c.l.s4 1966171168
    %v6746 = vunpack.c.0.s8 %v6745
    %v6747 = vlaneseq
    %v6748 = vshrl.u32 %v6747, 7
    %v6749 = vsub.s32 %v6746, %v6748
    %v6750 = vrot.slane %v6734, %v6749
    %v6752 = vunpack.c.l.s4 1966171168
    %v6753 = vunpack.c.0.s8 %v6752
    %v6754 = vlaneseq
    %v6755 = vshrl.u32 %v6754, 7
    %v6756 = vsub.s32 %v6753, %v6755
    %v6757 = vrot.slane %v6735, %v6756
    %v6759 = vunpack.c.l.s4 1966171168
    %v6760 = vunpack.c.0.s8 %v6759
    %v6761 = vlaneseq
    %v6762 = vshrl.u32 %v6761, 7
    %v6763 = vsub.s32 %v6760, %v6762
    %v6764 = vrot.slane %v6736, %v6763
    %v6765 = vcombine.low %v6743, %v6750
    %v6766 = vcombine.low %v6757, %v6764
    %v6768 = vunpack.c.l.s4 1966171168
    %v6769 = vunpack.c.0.s8 %v6768
    %v6770 = vlaneseq
    %v6771 = vshrl.u32 %v6770, 7
    %v6772 = vsub.s32 %v6769, %v6771
    %v6773 = vrot.slane %v6765, %v6772
    %v6775 = vunpack.c.l.s4 1966171168
    %v6776 = vunpack.c.0.s8 %v6775
    %v6777 = vlaneseq
    %v6778 = vshrl.u32 %v6777, 7
    %v6779 = vsub.s32 %v6776, %v6778
    %v6780 = vrot.slane %v6766, %v6779
    %v6781 = vcombine.low %v6773, %v6780
    %v6782 = vcombine.low %v2077, %v2081
    %v6783 = vcombine.low %v2085, %v2089
    %v6784 = vcombine.low %v2093, %v2097
    %v6785 = vcombine.low %v2101, %v2105
    %v6787 = vunpack.c.l.s4 1966171168
    %v6788 = vunpack.c.0.s8 %v6787
    %v6789 = vlaneseq
    %v6790 = vshrl.u32 %v6789, 7
    %v6791 = vsub.s32 %v6788, %v6790
    %v6792 = vrot.slane %v6782, %v6791
    %v6794 = vunpack.c.l.s4 1966171168
    %v6795 = vunpack.c.0.s8 %v6794
    %v6796 = vlaneseq
    %v6797 = vshrl.u32 %v6796, 7
    %v6798 = vsub.s32 %v6795, %v6797
    %v6799 = vrot.slane %v6783, %v6798
    %v6801 = vunpack.c.l.s4 1966171168
    %v6802 = vunpack.c.0.s8 %v6801
    %v6803 = vlaneseq
    %v6804 = vshrl.u32 %v6803, 7
    %v6805 = vsub.s32 %v6802, %v6804
    %v6806 = vrot.slane %v6784, %v6805
    %v6808 = vunpack.c.l.s4 1966171168
    %v6809 = vunpack.c.0.s8 %v6808
    %v6810 = vlaneseq
    %v6811 = vshrl.u32 %v6810, 7
    %v6812 = vsub.s32 %v6809, %v6811
    %v6813 = vrot.slane %v6785, %v6812
    %v6814 = vcombine.low %v6792, %v6799
    %v6815 = vcombine.low %v6806, %v6813
    %v6817 = vunpack.c.l.s4 1966171168
    %v6818 = vunpack.c.0.s8 %v6817
    %v6819 = vlaneseq
    %v6820 = vshrl.u32 %v6819, 7
    %v6821 = vsub.s32 %v6818, %v6820
    %v6822 = vrot.slane %v6814, %v6821
    %v6824 = vunpack.c.l.s4 1966171168
    %v6825 = vunpack.c.0.s8 %v6824
    %v6826 = vlaneseq
    %v6827 = vshrl.u32 %v6826, 7
    %v6828 = vsub.s32 %v6825, %v6827
    %v6829 = vrot.slane %v6815, %v6828
    %v6830 = vcombine.low %v6822, %v6829
    %v6831 = vcombine.low %v2109, %v2113
    %v6832 = vcombine.low %v2117, %v2121
    %v6833 = vcombine.low %v2125, %v2129
    %v6834 = vcombine.low %v2133, %v2137
    %v6836 = vunpack.c.l.s4 1966171168
    %v6837 = vunpack.c.0.s8 %v6836
    %v6838 = vlaneseq
    %v6839 = vshrl.u32 %v6838, 7
    %v6840 = vsub.s32 %v6837, %v6839
    %v6841 = vrot.slane %v6831, %v6840
    %v6843 = vunpack.c.l.s4 1966171168
    %v6844 = vunpack.c.0.s8 %v6843
    %v6845 = vlaneseq
    %v6846 = vshrl.u32 %v6845, 7
    %v6847 = vsub.s32 %v6844, %v6846
    %v6848 = vrot.slane %v6832, %v6847
    %v6850 = vunpack.c.l.s4 1966171168
    %v6851 = vunpack.c.0.s8 %v6850
    %v6852 = vlaneseq
    %v6853 = vshrl.u32 %v6852, 7
    %v6854 = vsub.s32 %v6851, %v6853
    %v6855 = vrot.slane %v6833, %v6854
    %v6857 = vunpack.c.l.s4 1966171168
    %v6858 = vunpack.c.0.s8 %v6857
    %v6859 = vlaneseq
    %v6860 = vshrl.u32 %v6859, 7
    %v6861 = vsub.s32 %v6858, %v6860
    %v6862 = vrot.slane %v6834, %v6861
    %v6863 = vcombine.low %v6841, %v6848
    %v6864 = vcombine.low %v6855, %v6862
    %v6866 = vunpack.c.l.s4 1966171168
    %v6867 = vunpack.c.0.s8 %v6866
    %v6868 = vlaneseq
    %v6869 = vshrl.u32 %v6868, 7
    %v6870 = vsub.s32 %v6867, %v6869
    %v6871 = vrot.slane %v6863, %v6870
    %v6873 = vunpack.c.l.s4 1966171168
    %v6874 = vunpack.c.0.s8 %v6873
    %v6875 = vlaneseq
    %v6876 = vshrl.u32 %v6875, 7
    %v6877 = vsub.s32 %v6874, %v6876
    %v6878 = vrot.slane %v6864, %v6877
    %v6879 = vcombine.low %v6871, %v6878
    %v6880 = vcombine.low %v2141, %v2145
    %v6881 = vcombine.low %v2149, %v2153
    %v6882 = vcombine.low %v2157, %v2161
    %v6883 = vcombine.low %v2165, %v2169
    %v6885 = vunpack.c.l.s4 1966171168
    %v6886 = vunpack.c.0.s8 %v6885
    %v6887 = vlaneseq
    %v6888 = vshrl.u32 %v6887, 7
    %v6889 = vsub.s32 %v6886, %v6888
    %v6890 = vrot.slane %v6880, %v6889
    %v6892 = vunpack.c.l.s4 1966171168
    %v6893 = vunpack.c.0.s8 %v6892
    %v6894 = vlaneseq
    %v6895 = vshrl.u32 %v6894, 7
    %v6896 = vsub.s32 %v6893, %v6895
    %v6897 = vrot.slane %v6881, %v6896
    %v6899 = vunpack.c.l.s4 1966171168
    %v6900 = vunpack.c.0.s8 %v6899
    %v6901 = vlaneseq
    %v6902 = vshrl.u32 %v6901, 7
    %v6903 = vsub.s32 %v6900, %v6902
    %v6904 = vrot.slane %v6882, %v6903
    %v6906 = vunpack.c.l.s4 1966171168
    %v6907 = vunpack.c.0.s8 %v6906
    %v6908 = vlaneseq
    %v6909 = vshrl.u32 %v6908, 7
    %v6910 = vsub.s32 %v6907, %v6909
    %v6911 = vrot.slane %v6883, %v6910
    %v6912 = vcombine.low %v6890, %v6897
    %v6913 = vcombine.low %v6904, %v6911
    %v6915 = vunpack.c.l.s4 1966171168
    %v6916 = vunpack.c.0.s8 %v6915
    %v6917 = vlaneseq
    %v6918 = vshrl.u32 %v6917, 7
    %v6919 = vsub.s32 %v6916, %v6918
    %v6920 = vrot.slane %v6912, %v6919
    %v6922 = vunpack.c.l.s4 1966171168
    %v6923 = vunpack.c.0.s8 %v6922
    %v6924 = vlaneseq
    %v6925 = vshrl.u32 %v6924, 7
    %v6926 = vsub.s32 %v6923, %v6925
    %v6927 = vrot.slane %v6913, %v6926
    %v6928 = vcombine.low %v6920, %v6927
    %v6929 = vcombine.low %v2173, %v2177
    %v6930 = vcombine.low %v2181, %v2185
    %v6931 = vcombine.low %v2189, %v2193
    %v6932 = vcombine.low %v2197, %v2201
    %v6934 = vunpack.c.l.s4 1966171168
    %v6935 = vunpack.c.0.s8 %v6934
    %v6936 = vlaneseq
    %v6937 = vshrl.u32 %v6936, 7
    %v6938 = vsub.s32 %v6935, %v6937
    %v6939 = vrot.slane %v6929, %v6938
    %v6941 = vunpack.c.l.s4 1966171168
    %v6942 = vunpack.c.0.s8 %v6941
    %v6943 = vlaneseq
    %v6944 = vshrl.u32 %v6943, 7
    %v6945 = vsub.s32 %v6942, %v6944
    %v6946 = vrot.slane %v6930, %v6945
    %v6948 = vunpack.c.l.s4 1966171168
    %v6949 = vunpack.c.0.s8 %v6948
    %v6950 = vlaneseq
    %v6951 = vshrl.u32 %v6950, 7
    %v6952 = vsub.s32 %v6949, %v6951
    %v6953 = vrot.slane %v6931, %v6952
    %v6955 = vunpack.c.l.s4 1966171168
    %v6956 = vunpack.c.0.s8 %v6955
    %v6957 = vlaneseq
    %v6958 = vshrl.u32 %v6957, 7
    %v6959 = vsub.s32 %v6956, %v6958
    %v6960 = vrot.slane %v6932, %v6959
    %v6961 = vcombine.low %v6939, %v6946
    %v6962 = vcombine.low %v6953, %v6960
    %v6964 = vunpack.c.l.s4 1966171168
    %v6965 = vunpack.c.0.s8 %v6964
    %v6966 = vlaneseq
    %v6967 = vshrl.u32 %v6966, 7
    %v6968 = vsub.s32 %v6965, %v6967
    %v6969 = vrot.slane %v6961, %v6968
    %v6971 = vunpack.c.l.s4 1966171168
    %v6972 = vunpack.c.0.s8 %v6971
    %v6973 = vlaneseq
    %v6974 = vshrl.u32 %v6973, 7
    %v6975 = vsub.s32 %v6972, %v6974
    %v6976 = vrot.slane %v6962, %v6975
    %v6977 = vcombine.low %v6969, %v6976
    %v6978 = vcombine.low %v2205, %v2209
    %v6979 = vcombine.low %v2213, %v2217
    %v6980 = vcombine.low %v2221, %v2225
    %v6981 = vcombine.low %v2229, %v2233
    %v6983 = vunpack.c.l.s4 1966171168
    %v6984 = vunpack.c.0.s8 %v6983
    %v6985 = vlaneseq
    %v6986 = vshrl.u32 %v6985, 7
    %v6987 = vsub.s32 %v6984, %v6986
    %v6988 = vrot.slane %v6978, %v6987
    %v6990 = vunpack.c.l.s4 1966171168
    %v6991 = vunpack.c.0.s8 %v6990
    %v6992 = vlaneseq
    %v6993 = vshrl.u32 %v6992, 7
    %v6994 = vsub.s32 %v6991, %v6993
    %v6995 = vrot.slane %v6979, %v6994
    %v6997 = vunpack.c.l.s4 1966171168
    %v6998 = vunpack.c.0.s8 %v6997
    %v6999 = vlaneseq
    %v7000 = vshrl.u32 %v6999, 7
    %v7001 = vsub.s32 %v6998, %v7000
    %v7002 = vrot.slane %v6980, %v7001
    %v7004 = vunpack.c.l.s4 1966171168
    %v7005 = vunpack.c.0.s8 %v7004
    %v7006 = vlaneseq
    %v7007 = vshrl.u32 %v7006, 7
    %v7008 = vsub.s32 %v7005, %v7007
    %v7009 = vrot.slane %v6981, %v7008
    %v7010 = vcombine.low %v6988, %v6995
    %v7011 = vcombine.low %v7002, %v7009
    %v7013 = vunpack.c.l.s4 1966171168
    %v7014 = vunpack.c.0.s8 %v7013
    %v7015 = vlaneseq
    %v7016 = vshrl.u32 %v7015, 7
    %v7017 = vsub.s32 %v7014, %v7016
    %v7018 = vrot.slane %v7010, %v7017
    %v7020 = vunpack.c.l.s4 1966171168
    %v7021 = vunpack.c.0.s8 %v7020
    %v7022 = vlaneseq
    %v7023 = vshrl.u32 %v7022, 7
    %v7024 = vsub.s32 %v7021, %v7023
    %v7025 = vrot.slane %v7011, %v7024
    %v7026 = vcombine.low %v7018, %v7025
    %v7027 = vcombine.low %v2237, %v2241
    %v7028 = vcombine.low %v2245, %v2249
    %v7029 = vcombine.low %v2253, %v2257
    %v7030 = vcombine.low %v2261, %v2265
    %v7032 = vunpack.c.l.s4 1966171168
    %v7033 = vunpack.c.0.s8 %v7032
    %v7034 = vlaneseq
    %v7035 = vshrl.u32 %v7034, 7
    %v7036 = vsub.s32 %v7033, %v7035
    %v7037 = vrot.slane %v7027, %v7036
    %v7039 = vunpack.c.l.s4 1966171168
    %v7040 = vunpack.c.0.s8 %v7039
    %v7041 = vlaneseq
    %v7042 = vshrl.u32 %v7041, 7
    %v7043 = vsub.s32 %v7040, %v7042
    %v7044 = vrot.slane %v7028, %v7043
    %v7046 = vunpack.c.l.s4 1966171168
    %v7047 = vunpack.c.0.s8 %v7046
    %v7048 = vlaneseq
    %v7049 = vshrl.u32 %v7048, 7
    %v7050 = vsub.s32 %v7047, %v7049
    %v7051 = vrot.slane %v7029, %v7050
    %v7053 = vunpack.c.l.s4 1966171168
    %v7054 = vunpack.c.0.s8 %v7053
    %v7055 = vlaneseq
    %v7056 = vshrl.u32 %v7055, 7
    %v7057 = vsub.s32 %v7054, %v7056
    %v7058 = vrot.slane %v7030, %v7057
    %v7059 = vcombine.low %v7037, %v7044
    %v7060 = vcombine.low %v7051, %v7058
    %v7062 = vunpack.c.l.s4 1966171168
    %v7063 = vunpack.c.0.s8 %v7062
    %v7064 = vlaneseq
    %v7065 = vshrl.u32 %v7064, 7
    %v7066 = vsub.s32 %v7063, %v7065
    %v7067 = vrot.slane %v7059, %v7066
    %v7069 = vunpack.c.l.s4 1966171168
    %v7070 = vunpack.c.0.s8 %v7069
    %v7071 = vlaneseq
    %v7072 = vshrl.u32 %v7071, 7
    %v7073 = vsub.s32 %v7070, %v7072
    %v7074 = vrot.slane %v7060, %v7073
    %v7075 = vcombine.low %v7067, %v7074
    %v7076 = vcombine.low %v2269, %v2273
    %v7077 = vcombine.low %v2277, %v2281
    %v7078 = vcombine.low %v2285, %v2289
    %v7079 = vcombine.low %v2293, %v2297
    %v7081 = vunpack.c.l.s4 1966171168
    %v7082 = vunpack.c.0.s8 %v7081
    %v7083 = vlaneseq
    %v7084 = vshrl.u32 %v7083, 7
    %v7085 = vsub.s32 %v7082, %v7084
    %v7086 = vrot.slane %v7076, %v7085
    %v7088 = vunpack.c.l.s4 1966171168
    %v7089 = vunpack.c.0.s8 %v7088
    %v7090 = vlaneseq
    %v7091 = vshrl.u32 %v7090, 7
    %v7092 = vsub.s32 %v7089, %v7091
    %v7093 = vrot.slane %v7077, %v7092
    %v7095 = vunpack.c.l.s4 1966171168
    %v7096 = vunpack.c.0.s8 %v7095
    %v7097 = vlaneseq
    %v7098 = vshrl.u32 %v7097, 7
    %v7099 = vsub.s32 %v7096, %v7098
    %v7100 = vrot.slane %v7078, %v7099
    %v7102 = vunpack.c.l.s4 1966171168
    %v7103 = vunpack.c.0.s8 %v7102
    %v7104 = vlaneseq
    %v7105 = vshrl.u32 %v7104, 7
    %v7106 = vsub.s32 %v7103, %v7105
    %v7107 = vrot.slane %v7079, %v7106
    %v7108 = vcombine.low %v7086, %v7093
    %v7109 = vcombine.low %v7100, %v7107
    %v7111 = vunpack.c.l.s4 1966171168
    %v7112 = vunpack.c.0.s8 %v7111
    %v7113 = vlaneseq
    %v7114 = vshrl.u32 %v7113, 7
    %v7115 = vsub.s32 %v7112, %v7114
    %v7116 = vrot.slane %v7108, %v7115
    %v7118 = vunpack.c.l.s4 1966171168
    %v7119 = vunpack.c.0.s8 %v7118
    %v7120 = vlaneseq
    %v7121 = vshrl.u32 %v7120, 7
    %v7122 = vsub.s32 %v7119, %v7121
    %v7123 = vrot.slane %v7109, %v7122
    %v7124 = vcombine.low %v7116, %v7123
    %v7125 = vcombine.low %v2301, %v2305
    %v7126 = vcombine.low %v2309, %v2313
    %v7127 = vcombine.low %v2317, %v2321
    %v7128 = vcombine.low %v2325, %v2329
    %v7130 = vunpack.c.l.s4 1966171168
    %v7131 = vunpack.c.0.s8 %v7130
    %v7132 = vlaneseq
    %v7133 = vshrl.u32 %v7132, 7
    %v7134 = vsub.s32 %v7131, %v7133
    %v7135 = vrot.slane %v7125, %v7134
    %v7137 = vunpack.c.l.s4 1966171168
    %v7138 = vunpack.c.0.s8 %v7137
    %v7139 = vlaneseq
    %v7140 = vshrl.u32 %v7139, 7
    %v7141 = vsub.s32 %v7138, %v7140
    %v7142 = vrot.slane %v7126, %v7141
    %v7144 = vunpack.c.l.s4 1966171168
    %v7145 = vunpack.c.0.s8 %v7144
    %v7146 = vlaneseq
    %v7147 = vshrl.u32 %v7146, 7
    %v7148 = vsub.s32 %v7145, %v7147
    %v7149 = vrot.slane %v7127, %v7148
    %v7151 = vunpack.c.l.s4 1966171168
    %v7152 = vunpack.c.0.s8 %v7151
    %v7153 = vlaneseq
    %v7154 = vshrl.u32 %v7153, 7
    %v7155 = vsub.s32 %v7152, %v7154
    %v7156 = vrot.slane %v7128, %v7155
    %v7157 = vcombine.low %v7135, %v7142
    %v7158 = vcombine.low %v7149, %v7156
    %v7160 = vunpack.c.l.s4 1966171168
    %v7161 = vunpack.c.0.s8 %v7160
    %v7162 = vlaneseq
    %v7163 = vshrl.u32 %v7162, 7
    %v7164 = vsub.s32 %v7161, %v7163
    %v7165 = vrot.slane %v7157, %v7164
    %v7167 = vunpack.c.l.s4 1966171168
    %v7168 = vunpack.c.0.s8 %v7167
    %v7169 = vlaneseq
    %v7170 = vshrl.u32 %v7169, 7
    %v7171 = vsub.s32 %v7168, %v7170
    %v7172 = vrot.slane %v7158, %v7171
    %v7173 = vcombine.low %v7165, %v7172
    %v7174 = vcombine.low %v2333, %v2337
    %v7175 = vcombine.low %v2341, %v2345
    %v7176 = vcombine.low %v2349, %v2353
    %v7177 = vcombine.low %v2357, %v2361
    %v7179 = vunpack.c.l.s4 1966171168
    %v7180 = vunpack.c.0.s8 %v7179
    %v7181 = vlaneseq
    %v7182 = vshrl.u32 %v7181, 7
    %v7183 = vsub.s32 %v7180, %v7182
    %v7184 = vrot.slane %v7174, %v7183
    %v7186 = vunpack.c.l.s4 1966171168
    %v7187 = vunpack.c.0.s8 %v7186
    %v7188 = vlaneseq
    %v7189 = vshrl.u32 %v7188, 7
    %v7190 = vsub.s32 %v7187, %v7189
    %v7191 = vrot.slane %v7175, %v7190
    %v7193 = vunpack.c.l.s4 1966171168
    %v7194 = vunpack.c.0.s8 %v7193
    %v7195 = vlaneseq
    %v7196 = vshrl.u32 %v7195, 7
    %v7197 = vsub.s32 %v7194, %v7196
    %v7198 = vrot.slane %v7176, %v7197
    %v7200 = vunpack.c.l.s4 1966171168
    %v7201 = vunpack.c.0.s8 %v7200
    %v7202 = vlaneseq
    %v7203 = vshrl.u32 %v7202, 7
    %v7204 = vsub.s32 %v7201, %v7203
    %v7205 = vrot.slane %v7177, %v7204
    %v7206 = vcombine.low %v7184, %v7191
    %v7207 = vcombine.low %v7198, %v7205
    %v7209 = vunpack.c.l.s4 1966171168
    %v7210 = vunpack.c.0.s8 %v7209
    %v7211 = vlaneseq
    %v7212 = vshrl.u32 %v7211, 7
    %v7213 = vsub.s32 %v7210, %v7212
    %v7214 = vrot.slane %v7206, %v7213
    %v7216 = vunpack.c.l.s4 1966171168
    %v7217 = vunpack.c.0.s8 %v7216
    %v7218 = vlaneseq
    %v7219 = vshrl.u32 %v7218, 7
    %v7220 = vsub.s32 %v7217, %v7219
    %v7221 = vrot.slane %v7207, %v7220
    %v7222 = vcombine.low %v7214, %v7221
    %v7223 = vcombine.low %v2365, %v2369
    %v7224 = vcombine.low %v2373, %v2377
    %v7225 = vcombine.low %v2381, %v2385
    %v7226 = vcombine.low %v2389, %v2393
    %v7228 = vunpack.c.l.s4 1966171168
    %v7229 = vunpack.c.0.s8 %v7228
    %v7230 = vlaneseq
    %v7231 = vshrl.u32 %v7230, 7
    %v7232 = vsub.s32 %v7229, %v7231
    %v7233 = vrot.slane %v7223, %v7232
    %v7235 = vunpack.c.l.s4 1966171168
    %v7236 = vunpack.c.0.s8 %v7235
    %v7237 = vlaneseq
    %v7238 = vshrl.u32 %v7237, 7
    %v7239 = vsub.s32 %v7236, %v7238
    %v7240 = vrot.slane %v7224, %v7239
    %v7242 = vunpack.c.l.s4 1966171168
    %v7243 = vunpack.c.0.s8 %v7242
    %v7244 = vlaneseq
    %v7245 = vshrl.u32 %v7244, 7
    %v7246 = vsub.s32 %v7243, %v7245
    %v7247 = vrot.slane %v7225, %v7246
    %v7249 = vunpack.c.l.s4 1966171168
    %v7250 = vunpack.c.0.s8 %v7249
    %v7251 = vlaneseq
    %v7252 = vshrl.u32 %v7251, 7
    %v7253 = vsub.s32 %v7250, %v7252
    %v7254 = vrot.slane %v7226, %v7253
    %v7255 = vcombine.low %v7233, %v7240
    %v7256 = vcombine.low %v7247, %v7254
    %v7258 = vunpack.c.l.s4 1966171168
    %v7259 = vunpack.c.0.s8 %v7258
    %v7260 = vlaneseq
    %v7261 = vshrl.u32 %v7260, 7
    %v7262 = vsub.s32 %v7259, %v7261
    %v7263 = vrot.slane %v7255, %v7262
    %v7265 = vunpack.c.l.s4 1966171168
    %v7266 = vunpack.c.0.s8 %v7265
    %v7267 = vlaneseq
    %v7268 = vshrl.u32 %v7267, 7
    %v7269 = vsub.s32 %v7266, %v7268
    %v7270 = vrot.slane %v7256, %v7269
    %v7271 = vcombine.low %v7263, %v7270
    %v7272 = vcombine.low %v2397, %v2401
    %v7273 = vcombine.low %v2405, %v2409
    %v7274 = vcombine.low %v2413, %v2417
    %v7275 = vcombine.low %v2421, %v2425
    %v7277 = vunpack.c.l.s4 1966171168
    %v7278 = vunpack.c.0.s8 %v7277
    %v7279 = vlaneseq
    %v7280 = vshrl.u32 %v7279, 7
    %v7281 = vsub.s32 %v7278, %v7280
    %v7282 = vrot.slane %v7272, %v7281
    %v7284 = vunpack.c.l.s4 1966171168
    %v7285 = vunpack.c.0.s8 %v7284
    %v7286 = vlaneseq
    %v7287 = vshrl.u32 %v7286, 7
    %v7288 = vsub.s32 %v7285, %v7287
    %v7289 = vrot.slane %v7273, %v7288
    %v7291 = vunpack.c.l.s4 1966171168
    %v7292 = vunpack.c.0.s8 %v7291
    %v7293 = vlaneseq
    %v7294 = vshrl.u32 %v7293, 7
    %v7295 = vsub.s32 %v7292, %v7294
    %v7296 = vrot.slane %v7274, %v7295
    %v7298 = vunpack.c.l.s4 1966171168
    %v7299 = vunpack.c.0.s8 %v7298
    %v7300 = vlaneseq
    %v7301 = vshrl.u32 %v7300, 7
    %v7302 = vsub.s32 %v7299, %v7301
    %v7303 = vrot.slane %v7275, %v7302
    %v7304 = vcombine.low %v7282, %v7289
    %v7305 = vcombine.low %v7296, %v7303
    %v7307 = vunpack.c.l.s4 1966171168
    %v7308 = vunpack.c.0.s8 %v7307
    %v7309 = vlaneseq
    %v7310 = vshrl.u32 %v7309, 7
    %v7311 = vsub.s32 %v7308, %v7310
    %v7312 = vrot.slane %v7304, %v7311
    %v7314 = vunpack.c.l.s4 1966171168
    %v7315 = vunpack.c.0.s8 %v7314
    %v7316 = vlaneseq
    %v7317 = vshrl.u32 %v7316, 7
    %v7318 = vsub.s32 %v7315, %v7317
    %v7319 = vrot.slane %v7305, %v7318
    %v7320 = vcombine.low %v7312, %v7319
    %v7321 = vcombine.low %v2429, %v2433
    %v7322 = vcombine.low %v2437, %v2441
    %v7323 = vcombine.low %v2445, %v2449
    %v7324 = vcombine.low %v2453, %v2457
    %v7326 = vunpack.c.l.s4 1966171168
    %v7327 = vunpack.c.0.s8 %v7326
    %v7328 = vlaneseq
    %v7329 = vshrl.u32 %v7328, 7
    %v7330 = vsub.s32 %v7327, %v7329
    %v7331 = vrot.slane %v7321, %v7330
    %v7333 = vunpack.c.l.s4 1966171168
    %v7334 = vunpack.c.0.s8 %v7333
    %v7335 = vlaneseq
    %v7336 = vshrl.u32 %v7335, 7
    %v7337 = vsub.s32 %v7334, %v7336
    %v7338 = vrot.slane %v7322, %v7337
    %v7340 = vunpack.c.l.s4 1966171168
    %v7341 = vunpack.c.0.s8 %v7340
    %v7342 = vlaneseq
    %v7343 = vshrl.u32 %v7342, 7
    %v7344 = vsub.s32 %v7341, %v7343
    %v7345 = vrot.slane %v7323, %v7344
    %v7347 = vunpack.c.l.s4 1966171168
    %v7348 = vunpack.c.0.s8 %v7347
    %v7349 = vlaneseq
    %v7350 = vshrl.u32 %v7349, 7
    %v7351 = vsub.s32 %v7348, %v7350
    %v7352 = vrot.slane %v7324, %v7351
    %v7353 = vcombine.low %v7331, %v7338
    %v7354 = vcombine.low %v7345, %v7352
    %v7356 = vunpack.c.l.s4 1966171168
    %v7357 = vunpack.c.0.s8 %v7356
    %v7358 = vlaneseq
    %v7359 = vshrl.u32 %v7358, 7
    %v7360 = vsub.s32 %v7357, %v7359
    %v7361 = vrot.slane %v7353, %v7360
    %v7363 = vunpack.c.l.s4 1966171168
    %v7364 = vunpack.c.0.s8 %v7363
    %v7365 = vlaneseq
    %v7366 = vshrl.u32 %v7365, 7
    %v7367 = vsub.s32 %v7364, %v7366
    %v7368 = vrot.slane %v7354, %v7367
    %v7369 = vcombine.low %v7361, %v7368
    %v7370 = vcombine.low %v2461, %v2465
    %v7371 = vcombine.low %v2469, %v2473
    %v7372 = vcombine.low %v2477, %v2481
    %v7373 = vcombine.low %v2485, %v2489
    %v7375 = vunpack.c.l.s4 1966171168
    %v7376 = vunpack.c.0.s8 %v7375
    %v7377 = vlaneseq
    %v7378 = vshrl.u32 %v7377, 7
    %v7379 = vsub.s32 %v7376, %v7378
    %v7380 = vrot.slane %v7370, %v7379
    %v7382 = vunpack.c.l.s4 1966171168
    %v7383 = vunpack.c.0.s8 %v7382
    %v7384 = vlaneseq
    %v7385 = vshrl.u32 %v7384, 7
    %v7386 = vsub.s32 %v7383, %v7385
    %v7387 = vrot.slane %v7371, %v7386
    %v7389 = vunpack.c.l.s4 1966171168
    %v7390 = vunpack.c.0.s8 %v7389
    %v7391 = vlaneseq
    %v7392 = vshrl.u32 %v7391, 7
    %v7393 = vsub.s32 %v7390, %v7392
    %v7394 = vrot.slane %v7372, %v7393
    %v7396 = vunpack.c.l.s4 1966171168
    %v7397 = vunpack.c.0.s8 %v7396
    %v7398 = vlaneseq
    %v7399 = vshrl.u32 %v7398, 7
    %v7400 = vsub.s32 %v7397, %v7399
    %v7401 = vrot.slane %v7373, %v7400
    %v7402 = vcombine.low %v7380, %v7387
    %v7403 = vcombine.low %v7394, %v7401
    %v7405 = vunpack.c.l.s4 1966171168
    %v7406 = vunpack.c.0.s8 %v7405
    %v7407 = vlaneseq
    %v7408 = vshrl.u32 %v7407, 7
    %v7409 = vsub.s32 %v7406, %v7408
    %v7410 = vrot.slane %v7402, %v7409
    %v7412 = vunpack.c.l.s4 1966171168
    %v7413 = vunpack.c.0.s8 %v7412
    %v7414 = vlaneseq
    %v7415 = vshrl.u32 %v7414, 7
    %v7416 = vsub.s32 %v7413, %v7415
    %v7417 = vrot.slane %v7403, %v7416
    %v7418 = vcombine.low %v7410, %v7417
    %v7419 = vcombine.low %v2493, %v2497
    %v7420 = vcombine.low %v2501, %v2505
    %v7421 = vcombine.low %v2509, %v2513
    %v7422 = vcombine.low %v2517, %v2521
    %v7424 = vunpack.c.l.s4 1966171168
    %v7425 = vunpack.c.0.s8 %v7424
    %v7426 = vlaneseq
    %v7427 = vshrl.u32 %v7426, 7
    %v7428 = vsub.s32 %v7425, %v7427
    %v7429 = vrot.slane %v7419, %v7428
    %v7431 = vunpack.c.l.s4 1966171168
    %v7432 = vunpack.c.0.s8 %v7431
    %v7433 = vlaneseq
    %v7434 = vshrl.u32 %v7433, 7
    %v7435 = vsub.s32 %v7432, %v7434
    %v7436 = vrot.slane %v7420, %v7435
    %v7438 = vunpack.c.l.s4 1966171168
    %v7439 = vunpack.c.0.s8 %v7438
    %v7440 = vlaneseq
    %v7441 = vshrl.u32 %v7440, 7
    %v7442 = vsub.s32 %v7439, %v7441
    %v7443 = vrot.slane %v7421, %v7442
    %v7445 = vunpack.c.l.s4 1966171168
    %v7446 = vunpack.c.0.s8 %v7445
    %v7447 = vlaneseq
    %v7448 = vshrl.u32 %v7447, 7
    %v7449 = vsub.s32 %v7446, %v7448
    %v7450 = vrot.slane %v7422, %v7449
    %v7451 = vcombine.low %v7429, %v7436
    %v7452 = vcombine.low %v7443, %v7450
    %v7454 = vunpack.c.l.s4 1966171168
    %v7455 = vunpack.c.0.s8 %v7454
    %v7456 = vlaneseq
    %v7457 = vshrl.u32 %v7456, 7
    %v7458 = vsub.s32 %v7455, %v7457
    %v7459 = vrot.slane %v7451, %v7458
    %v7461 = vunpack.c.l.s4 1966171168
    %v7462 = vunpack.c.0.s8 %v7461
    %v7463 = vlaneseq
    %v7464 = vshrl.u32 %v7463, 7
    %v7465 = vsub.s32 %v7462, %v7464
    %v7466 = vrot.slane %v7452, %v7465
    %v7467 = vcombine.low %v7459, %v7466
    %v7468 = vcombine.low %v2525, %v2529
    %v7469 = vcombine.low %v2533, %v2537
    %v7470 = vcombine.low %v2541, %v2545
    %v7471 = vcombine.low %v2549, %v2553
    %v7473 = vunpack.c.l.s4 1966171168
    %v7474 = vunpack.c.0.s8 %v7473
    %v7475 = vlaneseq
    %v7476 = vshrl.u32 %v7475, 7
    %v7477 = vsub.s32 %v7474, %v7476
    %v7478 = vrot.slane %v7468, %v7477
    %v7480 = vunpack.c.l.s4 1966171168
    %v7481 = vunpack.c.0.s8 %v7480
    %v7482 = vlaneseq
    %v7483 = vshrl.u32 %v7482, 7
    %v7484 = vsub.s32 %v7481, %v7483
    %v7485 = vrot.slane %v7469, %v7484
    %v7487 = vunpack.c.l.s4 1966171168
    %v7488 = vunpack.c.0.s8 %v7487
    %v7489 = vlaneseq
    %v7490 = vshrl.u32 %v7489, 7
    %v7491 = vsub.s32 %v7488, %v7490
    %v7492 = vrot.slane %v7470, %v7491
    %v7494 = vunpack.c.l.s4 1966171168
    %v7495 = vunpack.c.0.s8 %v7494
    %v7496 = vlaneseq
    %v7497 = vshrl.u32 %v7496, 7
    %v7498 = vsub.s32 %v7495, %v7497
    %v7499 = vrot.slane %v7471, %v7498
    %v7500 = vcombine.low %v7478, %v7485
    %v7501 = vcombine.low %v7492, %v7499
    %v7503 = vunpack.c.l.s4 1966171168
    %v7504 = vunpack.c.0.s8 %v7503
    %v7505 = vlaneseq
    %v7506 = vshrl.u32 %v7505, 7
    %v7507 = vsub.s32 %v7504, %v7506
    %v7508 = vrot.slane %v7500, %v7507
    %v7510 = vunpack.c.l.s4 1966171168
    %v7511 = vunpack.c.0.s8 %v7510
    %v7512 = vlaneseq
    %v7513 = vshrl.u32 %v7512, 7
    %v7514 = vsub.s32 %v7511, %v7513
    %v7515 = vrot.slane %v7501, %v7514
    %v7516 = vcombine.low %v7508, %v7515
    %v7517 = vcombine.low %v2557, %v2561
    %v7518 = vcombine.low %v2565, %v2569
    %v7519 = vcombine.low %v2573, %v2577
    %v7520 = vcombine.low %v2581, %v2585
    %v7522 = vunpack.c.l.s4 1966171168
    %v7523 = vunpack.c.0.s8 %v7522
    %v7524 = vlaneseq
    %v7525 = vshrl.u32 %v7524, 7
    %v7526 = vsub.s32 %v7523, %v7525
    %v7527 = vrot.slane %v7517, %v7526
    %v7529 = vunpack.c.l.s4 1966171168
    %v7530 = vunpack.c.0.s8 %v7529
    %v7531 = vlaneseq
    %v7532 = vshrl.u32 %v7531, 7
    %v7533 = vsub.s32 %v7530, %v7532
    %v7534 = vrot.slane %v7518, %v7533
    %v7536 = vunpack.c.l.s4 1966171168
    %v7537 = vunpack.c.0.s8 %v7536
    %v7538 = vlaneseq
    %v7539 = vshrl.u32 %v7538, 7
    %v7540 = vsub.s32 %v7537, %v7539
    %v7541 = vrot.slane %v7519, %v7540
    %v7543 = vunpack.c.l.s4 1966171168
    %v7544 = vunpack.c.0.s8 %v7543
    %v7545 = vlaneseq
    %v7546 = vshrl.u32 %v7545, 7
    %v7547 = vsub.s32 %v7544, %v7546
    %v7548 = vrot.slane %v7520, %v7547
    %v7549 = vcombine.low %v7527, %v7534
    %v7550 = vcombine.low %v7541, %v7548
    %v7552 = vunpack.c.l.s4 1966171168
    %v7553 = vunpack.c.0.s8 %v7552
    %v7554 = vlaneseq
    %v7555 = vshrl.u32 %v7554, 7
    %v7556 = vsub.s32 %v7553, %v7555
    %v7557 = vrot.slane %v7549, %v7556
    %v7559 = vunpack.c.l.s4 1966171168
    %v7560 = vunpack.c.0.s8 %v7559
    %v7561 = vlaneseq
    %v7562 = vshrl.u32 %v7561, 7
    %v7563 = vsub.s32 %v7560, %v7562
    %v7564 = vrot.slane %v7550, %v7563
    %v7565 = vcombine.low %v7557, %v7564
    %v7566 = vcombine.low %v2589, %v2593
    %v7567 = vcombine.low %v2597, %v2601
    %v7568 = vcombine.low %v2605, %v2609
    %v7569 = vcombine.low %v2613, %v2617
    %v7571 = vunpack.c.l.s4 1966171168
    %v7572 = vunpack.c.0.s8 %v7571
    %v7573 = vlaneseq
    %v7574 = vshrl.u32 %v7573, 7
    %v7575 = vsub.s32 %v7572, %v7574
    %v7576 = vrot.slane %v7566, %v7575
    %v7578 = vunpack.c.l.s4 1966171168
    %v7579 = vunpack.c.0.s8 %v7578
    %v7580 = vlaneseq
    %v7581 = vshrl.u32 %v7580, 7
    %v7582 = vsub.s32 %v7579, %v7581
    %v7583 = vrot.slane %v7567, %v7582
    %v7585 = vunpack.c.l.s4 1966171168
    %v7586 = vunpack.c.0.s8 %v7585
    %v7587 = vlaneseq
    %v7588 = vshrl.u32 %v7587, 7
    %v7589 = vsub.s32 %v7586, %v7588
    %v7590 = vrot.slane %v7568, %v7589
    %v7592 = vunpack.c.l.s4 1966171168
    %v7593 = vunpack.c.0.s8 %v7592
    %v7594 = vlaneseq
    %v7595 = vshrl.u32 %v7594, 7
    %v7596 = vsub.s32 %v7593, %v7595
    %v7597 = vrot.slane %v7569, %v7596
    %v7598 = vcombine.low %v7576, %v7583
    %v7599 = vcombine.low %v7590, %v7597
    %v7601 = vunpack.c.l.s4 1966171168
    %v7602 = vunpack.c.0.s8 %v7601
    %v7603 = vlaneseq
    %v7604 = vshrl.u32 %v7603, 7
    %v7605 = vsub.s32 %v7602, %v7604
    %v7606 = vrot.slane %v7598, %v7605
    %v7608 = vunpack.c.l.s4 1966171168
    %v7609 = vunpack.c.0.s8 %v7608
    %v7610 = vlaneseq
    %v7611 = vshrl.u32 %v7610, 7
    %v7612 = vsub.s32 %v7609, %v7611
    %v7613 = vrot.slane %v7599, %v7612
    %v7614 = vcombine.low %v7606, %v7613
    %v7615 = vcombine.low %v2621, %v2625
    %v7616 = vcombine.low %v2629, %v2633
    %v7617 = vcombine.low %v2637, %v2641
    %v7618 = vcombine.low %v2645, %v2649
    %v7620 = vunpack.c.l.s4 1966171168
    %v7621 = vunpack.c.0.s8 %v7620
    %v7622 = vlaneseq
    %v7623 = vshrl.u32 %v7622, 7
    %v7624 = vsub.s32 %v7621, %v7623
    %v7625 = vrot.slane %v7615, %v7624
    %v7627 = vunpack.c.l.s4 1966171168
    %v7628 = vunpack.c.0.s8 %v7627
    %v7629 = vlaneseq
    %v7630 = vshrl.u32 %v7629, 7
    %v7631 = vsub.s32 %v7628, %v7630
    %v7632 = vrot.slane %v7616, %v7631
    %v7634 = vunpack.c.l.s4 1966171168
    %v7635 = vunpack.c.0.s8 %v7634
    %v7636 = vlaneseq
    %v7637 = vshrl.u32 %v7636, 7
    %v7638 = vsub.s32 %v7635, %v7637
    %v7639 = vrot.slane %v7617, %v7638
    %v7641 = vunpack.c.l.s4 1966171168
    %v7642 = vunpack.c.0.s8 %v7641
    %v7643 = vlaneseq
    %v7644 = vshrl.u32 %v7643, 7
    %v7645 = vsub.s32 %v7642, %v7644
    %v7646 = vrot.slane %v7618, %v7645
    %v7647 = vcombine.low %v7625, %v7632
    %v7648 = vcombine.low %v7639, %v7646
    %v7650 = vunpack.c.l.s4 1966171168
    %v7651 = vunpack.c.0.s8 %v7650
    %v7652 = vlaneseq
    %v7653 = vshrl.u32 %v7652, 7
    %v7654 = vsub.s32 %v7651, %v7653
    %v7655 = vrot.slane %v7647, %v7654
    %v7657 = vunpack.c.l.s4 1966171168
    %v7658 = vunpack.c.0.s8 %v7657
    %v7659 = vlaneseq
    %v7660 = vshrl.u32 %v7659, 7
    %v7661 = vsub.s32 %v7658, %v7660
    %v7662 = vrot.slane %v7648, %v7661
    %v7663 = vcombine.low %v7655, %v7662
    %v7664 = vcombine.low %v2653, %v2657
    %v7665 = vcombine.low %v2661, %v2665
    %v7666 = vcombine.low %v2669, %v2673
    %v7667 = vcombine.low %v2677, %v2681
    %v7669 = vunpack.c.l.s4 1966171168
    %v7670 = vunpack.c.0.s8 %v7669
    %v7671 = vlaneseq
    %v7672 = vshrl.u32 %v7671, 7
    %v7673 = vsub.s32 %v7670, %v7672
    %v7674 = vrot.slane %v7664, %v7673
    %v7676 = vunpack.c.l.s4 1966171168
    %v7677 = vunpack.c.0.s8 %v7676
    %v7678 = vlaneseq
    %v7679 = vshrl.u32 %v7678, 7
    %v7680 = vsub.s32 %v7677, %v7679
    %v7681 = vrot.slane %v7665, %v7680
    %v7683 = vunpack.c.l.s4 1966171168
    %v7684 = vunpack.c.0.s8 %v7683
    %v7685 = vlaneseq
    %v7686 = vshrl.u32 %v7685, 7
    %v7687 = vsub.s32 %v7684, %v7686
    %v7688 = vrot.slane %v7666, %v7687
    %v7690 = vunpack.c.l.s4 1966171168
    %v7691 = vunpack.c.0.s8 %v7690
    %v7692 = vlaneseq
    %v7693 = vshrl.u32 %v7692, 7
    %v7694 = vsub.s32 %v7691, %v7693
    %v7695 = vrot.slane %v7667, %v7694
    %v7696 = vcombine.low %v7674, %v7681
    %v7697 = vcombine.low %v7688, %v7695
    %v7699 = vunpack.c.l.s4 1966171168
    %v7700 = vunpack.c.0.s8 %v7699
    %v7701 = vlaneseq
    %v7702 = vshrl.u32 %v7701, 7
    %v7703 = vsub.s32 %v7700, %v7702
    %v7704 = vrot.slane %v7696, %v7703
    %v7706 = vunpack.c.l.s4 1966171168
    %v7707 = vunpack.c.0.s8 %v7706
    %v7708 = vlaneseq
    %v7709 = vshrl.u32 %v7708, 7
    %v7710 = vsub.s32 %v7707, %v7709
    %v7711 = vrot.slane %v7697, %v7710
    %v7712 = vcombine.low %v7704, %v7711
    %v7713 = vcombine.low %v2685, %v2689
    %v7714 = vcombine.low %v2693, %v2697
    %v7715 = vcombine.low %v2701, %v2705
    %v7716 = vcombine.low %v2709, %v2713
    %v7718 = vunpack.c.l.s4 1966171168
    %v7719 = vunpack.c.0.s8 %v7718
    %v7720 = vlaneseq
    %v7721 = vshrl.u32 %v7720, 7
    %v7722 = vsub.s32 %v7719, %v7721
    %v7723 = vrot.slane %v7713, %v7722
    %v7725 = vunpack.c.l.s4 1966171168
    %v7726 = vunpack.c.0.s8 %v7725
    %v7727 = vlaneseq
    %v7728 = vshrl.u32 %v7727, 7
    %v7729 = vsub.s32 %v7726, %v7728
    %v7730 = vrot.slane %v7714, %v7729
    %v7732 = vunpack.c.l.s4 1966171168
    %v7733 = vunpack.c.0.s8 %v7732
    %v7734 = vlaneseq
    %v7735 = vshrl.u32 %v7734, 7
    %v7736 = vsub.s32 %v7733, %v7735
    %v7737 = vrot.slane %v7715, %v7736
    %v7739 = vunpack.c.l.s4 1966171168
    %v7740 = vunpack.c.0.s8 %v7739
    %v7741 = vlaneseq
    %v7742 = vshrl.u32 %v7741, 7
    %v7743 = vsub.s32 %v7740, %v7742
    %v7744 = vrot.slane %v7716, %v7743
    %v7745 = vcombine.low %v7723, %v7730
    %v7746 = vcombine.low %v7737, %v7744
    %v7748 = vunpack.c.l.s4 1966171168
    %v7749 = vunpack.c.0.s8 %v7748
    %v7750 = vlaneseq
    %v7751 = vshrl.u32 %v7750, 7
    %v7752 = vsub.s32 %v7749, %v7751
    %v7753 = vrot.slane %v7745, %v7752
    %v7755 = vunpack.c.l.s4 1966171168
    %v7756 = vunpack.c.0.s8 %v7755
    %v7757 = vlaneseq
    %v7758 = vshrl.u32 %v7757, 7
    %v7759 = vsub.s32 %v7756, %v7758
    %v7760 = vrot.slane %v7746, %v7759
    %v7761 = vcombine.low %v7753, %v7760
    %v7762 = vcombine.low %v2717, %v2721
    %v7763 = vcombine.low %v2725, %v2729
    %v7764 = vcombine.low %v2733, %v2737
    %v7765 = vcombine.low %v2741, %v2745
    %v7767 = vunpack.c.l.s4 1966171168
    %v7768 = vunpack.c.0.s8 %v7767
    %v7769 = vlaneseq
    %v7770 = vshrl.u32 %v7769, 7
    %v7771 = vsub.s32 %v7768, %v7770
    %v7772 = vrot.slane %v7762, %v7771
    %v7774 = vunpack.c.l.s4 1966171168
    %v7775 = vunpack.c.0.s8 %v7774
    %v7776 = vlaneseq
    %v7777 = vshrl.u32 %v7776, 7
    %v7778 = vsub.s32 %v7775, %v7777
    %v7779 = vrot.slane %v7763, %v7778
    %v7781 = vunpack.c.l.s4 1966171168
    %v7782 = vunpack.c.0.s8 %v7781
    %v7783 = vlaneseq
    %v7784 = vshrl.u32 %v7783, 7
    %v7785 = vsub.s32 %v7782, %v7784
    %v7786 = vrot.slane %v7764, %v7785
    %v7788 = vunpack.c.l.s4 1966171168
    %v7789 = vunpack.c.0.s8 %v7788
    %v7790 = vlaneseq
    %v7791 = vshrl.u32 %v7790, 7
    %v7792 = vsub.s32 %v7789, %v7791
    %v7793 = vrot.slane %v7765, %v7792
    %v7794 = vcombine.low %v7772, %v7779
    %v7795 = vcombine.low %v7786, %v7793
    %v7797 = vunpack.c.l.s4 1966171168
    %v7798 = vunpack.c.0.s8 %v7797
    %v7799 = vlaneseq
    %v7800 = vshrl.u32 %v7799, 7
    %v7801 = vsub.s32 %v7798, %v7800
    %v7802 = vrot.slane %v7794, %v7801
    %v7804 = vunpack.c.l.s4 1966171168
    %v7805 = vunpack.c.0.s8 %v7804
    %v7806 = vlaneseq
    %v7807 = vshrl.u32 %v7806, 7
    %v7808 = vsub.s32 %v7805, %v7807
    %v7809 = vrot.slane %v7795, %v7808
    %v7810 = vcombine.low %v7802, %v7809
    %v7811 = vcombine.low %v2749, %v2753
    %v7812 = vcombine.low %v2757, %v2761
    %v7813 = vcombine.low %v2765, %v2769
    %v7814 = vcombine.low %v2773, %v2777
    %v7816 = vunpack.c.l.s4 1966171168
    %v7817 = vunpack.c.0.s8 %v7816
    %v7818 = vlaneseq
    %v7819 = vshrl.u32 %v7818, 7
    %v7820 = vsub.s32 %v7817, %v7819
    %v7821 = vrot.slane %v7811, %v7820
    %v7823 = vunpack.c.l.s4 1966171168
    %v7824 = vunpack.c.0.s8 %v7823
    %v7825 = vlaneseq
    %v7826 = vshrl.u32 %v7825, 7
    %v7827 = vsub.s32 %v7824, %v7826
    %v7828 = vrot.slane %v7812, %v7827
    %v7830 = vunpack.c.l.s4 1966171168
    %v7831 = vunpack.c.0.s8 %v7830
    %v7832 = vlaneseq
    %v7833 = vshrl.u32 %v7832, 7
    %v7834 = vsub.s32 %v7831, %v7833
    %v7835 = vrot.slane %v7813, %v7834
    %v7837 = vunpack.c.l.s4 1966171168
    %v7838 = vunpack.c.0.s8 %v7837
    %v7839 = vlaneseq
    %v7840 = vshrl.u32 %v7839, 7
    %v7841 = vsub.s32 %v7838, %v7840
    %v7842 = vrot.slane %v7814, %v7841
    %v7843 = vcombine.low %v7821, %v7828
    %v7844 = vcombine.low %v7835, %v7842
    %v7846 = vunpack.c.l.s4 1966171168
    %v7847 = vunpack.c.0.s8 %v7846
    %v7848 = vlaneseq
    %v7849 = vshrl.u32 %v7848, 7
    %v7850 = vsub.s32 %v7847, %v7849
    %v7851 = vrot.slane %v7843, %v7850
    %v7853 = vunpack.c.l.s4 1966171168
    %v7854 = vunpack.c.0.s8 %v7853
    %v7855 = vlaneseq
    %v7856 = vshrl.u32 %v7855, 7
    %v7857 = vsub.s32 %v7854, %v7856
    %v7858 = vrot.slane %v7844, %v7857
    %v7859 = vcombine.low %v7851, %v7858
    %v7860 = vcombine.low %v2781, %v2785
    %v7861 = vcombine.low %v2789, %v2793
    %v7862 = vcombine.low %v2797, %v2801
    %v7863 = vcombine.low %v2805, %v2809
    %v7865 = vunpack.c.l.s4 1966171168
    %v7866 = vunpack.c.0.s8 %v7865
    %v7867 = vlaneseq
    %v7868 = vshrl.u32 %v7867, 7
    %v7869 = vsub.s32 %v7866, %v7868
    %v7870 = vrot.slane %v7860, %v7869
    %v7872 = vunpack.c.l.s4 1966171168
    %v7873 = vunpack.c.0.s8 %v7872
    %v7874 = vlaneseq
    %v7875 = vshrl.u32 %v7874, 7
    %v7876 = vsub.s32 %v7873, %v7875
    %v7877 = vrot.slane %v7861, %v7876
    %v7879 = vunpack.c.l.s4 1966171168
    %v7880 = vunpack.c.0.s8 %v7879
    %v7881 = vlaneseq
    %v7882 = vshrl.u32 %v7881, 7
    %v7883 = vsub.s32 %v7880, %v7882
    %v7884 = vrot.slane %v7862, %v7883
    %v7886 = vunpack.c.l.s4 1966171168
    %v7887 = vunpack.c.0.s8 %v7886
    %v7888 = vlaneseq
    %v7889 = vshrl.u32 %v7888, 7
    %v7890 = vsub.s32 %v7887, %v7889
    %v7891 = vrot.slane %v7863, %v7890
    %v7892 = vcombine.low %v7870, %v7877
    %v7893 = vcombine.low %v7884, %v7891
    %v7895 = vunpack.c.l.s4 1966171168
    %v7896 = vunpack.c.0.s8 %v7895
    %v7897 = vlaneseq
    %v7898 = vshrl.u32 %v7897, 7
    %v7899 = vsub.s32 %v7896, %v7898
    %v7900 = vrot.slane %v7892, %v7899
    %v7902 = vunpack.c.l.s4 1966171168
    %v7903 = vunpack.c.0.s8 %v7902
    %v7904 = vlaneseq
    %v7905 = vshrl.u32 %v7904, 7
    %v7906 = vsub.s32 %v7903, %v7905
    %v7907 = vrot.slane %v7893, %v7906
    %v7908 = vcombine.low %v7900, %v7907
    %v7909 = vcombine.low %v2813, %v2817
    %v7910 = vcombine.low %v2821, %v2825
    %v7911 = vcombine.low %v2829, %v2833
    %v7912 = vcombine.low %v2837, %v2841
    %v7914 = vunpack.c.l.s4 1966171168
    %v7915 = vunpack.c.0.s8 %v7914
    %v7916 = vlaneseq
    %v7917 = vshrl.u32 %v7916, 7
    %v7918 = vsub.s32 %v7915, %v7917
    %v7919 = vrot.slane %v7909, %v7918
    %v7921 = vunpack.c.l.s4 1966171168
    %v7922 = vunpack.c.0.s8 %v7921
    %v7923 = vlaneseq
    %v7924 = vshrl.u32 %v7923, 7
    %v7925 = vsub.s32 %v7922, %v7924
    %v7926 = vrot.slane %v7910, %v7925
    %v7928 = vunpack.c.l.s4 1966171168
    %v7929 = vunpack.c.0.s8 %v7928
    %v7930 = vlaneseq
    %v7931 = vshrl.u32 %v7930, 7
    %v7932 = vsub.s32 %v7929, %v7931
    %v7933 = vrot.slane %v7911, %v7932
    %v7935 = vunpack.c.l.s4 1966171168
    %v7936 = vunpack.c.0.s8 %v7935
    %v7937 = vlaneseq
    %v7938 = vshrl.u32 %v7937, 7
    %v7939 = vsub.s32 %v7936, %v7938
    %v7940 = vrot.slane %v7912, %v7939
    %v7941 = vcombine.low %v7919, %v7926
    %v7942 = vcombine.low %v7933, %v7940
    %v7944 = vunpack.c.l.s4 1966171168
    %v7945 = vunpack.c.0.s8 %v7944
    %v7946 = vlaneseq
    %v7947 = vshrl.u32 %v7946, 7
    %v7948 = vsub.s32 %v7945, %v7947
    %v7949 = vrot.slane %v7941, %v7948
    %v7951 = vunpack.c.l.s4 1966171168
    %v7952 = vunpack.c.0.s8 %v7951
    %v7953 = vlaneseq
    %v7954 = vshrl.u32 %v7953, 7
    %v7955 = vsub.s32 %v7952, %v7954
    %v7956 = vrot.slane %v7942, %v7955
    %v7957 = vcombine.low %v7949, %v7956
    %v7958 = vcombine.low %v2845, %v2849
    %v7959 = vcombine.low %v2853, %v2857
    %v7960 = vcombine.low %v2861, %v2865
    %v7961 = vcombine.low %v2869, %v2873
    %v7963 = vunpack.c.l.s4 1966171168
    %v7964 = vunpack.c.0.s8 %v7963
    %v7965 = vlaneseq
    %v7966 = vshrl.u32 %v7965, 7
    %v7967 = vsub.s32 %v7964, %v7966
    %v7968 = vrot.slane %v7958, %v7967
    %v7970 = vunpack.c.l.s4 1966171168
    %v7971 = vunpack.c.0.s8 %v7970
    %v7972 = vlaneseq
    %v7973 = vshrl.u32 %v7972, 7
    %v7974 = vsub.s32 %v7971, %v7973
    %v7975 = vrot.slane %v7959, %v7974
    %v7977 = vunpack.c.l.s4 1966171168
    %v7978 = vunpack.c.0.s8 %v7977
    %v7979 = vlaneseq
    %v7980 = vshrl.u32 %v7979, 7
    %v7981 = vsub.s32 %v7978, %v7980
    %v7982 = vrot.slane %v7960, %v7981
    %v7984 = vunpack.c.l.s4 1966171168
    %v7985 = vunpack.c.0.s8 %v7984
    %v7986 = vlaneseq
    %v7987 = vshrl.u32 %v7986, 7
    %v7988 = vsub.s32 %v7985, %v7987
    %v7989 = vrot.slane %v7961, %v7988
    %v7990 = vcombine.low %v7968, %v7975
    %v7991 = vcombine.low %v7982, %v7989
    %v7993 = vunpack.c.l.s4 1966171168
    %v7994 = vunpack.c.0.s8 %v7993
    %v7995 = vlaneseq
    %v7996 = vshrl.u32 %v7995, 7
    %v7997 = vsub.s32 %v7994, %v7996
    %v7998 = vrot.slane %v7990, %v7997
    %v8000 = vunpack.c.l.s4 1966171168
    %v8001 = vunpack.c.0.s8 %v8000
    %v8002 = vlaneseq
    %v8003 = vshrl.u32 %v8002, 7
    %v8004 = vsub.s32 %v8001, %v8003
    %v8005 = vrot.slane %v7991, %v8004
    %v8006 = vcombine.low %v7998, %v8005
    %v8007 = vcombine.low %v2877, %v2881
    %v8008 = vcombine.low %v2885, %v2889
    %v8009 = vcombine.low %v2893, %v2897
    %v8010 = vcombine.low %v2901, %v2905
    %v8012 = vunpack.c.l.s4 1966171168
    %v8013 = vunpack.c.0.s8 %v8012
    %v8014 = vlaneseq
    %v8015 = vshrl.u32 %v8014, 7
    %v8016 = vsub.s32 %v8013, %v8015
    %v8017 = vrot.slane %v8007, %v8016
    %v8019 = vunpack.c.l.s4 1966171168
    %v8020 = vunpack.c.0.s8 %v8019
    %v8021 = vlaneseq
    %v8022 = vshrl.u32 %v8021, 7
    %v8023 = vsub.s32 %v8020, %v8022
    %v8024 = vrot.slane %v8008, %v8023
    %v8026 = vunpack.c.l.s4 1966171168
    %v8027 = vunpack.c.0.s8 %v8026
    %v8028 = vlaneseq
    %v8029 = vshrl.u32 %v8028, 7
    %v8030 = vsub.s32 %v8027, %v8029
    %v8031 = vrot.slane %v8009, %v8030
    %v8033 = vunpack.c.l.s4 1966171168
    %v8034 = vunpack.c.0.s8 %v8033
    %v8035 = vlaneseq
    %v8036 = vshrl.u32 %v8035, 7
    %v8037 = vsub.s32 %v8034, %v8036
    %v8038 = vrot.slane %v8010, %v8037
    %v8039 = vcombine.low %v8017, %v8024
    %v8040 = vcombine.low %v8031, %v8038
    %v8042 = vunpack.c.l.s4 1966171168
    %v8043 = vunpack.c.0.s8 %v8042
    %v8044 = vlaneseq
    %v8045 = vshrl.u32 %v8044, 7
    %v8046 = vsub.s32 %v8043, %v8045
    %v8047 = vrot.slane %v8039, %v8046
    %v8049 = vunpack.c.l.s4 1966171168
    %v8050 = vunpack.c.0.s8 %v8049
    %v8051 = vlaneseq
    %v8052 = vshrl.u32 %v8051, 7
    %v8053 = vsub.s32 %v8050, %v8052
    %v8054 = vrot.slane %v8040, %v8053
    %v8055 = vcombine.low %v8047, %v8054
    %v8056 = vcombine.low %v2909, %v2913
    %v8057 = vcombine.low %v2917, %v2921
    %v8058 = vcombine.low %v2925, %v2929
    %v8059 = vcombine.low %v2933, %v2937
    %v8061 = vunpack.c.l.s4 1966171168
    %v8062 = vunpack.c.0.s8 %v8061
    %v8063 = vlaneseq
    %v8064 = vshrl.u32 %v8063, 7
    %v8065 = vsub.s32 %v8062, %v8064
    %v8066 = vrot.slane %v8056, %v8065
    %v8068 = vunpack.c.l.s4 1966171168
    %v8069 = vunpack.c.0.s8 %v8068
    %v8070 = vlaneseq
    %v8071 = vshrl.u32 %v8070, 7
    %v8072 = vsub.s32 %v8069, %v8071
    %v8073 = vrot.slane %v8057, %v8072
    %v8075 = vunpack.c.l.s4 1966171168
    %v8076 = vunpack.c.0.s8 %v8075
    %v8077 = vlaneseq
    %v8078 = vshrl.u32 %v8077, 7
    %v8079 = vsub.s32 %v8076, %v8078
    %v8080 = vrot.slane %v8058, %v8079
    %v8082 = vunpack.c.l.s4 1966171168
    %v8083 = vunpack.c.0.s8 %v8082
    %v8084 = vlaneseq
    %v8085 = vshrl.u32 %v8084, 7
    %v8086 = vsub.s32 %v8083, %v8085
    %v8087 = vrot.slane %v8059, %v8086
    %v8088 = vcombine.low %v8066, %v8073
    %v8089 = vcombine.low %v8080, %v8087
    %v8091 = vunpack.c.l.s4 1966171168
    %v8092 = vunpack.c.0.s8 %v8091
    %v8093 = vlaneseq
    %v8094 = vshrl.u32 %v8093, 7
    %v8095 = vsub.s32 %v8092, %v8094
    %v8096 = vrot.slane %v8088, %v8095
    %v8098 = vunpack.c.l.s4 1966171168
    %v8099 = vunpack.c.0.s8 %v8098
    %v8100 = vlaneseq
    %v8101 = vshrl.u32 %v8100, 7
    %v8102 = vsub.s32 %v8099, %v8101
    %v8103 = vrot.slane %v8089, %v8102
    %v8104 = vcombine.low %v8096, %v8103
    %v8105 = vcombine.low %v2941, %v2945
    %v8106 = vcombine.low %v2949, %v2953
    %v8107 = vcombine.low %v2957, %v2961
    %v8108 = vcombine.low %v2965, %v2969
    %v8110 = vunpack.c.l.s4 1966171168
    %v8111 = vunpack.c.0.s8 %v8110
    %v8112 = vlaneseq
    %v8113 = vshrl.u32 %v8112, 7
    %v8114 = vsub.s32 %v8111, %v8113
    %v8115 = vrot.slane %v8105, %v8114
    %v8117 = vunpack.c.l.s4 1966171168
    %v8118 = vunpack.c.0.s8 %v8117
    %v8119 = vlaneseq
    %v8120 = vshrl.u32 %v8119, 7
    %v8121 = vsub.s32 %v8118, %v8120
    %v8122 = vrot.slane %v8106, %v8121
    %v8124 = vunpack.c.l.s4 1966171168
    %v8125 = vunpack.c.0.s8 %v8124
    %v8126 = vlaneseq
    %v8127 = vshrl.u32 %v8126, 7
    %v8128 = vsub.s32 %v8125, %v8127
    %v8129 = vrot.slane %v8107, %v8128
    %v8131 = vunpack.c.l.s4 1966171168
    %v8132 = vunpack.c.0.s8 %v8131
    %v8133 = vlaneseq
    %v8134 = vshrl.u32 %v8133, 7
    %v8135 = vsub.s32 %v8132, %v8134
    %v8136 = vrot.slane %v8108, %v8135
    %v8137 = vcombine.low %v8115, %v8122
    %v8138 = vcombine.low %v8129, %v8136
    %v8140 = vunpack.c.l.s4 1966171168
    %v8141 = vunpack.c.0.s8 %v8140
    %v8142 = vlaneseq
    %v8143 = vshrl.u32 %v8142, 7
    %v8144 = vsub.s32 %v8141, %v8143
    %v8145 = vrot.slane %v8137, %v8144
    %v8147 = vunpack.c.l.s4 1966171168
    %v8148 = vunpack.c.0.s8 %v8147
    %v8149 = vlaneseq
    %v8150 = vshrl.u32 %v8149, 7
    %v8151 = vsub.s32 %v8148, %v8150
    %v8152 = vrot.slane %v8138, %v8151
    %v8153 = vcombine.low %v8145, %v8152
    %v8154 = vcombine.low %v2973, %v2977
    %v8155 = vcombine.low %v2981, %v2985
    %v8156 = vcombine.low %v2989, %v2993
    %v8157 = vcombine.low %v2997, %v3001
    %v8159 = vunpack.c.l.s4 1966171168
    %v8160 = vunpack.c.0.s8 %v8159
    %v8161 = vlaneseq
    %v8162 = vshrl.u32 %v8161, 7
    %v8163 = vsub.s32 %v8160, %v8162
    %v8164 = vrot.slane %v8154, %v8163
    %v8166 = vunpack.c.l.s4 1966171168
    %v8167 = vunpack.c.0.s8 %v8166
    %v8168 = vlaneseq
    %v8169 = vshrl.u32 %v8168, 7
    %v8170 = vsub.s32 %v8167, %v8169
    %v8171 = vrot.slane %v8155, %v8170
    %v8173 = vunpack.c.l.s4 1966171168
    %v8174 = vunpack.c.0.s8 %v8173
    %v8175 = vlaneseq
    %v8176 = vshrl.u32 %v8175, 7
    %v8177 = vsub.s32 %v8174, %v8176
    %v8178 = vrot.slane %v8156, %v8177
    %v8180 = vunpack.c.l.s4 1966171168
    %v8181 = vunpack.c.0.s8 %v8180
    %v8182 = vlaneseq
    %v8183 = vshrl.u32 %v8182, 7
    %v8184 = vsub.s32 %v8181, %v8183
    %v8185 = vrot.slane %v8157, %v8184
    %v8186 = vcombine.low %v8164, %v8171
    %v8187 = vcombine.low %v8178, %v8185
    %v8189 = vunpack.c.l.s4 1966171168
    %v8190 = vunpack.c.0.s8 %v8189
    %v8191 = vlaneseq
    %v8192 = vshrl.u32 %v8191, 7
    %v8193 = vsub.s32 %v8190, %v8192
    %v8194 = vrot.slane %v8186, %v8193
    %v8196 = vunpack.c.l.s4 1966171168
    %v8197 = vunpack.c.0.s8 %v8196
    %v8198 = vlaneseq
    %v8199 = vshrl.u32 %v8198, 7
    %v8200 = vsub.s32 %v8197, %v8199
    %v8201 = vrot.slane %v8187, %v8200
    %v8202 = vcombine.low %v8194, %v8201
    %v8203 = vcombine.low %v3005, %v3009
    %v8204 = vcombine.low %v3013, %v3017
    %v8205 = vcombine.low %v3021, %v3025
    %v8206 = vcombine.low %v3029, %v3033
    %v8208 = vunpack.c.l.s4 1966171168
    %v8209 = vunpack.c.0.s8 %v8208
    %v8210 = vlaneseq
    %v8211 = vshrl.u32 %v8210, 7
    %v8212 = vsub.s32 %v8209, %v8211
    %v8213 = vrot.slane %v8203, %v8212
    %v8215 = vunpack.c.l.s4 1966171168
    %v8216 = vunpack.c.0.s8 %v8215
    %v8217 = vlaneseq
    %v8218 = vshrl.u32 %v8217, 7
    %v8219 = vsub.s32 %v8216, %v8218
    %v8220 = vrot.slane %v8204, %v8219
    %v8222 = vunpack.c.l.s4 1966171168
    %v8223 = vunpack.c.0.s8 %v8222
    %v8224 = vlaneseq
    %v8225 = vshrl.u32 %v8224, 7
    %v8226 = vsub.s32 %v8223, %v8225
    %v8227 = vrot.slane %v8205, %v8226
    %v8229 = vunpack.c.l.s4 1966171168
    %v8230 = vunpack.c.0.s8 %v8229
    %v8231 = vlaneseq
    %v8232 = vshrl.u32 %v8231, 7
    %v8233 = vsub.s32 %v8230, %v8232
    %v8234 = vrot.slane %v8206, %v8233
    %v8235 = vcombine.low %v8213, %v8220
    %v8236 = vcombine.low %v8227, %v8234
    %v8238 = vunpack.c.l.s4 1966171168
    %v8239 = vunpack.c.0.s8 %v8238
    %v8240 = vlaneseq
    %v8241 = vshrl.u32 %v8240, 7
    %v8242 = vsub.s32 %v8239, %v8241
    %v8243 = vrot.slane %v8235, %v8242
    %v8245 = vunpack.c.l.s4 1966171168
    %v8246 = vunpack.c.0.s8 %v8245
    %v8247 = vlaneseq
    %v8248 = vshrl.u32 %v8247, 7
    %v8249 = vsub.s32 %v8246, %v8248
    %v8250 = vrot.slane %v8236, %v8249
    %v8251 = vcombine.low %v8243, %v8250
    %v8252 = vcombine.low %v3037, %v3041
    %v8253 = vcombine.low %v3045, %v3049
    %v8254 = vcombine.low %v3053, %v3057
    %v8255 = vcombine.low %v3061, %v3065
    %v8257 = vunpack.c.l.s4 1966171168
    %v8258 = vunpack.c.0.s8 %v8257
    %v8259 = vlaneseq
    %v8260 = vshrl.u32 %v8259, 7
    %v8261 = vsub.s32 %v8258, %v8260
    %v8262 = vrot.slane %v8252, %v8261
    %v8264 = vunpack.c.l.s4 1966171168
    %v8265 = vunpack.c.0.s8 %v8264
    %v8266 = vlaneseq
    %v8267 = vshrl.u32 %v8266, 7
    %v8268 = vsub.s32 %v8265, %v8267
    %v8269 = vrot.slane %v8253, %v8268
    %v8271 = vunpack.c.l.s4 1966171168
    %v8272 = vunpack.c.0.s8 %v8271
    %v8273 = vlaneseq
    %v8274 = vshrl.u32 %v8273, 7
    %v8275 = vsub.s32 %v8272, %v8274
    %v8276 = vrot.slane %v8254, %v8275
    %v8278 = vunpack.c.l.s4 1966171168
    %v8279 = vunpack.c.0.s8 %v8278
    %v8280 = vlaneseq
    %v8281 = vshrl.u32 %v8280, 7
    %v8282 = vsub.s32 %v8279, %v8281
    %v8283 = vrot.slane %v8255, %v8282
    %v8284 = vcombine.low %v8262, %v8269
    %v8285 = vcombine.low %v8276, %v8283
    %v8287 = vunpack.c.l.s4 1966171168
    %v8288 = vunpack.c.0.s8 %v8287
    %v8289 = vlaneseq
    %v8290 = vshrl.u32 %v8289, 7
    %v8291 = vsub.s32 %v8288, %v8290
    %v8292 = vrot.slane %v8284, %v8291
    %v8294 = vunpack.c.l.s4 1966171168
    %v8295 = vunpack.c.0.s8 %v8294
    %v8296 = vlaneseq
    %v8297 = vshrl.u32 %v8296, 7
    %v8298 = vsub.s32 %v8295, %v8297
    %v8299 = vrot.slane %v8285, %v8298
    %v8300 = vcombine.low %v8292, %v8299
    %v8301 = vcombine.low %v3069, %v3073
    %v8302 = vcombine.low %v3077, %v3081
    %v8303 = vcombine.low %v3085, %v3089
    %v8304 = vcombine.low %v3093, %v3097
    %v8306 = vunpack.c.l.s4 1966171168
    %v8307 = vunpack.c.0.s8 %v8306
    %v8308 = vlaneseq
    %v8309 = vshrl.u32 %v8308, 7
    %v8310 = vsub.s32 %v8307, %v8309
    %v8311 = vrot.slane %v8301, %v8310
    %v8313 = vunpack.c.l.s4 1966171168
    %v8314 = vunpack.c.0.s8 %v8313
    %v8315 = vlaneseq
    %v8316 = vshrl.u32 %v8315, 7
    %v8317 = vsub.s32 %v8314, %v8316
    %v8318 = vrot.slane %v8302, %v8317
    %v8320 = vunpack.c.l.s4 1966171168
    %v8321 = vunpack.c.0.s8 %v8320
    %v8322 = vlaneseq
    %v8323 = vshrl.u32 %v8322, 7
    %v8324 = vsub.s32 %v8321, %v8323
    %v8325 = vrot.slane %v8303, %v8324
    %v8327 = vunpack.c.l.s4 1966171168
    %v8328 = vunpack.c.0.s8 %v8327
    %v8329 = vlaneseq
    %v8330 = vshrl.u32 %v8329, 7
    %v8331 = vsub.s32 %v8328, %v8330
    %v8332 = vrot.slane %v8304, %v8331
    %v8333 = vcombine.low %v8311, %v8318
    %v8334 = vcombine.low %v8325, %v8332
    %v8336 = vunpack.c.l.s4 1966171168
    %v8337 = vunpack.c.0.s8 %v8336
    %v8338 = vlaneseq
    %v8339 = vshrl.u32 %v8338, 7
    %v8340 = vsub.s32 %v8337, %v8339
    %v8341 = vrot.slane %v8333, %v8340
    %v8343 = vunpack.c.l.s4 1966171168
    %v8344 = vunpack.c.0.s8 %v8343
    %v8345 = vlaneseq
    %v8346 = vshrl.u32 %v8345, 7
    %v8347 = vsub.s32 %v8344, %v8346
    %v8348 = vrot.slane %v8334, %v8347
    %v8349 = vcombine.low %v8341, %v8348
    %v8350 = vcombine.low %v3101, %v3105
    %v8351 = vcombine.low %v3109, %v3113
    %v8352 = vcombine.low %v3117, %v3121
    %v8353 = vcombine.low %v3125, %v3129
    %v8355 = vunpack.c.l.s4 1966171168
    %v8356 = vunpack.c.0.s8 %v8355
    %v8357 = vlaneseq
    %v8358 = vshrl.u32 %v8357, 7
    %v8359 = vsub.s32 %v8356, %v8358
    %v8360 = vrot.slane %v8350, %v8359
    %v8362 = vunpack.c.l.s4 1966171168
    %v8363 = vunpack.c.0.s8 %v8362
    %v8364 = vlaneseq
    %v8365 = vshrl.u32 %v8364, 7
    %v8366 = vsub.s32 %v8363, %v8365
    %v8367 = vrot.slane %v8351, %v8366
    %v8369 = vunpack.c.l.s4 1966171168
    %v8370 = vunpack.c.0.s8 %v8369
    %v8371 = vlaneseq
    %v8372 = vshrl.u32 %v8371, 7
    %v8373 = vsub.s32 %v8370, %v8372
    %v8374 = vrot.slane %v8352, %v8373
    %v8376 = vunpack.c.l.s4 1966171168
    %v8377 = vunpack.c.0.s8 %v8376
    %v8378 = vlaneseq
    %v8379 = vshrl.u32 %v8378, 7
    %v8380 = vsub.s32 %v8377, %v8379
    %v8381 = vrot.slane %v8353, %v8380
    %v8382 = vcombine.low %v8360, %v8367
    %v8383 = vcombine.low %v8374, %v8381
    %v8385 = vunpack.c.l.s4 1966171168
    %v8386 = vunpack.c.0.s8 %v8385
    %v8387 = vlaneseq
    %v8388 = vshrl.u32 %v8387, 7
    %v8389 = vsub.s32 %v8386, %v8388
    %v8390 = vrot.slane %v8382, %v8389
    %v8392 = vunpack.c.l.s4 1966171168
    %v8393 = vunpack.c.0.s8 %v8392
    %v8394 = vlaneseq
    %v8395 = vshrl.u32 %v8394, 7
    %v8396 = vsub.s32 %v8393, %v8395
    %v8397 = vrot.slane %v8383, %v8396
    %v8398 = vcombine.low %v8390, %v8397
    %v8399 = vcombine.low %v3133, %v3137
    %v8400 = vcombine.low %v3141, %v3145
    %v8401 = vcombine.low %v3149, %v3153
    %v8402 = vcombine.low %v3157, %v3161
    %v8404 = vunpack.c.l.s4 1966171168
    %v8405 = vunpack.c.0.s8 %v8404
    %v8406 = vlaneseq
    %v8407 = vshrl.u32 %v8406, 7
    %v8408 = vsub.s32 %v8405, %v8407
    %v8409 = vrot.slane %v8399, %v8408
    %v8411 = vunpack.c.l.s4 1966171168
    %v8412 = vunpack.c.0.s8 %v8411
    %v8413 = vlaneseq
    %v8414 = vshrl.u32 %v8413, 7
    %v8415 = vsub.s32 %v8412, %v8414
    %v8416 = vrot.slane %v8400, %v8415
    %v8418 = vunpack.c.l.s4 1966171168
    %v8419 = vunpack.c.0.s8 %v8418
    %v8420 = vlaneseq
    %v8421 = vshrl.u32 %v8420, 7
    %v8422 = vsub.s32 %v8419, %v8421
    %v8423 = vrot.slane %v8401, %v8422
    %v8425 = vunpack.c.l.s4 1966171168
    %v8426 = vunpack.c.0.s8 %v8425
    %v8427 = vlaneseq
    %v8428 = vshrl.u32 %v8427, 7
    %v8429 = vsub.s32 %v8426, %v8428
    %v8430 = vrot.slane %v8402, %v8429
    %v8431 = vcombine.low %v8409, %v8416
    %v8432 = vcombine.low %v8423, %v8430
    %v8434 = vunpack.c.l.s4 1966171168
    %v8435 = vunpack.c.0.s8 %v8434
    %v8436 = vlaneseq
    %v8437 = vshrl.u32 %v8436, 7
    %v8438 = vsub.s32 %v8435, %v8437
    %v8439 = vrot.slane %v8431, %v8438
    %v8441 = vunpack.c.l.s4 1966171168
    %v8442 = vunpack.c.0.s8 %v8441
    %v8443 = vlaneseq
    %v8444 = vshrl.u32 %v8443, 7
    %v8445 = vsub.s32 %v8442, %v8444
    %v8446 = vrot.slane %v8432, %v8445
    %v8447 = vcombine.low %v8439, %v8446
    %v8448 = vcombine.low %v3165, %v3169
    %v8449 = vcombine.low %v3173, %v3177
    %v8450 = vcombine.low %v3181, %v3185
    %v8451 = vcombine.low %v3189, %v3193
    %v8453 = vunpack.c.l.s4 1966171168
    %v8454 = vunpack.c.0.s8 %v8453
    %v8455 = vlaneseq
    %v8456 = vshrl.u32 %v8455, 7
    %v8457 = vsub.s32 %v8454, %v8456
    %v8458 = vrot.slane %v8448, %v8457
    %v8460 = vunpack.c.l.s4 1966171168
    %v8461 = vunpack.c.0.s8 %v8460
    %v8462 = vlaneseq
    %v8463 = vshrl.u32 %v8462, 7
    %v8464 = vsub.s32 %v8461, %v8463
    %v8465 = vrot.slane %v8449, %v8464
    %v8467 = vunpack.c.l.s4 1966171168
    %v8468 = vunpack.c.0.s8 %v8467
    %v8469 = vlaneseq
    %v8470 = vshrl.u32 %v8469, 7
    %v8471 = vsub.s32 %v8468, %v8470
    %v8472 = vrot.slane %v8450, %v8471
    %v8474 = vunpack.c.l.s4 1966171168
    %v8475 = vunpack.c.0.s8 %v8474
    %v8476 = vlaneseq
    %v8477 = vshrl.u32 %v8476, 7
    %v8478 = vsub.s32 %v8475, %v8477
    %v8479 = vrot.slane %v8451, %v8478
    %v8480 = vcombine.low %v8458, %v8465
    %v8481 = vcombine.low %v8472, %v8479
    %v8483 = vunpack.c.l.s4 1966171168
    %v8484 = vunpack.c.0.s8 %v8483
    %v8485 = vlaneseq
    %v8486 = vshrl.u32 %v8485, 7
    %v8487 = vsub.s32 %v8484, %v8486
    %v8488 = vrot.slane %v8480, %v8487
    %v8490 = vunpack.c.l.s4 1966171168
    %v8491 = vunpack.c.0.s8 %v8490
    %v8492 = vlaneseq
    %v8493 = vshrl.u32 %v8492, 7
    %v8494 = vsub.s32 %v8491, %v8493
    %v8495 = vrot.slane %v8481, %v8494
    %v8496 = vcombine.low %v8488, %v8495
    %v8497 = vcombine.low %v3197, %v3201
    %v8498 = vcombine.low %v3205, %v3209
    %v8499 = vcombine.low %v3213, %v3217
    %v8500 = vcombine.low %v3221, %v3225
    %v8502 = vunpack.c.l.s4 1966171168
    %v8503 = vunpack.c.0.s8 %v8502
    %v8504 = vlaneseq
    %v8505 = vshrl.u32 %v8504, 7
    %v8506 = vsub.s32 %v8503, %v8505
    %v8507 = vrot.slane %v8497, %v8506
    %v8509 = vunpack.c.l.s4 1966171168
    %v8510 = vunpack.c.0.s8 %v8509
    %v8511 = vlaneseq
    %v8512 = vshrl.u32 %v8511, 7
    %v8513 = vsub.s32 %v8510, %v8512
    %v8514 = vrot.slane %v8498, %v8513
    %v8516 = vunpack.c.l.s4 1966171168
    %v8517 = vunpack.c.0.s8 %v8516
    %v8518 = vlaneseq
    %v8519 = vshrl.u32 %v8518, 7
    %v8520 = vsub.s32 %v8517, %v8519
    %v8521 = vrot.slane %v8499, %v8520
    %v8523 = vunpack.c.l.s4 1966171168
    %v8524 = vunpack.c.0.s8 %v8523
    %v8525 = vlaneseq
    %v8526 = vshrl.u32 %v8525, 7
    %v8527 = vsub.s32 %v8524, %v8526
    %v8528 = vrot.slane %v8500, %v8527
    %v8529 = vcombine.low %v8507, %v8514
    %v8530 = vcombine.low %v8521, %v8528
    %v8532 = vunpack.c.l.s4 1966171168
    %v8533 = vunpack.c.0.s8 %v8532
    %v8534 = vlaneseq
    %v8535 = vshrl.u32 %v8534, 7
    %v8536 = vsub.s32 %v8533, %v8535
    %v8537 = vrot.slane %v8529, %v8536
    %v8539 = vunpack.c.l.s4 1966171168
    %v8540 = vunpack.c.0.s8 %v8539
    %v8541 = vlaneseq
    %v8542 = vshrl.u32 %v8541, 7
    %v8543 = vsub.s32 %v8540, %v8542
    %v8544 = vrot.slane %v8530, %v8543
    %v8545 = vcombine.low %v8537, %v8544
    %v8546 = vcombine.low %v3229, %v3233
    %v8547 = vcombine.low %v3237, %v3241
    %v8548 = vcombine.low %v3245, %v3249
    %v8549 = vcombine.low %v3253, %v3257
    %v8551 = vunpack.c.l.s4 1966171168
    %v8552 = vunpack.c.0.s8 %v8551
    %v8553 = vlaneseq
    %v8554 = vshrl.u32 %v8553, 7
    %v8555 = vsub.s32 %v8552, %v8554
    %v8556 = vrot.slane %v8546, %v8555
    %v8558 = vunpack.c.l.s4 1966171168
    %v8559 = vunpack.c.0.s8 %v8558
    %v8560 = vlaneseq
    %v8561 = vshrl.u32 %v8560, 7
    %v8562 = vsub.s32 %v8559, %v8561
    %v8563 = vrot.slane %v8547, %v8562
    %v8565 = vunpack.c.l.s4 1966171168
    %v8566 = vunpack.c.0.s8 %v8565
    %v8567 = vlaneseq
    %v8568 = vshrl.u32 %v8567, 7
    %v8569 = vsub.s32 %v8566, %v8568
    %v8570 = vrot.slane %v8548, %v8569
    %v8572 = vunpack.c.l.s4 1966171168
    %v8573 = vunpack.c.0.s8 %v8572
    %v8574 = vlaneseq
    %v8575 = vshrl.u32 %v8574, 7
    %v8576 = vsub.s32 %v8573, %v8575
    %v8577 = vrot.slane %v8549, %v8576
    %v8578 = vcombine.low %v8556, %v8563
    %v8579 = vcombine.low %v8570, %v8577
    %v8581 = vunpack.c.l.s4 1966171168
    %v8582 = vunpack.c.0.s8 %v8581
    %v8583 = vlaneseq
    %v8584 = vshrl.u32 %v8583, 7
    %v8585 = vsub.s32 %v8582, %v8584
    %v8586 = vrot.slane %v8578, %v8585
    %v8588 = vunpack.c.l.s4 1966171168
    %v8589 = vunpack.c.0.s8 %v8588
    %v8590 = vlaneseq
    %v8591 = vshrl.u32 %v8590, 7
    %v8592 = vsub.s32 %v8589, %v8591
    %v8593 = vrot.slane %v8579, %v8592
    %v8594 = vcombine.low %v8586, %v8593
    %v8595 = vcombine.low %v3261, %v3265
    %v8596 = vcombine.low %v3269, %v3273
    %v8597 = vcombine.low %v3277, %v3281
    %v8598 = vcombine.low %v3285, %v3289
    %v8600 = vunpack.c.l.s4 1966171168
    %v8601 = vunpack.c.0.s8 %v8600
    %v8602 = vlaneseq
    %v8603 = vshrl.u32 %v8602, 7
    %v8604 = vsub.s32 %v8601, %v8603
    %v8605 = vrot.slane %v8595, %v8604
    %v8607 = vunpack.c.l.s4 1966171168
    %v8608 = vunpack.c.0.s8 %v8607
    %v8609 = vlaneseq
    %v8610 = vshrl.u32 %v8609, 7
    %v8611 = vsub.s32 %v8608, %v8610
    %v8612 = vrot.slane %v8596, %v8611
    %v8614 = vunpack.c.l.s4 1966171168
    %v8615 = vunpack.c.0.s8 %v8614
    %v8616 = vlaneseq
    %v8617 = vshrl.u32 %v8616, 7
    %v8618 = vsub.s32 %v8615, %v8617
    %v8619 = vrot.slane %v8597, %v8618
    %v8621 = vunpack.c.l.s4 1966171168
    %v8622 = vunpack.c.0.s8 %v8621
    %v8623 = vlaneseq
    %v8624 = vshrl.u32 %v8623, 7
    %v8625 = vsub.s32 %v8622, %v8624
    %v8626 = vrot.slane %v8598, %v8625
    %v8627 = vcombine.low %v8605, %v8612
    %v8628 = vcombine.low %v8619, %v8626
    %v8630 = vunpack.c.l.s4 1966171168
    %v8631 = vunpack.c.0.s8 %v8630
    %v8632 = vlaneseq
    %v8633 = vshrl.u32 %v8632, 7
    %v8634 = vsub.s32 %v8631, %v8633
    %v8635 = vrot.slane %v8627, %v8634
    %v8637 = vunpack.c.l.s4 1966171168
    %v8638 = vunpack.c.0.s8 %v8637
    %v8639 = vlaneseq
    %v8640 = vshrl.u32 %v8639, 7
    %v8641 = vsub.s32 %v8638, %v8640
    %v8642 = vrot.slane %v8628, %v8641
    %v8643 = vcombine.low %v8635, %v8642
    %v8644 = vcombine.low %v3293, %v3297
    %v8645 = vcombine.low %v3301, %v3305
    %v8646 = vcombine.low %v3309, %v3313
    %v8647 = vcombine.low %v3317, %v3321
    %v8649 = vunpack.c.l.s4 1966171168
    %v8650 = vunpack.c.0.s8 %v8649
    %v8651 = vlaneseq
    %v8652 = vshrl.u32 %v8651, 7
    %v8653 = vsub.s32 %v8650, %v8652
    %v8654 = vrot.slane %v8644, %v8653
    %v8656 = vunpack.c.l.s4 1966171168
    %v8657 = vunpack.c.0.s8 %v8656
    %v8658 = vlaneseq
    %v8659 = vshrl.u32 %v8658, 7
    %v8660 = vsub.s32 %v8657, %v8659
    %v8661 = vrot.slane %v8645, %v8660
    %v8663 = vunpack.c.l.s4 1966171168
    %v8664 = vunpack.c.0.s8 %v8663
    %v8665 = vlaneseq
    %v8666 = vshrl.u32 %v8665, 7
    %v8667 = vsub.s32 %v8664, %v8666
    %v8668 = vrot.slane %v8646, %v8667
    %v8670 = vunpack.c.l.s4 1966171168
    %v8671 = vunpack.c.0.s8 %v8670
    %v8672 = vlaneseq
    %v8673 = vshrl.u32 %v8672, 7
    %v8674 = vsub.s32 %v8671, %v8673
    %v8675 = vrot.slane %v8647, %v8674
    %v8676 = vcombine.low %v8654, %v8661
    %v8677 = vcombine.low %v8668, %v8675
    %v8679 = vunpack.c.l.s4 1966171168
    %v8680 = vunpack.c.0.s8 %v8679
    %v8681 = vlaneseq
    %v8682 = vshrl.u32 %v8681, 7
    %v8683 = vsub.s32 %v8680, %v8682
    %v8684 = vrot.slane %v8676, %v8683
    %v8686 = vunpack.c.l.s4 1966171168
    %v8687 = vunpack.c.0.s8 %v8686
    %v8688 = vlaneseq
    %v8689 = vshrl.u32 %v8688, 7
    %v8690 = vsub.s32 %v8687, %v8689
    %v8691 = vrot.slane %v8677, %v8690
    %v8692 = vcombine.low %v8684, %v8691
    %v8693 = vcombine.low %v3325, %v3329
    %v8694 = vcombine.low %v3333, %v3337
    %v8695 = vcombine.low %v3341, %v3345
    %v8696 = vcombine.low %v3349, %v3353
    %v8698 = vunpack.c.l.s4 1966171168
    %v8699 = vunpack.c.0.s8 %v8698
    %v8700 = vlaneseq
    %v8701 = vshrl.u32 %v8700, 7
    %v8702 = vsub.s32 %v8699, %v8701
    %v8703 = vrot.slane %v8693, %v8702
    %v8705 = vunpack.c.l.s4 1966171168
    %v8706 = vunpack.c.0.s8 %v8705
    %v8707 = vlaneseq
    %v8708 = vshrl.u32 %v8707, 7
    %v8709 = vsub.s32 %v8706, %v8708
    %v8710 = vrot.slane %v8694, %v8709
    %v8712 = vunpack.c.l.s4 1966171168
    %v8713 = vunpack.c.0.s8 %v8712
    %v8714 = vlaneseq
    %v8715 = vshrl.u32 %v8714, 7
    %v8716 = vsub.s32 %v8713, %v8715
    %v8717 = vrot.slane %v8695, %v8716
    %v8719 = vunpack.c.l.s4 1966171168
    %v8720 = vunpack.c.0.s8 %v8719
    %v8721 = vlaneseq
    %v8722 = vshrl.u32 %v8721, 7
    %v8723 = vsub.s32 %v8720, %v8722
    %v8724 = vrot.slane %v8696, %v8723
    %v8725 = vcombine.low %v8703, %v8710
    %v8726 = vcombine.low %v8717, %v8724
    %v8728 = vunpack.c.l.s4 1966171168
    %v8729 = vunpack.c.0.s8 %v8728
    %v8730 = vlaneseq
    %v8731 = vshrl.u32 %v8730, 7
    %v8732 = vsub.s32 %v8729, %v8731
    %v8733 = vrot.slane %v8725, %v8732
    %v8735 = vunpack.c.l.s4 1966171168
    %v8736 = vunpack.c.0.s8 %v8735
    %v8737 = vlaneseq
    %v8738 = vshrl.u32 %v8737, 7
    %v8739 = vsub.s32 %v8736, %v8738
    %v8740 = vrot.slane %v8726, %v8739
    %v8741 = vcombine.low %v8733, %v8740
    %v8742 = vcombine.low %v3357, %v3361
    %v8743 = vcombine.low %v3365, %v3369
    %v8744 = vcombine.low %v3373, %v3377
    %v8745 = vcombine.low %v3381, %v3385
    %v8747 = vunpack.c.l.s4 1966171168
    %v8748 = vunpack.c.0.s8 %v8747
    %v8749 = vlaneseq
    %v8750 = vshrl.u32 %v8749, 7
    %v8751 = vsub.s32 %v8748, %v8750
    %v8752 = vrot.slane %v8742, %v8751
    %v8754 = vunpack.c.l.s4 1966171168
    %v8755 = vunpack.c.0.s8 %v8754
    %v8756 = vlaneseq
    %v8757 = vshrl.u32 %v8756, 7
    %v8758 = vsub.s32 %v8755, %v8757
    %v8759 = vrot.slane %v8743, %v8758
    %v8761 = vunpack.c.l.s4 1966171168
    %v8762 = vunpack.c.0.s8 %v8761
    %v8763 = vlaneseq
    %v8764 = vshrl.u32 %v8763, 7
    %v8765 = vsub.s32 %v8762, %v8764
    %v8766 = vrot.slane %v8744, %v8765
    %v8768 = vunpack.c.l.s4 1966171168
    %v8769 = vunpack.c.0.s8 %v8768
    %v8770 = vlaneseq
    %v8771 = vshrl.u32 %v8770, 7
    %v8772 = vsub.s32 %v8769, %v8771
    %v8773 = vrot.slane %v8745, %v8772
    %v8774 = vcombine.low %v8752, %v8759
    %v8775 = vcombine.low %v8766, %v8773
    %v8777 = vunpack.c.l.s4 1966171168
    %v8778 = vunpack.c.0.s8 %v8777
    %v8779 = vlaneseq
    %v8780 = vshrl.u32 %v8779, 7
    %v8781 = vsub.s32 %v8778, %v8780
    %v8782 = vrot.slane %v8774, %v8781
    %v8784 = vunpack.c.l.s4 1966171168
    %v8785 = vunpack.c.0.s8 %v8784
    %v8786 = vlaneseq
    %v8787 = vshrl.u32 %v8786, 7
    %v8788 = vsub.s32 %v8785, %v8787
    %v8789 = vrot.slane %v8775, %v8788
    %v8790 = vcombine.low %v8782, %v8789
    %v8791 = vcombine.low %v3389, %v3393
    %v8792 = vcombine.low %v3397, %v3401
    %v8793 = vcombine.low %v3405, %v3409
    %v8794 = vcombine.low %v3413, %v3417
    %v8796 = vunpack.c.l.s4 1966171168
    %v8797 = vunpack.c.0.s8 %v8796
    %v8798 = vlaneseq
    %v8799 = vshrl.u32 %v8798, 7
    %v8800 = vsub.s32 %v8797, %v8799
    %v8801 = vrot.slane %v8791, %v8800
    %v8803 = vunpack.c.l.s4 1966171168
    %v8804 = vunpack.c.0.s8 %v8803
    %v8805 = vlaneseq
    %v8806 = vshrl.u32 %v8805, 7
    %v8807 = vsub.s32 %v8804, %v8806
    %v8808 = vrot.slane %v8792, %v8807
    %v8810 = vunpack.c.l.s4 1966171168
    %v8811 = vunpack.c.0.s8 %v8810
    %v8812 = vlaneseq
    %v8813 = vshrl.u32 %v8812, 7
    %v8814 = vsub.s32 %v8811, %v8813
    %v8815 = vrot.slane %v8793, %v8814
    %v8817 = vunpack.c.l.s4 1966171168
    %v8818 = vunpack.c.0.s8 %v8817
    %v8819 = vlaneseq
    %v8820 = vshrl.u32 %v8819, 7
    %v8821 = vsub.s32 %v8818, %v8820
    %v8822 = vrot.slane %v8794, %v8821
    %v8823 = vcombine.low %v8801, %v8808
    %v8824 = vcombine.low %v8815, %v8822
    %v8826 = vunpack.c.l.s4 1966171168
    %v8827 = vunpack.c.0.s8 %v8826
    %v8828 = vlaneseq
    %v8829 = vshrl.u32 %v8828, 7
    %v8830 = vsub.s32 %v8827, %v8829
    %v8831 = vrot.slane %v8823, %v8830
    %v8833 = vunpack.c.l.s4 1966171168
    %v8834 = vunpack.c.0.s8 %v8833
    %v8835 = vlaneseq
    %v8836 = vshrl.u32 %v8835, 7
    %v8837 = vsub.s32 %v8834, %v8836
    %v8838 = vrot.slane %v8824, %v8837
    %v8839 = vcombine.low %v8831, %v8838
    %v8840 = vcombine.low %v3421, %v3425
    %v8841 = vcombine.low %v3429, %v3433
    %v8842 = vcombine.low %v3437, %v3441
    %v8843 = vcombine.low %v3445, %v3449
    %v8845 = vunpack.c.l.s4 1966171168
    %v8846 = vunpack.c.0.s8 %v8845
    %v8847 = vlaneseq
    %v8848 = vshrl.u32 %v8847, 7
    %v8849 = vsub.s32 %v8846, %v8848
    %v8850 = vrot.slane %v8840, %v8849
    %v8852 = vunpack.c.l.s4 1966171168
    %v8853 = vunpack.c.0.s8 %v8852
    %v8854 = vlaneseq
    %v8855 = vshrl.u32 %v8854, 7
    %v8856 = vsub.s32 %v8853, %v8855
    %v8857 = vrot.slane %v8841, %v8856
    %v8859 = vunpack.c.l.s4 1966171168
    %v8860 = vunpack.c.0.s8 %v8859
    %v8861 = vlaneseq
    %v8862 = vshrl.u32 %v8861, 7
    %v8863 = vsub.s32 %v8860, %v8862
    %v8864 = vrot.slane %v8842, %v8863
    %v8866 = vunpack.c.l.s4 1966171168
    %v8867 = vunpack.c.0.s8 %v8866
    %v8868 = vlaneseq
    %v8869 = vshrl.u32 %v8868, 7
    %v8870 = vsub.s32 %v8867, %v8869
    %v8871 = vrot.slane %v8843, %v8870
    %v8872 = vcombine.low %v8850, %v8857
    %v8873 = vcombine.low %v8864, %v8871
    %v8875 = vunpack.c.l.s4 1966171168
    %v8876 = vunpack.c.0.s8 %v8875
    %v8877 = vlaneseq
    %v8878 = vshrl.u32 %v8877, 7
    %v8879 = vsub.s32 %v8876, %v8878
    %v8880 = vrot.slane %v8872, %v8879
    %v8882 = vunpack.c.l.s4 1966171168
    %v8883 = vunpack.c.0.s8 %v8882
    %v8884 = vlaneseq
    %v8885 = vshrl.u32 %v8884, 7
    %v8886 = vsub.s32 %v8883, %v8885
    %v8887 = vrot.slane %v8873, %v8886
    %v8888 = vcombine.low %v8880, %v8887
    %v8889 = vcombine.low %v3453, %v3457
    %v8890 = vcombine.low %v3461, %v3465
    %v8891 = vcombine.low %v3469, %v3473
    %v8892 = vcombine.low %v3477, %v3481
    %v8894 = vunpack.c.l.s4 1966171168
    %v8895 = vunpack.c.0.s8 %v8894
    %v8896 = vlaneseq
    %v8897 = vshrl.u32 %v8896, 7
    %v8898 = vsub.s32 %v8895, %v8897
    %v8899 = vrot.slane %v8889, %v8898
    %v8901 = vunpack.c.l.s4 1966171168
    %v8902 = vunpack.c.0.s8 %v8901
    %v8903 = vlaneseq
    %v8904 = vshrl.u32 %v8903, 7
    %v8905 = vsub.s32 %v8902, %v8904
    %v8906 = vrot.slane %v8890, %v8905
    %v8908 = vunpack.c.l.s4 1966171168
    %v8909 = vunpack.c.0.s8 %v8908
    %v8910 = vlaneseq
    %v8911 = vshrl.u32 %v8910, 7
    %v8912 = vsub.s32 %v8909, %v8911
    %v8913 = vrot.slane %v8891, %v8912
    %v8915 = vunpack.c.l.s4 1966171168
    %v8916 = vunpack.c.0.s8 %v8915
    %v8917 = vlaneseq
    %v8918 = vshrl.u32 %v8917, 7
    %v8919 = vsub.s32 %v8916, %v8918
    %v8920 = vrot.slane %v8892, %v8919
    %v8921 = vcombine.low %v8899, %v8906
    %v8922 = vcombine.low %v8913, %v8920
    %v8924 = vunpack.c.l.s4 1966171168
    %v8925 = vunpack.c.0.s8 %v8924
    %v8926 = vlaneseq
    %v8927 = vshrl.u32 %v8926, 7
    %v8928 = vsub.s32 %v8925, %v8927
    %v8929 = vrot.slane %v8921, %v8928
    %v8931 = vunpack.c.l.s4 1966171168
    %v8932 = vunpack.c.0.s8 %v8931
    %v8933 = vlaneseq
    %v8934 = vshrl.u32 %v8933, 7
    %v8935 = vsub.s32 %v8932, %v8934
    %v8936 = vrot.slane %v8922, %v8935
    %v8937 = vcombine.low %v8929, %v8936
    %v8938 = vcombine.low %v3485, %v3489
    %v8939 = vcombine.low %v3493, %v3497
    %v8940 = vcombine.low %v3501, %v3505
    %v8941 = vcombine.low %v3509, %v3513
    %v8943 = vunpack.c.l.s4 1966171168
    %v8944 = vunpack.c.0.s8 %v8943
    %v8945 = vlaneseq
    %v8946 = vshrl.u32 %v8945, 7
    %v8947 = vsub.s32 %v8944, %v8946
    %v8948 = vrot.slane %v8938, %v8947
    %v8950 = vunpack.c.l.s4 1966171168
    %v8951 = vunpack.c.0.s8 %v8950
    %v8952 = vlaneseq
    %v8953 = vshrl.u32 %v8952, 7
    %v8954 = vsub.s32 %v8951, %v8953
    %v8955 = vrot.slane %v8939, %v8954
    %v8957 = vunpack.c.l.s4 1966171168
    %v8958 = vunpack.c.0.s8 %v8957
    %v8959 = vlaneseq
    %v8960 = vshrl.u32 %v8959, 7
    %v8961 = vsub.s32 %v8958, %v8960
    %v8962 = vrot.slane %v8940, %v8961
    %v8964 = vunpack.c.l.s4 1966171168
    %v8965 = vunpack.c.0.s8 %v8964
    %v8966 = vlaneseq
    %v8967 = vshrl.u32 %v8966, 7
    %v8968 = vsub.s32 %v8965, %v8967
    %v8969 = vrot.slane %v8941, %v8968
    %v8970 = vcombine.low %v8948, %v8955
    %v8971 = vcombine.low %v8962, %v8969
    %v8973 = vunpack.c.l.s4 1966171168
    %v8974 = vunpack.c.0.s8 %v8973
    %v8975 = vlaneseq
    %v8976 = vshrl.u32 %v8975, 7
    %v8977 = vsub.s32 %v8974, %v8976
    %v8978 = vrot.slane %v8970, %v8977
    %v8980 = vunpack.c.l.s4 1966171168
    %v8981 = vunpack.c.0.s8 %v8980
    %v8982 = vlaneseq
    %v8983 = vshrl.u32 %v8982, 7
    %v8984 = vsub.s32 %v8981, %v8983
    %v8985 = vrot.slane %v8971, %v8984
    %v8986 = vcombine.low %v8978, %v8985
    %v8987 = vcombine.low %v3517, %v3521
    %v8988 = vcombine.low %v3525, %v3529
    %v8989 = vcombine.low %v3533, %v3537
    %v8990 = vcombine.low %v3541, %v3545
    %v8992 = vunpack.c.l.s4 1966171168
    %v8993 = vunpack.c.0.s8 %v8992
    %v8994 = vlaneseq
    %v8995 = vshrl.u32 %v8994, 7
    %v8996 = vsub.s32 %v8993, %v8995
    %v8997 = vrot.slane %v8987, %v8996
    %v8999 = vunpack.c.l.s4 1966171168
    %v9000 = vunpack.c.0.s8 %v8999
    %v9001 = vlaneseq
    %v9002 = vshrl.u32 %v9001, 7
    %v9003 = vsub.s32 %v9000, %v9002
    %v9004 = vrot.slane %v8988, %v9003
    %v9006 = vunpack.c.l.s4 1966171168
    %v9007 = vunpack.c.0.s8 %v9006
    %v9008 = vlaneseq
    %v9009 = vshrl.u32 %v9008, 7
    %v9010 = vsub.s32 %v9007, %v9009
    %v9011 = vrot.slane %v8989, %v9010
    %v9013 = vunpack.c.l.s4 1966171168
    %v9014 = vunpack.c.0.s8 %v9013
    %v9015 = vlaneseq
    %v9016 = vshrl.u32 %v9015, 7
    %v9017 = vsub.s32 %v9014, %v9016
    %v9018 = vrot.slane %v8990, %v9017
    %v9019 = vcombine.low %v8997, %v9004
    %v9020 = vcombine.low %v9011, %v9018
    %v9022 = vunpack.c.l.s4 1966171168
    %v9023 = vunpack.c.0.s8 %v9022
    %v9024 = vlaneseq
    %v9025 = vshrl.u32 %v9024, 7
    %v9026 = vsub.s32 %v9023, %v9025
    %v9027 = vrot.slane %v9019, %v9026
    %v9029 = vunpack.c.l.s4 1966171168
    %v9030 = vunpack.c.0.s8 %v9029
    %v9031 = vlaneseq
    %v9032 = vshrl.u32 %v9031, 7
    %v9033 = vsub.s32 %v9030, %v9032
    %v9034 = vrot.slane %v9020, %v9033
    %v9035 = vcombine.low %v9027, %v9034
    %v9036 = vcombine.low %v3549, %v3553
    %v9037 = vcombine.low %v3557, %v3561
    %v9038 = vcombine.low %v3565, %v3569
    %v9039 = vcombine.low %v3573, %v3577
    %v9041 = vunpack.c.l.s4 1966171168
    %v9042 = vunpack.c.0.s8 %v9041
    %v9043 = vlaneseq
    %v9044 = vshrl.u32 %v9043, 7
    %v9045 = vsub.s32 %v9042, %v9044
    %v9046 = vrot.slane %v9036, %v9045
    %v9048 = vunpack.c.l.s4 1966171168
    %v9049 = vunpack.c.0.s8 %v9048
    %v9050 = vlaneseq
    %v9051 = vshrl.u32 %v9050, 7
    %v9052 = vsub.s32 %v9049, %v9051
    %v9053 = vrot.slane %v9037, %v9052
    %v9055 = vunpack.c.l.s4 1966171168
    %v9056 = vunpack.c.0.s8 %v9055
    %v9057 = vlaneseq
    %v9058 = vshrl.u32 %v9057, 7
    %v9059 = vsub.s32 %v9056, %v9058
    %v9060 = vrot.slane %v9038, %v9059
    %v9062 = vunpack.c.l.s4 1966171168
    %v9063 = vunpack.c.0.s8 %v9062
    %v9064 = vlaneseq
    %v9065 = vshrl.u32 %v9064, 7
    %v9066 = vsub.s32 %v9063, %v9065
    %v9067 = vrot.slane %v9039, %v9066
    %v9068 = vcombine.low %v9046, %v9053
    %v9069 = vcombine.low %v9060, %v9067
    %v9071 = vunpack.c.l.s4 1966171168
    %v9072 = vunpack.c.0.s8 %v9071
    %v9073 = vlaneseq
    %v9074 = vshrl.u32 %v9073, 7
    %v9075 = vsub.s32 %v9072, %v9074
    %v9076 = vrot.slane %v9068, %v9075
    %v9078 = vunpack.c.l.s4 1966171168
    %v9079 = vunpack.c.0.s8 %v9078
    %v9080 = vlaneseq
    %v9081 = vshrl.u32 %v9080, 7
    %v9082 = vsub.s32 %v9079, %v9081
    %v9083 = vrot.slane %v9069, %v9082
    %v9084 = vcombine.low %v9076, %v9083
    %v9085 = vcombine.low %v3581, %v3585
    %v9086 = vcombine.low %v3589, %v3593
    %v9087 = vcombine.low %v3597, %v3601
    %v9088 = vcombine.low %v3605, %v3609
    %v9090 = vunpack.c.l.s4 1966171168
    %v9091 = vunpack.c.0.s8 %v9090
    %v9092 = vlaneseq
    %v9093 = vshrl.u32 %v9092, 7
    %v9094 = vsub.s32 %v9091, %v9093
    %v9095 = vrot.slane %v9085, %v9094
    %v9097 = vunpack.c.l.s4 1966171168
    %v9098 = vunpack.c.0.s8 %v9097
    %v9099 = vlaneseq
    %v9100 = vshrl.u32 %v9099, 7
    %v9101 = vsub.s32 %v9098, %v9100
    %v9102 = vrot.slane %v9086, %v9101
    %v9104 = vunpack.c.l.s4 1966171168
    %v9105 = vunpack.c.0.s8 %v9104
    %v9106 = vlaneseq
    %v9107 = vshrl.u32 %v9106, 7
    %v9108 = vsub.s32 %v9105, %v9107
    %v9109 = vrot.slane %v9087, %v9108
    %v9111 = vunpack.c.l.s4 1966171168
    %v9112 = vunpack.c.0.s8 %v9111
    %v9113 = vlaneseq
    %v9114 = vshrl.u32 %v9113, 7
    %v9115 = vsub.s32 %v9112, %v9114
    %v9116 = vrot.slane %v9088, %v9115
    %v9117 = vcombine.low %v9095, %v9102
    %v9118 = vcombine.low %v9109, %v9116
    %v9120 = vunpack.c.l.s4 1966171168
    %v9121 = vunpack.c.0.s8 %v9120
    %v9122 = vlaneseq
    %v9123 = vshrl.u32 %v9122, 7
    %v9124 = vsub.s32 %v9121, %v9123
    %v9125 = vrot.slane %v9117, %v9124
    %v9127 = vunpack.c.l.s4 1966171168
    %v9128 = vunpack.c.0.s8 %v9127
    %v9129 = vlaneseq
    %v9130 = vshrl.u32 %v9129, 7
    %v9131 = vsub.s32 %v9128, %v9130
    %v9132 = vrot.slane %v9118, %v9131
    %v9133 = vcombine.low %v9125, %v9132
    %v9134 = vcombine.low %v3613, %v3617
    %v9135 = vcombine.low %v3621, %v3625
    %v9136 = vcombine.low %v3629, %v3633
    %v9137 = vcombine.low %v3637, %v3641
    %v9139 = vunpack.c.l.s4 1966171168
    %v9140 = vunpack.c.0.s8 %v9139
    %v9141 = vlaneseq
    %v9142 = vshrl.u32 %v9141, 7
    %v9143 = vsub.s32 %v9140, %v9142
    %v9144 = vrot.slane %v9134, %v9143
    %v9146 = vunpack.c.l.s4 1966171168
    %v9147 = vunpack.c.0.s8 %v9146
    %v9148 = vlaneseq
    %v9149 = vshrl.u32 %v9148, 7
    %v9150 = vsub.s32 %v9147, %v9149
    %v9151 = vrot.slane %v9135, %v9150
    %v9153 = vunpack.c.l.s4 1966171168
    %v9154 = vunpack.c.0.s8 %v9153
    %v9155 = vlaneseq
    %v9156 = vshrl.u32 %v9155, 7
    %v9157 = vsub.s32 %v9154, %v9156
    %v9158 = vrot.slane %v9136, %v9157
    %v9160 = vunpack.c.l.s4 1966171168
    %v9161 = vunpack.c.0.s8 %v9160
    %v9162 = vlaneseq
    %v9163 = vshrl.u32 %v9162, 7
    %v9164 = vsub.s32 %v9161, %v9163
    %v9165 = vrot.slane %v9137, %v9164
    %v9166 = vcombine.low %v9144, %v9151
    %v9167 = vcombine.low %v9158, %v9165
    %v9169 = vunpack.c.l.s4 1966171168
    %v9170 = vunpack.c.0.s8 %v9169
    %v9171 = vlaneseq
    %v9172 = vshrl.u32 %v9171, 7
    %v9173 = vsub.s32 %v9170, %v9172
    %v9174 = vrot.slane %v9166, %v9173
    %v9176 = vunpack.c.l.s4 1966171168
    %v9177 = vunpack.c.0.s8 %v9176
    %v9178 = vlaneseq
    %v9179 = vshrl.u32 %v9178, 7
    %v9180 = vsub.s32 %v9177, %v9179
    %v9181 = vrot.slane %v9167, %v9180
    %v9182 = vcombine.low %v9174, %v9181
    %v9183 = vcombine.low %v3645, %v3649
    %v9184 = vcombine.low %v3653, %v3657
    %v9185 = vcombine.low %v3661, %v3665
    %v9186 = vcombine.low %v3669, %v3673
    %v9188 = vunpack.c.l.s4 1966171168
    %v9189 = vunpack.c.0.s8 %v9188
    %v9190 = vlaneseq
    %v9191 = vshrl.u32 %v9190, 7
    %v9192 = vsub.s32 %v9189, %v9191
    %v9193 = vrot.slane %v9183, %v9192
    %v9195 = vunpack.c.l.s4 1966171168
    %v9196 = vunpack.c.0.s8 %v9195
    %v9197 = vlaneseq
    %v9198 = vshrl.u32 %v9197, 7
    %v9199 = vsub.s32 %v9196, %v9198
    %v9200 = vrot.slane %v9184, %v9199
    %v9202 = vunpack.c.l.s4 1966171168
    %v9203 = vunpack.c.0.s8 %v9202
    %v9204 = vlaneseq
    %v9205 = vshrl.u32 %v9204, 7
    %v9206 = vsub.s32 %v9203, %v9205
    %v9207 = vrot.slane %v9185, %v9206
    %v9209 = vunpack.c.l.s4 1966171168
    %v9210 = vunpack.c.0.s8 %v9209
    %v9211 = vlaneseq
    %v9212 = vshrl.u32 %v9211, 7
    %v9213 = vsub.s32 %v9210, %v9212
    %v9214 = vrot.slane %v9186, %v9213
    %v9215 = vcombine.low %v9193, %v9200
    %v9216 = vcombine.low %v9207, %v9214
    %v9218 = vunpack.c.l.s4 1966171168
    %v9219 = vunpack.c.0.s8 %v9218
    %v9220 = vlaneseq
    %v9221 = vshrl.u32 %v9220, 7
    %v9222 = vsub.s32 %v9219, %v9221
    %v9223 = vrot.slane %v9215, %v9222
    %v9225 = vunpack.c.l.s4 1966171168
    %v9226 = vunpack.c.0.s8 %v9225
    %v9227 = vlaneseq
    %v9228 = vshrl.u32 %v9227, 7
    %v9229 = vsub.s32 %v9226, %v9228
    %v9230 = vrot.slane %v9216, %v9229
    %v9231 = vcombine.low %v9223, %v9230
    %v9232 = vcombine.low %v3677, %v3681
    %v9233 = vcombine.low %v3685, %v3689
    %v9234 = vcombine.low %v3693, %v3697
    %v9235 = vcombine.low %v3701, %v3705
    %v9237 = vunpack.c.l.s4 1966171168
    %v9238 = vunpack.c.0.s8 %v9237
    %v9239 = vlaneseq
    %v9240 = vshrl.u32 %v9239, 7
    %v9241 = vsub.s32 %v9238, %v9240
    %v9242 = vrot.slane %v9232, %v9241
    %v9244 = vunpack.c.l.s4 1966171168
    %v9245 = vunpack.c.0.s8 %v9244
    %v9246 = vlaneseq
    %v9247 = vshrl.u32 %v9246, 7
    %v9248 = vsub.s32 %v9245, %v9247
    %v9249 = vrot.slane %v9233, %v9248
    %v9251 = vunpack.c.l.s4 1966171168
    %v9252 = vunpack.c.0.s8 %v9251
    %v9253 = vlaneseq
    %v9254 = vshrl.u32 %v9253, 7
    %v9255 = vsub.s32 %v9252, %v9254
    %v9256 = vrot.slane %v9234, %v9255
    %v9258 = vunpack.c.l.s4 1966171168
    %v9259 = vunpack.c.0.s8 %v9258
    %v9260 = vlaneseq
    %v9261 = vshrl.u32 %v9260, 7
    %v9262 = vsub.s32 %v9259, %v9261
    %v9263 = vrot.slane %v9235, %v9262
    %v9264 = vcombine.low %v9242, %v9249
    %v9265 = vcombine.low %v9256, %v9263
    %v9267 = vunpack.c.l.s4 1966171168
    %v9268 = vunpack.c.0.s8 %v9267
    %v9269 = vlaneseq
    %v9270 = vshrl.u32 %v9269, 7
    %v9271 = vsub.s32 %v9268, %v9270
    %v9272 = vrot.slane %v9264, %v9271
    %v9274 = vunpack.c.l.s4 1966171168
    %v9275 = vunpack.c.0.s8 %v9274
    %v9276 = vlaneseq
    %v9277 = vshrl.u32 %v9276, 7
    %v9278 = vsub.s32 %v9275, %v9277
    %v9279 = vrot.slane %v9265, %v9278
    %v9280 = vcombine.low %v9272, %v9279
    %v9281 = vcombine.low %v3709, %v3713
    %v9282 = vcombine.low %v3717, %v3721
    %v9283 = vcombine.low %v3725, %v3729
    %v9284 = vcombine.low %v3733, %v3737
    %v9286 = vunpack.c.l.s4 1966171168
    %v9287 = vunpack.c.0.s8 %v9286
    %v9288 = vlaneseq
    %v9289 = vshrl.u32 %v9288, 7
    %v9290 = vsub.s32 %v9287, %v9289
    %v9291 = vrot.slane %v9281, %v9290
    %v9293 = vunpack.c.l.s4 1966171168
    %v9294 = vunpack.c.0.s8 %v9293
    %v9295 = vlaneseq
    %v9296 = vshrl.u32 %v9295, 7
    %v9297 = vsub.s32 %v9294, %v9296
    %v9298 = vrot.slane %v9282, %v9297
    %v9300 = vunpack.c.l.s4 1966171168
    %v9301 = vunpack.c.0.s8 %v9300
    %v9302 = vlaneseq
    %v9303 = vshrl.u32 %v9302, 7
    %v9304 = vsub.s32 %v9301, %v9303
    %v9305 = vrot.slane %v9283, %v9304
    %v9307 = vunpack.c.l.s4 1966171168
    %v9308 = vunpack.c.0.s8 %v9307
    %v9309 = vlaneseq
    %v9310 = vshrl.u32 %v9309, 7
    %v9311 = vsub.s32 %v9308, %v9310
    %v9312 = vrot.slane %v9284, %v9311
    %v9313 = vcombine.low %v9291, %v9298
    %v9314 = vcombine.low %v9305, %v9312
    %v9316 = vunpack.c.l.s4 1966171168
    %v9317 = vunpack.c.0.s8 %v9316
    %v9318 = vlaneseq
    %v9319 = vshrl.u32 %v9318, 7
    %v9320 = vsub.s32 %v9317, %v9319
    %v9321 = vrot.slane %v9313, %v9320
    %v9323 = vunpack.c.l.s4 1966171168
    %v9324 = vunpack.c.0.s8 %v9323
    %v9325 = vlaneseq
    %v9326 = vshrl.u32 %v9325, 7
    %v9327 = vsub.s32 %v9324, %v9326
    %v9328 = vrot.slane %v9314, %v9327
    %v9329 = vcombine.low %v9321, %v9328
    %v9330 = vcombine.low %v3741, %v3745
    %v9331 = vcombine.low %v3749, %v3753
    %v9332 = vcombine.low %v3757, %v3761
    %v9333 = vcombine.low %v3765, %v3769
    %v9335 = vunpack.c.l.s4 1966171168
    %v9336 = vunpack.c.0.s8 %v9335
    %v9337 = vlaneseq
    %v9338 = vshrl.u32 %v9337, 7
    %v9339 = vsub.s32 %v9336, %v9338
    %v9340 = vrot.slane %v9330, %v9339
    %v9342 = vunpack.c.l.s4 1966171168
    %v9343 = vunpack.c.0.s8 %v9342
    %v9344 = vlaneseq
    %v9345 = vshrl.u32 %v9344, 7
    %v9346 = vsub.s32 %v9343, %v9345
    %v9347 = vrot.slane %v9331, %v9346
    %v9349 = vunpack.c.l.s4 1966171168
    %v9350 = vunpack.c.0.s8 %v9349
    %v9351 = vlaneseq
    %v9352 = vshrl.u32 %v9351, 7
    %v9353 = vsub.s32 %v9350, %v9352
    %v9354 = vrot.slane %v9332, %v9353
    %v9356 = vunpack.c.l.s4 1966171168
    %v9357 = vunpack.c.0.s8 %v9356
    %v9358 = vlaneseq
    %v9359 = vshrl.u32 %v9358, 7
    %v9360 = vsub.s32 %v9357, %v9359
    %v9361 = vrot.slane %v9333, %v9360
    %v9362 = vcombine.low %v9340, %v9347
    %v9363 = vcombine.low %v9354, %v9361
    %v9365 = vunpack.c.l.s4 1966171168
    %v9366 = vunpack.c.0.s8 %v9365
    %v9367 = vlaneseq
    %v9368 = vshrl.u32 %v9367, 7
    %v9369 = vsub.s32 %v9366, %v9368
    %v9370 = vrot.slane %v9362, %v9369
    %v9372 = vunpack.c.l.s4 1966171168
    %v9373 = vunpack.c.0.s8 %v9372
    %v9374 = vlaneseq
    %v9375 = vshrl.u32 %v9374, 7
    %v9376 = vsub.s32 %v9373, %v9375
    %v9377 = vrot.slane %v9363, %v9376
    %v9378 = vcombine.low %v9370, %v9377
    %v9379 = vcombine.low %v3773, %v3777
    %v9380 = vcombine.low %v3781, %v3785
    %v9381 = vcombine.low %v3789, %v3793
    %v9382 = vcombine.low %v3797, %v3801
    %v9384 = vunpack.c.l.s4 1966171168
    %v9385 = vunpack.c.0.s8 %v9384
    %v9386 = vlaneseq
    %v9387 = vshrl.u32 %v9386, 7
    %v9388 = vsub.s32 %v9385, %v9387
    %v9389 = vrot.slane %v9379, %v9388
    %v9391 = vunpack.c.l.s4 1966171168
    %v9392 = vunpack.c.0.s8 %v9391
    %v9393 = vlaneseq
    %v9394 = vshrl.u32 %v9393, 7
    %v9395 = vsub.s32 %v9392, %v9394
    %v9396 = vrot.slane %v9380, %v9395
    %v9398 = vunpack.c.l.s4 1966171168
    %v9399 = vunpack.c.0.s8 %v9398
    %v9400 = vlaneseq
    %v9401 = vshrl.u32 %v9400, 7
    %v9402 = vsub.s32 %v9399, %v9401
    %v9403 = vrot.slane %v9381, %v9402
    %v9405 = vunpack.c.l.s4 1966171168
    %v9406 = vunpack.c.0.s8 %v9405
    %v9407 = vlaneseq
    %v9408 = vshrl.u32 %v9407, 7
    %v9409 = vsub.s32 %v9406, %v9408
    %v9410 = vrot.slane %v9382, %v9409
    %v9411 = vcombine.low %v9389, %v9396
    %v9412 = vcombine.low %v9403, %v9410
    %v9414 = vunpack.c.l.s4 1966171168
    %v9415 = vunpack.c.0.s8 %v9414
    %v9416 = vlaneseq
    %v9417 = vshrl.u32 %v9416, 7
    %v9418 = vsub.s32 %v9415, %v9417
    %v9419 = vrot.slane %v9411, %v9418
    %v9421 = vunpack.c.l.s4 1966171168
    %v9422 = vunpack.c.0.s8 %v9421
    %v9423 = vlaneseq
    %v9424 = vshrl.u32 %v9423, 7
    %v9425 = vsub.s32 %v9422, %v9424
    %v9426 = vrot.slane %v9412, %v9425
    %v9427 = vcombine.low %v9419, %v9426
    %v9428 = vcombine.low %v3805, %v3809
    %v9429 = vcombine.low %v3813, %v3817
    %v9430 = vcombine.low %v3821, %v3825
    %v9431 = vcombine.low %v3829, %v3833
    %v9433 = vunpack.c.l.s4 1966171168
    %v9434 = vunpack.c.0.s8 %v9433
    %v9435 = vlaneseq
    %v9436 = vshrl.u32 %v9435, 7
    %v9437 = vsub.s32 %v9434, %v9436
    %v9438 = vrot.slane %v9428, %v9437
    %v9440 = vunpack.c.l.s4 1966171168
    %v9441 = vunpack.c.0.s8 %v9440
    %v9442 = vlaneseq
    %v9443 = vshrl.u32 %v9442, 7
    %v9444 = vsub.s32 %v9441, %v9443
    %v9445 = vrot.slane %v9429, %v9444
    %v9447 = vunpack.c.l.s4 1966171168
    %v9448 = vunpack.c.0.s8 %v9447
    %v9449 = vlaneseq
    %v9450 = vshrl.u32 %v9449, 7
    %v9451 = vsub.s32 %v9448, %v9450
    %v9452 = vrot.slane %v9430, %v9451
    %v9454 = vunpack.c.l.s4 1966171168
    %v9455 = vunpack.c.0.s8 %v9454
    %v9456 = vlaneseq
    %v9457 = vshrl.u32 %v9456, 7
    %v9458 = vsub.s32 %v9455, %v9457
    %v9459 = vrot.slane %v9431, %v9458
    %v9460 = vcombine.low %v9438, %v9445
    %v9461 = vcombine.low %v9452, %v9459
    %v9463 = vunpack.c.l.s4 1966171168
    %v9464 = vunpack.c.0.s8 %v9463
    %v9465 = vlaneseq
    %v9466 = vshrl.u32 %v9465, 7
    %v9467 = vsub.s32 %v9464, %v9466
    %v9468 = vrot.slane %v9460, %v9467
    %v9470 = vunpack.c.l.s4 1966171168
    %v9471 = vunpack.c.0.s8 %v9470
    %v9472 = vlaneseq
    %v9473 = vshrl.u32 %v9472, 7
    %v9474 = vsub.s32 %v9471, %v9473
    %v9475 = vrot.slane %v9461, %v9474
    %v9476 = vcombine.low %v9468, %v9475
    %v9477 = vcombine.low %v3837, %v3841
    %v9478 = vcombine.low %v3845, %v3849
    %v9479 = vcombine.low %v3853, %v3857
    %v9480 = vcombine.low %v3861, %v3865
    %v9482 = vunpack.c.l.s4 1966171168
    %v9483 = vunpack.c.0.s8 %v9482
    %v9484 = vlaneseq
    %v9485 = vshrl.u32 %v9484, 7
    %v9486 = vsub.s32 %v9483, %v9485
    %v9487 = vrot.slane %v9477, %v9486
    %v9489 = vunpack.c.l.s4 1966171168
    %v9490 = vunpack.c.0.s8 %v9489
    %v9491 = vlaneseq
    %v9492 = vshrl.u32 %v9491, 7
    %v9493 = vsub.s32 %v9490, %v9492
    %v9494 = vrot.slane %v9478, %v9493
    %v9496 = vunpack.c.l.s4 1966171168
    %v9497 = vunpack.c.0.s8 %v9496
    %v9498 = vlaneseq
    %v9499 = vshrl.u32 %v9498, 7
    %v9500 = vsub.s32 %v9497, %v9499
    %v9501 = vrot.slane %v9479, %v9500
    %v9503 = vunpack.c.l.s4 1966171168
    %v9504 = vunpack.c.0.s8 %v9503
    %v9505 = vlaneseq
    %v9506 = vshrl.u32 %v9505, 7
    %v9507 = vsub.s32 %v9504, %v9506
    %v9508 = vrot.slane %v9480, %v9507
    %v9509 = vcombine.low %v9487, %v9494
    %v9510 = vcombine.low %v9501, %v9508
    %v9512 = vunpack.c.l.s4 1966171168
    %v9513 = vunpack.c.0.s8 %v9512
    %v9514 = vlaneseq
    %v9515 = vshrl.u32 %v9514, 7
    %v9516 = vsub.s32 %v9513, %v9515
    %v9517 = vrot.slane %v9509, %v9516
    %v9519 = vunpack.c.l.s4 1966171168
    %v9520 = vunpack.c.0.s8 %v9519
    %v9521 = vlaneseq
    %v9522 = vshrl.u32 %v9521, 7
    %v9523 = vsub.s32 %v9520, %v9522
    %v9524 = vrot.slane %v9510, %v9523
    %v9525 = vcombine.low %v9517, %v9524
    %v9526 = vcombine.low %v3869, %v3873
    %v9527 = vcombine.low %v3877, %v3881
    %v9528 = vcombine.low %v3885, %v3889
    %v9529 = vcombine.low %v3893, %v3897
    %v9531 = vunpack.c.l.s4 1966171168
    %v9532 = vunpack.c.0.s8 %v9531
    %v9533 = vlaneseq
    %v9534 = vshrl.u32 %v9533, 7
    %v9535 = vsub.s32 %v9532, %v9534
    %v9536 = vrot.slane %v9526, %v9535
    %v9538 = vunpack.c.l.s4 1966171168
    %v9539 = vunpack.c.0.s8 %v9538
    %v9540 = vlaneseq
    %v9541 = vshrl.u32 %v9540, 7
    %v9542 = vsub.s32 %v9539, %v9541
    %v9543 = vrot.slane %v9527, %v9542
    %v9545 = vunpack.c.l.s4 1966171168
    %v9546 = vunpack.c.0.s8 %v9545
    %v9547 = vlaneseq
    %v9548 = vshrl.u32 %v9547, 7
    %v9549 = vsub.s32 %v9546, %v9548
    %v9550 = vrot.slane %v9528, %v9549
    %v9552 = vunpack.c.l.s4 1966171168
    %v9553 = vunpack.c.0.s8 %v9552
    %v9554 = vlaneseq
    %v9555 = vshrl.u32 %v9554, 7
    %v9556 = vsub.s32 %v9553, %v9555
    %v9557 = vrot.slane %v9529, %v9556
    %v9558 = vcombine.low %v9536, %v9543
    %v9559 = vcombine.low %v9550, %v9557
    %v9561 = vunpack.c.l.s4 1966171168
    %v9562 = vunpack.c.0.s8 %v9561
    %v9563 = vlaneseq
    %v9564 = vshrl.u32 %v9563, 7
    %v9565 = vsub.s32 %v9562, %v9564
    %v9566 = vrot.slane %v9558, %v9565
    %v9568 = vunpack.c.l.s4 1966171168
    %v9569 = vunpack.c.0.s8 %v9568
    %v9570 = vlaneseq
    %v9571 = vshrl.u32 %v9570, 7
    %v9572 = vsub.s32 %v9569, %v9571
    %v9573 = vrot.slane %v9559, %v9572
    %v9574 = vcombine.low %v9566, %v9573
    %v9575 = vcombine.low %v3901, %v3905
    %v9576 = vcombine.low %v3909, %v3913
    %v9577 = vcombine.low %v3917, %v3921
    %v9578 = vcombine.low %v3925, %v3929
    %v9580 = vunpack.c.l.s4 1966171168
    %v9581 = vunpack.c.0.s8 %v9580
    %v9582 = vlaneseq
    %v9583 = vshrl.u32 %v9582, 7
    %v9584 = vsub.s32 %v9581, %v9583
    %v9585 = vrot.slane %v9575, %v9584
    %v9587 = vunpack.c.l.s4 1966171168
    %v9588 = vunpack.c.0.s8 %v9587
    %v9589 = vlaneseq
    %v9590 = vshrl.u32 %v9589, 7
    %v9591 = vsub.s32 %v9588, %v9590
    %v9592 = vrot.slane %v9576, %v9591
    %v9594 = vunpack.c.l.s4 1966171168
    %v9595 = vunpack.c.0.s8 %v9594
    %v9596 = vlaneseq
    %v9597 = vshrl.u32 %v9596, 7
    %v9598 = vsub.s32 %v9595, %v9597
    %v9599 = vrot.slane %v9577, %v9598
    %v9601 = vunpack.c.l.s4 1966171168
    %v9602 = vunpack.c.0.s8 %v9601
    %v9603 = vlaneseq
    %v9604 = vshrl.u32 %v9603, 7
    %v9605 = vsub.s32 %v9602, %v9604
    %v9606 = vrot.slane %v9578, %v9605
    %v9607 = vcombine.low %v9585, %v9592
    %v9608 = vcombine.low %v9599, %v9606
    %v9610 = vunpack.c.l.s4 1966171168
    %v9611 = vunpack.c.0.s8 %v9610
    %v9612 = vlaneseq
    %v9613 = vshrl.u32 %v9612, 7
    %v9614 = vsub.s32 %v9611, %v9613
    %v9615 = vrot.slane %v9607, %v9614
    %v9617 = vunpack.c.l.s4 1966171168
    %v9618 = vunpack.c.0.s8 %v9617
    %v9619 = vlaneseq
    %v9620 = vshrl.u32 %v9619, 7
    %v9621 = vsub.s32 %v9618, %v9620
    %v9622 = vrot.slane %v9608, %v9621
    %v9623 = vcombine.low %v9615, %v9622
    %v9624 = vcombine.low %v3933, %v3937
    %v9625 = vcombine.low %v3941, %v3945
    %v9626 = vcombine.low %v3949, %v3953
    %v9627 = vcombine.low %v3957, %v3961
    %v9629 = vunpack.c.l.s4 1966171168
    %v9630 = vunpack.c.0.s8 %v9629
    %v9631 = vlaneseq
    %v9632 = vshrl.u32 %v9631, 7
    %v9633 = vsub.s32 %v9630, %v9632
    %v9634 = vrot.slane %v9624, %v9633
    %v9636 = vunpack.c.l.s4 1966171168
    %v9637 = vunpack.c.0.s8 %v9636
    %v9638 = vlaneseq
    %v9639 = vshrl.u32 %v9638, 7
    %v9640 = vsub.s32 %v9637, %v9639
    %v9641 = vrot.slane %v9625, %v9640
    %v9643 = vunpack.c.l.s4 1966171168
    %v9644 = vunpack.c.0.s8 %v9643
    %v9645 = vlaneseq
    %v9646 = vshrl.u32 %v9645, 7
    %v9647 = vsub.s32 %v9644, %v9646
    %v9648 = vrot.slane %v9626, %v9647
    %v9650 = vunpack.c.l.s4 1966171168
    %v9651 = vunpack.c.0.s8 %v9650
    %v9652 = vlaneseq
    %v9653 = vshrl.u32 %v9652, 7
    %v9654 = vsub.s32 %v9651, %v9653
    %v9655 = vrot.slane %v9627, %v9654
    %v9656 = vcombine.low %v9634, %v9641
    %v9657 = vcombine.low %v9648, %v9655
    %v9659 = vunpack.c.l.s4 1966171168
    %v9660 = vunpack.c.0.s8 %v9659
    %v9661 = vlaneseq
    %v9662 = vshrl.u32 %v9661, 7
    %v9663 = vsub.s32 %v9660, %v9662
    %v9664 = vrot.slane %v9656, %v9663
    %v9666 = vunpack.c.l.s4 1966171168
    %v9667 = vunpack.c.0.s8 %v9666
    %v9668 = vlaneseq
    %v9669 = vshrl.u32 %v9668, 7
    %v9670 = vsub.s32 %v9667, %v9669
    %v9671 = vrot.slane %v9657, %v9670
    %v9672 = vcombine.low %v9664, %v9671
    %v9673 = vcombine.low %v3965, %v3969
    %v9674 = vcombine.low %v3973, %v3977
    %v9675 = vcombine.low %v3981, %v3985
    %v9676 = vcombine.low %v3989, %v3993
    %v9678 = vunpack.c.l.s4 1966171168
    %v9679 = vunpack.c.0.s8 %v9678
    %v9680 = vlaneseq
    %v9681 = vshrl.u32 %v9680, 7
    %v9682 = vsub.s32 %v9679, %v9681
    %v9683 = vrot.slane %v9673, %v9682
    %v9685 = vunpack.c.l.s4 1966171168
    %v9686 = vunpack.c.0.s8 %v9685
    %v9687 = vlaneseq
    %v9688 = vshrl.u32 %v9687, 7
    %v9689 = vsub.s32 %v9686, %v9688
    %v9690 = vrot.slane %v9674, %v9689
    %v9692 = vunpack.c.l.s4 1966171168
    %v9693 = vunpack.c.0.s8 %v9692
    %v9694 = vlaneseq
    %v9695 = vshrl.u32 %v9694, 7
    %v9696 = vsub.s32 %v9693, %v9695
    %v9697 = vrot.slane %v9675, %v9696
    %v9699 = vunpack.c.l.s4 1966171168
    %v9700 = vunpack.c.0.s8 %v9699
    %v9701 = vlaneseq
    %v9702 = vshrl.u32 %v9701, 7
    %v9703 = vsub.s32 %v9700, %v9702
    %v9704 = vrot.slane %v9676, %v9703
    %v9705 = vcombine.low %v9683, %v9690
    %v9706 = vcombine.low %v9697, %v9704
    %v9708 = vunpack.c.l.s4 1966171168
    %v9709 = vunpack.c.0.s8 %v9708
    %v9710 = vlaneseq
    %v9711 = vshrl.u32 %v9710, 7
    %v9712 = vsub.s32 %v9709, %v9711
    %v9713 = vrot.slane %v9705, %v9712
    %v9715 = vunpack.c.l.s4 1966171168
    %v9716 = vunpack.c.0.s8 %v9715
    %v9717 = vlaneseq
    %v9718 = vshrl.u32 %v9717, 7
    %v9719 = vsub.s32 %v9716, %v9718
    %v9720 = vrot.slane %v9706, %v9719
    %v9721 = vcombine.low %v9713, %v9720
    %v9722 = vcombine.low %v3997, %v4001
    %v9723 = vcombine.low %v4005, %v4009
    %v9724 = vcombine.low %v4013, %v4017
    %v9725 = vcombine.low %v4021, %v4025
    %v9727 = vunpack.c.l.s4 1966171168
    %v9728 = vunpack.c.0.s8 %v9727
    %v9729 = vlaneseq
    %v9730 = vshrl.u32 %v9729, 7
    %v9731 = vsub.s32 %v9728, %v9730
    %v9732 = vrot.slane %v9722, %v9731
    %v9734 = vunpack.c.l.s4 1966171168
    %v9735 = vunpack.c.0.s8 %v9734
    %v9736 = vlaneseq
    %v9737 = vshrl.u32 %v9736, 7
    %v9738 = vsub.s32 %v9735, %v9737
    %v9739 = vrot.slane %v9723, %v9738
    %v9741 = vunpack.c.l.s4 1966171168
    %v9742 = vunpack.c.0.s8 %v9741
    %v9743 = vlaneseq
    %v9744 = vshrl.u32 %v9743, 7
    %v9745 = vsub.s32 %v9742, %v9744
    %v9746 = vrot.slane %v9724, %v9745
    %v9748 = vunpack.c.l.s4 1966171168
    %v9749 = vunpack.c.0.s8 %v9748
    %v9750 = vlaneseq
    %v9751 = vshrl.u32 %v9750, 7
    %v9752 = vsub.s32 %v9749, %v9751
    %v9753 = vrot.slane %v9725, %v9752
    %v9754 = vcombine.low %v9732, %v9739
    %v9755 = vcombine.low %v9746, %v9753
    %v9757 = vunpack.c.l.s4 1966171168
    %v9758 = vunpack.c.0.s8 %v9757
    %v9759 = vlaneseq
    %v9760 = vshrl.u32 %v9759, 7
    %v9761 = vsub.s32 %v9758, %v9760
    %v9762 = vrot.slane %v9754, %v9761
    %v9764 = vunpack.c.l.s4 1966171168
    %v9765 = vunpack.c.0.s8 %v9764
    %v9766 = vlaneseq
    %v9767 = vshrl.u32 %v9766, 7
    %v9768 = vsub.s32 %v9765, %v9767
    %v9769 = vrot.slane %v9755, %v9768
    %v9770 = vcombine.low %v9762, %v9769
    %v9771 = vcombine.low %v4029, %v4033
    %v9772 = vcombine.low %v4037, %v4041
    %v9773 = vcombine.low %v4045, %v4049
    %v9774 = vcombine.low %v4053, %v4057
    %v9776 = vunpack.c.l.s4 1966171168
    %v9777 = vunpack.c.0.s8 %v9776
    %v9778 = vlaneseq
    %v9779 = vshrl.u32 %v9778, 7
    %v9780 = vsub.s32 %v9777, %v9779
    %v9781 = vrot.slane %v9771, %v9780
    %v9783 = vunpack.c.l.s4 1966171168
    %v9784 = vunpack.c.0.s8 %v9783
    %v9785 = vlaneseq
    %v9786 = vshrl.u32 %v9785, 7
    %v9787 = vsub.s32 %v9784, %v9786
    %v9788 = vrot.slane %v9772, %v9787
    %v9790 = vunpack.c.l.s4 1966171168
    %v9791 = vunpack.c.0.s8 %v9790
    %v9792 = vlaneseq
    %v9793 = vshrl.u32 %v9792, 7
    %v9794 = vsub.s32 %v9791, %v9793
    %v9795 = vrot.slane %v9773, %v9794
    %v9797 = vunpack.c.l.s4 1966171168
    %v9798 = vunpack.c.0.s8 %v9797
    %v9799 = vlaneseq
    %v9800 = vshrl.u32 %v9799, 7
    %v9801 = vsub.s32 %v9798, %v9800
    %v9802 = vrot.slane %v9774, %v9801
    %v9803 = vcombine.low %v9781, %v9788
    %v9804 = vcombine.low %v9795, %v9802
    %v9806 = vunpack.c.l.s4 1966171168
    %v9807 = vunpack.c.0.s8 %v9806
    %v9808 = vlaneseq
    %v9809 = vshrl.u32 %v9808, 7
    %v9810 = vsub.s32 %v9807, %v9809
    %v9811 = vrot.slane %v9803, %v9810
    %v9813 = vunpack.c.l.s4 1966171168
    %v9814 = vunpack.c.0.s8 %v9813
    %v9815 = vlaneseq
    %v9816 = vshrl.u32 %v9815, 7
    %v9817 = vsub.s32 %v9814, %v9816
    %v9818 = vrot.slane %v9804, %v9817
    %v9819 = vcombine.low %v9811, %v9818
    %v9820 = vcombine.low %v4061, %v4065
    %v9821 = vcombine.low %v4069, %v4073
    %v9822 = vcombine.low %v4077, %v4081
    %v9823 = vcombine.low %v4085, %v4089
    %v9825 = vunpack.c.l.s4 1966171168
    %v9826 = vunpack.c.0.s8 %v9825
    %v9827 = vlaneseq
    %v9828 = vshrl.u32 %v9827, 7
    %v9829 = vsub.s32 %v9826, %v9828
    %v9830 = vrot.slane %v9820, %v9829
    %v9832 = vunpack.c.l.s4 1966171168
    %v9833 = vunpack.c.0.s8 %v9832
    %v9834 = vlaneseq
    %v9835 = vshrl.u32 %v9834, 7
    %v9836 = vsub.s32 %v9833, %v9835
    %v9837 = vrot.slane %v9821, %v9836
    %v9839 = vunpack.c.l.s4 1966171168
    %v9840 = vunpack.c.0.s8 %v9839
    %v9841 = vlaneseq
    %v9842 = vshrl.u32 %v9841, 7
    %v9843 = vsub.s32 %v9840, %v9842
    %v9844 = vrot.slane %v9822, %v9843
    %v9846 = vunpack.c.l.s4 1966171168
    %v9847 = vunpack.c.0.s8 %v9846
    %v9848 = vlaneseq
    %v9849 = vshrl.u32 %v9848, 7
    %v9850 = vsub.s32 %v9847, %v9849
    %v9851 = vrot.slane %v9823, %v9850
    %v9852 = vcombine.low %v9830, %v9837
    %v9853 = vcombine.low %v9844, %v9851
    %v9855 = vunpack.c.l.s4 1966171168
    %v9856 = vunpack.c.0.s8 %v9855
    %v9857 = vlaneseq
    %v9858 = vshrl.u32 %v9857, 7
    %v9859 = vsub.s32 %v9856, %v9858
    %v9860 = vrot.slane %v9852, %v9859
    %v9862 = vunpack.c.l.s4 1966171168
    %v9863 = vunpack.c.0.s8 %v9862
    %v9864 = vlaneseq
    %v9865 = vshrl.u32 %v9864, 7
    %v9866 = vsub.s32 %v9863, %v9865
    %v9867 = vrot.slane %v9853, %v9866
    %v9868 = vcombine.low %v9860, %v9867
    %v9869 = vcombine.low %v4093, %v4097
    %v9870 = vcombine.low %v4101, %v4105
    %v9871 = vcombine.low %v4109, %v4113
    %v9872 = vcombine.low %v4117, %v4121
    %v9874 = vunpack.c.l.s4 1966171168
    %v9875 = vunpack.c.0.s8 %v9874
    %v9876 = vlaneseq
    %v9877 = vshrl.u32 %v9876, 7
    %v9878 = vsub.s32 %v9875, %v9877
    %v9879 = vrot.slane %v9869, %v9878
    %v9881 = vunpack.c.l.s4 1966171168
    %v9882 = vunpack.c.0.s8 %v9881
    %v9883 = vlaneseq
    %v9884 = vshrl.u32 %v9883, 7
    %v9885 = vsub.s32 %v9882, %v9884
    %v9886 = vrot.slane %v9870, %v9885
    %v9888 = vunpack.c.l.s4 1966171168
    %v9889 = vunpack.c.0.s8 %v9888
    %v9890 = vlaneseq
    %v9891 = vshrl.u32 %v9890, 7
    %v9892 = vsub.s32 %v9889, %v9891
    %v9893 = vrot.slane %v9871, %v9892
    %v9895 = vunpack.c.l.s4 1966171168
    %v9896 = vunpack.c.0.s8 %v9895
    %v9897 = vlaneseq
    %v9898 = vshrl.u32 %v9897, 7
    %v9899 = vsub.s32 %v9896, %v9898
    %v9900 = vrot.slane %v9872, %v9899
    %v9901 = vcombine.low %v9879, %v9886
    %v9902 = vcombine.low %v9893, %v9900
    %v9904 = vunpack.c.l.s4 1966171168
    %v9905 = vunpack.c.0.s8 %v9904
    %v9906 = vlaneseq
    %v9907 = vshrl.u32 %v9906, 7
    %v9908 = vsub.s32 %v9905, %v9907
    %v9909 = vrot.slane %v9901, %v9908
    %v9911 = vunpack.c.l.s4 1966171168
    %v9912 = vunpack.c.0.s8 %v9911
    %v9913 = vlaneseq
    %v9914 = vshrl.u32 %v9913, 7
    %v9915 = vsub.s32 %v9912, %v9914
    %v9916 = vrot.slane %v9902, %v9915
    %v9917 = vcombine.low %v9909, %v9916
    %v9918 = vcombine.low %v4125, %v4129
    %v9919 = vcombine.low %v4133, %v4137
    %v9920 = vcombine.low %v4141, %v4145
    %v9921 = vcombine.low %v4149, %v4153
    %v9923 = vunpack.c.l.s4 1966171168
    %v9924 = vunpack.c.0.s8 %v9923
    %v9925 = vlaneseq
    %v9926 = vshrl.u32 %v9925, 7
    %v9927 = vsub.s32 %v9924, %v9926
    %v9928 = vrot.slane %v9918, %v9927
    %v9930 = vunpack.c.l.s4 1966171168
    %v9931 = vunpack.c.0.s8 %v9930
    %v9932 = vlaneseq
    %v9933 = vshrl.u32 %v9932, 7
    %v9934 = vsub.s32 %v9931, %v9933
    %v9935 = vrot.slane %v9919, %v9934
    %v9937 = vunpack.c.l.s4 1966171168
    %v9938 = vunpack.c.0.s8 %v9937
    %v9939 = vlaneseq
    %v9940 = vshrl.u32 %v9939, 7
    %v9941 = vsub.s32 %v9938, %v9940
    %v9942 = vrot.slane %v9920, %v9941
    %v9944 = vunpack.c.l.s4 1966171168
    %v9945 = vunpack.c.0.s8 %v9944
    %v9946 = vlaneseq
    %v9947 = vshrl.u32 %v9946, 7
    %v9948 = vsub.s32 %v9945, %v9947
    %v9949 = vrot.slane %v9921, %v9948
    %v9950 = vcombine.low %v9928, %v9935
    %v9951 = vcombine.low %v9942, %v9949
    %v9953 = vunpack.c.l.s4 1966171168
    %v9954 = vunpack.c.0.s8 %v9953
    %v9955 = vlaneseq
    %v9956 = vshrl.u32 %v9955, 7
    %v9957 = vsub.s32 %v9954, %v9956
    %v9958 = vrot.slane %v9950, %v9957
    %v9960 = vunpack.c.l.s4 1966171168
    %v9961 = vunpack.c.0.s8 %v9960
    %v9962 = vlaneseq
    %v9963 = vshrl.u32 %v9962, 7
    %v9964 = vsub.s32 %v9961, %v9963
    %v9965 = vrot.slane %v9951, %v9964
    %v9966 = vcombine.low %v9958, %v9965
    %v9967 = vcombine.low %v4157, %v4161
    %v9968 = vcombine.low %v4165, %v4169
    %v9969 = vcombine.low %v4173, %v4177
    %v9970 = vcombine.low %v4181, %v4185
    %v9972 = vunpack.c.l.s4 1966171168
    %v9973 = vunpack.c.0.s8 %v9972
    %v9974 = vlaneseq
    %v9975 = vshrl.u32 %v9974, 7
    %v9976 = vsub.s32 %v9973, %v9975
    %v9977 = vrot.slane %v9967, %v9976
    %v9979 = vunpack.c.l.s4 1966171168
    %v9980 = vunpack.c.0.s8 %v9979
    %v9981 = vlaneseq
    %v9982 = vshrl.u32 %v9981, 7
    %v9983 = vsub.s32 %v9980, %v9982
    %v9984 = vrot.slane %v9968, %v9983
    %v9986 = vunpack.c.l.s4 1966171168
    %v9987 = vunpack.c.0.s8 %v9986
    %v9988 = vlaneseq
    %v9989 = vshrl.u32 %v9988, 7
    %v9990 = vsub.s32 %v9987, %v9989
    %v9991 = vrot.slane %v9969, %v9990
    %v9993 = vunpack.c.l.s4 1966171168
    %v9994 = vunpack.c.0.s8 %v9993
    %v9995 = vlaneseq
    %v9996 = vshrl.u32 %v9995, 7
    %v9997 = vsub.s32 %v9994, %v9996
    %v9998 = vrot.slane %v9970, %v9997
    %v9999 = vcombine.low %v9977, %v9984
    %v10000 = vcombine.low %v9991, %v9998
    %v10002 = vunpack.c.l.s4 1966171168
    %v10003 = vunpack.c.0.s8 %v10002
    %v10004 = vlaneseq
    %v10005 = vshrl.u32 %v10004, 7
    %v10006 = vsub.s32 %v10003, %v10005
    %v10007 = vrot.slane %v9999, %v10006
    %v10009 = vunpack.c.l.s4 1966171168
    %v10010 = vunpack.c.0.s8 %v10009
    %v10011 = vlaneseq
    %v10012 = vshrl.u32 %v10011, 7
    %v10013 = vsub.s32 %v10010, %v10012
    %v10014 = vrot.slane %v10000, %v10013
    %v10015 = vcombine.low %v10007, %v10014
    %v10016 = vcombine.low %v4189, %v4193
    %v10017 = vcombine.low %v4197, %v4201
    %v10018 = vcombine.low %v4205, %v4209
    %v10019 = vcombine.low %v4213, %v4217
    %v10021 = vunpack.c.l.s4 1966171168
    %v10022 = vunpack.c.0.s8 %v10021
    %v10023 = vlaneseq
    %v10024 = vshrl.u32 %v10023, 7
    %v10025 = vsub.s32 %v10022, %v10024
    %v10026 = vrot.slane %v10016, %v10025
    %v10028 = vunpack.c.l.s4 1966171168
    %v10029 = vunpack.c.0.s8 %v10028
    %v10030 = vlaneseq
    %v10031 = vshrl.u32 %v10030, 7
    %v10032 = vsub.s32 %v10029, %v10031
    %v10033 = vrot.slane %v10017, %v10032
    %v10035 = vunpack.c.l.s4 1966171168
    %v10036 = vunpack.c.0.s8 %v10035
    %v10037 = vlaneseq
    %v10038 = vshrl.u32 %v10037, 7
    %v10039 = vsub.s32 %v10036, %v10038
    %v10040 = vrot.slane %v10018, %v10039
    %v10042 = vunpack.c.l.s4 1966171168
    %v10043 = vunpack.c.0.s8 %v10042
    %v10044 = vlaneseq
    %v10045 = vshrl.u32 %v10044, 7
    %v10046 = vsub.s32 %v10043, %v10045
    %v10047 = vrot.slane %v10019, %v10046
    %v10048 = vcombine.low %v10026, %v10033
    %v10049 = vcombine.low %v10040, %v10047
    %v10051 = vunpack.c.l.s4 1966171168
    %v10052 = vunpack.c.0.s8 %v10051
    %v10053 = vlaneseq
    %v10054 = vshrl.u32 %v10053, 7
    %v10055 = vsub.s32 %v10052, %v10054
    %v10056 = vrot.slane %v10048, %v10055
    %v10058 = vunpack.c.l.s4 1966171168
    %v10059 = vunpack.c.0.s8 %v10058
    %v10060 = vlaneseq
    %v10061 = vshrl.u32 %v10060, 7
    %v10062 = vsub.s32 %v10059, %v10061
    %v10063 = vrot.slane %v10049, %v10062
    %v10064 = vcombine.low %v10056, %v10063
    %v10065 = vcombine.low %v4221, %v4225
    %v10066 = vcombine.low %v4229, %v4233
    %v10067 = vcombine.low %v4237, %v4241
    %v10068 = vcombine.low %v4245, %v4249
    %v10070 = vunpack.c.l.s4 1966171168
    %v10071 = vunpack.c.0.s8 %v10070
    %v10072 = vlaneseq
    %v10073 = vshrl.u32 %v10072, 7
    %v10074 = vsub.s32 %v10071, %v10073
    %v10075 = vrot.slane %v10065, %v10074
    %v10077 = vunpack.c.l.s4 1966171168
    %v10078 = vunpack.c.0.s8 %v10077
    %v10079 = vlaneseq
    %v10080 = vshrl.u32 %v10079, 7
    %v10081 = vsub.s32 %v10078, %v10080
    %v10082 = vrot.slane %v10066, %v10081
    %v10084 = vunpack.c.l.s4 1966171168
    %v10085 = vunpack.c.0.s8 %v10084
    %v10086 = vlaneseq
    %v10087 = vshrl.u32 %v10086, 7
    %v10088 = vsub.s32 %v10085, %v10087
    %v10089 = vrot.slane %v10067, %v10088
    %v10091 = vunpack.c.l.s4 1966171168
    %v10092 = vunpack.c.0.s8 %v10091
    %v10093 = vlaneseq
    %v10094 = vshrl.u32 %v10093, 7
    %v10095 = vsub.s32 %v10092, %v10094
    %v10096 = vrot.slane %v10068, %v10095
    %v10097 = vcombine.low %v10075, %v10082
    %v10098 = vcombine.low %v10089, %v10096
    %v10100 = vunpack.c.l.s4 1966171168
    %v10101 = vunpack.c.0.s8 %v10100
    %v10102 = vlaneseq
    %v10103 = vshrl.u32 %v10102, 7
    %v10104 = vsub.s32 %v10101, %v10103
    %v10105 = vrot.slane %v10097, %v10104
    %v10107 = vunpack.c.l.s4 1966171168
    %v10108 = vunpack.c.0.s8 %v10107
    %v10109 = vlaneseq
    %v10110 = vshrl.u32 %v10109, 7
    %v10111 = vsub.s32 %v10108, %v10110
    %v10112 = vrot.slane %v10098, %v10111
    %v10113 = vcombine.low %v10105, %v10112
    %v10114 = vcombine.low %v4253, %v4257
    %v10115 = vcombine.low %v4261, %v4265
    %v10116 = vcombine.low %v4269, %v4273
    %v10117 = vcombine.low %v4277, %v4281
    %v10119 = vunpack.c.l.s4 1966171168
    %v10120 = vunpack.c.0.s8 %v10119
    %v10121 = vlaneseq
    %v10122 = vshrl.u32 %v10121, 7
    %v10123 = vsub.s32 %v10120, %v10122
    %v10124 = vrot.slane %v10114, %v10123
    %v10126 = vunpack.c.l.s4 1966171168
    %v10127 = vunpack.c.0.s8 %v10126
    %v10128 = vlaneseq
    %v10129 = vshrl.u32 %v10128, 7
    %v10130 = vsub.s32 %v10127, %v10129
    %v10131 = vrot.slane %v10115, %v10130
    %v10133 = vunpack.c.l.s4 1966171168
    %v10134 = vunpack.c.0.s8 %v10133
    %v10135 = vlaneseq
    %v10136 = vshrl.u32 %v10135, 7
    %v10137 = vsub.s32 %v10134, %v10136
    %v10138 = vrot.slane %v10116, %v10137
    %v10140 = vunpack.c.l.s4 1966171168
    %v10141 = vunpack.c.0.s8 %v10140
    %v10142 = vlaneseq
    %v10143 = vshrl.u32 %v10142, 7
    %v10144 = vsub.s32 %v10141, %v10143
    %v10145 = vrot.slane %v10117, %v10144
    %v10146 = vcombine.low %v10124, %v10131
    %v10147 = vcombine.low %v10138, %v10145
    %v10149 = vunpack.c.l.s4 1966171168
    %v10150 = vunpack.c.0.s8 %v10149
    %v10151 = vlaneseq
    %v10152 = vshrl.u32 %v10151, 7
    %v10153 = vsub.s32 %v10150, %v10152
    %v10154 = vrot.slane %v10146, %v10153
    %v10156 = vunpack.c.l.s4 1966171168
    %v10157 = vunpack.c.0.s8 %v10156
    %v10158 = vlaneseq
    %v10159 = vshrl.u32 %v10158, 7
    %v10160 = vsub.s32 %v10157, %v10159
    %v10161 = vrot.slane %v10147, %v10160
    %v10162 = vcombine.low %v10154, %v10161
    %v10163 = vcombine.low %v4285, %v4289
    %v10164 = vcombine.low %v4293, %v4297
    %v10165 = vcombine.low %v4301, %v4305
    %v10166 = vcombine.low %v4309, %v4313
    %v10168 = vunpack.c.l.s4 1966171168
    %v10169 = vunpack.c.0.s8 %v10168
    %v10170 = vlaneseq
    %v10171 = vshrl.u32 %v10170, 7
    %v10172 = vsub.s32 %v10169, %v10171
    %v10173 = vrot.slane %v10163, %v10172
    %v10175 = vunpack.c.l.s4 1966171168
    %v10176 = vunpack.c.0.s8 %v10175
    %v10177 = vlaneseq
    %v10178 = vshrl.u32 %v10177, 7
    %v10179 = vsub.s32 %v10176, %v10178
    %v10180 = vrot.slane %v10164, %v10179
    %v10182 = vunpack.c.l.s4 1966171168
    %v10183 = vunpack.c.0.s8 %v10182
    %v10184 = vlaneseq
    %v10185 = vshrl.u32 %v10184, 7
    %v10186 = vsub.s32 %v10183, %v10185
    %v10187 = vrot.slane %v10165, %v10186
    %v10189 = vunpack.c.l.s4 1966171168
    %v10190 = vunpack.c.0.s8 %v10189
    %v10191 = vlaneseq
    %v10192 = vshrl.u32 %v10191, 7
    %v10193 = vsub.s32 %v10190, %v10192
    %v10194 = vrot.slane %v10166, %v10193
    %v10195 = vcombine.low %v10173, %v10180
    %v10196 = vcombine.low %v10187, %v10194
    %v10198 = vunpack.c.l.s4 1966171168
    %v10199 = vunpack.c.0.s8 %v10198
    %v10200 = vlaneseq
    %v10201 = vshrl.u32 %v10200, 7
    %v10202 = vsub.s32 %v10199, %v10201
    %v10203 = vrot.slane %v10195, %v10202
    %v10205 = vunpack.c.l.s4 1966171168
    %v10206 = vunpack.c.0.s8 %v10205
    %v10207 = vlaneseq
    %v10208 = vshrl.u32 %v10207, 7
    %v10209 = vsub.s32 %v10206, %v10208
    %v10210 = vrot.slane %v10196, %v10209
    %v10211 = vcombine.low %v10203, %v10210
    %v10212 = vcombine.low %v4317, %v4321
    %v10213 = vcombine.low %v4325, %v4329
    %v10214 = vcombine.low %v4333, %v4337
    %v10215 = vcombine.low %v4341, %v4345
    %v10217 = vunpack.c.l.s4 1966171168
    %v10218 = vunpack.c.0.s8 %v10217
    %v10219 = vlaneseq
    %v10220 = vshrl.u32 %v10219, 7
    %v10221 = vsub.s32 %v10218, %v10220
    %v10222 = vrot.slane %v10212, %v10221
    %v10224 = vunpack.c.l.s4 1966171168
    %v10225 = vunpack.c.0.s8 %v10224
    %v10226 = vlaneseq
    %v10227 = vshrl.u32 %v10226, 7
    %v10228 = vsub.s32 %v10225, %v10227
    %v10229 = vrot.slane %v10213, %v10228
    %v10231 = vunpack.c.l.s4 1966171168
    %v10232 = vunpack.c.0.s8 %v10231
    %v10233 = vlaneseq
    %v10234 = vshrl.u32 %v10233, 7
    %v10235 = vsub.s32 %v10232, %v10234
    %v10236 = vrot.slane %v10214, %v10235
    %v10238 = vunpack.c.l.s4 1966171168
    %v10239 = vunpack.c.0.s8 %v10238
    %v10240 = vlaneseq
    %v10241 = vshrl.u32 %v10240, 7
    %v10242 = vsub.s32 %v10239, %v10241
    %v10243 = vrot.slane %v10215, %v10242
    %v10244 = vcombine.low %v10222, %v10229
    %v10245 = vcombine.low %v10236, %v10243
    %v10247 = vunpack.c.l.s4 1966171168
    %v10248 = vunpack.c.0.s8 %v10247
    %v10249 = vlaneseq
    %v10250 = vshrl.u32 %v10249, 7
    %v10251 = vsub.s32 %v10248, %v10250
    %v10252 = vrot.slane %v10244, %v10251
    %v10254 = vunpack.c.l.s4 1966171168
    %v10255 = vunpack.c.0.s8 %v10254
    %v10256 = vlaneseq
    %v10257 = vshrl.u32 %v10256, 7
    %v10258 = vsub.s32 %v10255, %v10257
    %v10259 = vrot.slane %v10245, %v10258
    %v10260 = vcombine.low %v10252, %v10259
    %v10261 = vcombine.low %v4349, %v4353
    %v10262 = vcombine.low %v4357, %v4361
    %v10263 = vcombine.low %v4365, %v4369
    %v10264 = vcombine.low %v4373, %v4377
    %v10266 = vunpack.c.l.s4 1966171168
    %v10267 = vunpack.c.0.s8 %v10266
    %v10268 = vlaneseq
    %v10269 = vshrl.u32 %v10268, 7
    %v10270 = vsub.s32 %v10267, %v10269
    %v10271 = vrot.slane %v10261, %v10270
    %v10273 = vunpack.c.l.s4 1966171168
    %v10274 = vunpack.c.0.s8 %v10273
    %v10275 = vlaneseq
    %v10276 = vshrl.u32 %v10275, 7
    %v10277 = vsub.s32 %v10274, %v10276
    %v10278 = vrot.slane %v10262, %v10277
    %v10280 = vunpack.c.l.s4 1966171168
    %v10281 = vunpack.c.0.s8 %v10280
    %v10282 = vlaneseq
    %v10283 = vshrl.u32 %v10282, 7
    %v10284 = vsub.s32 %v10281, %v10283
    %v10285 = vrot.slane %v10263, %v10284
    %v10287 = vunpack.c.l.s4 1966171168
    %v10288 = vunpack.c.0.s8 %v10287
    %v10289 = vlaneseq
    %v10290 = vshrl.u32 %v10289, 7
    %v10291 = vsub.s32 %v10288, %v10290
    %v10292 = vrot.slane %v10264, %v10291
    %v10293 = vcombine.low %v10271, %v10278
    %v10294 = vcombine.low %v10285, %v10292
    %v10296 = vunpack.c.l.s4 1966171168
    %v10297 = vunpack.c.0.s8 %v10296
    %v10298 = vlaneseq
    %v10299 = vshrl.u32 %v10298, 7
    %v10300 = vsub.s32 %v10297, %v10299
    %v10301 = vrot.slane %v10293, %v10300
    %v10303 = vunpack.c.l.s4 1966171168
    %v10304 = vunpack.c.0.s8 %v10303
    %v10305 = vlaneseq
    %v10306 = vshrl.u32 %v10305, 7
    %v10307 = vsub.s32 %v10304, %v10306
    %v10308 = vrot.slane %v10294, %v10307
    %v10309 = vcombine.low %v10301, %v10308
    %v10310 = vcombine.low %v4381, %v4385
    %v10311 = vcombine.low %v4389, %v4393
    %v10312 = vcombine.low %v4397, %v4401
    %v10313 = vcombine.low %v4405, %v4409
    %v10315 = vunpack.c.l.s4 1966171168
    %v10316 = vunpack.c.0.s8 %v10315
    %v10317 = vlaneseq
    %v10318 = vshrl.u32 %v10317, 7
    %v10319 = vsub.s32 %v10316, %v10318
    %v10320 = vrot.slane %v10310, %v10319
    %v10322 = vunpack.c.l.s4 1966171168
    %v10323 = vunpack.c.0.s8 %v10322
    %v10324 = vlaneseq
    %v10325 = vshrl.u32 %v10324, 7
    %v10326 = vsub.s32 %v10323, %v10325
    %v10327 = vrot.slane %v10311, %v10326
    %v10329 = vunpack.c.l.s4 1966171168
    %v10330 = vunpack.c.0.s8 %v10329
    %v10331 = vlaneseq
    %v10332 = vshrl.u32 %v10331, 7
    %v10333 = vsub.s32 %v10330, %v10332
    %v10334 = vrot.slane %v10312, %v10333
    %v10336 = vunpack.c.l.s4 1966171168
    %v10337 = vunpack.c.0.s8 %v10336
    %v10338 = vlaneseq
    %v10339 = vshrl.u32 %v10338, 7
    %v10340 = vsub.s32 %v10337, %v10339
    %v10341 = vrot.slane %v10313, %v10340
    %v10342 = vcombine.low %v10320, %v10327
    %v10343 = vcombine.low %v10334, %v10341
    %v10345 = vunpack.c.l.s4 1966171168
    %v10346 = vunpack.c.0.s8 %v10345
    %v10347 = vlaneseq
    %v10348 = vshrl.u32 %v10347, 7
    %v10349 = vsub.s32 %v10346, %v10348
    %v10350 = vrot.slane %v10342, %v10349
    %v10352 = vunpack.c.l.s4 1966171168
    %v10353 = vunpack.c.0.s8 %v10352
    %v10354 = vlaneseq
    %v10355 = vshrl.u32 %v10354, 7
    %v10356 = vsub.s32 %v10353, %v10355
    %v10357 = vrot.slane %v10343, %v10356
    %v10358 = vcombine.low %v10350, %v10357
    %v10359 = vcombine.low %v4413, %v4417
    %v10360 = vcombine.low %v4421, %v4425
    %v10361 = vcombine.low %v4429, %v4433
    %v10362 = vcombine.low %v4437, %v4441
    %v10364 = vunpack.c.l.s4 1966171168
    %v10365 = vunpack.c.0.s8 %v10364
    %v10366 = vlaneseq
    %v10367 = vshrl.u32 %v10366, 7
    %v10368 = vsub.s32 %v10365, %v10367
    %v10369 = vrot.slane %v10359, %v10368
    %v10371 = vunpack.c.l.s4 1966171168
    %v10372 = vunpack.c.0.s8 %v10371
    %v10373 = vlaneseq
    %v10374 = vshrl.u32 %v10373, 7
    %v10375 = vsub.s32 %v10372, %v10374
    %v10376 = vrot.slane %v10360, %v10375
    %v10378 = vunpack.c.l.s4 1966171168
    %v10379 = vunpack.c.0.s8 %v10378
    %v10380 = vlaneseq
    %v10381 = vshrl.u32 %v10380, 7
    %v10382 = vsub.s32 %v10379, %v10381
    %v10383 = vrot.slane %v10361, %v10382
    %v10385 = vunpack.c.l.s4 1966171168
    %v10386 = vunpack.c.0.s8 %v10385
    %v10387 = vlaneseq
    %v10388 = vshrl.u32 %v10387, 7
    %v10389 = vsub.s32 %v10386, %v10388
    %v10390 = vrot.slane %v10362, %v10389
    %v10391 = vcombine.low %v10369, %v10376
    %v10392 = vcombine.low %v10383, %v10390
    %v10394 = vunpack.c.l.s4 1966171168
    %v10395 = vunpack.c.0.s8 %v10394
    %v10396 = vlaneseq
    %v10397 = vshrl.u32 %v10396, 7
    %v10398 = vsub.s32 %v10395, %v10397
    %v10399 = vrot.slane %v10391, %v10398
    %v10401 = vunpack.c.l.s4 1966171168
    %v10402 = vunpack.c.0.s8 %v10401
    %v10403 = vlaneseq
    %v10404 = vshrl.u32 %v10403, 7
    %v10405 = vsub.s32 %v10402, %v10404
    %v10406 = vrot.slane %v10392, %v10405
    %v10407 = vcombine.low %v10399, %v10406
    %v10408 = vcombine.low %v4445, %v4449
    %v10409 = vcombine.low %v4453, %v4457
    %v10410 = vcombine.low %v4461, %v4465
    %v10411 = vcombine.low %v4469, %v4473
    %v10413 = vunpack.c.l.s4 1966171168
    %v10414 = vunpack.c.0.s8 %v10413
    %v10415 = vlaneseq
    %v10416 = vshrl.u32 %v10415, 7
    %v10417 = vsub.s32 %v10414, %v10416
    %v10418 = vrot.slane %v10408, %v10417
    %v10420 = vunpack.c.l.s4 1966171168
    %v10421 = vunpack.c.0.s8 %v10420
    %v10422 = vlaneseq
    %v10423 = vshrl.u32 %v10422, 7
    %v10424 = vsub.s32 %v10421, %v10423
    %v10425 = vrot.slane %v10409, %v10424
    %v10427 = vunpack.c.l.s4 1966171168
    %v10428 = vunpack.c.0.s8 %v10427
    %v10429 = vlaneseq
    %v10430 = vshrl.u32 %v10429, 7
    %v10431 = vsub.s32 %v10428, %v10430
    %v10432 = vrot.slane %v10410, %v10431
    %v10434 = vunpack.c.l.s4 1966171168
    %v10435 = vunpack.c.0.s8 %v10434
    %v10436 = vlaneseq
    %v10437 = vshrl.u32 %v10436, 7
    %v10438 = vsub.s32 %v10435, %v10437
    %v10439 = vrot.slane %v10411, %v10438
    %v10440 = vcombine.low %v10418, %v10425
    %v10441 = vcombine.low %v10432, %v10439
    %v10443 = vunpack.c.l.s4 1966171168
    %v10444 = vunpack.c.0.s8 %v10443
    %v10445 = vlaneseq
    %v10446 = vshrl.u32 %v10445, 7
    %v10447 = vsub.s32 %v10444, %v10446
    %v10448 = vrot.slane %v10440, %v10447
    %v10450 = vunpack.c.l.s4 1966171168
    %v10451 = vunpack.c.0.s8 %v10450
    %v10452 = vlaneseq
    %v10453 = vshrl.u32 %v10452, 7
    %v10454 = vsub.s32 %v10451, %v10453
    %v10455 = vrot.slane %v10441, %v10454
    %v10456 = vcombine.low %v10448, %v10455
    %v10457 = vcombine.low %v4477, %v4481
    %v10458 = vcombine.low %v4485, %v4489
    %v10459 = vcombine.low %v4493, %v4497
    %v10460 = vcombine.low %v4501, %v4505
    %v10462 = vunpack.c.l.s4 1966171168
    %v10463 = vunpack.c.0.s8 %v10462
    %v10464 = vlaneseq
    %v10465 = vshrl.u32 %v10464, 7
    %v10466 = vsub.s32 %v10463, %v10465
    %v10467 = vrot.slane %v10457, %v10466
    %v10469 = vunpack.c.l.s4 1966171168
    %v10470 = vunpack.c.0.s8 %v10469
    %v10471 = vlaneseq
    %v10472 = vshrl.u32 %v10471, 7
    %v10473 = vsub.s32 %v10470, %v10472
    %v10474 = vrot.slane %v10458, %v10473
    %v10476 = vunpack.c.l.s4 1966171168
    %v10477 = vunpack.c.0.s8 %v10476
    %v10478 = vlaneseq
    %v10479 = vshrl.u32 %v10478, 7
    %v10480 = vsub.s32 %v10477, %v10479
    %v10481 = vrot.slane %v10459, %v10480
    %v10483 = vunpack.c.l.s4 1966171168
    %v10484 = vunpack.c.0.s8 %v10483
    %v10485 = vlaneseq
    %v10486 = vshrl.u32 %v10485, 7
    %v10487 = vsub.s32 %v10484, %v10486
    %v10488 = vrot.slane %v10460, %v10487
    %v10489 = vcombine.low %v10467, %v10474
    %v10490 = vcombine.low %v10481, %v10488
    %v10492 = vunpack.c.l.s4 1966171168
    %v10493 = vunpack.c.0.s8 %v10492
    %v10494 = vlaneseq
    %v10495 = vshrl.u32 %v10494, 7
    %v10496 = vsub.s32 %v10493, %v10495
    %v10497 = vrot.slane %v10489, %v10496
    %v10499 = vunpack.c.l.s4 1966171168
    %v10500 = vunpack.c.0.s8 %v10499
    %v10501 = vlaneseq
    %v10502 = vshrl.u32 %v10501, 7
    %v10503 = vsub.s32 %v10500, %v10502
    %v10504 = vrot.slane %v10490, %v10503
    %v10505 = vcombine.low %v10497, %v10504
    %v10506 = vcombine.low %v4509, %v4513
    %v10507 = vcombine.low %v4517, %v4521
    %v10508 = vcombine.low %v4525, %v4529
    %v10509 = vcombine.low %v4533, %v4537
    %v10511 = vunpack.c.l.s4 1966171168
    %v10512 = vunpack.c.0.s8 %v10511
    %v10513 = vlaneseq
    %v10514 = vshrl.u32 %v10513, 7
    %v10515 = vsub.s32 %v10512, %v10514
    %v10516 = vrot.slane %v10506, %v10515
    %v10518 = vunpack.c.l.s4 1966171168
    %v10519 = vunpack.c.0.s8 %v10518
    %v10520 = vlaneseq
    %v10521 = vshrl.u32 %v10520, 7
    %v10522 = vsub.s32 %v10519, %v10521
    %v10523 = vrot.slane %v10507, %v10522
    %v10525 = vunpack.c.l.s4 1966171168
    %v10526 = vunpack.c.0.s8 %v10525
    %v10527 = vlaneseq
    %v10528 = vshrl.u32 %v10527, 7
    %v10529 = vsub.s32 %v10526, %v10528
    %v10530 = vrot.slane %v10508, %v10529
    %v10532 = vunpack.c.l.s4 1966171168
    %v10533 = vunpack.c.0.s8 %v10532
    %v10534 = vlaneseq
    %v10535 = vshrl.u32 %v10534, 7
    %v10536 = vsub.s32 %v10533, %v10535
    %v10537 = vrot.slane %v10509, %v10536
    %v10538 = vcombine.low %v10516, %v10523
    %v10539 = vcombine.low %v10530, %v10537
    %v10541 = vunpack.c.l.s4 1966171168
    %v10542 = vunpack.c.0.s8 %v10541
    %v10543 = vlaneseq
    %v10544 = vshrl.u32 %v10543, 7
    %v10545 = vsub.s32 %v10542, %v10544
    %v10546 = vrot.slane %v10538, %v10545
    %v10548 = vunpack.c.l.s4 1966171168
    %v10549 = vunpack.c.0.s8 %v10548
    %v10550 = vlaneseq
    %v10551 = vshrl.u32 %v10550, 7
    %v10552 = vsub.s32 %v10549, %v10551
    %v10553 = vrot.slane %v10539, %v10552
    %v10554 = vcombine.low %v10546, %v10553
    %v10555 = vcombine.low %v4541, %v4545
    %v10556 = vcombine.low %v4549, %v4553
    %v10557 = vcombine.low %v4557, %v4561
    %v10558 = vcombine.low %v4565, %v4569
    %v10560 = vunpack.c.l.s4 1966171168
    %v10561 = vunpack.c.0.s8 %v10560
    %v10562 = vlaneseq
    %v10563 = vshrl.u32 %v10562, 7
    %v10564 = vsub.s32 %v10561, %v10563
    %v10565 = vrot.slane %v10555, %v10564
    %v10567 = vunpack.c.l.s4 1966171168
    %v10568 = vunpack.c.0.s8 %v10567
    %v10569 = vlaneseq
    %v10570 = vshrl.u32 %v10569, 7
    %v10571 = vsub.s32 %v10568, %v10570
    %v10572 = vrot.slane %v10556, %v10571
    %v10574 = vunpack.c.l.s4 1966171168
    %v10575 = vunpack.c.0.s8 %v10574
    %v10576 = vlaneseq
    %v10577 = vshrl.u32 %v10576, 7
    %v10578 = vsub.s32 %v10575, %v10577
    %v10579 = vrot.slane %v10557, %v10578
    %v10581 = vunpack.c.l.s4 1966171168
    %v10582 = vunpack.c.0.s8 %v10581
    %v10583 = vlaneseq
    %v10584 = vshrl.u32 %v10583, 7
    %v10585 = vsub.s32 %v10582, %v10584
    %v10586 = vrot.slane %v10558, %v10585
    %v10587 = vcombine.low %v10565, %v10572
    %v10588 = vcombine.low %v10579, %v10586
    %v10590 = vunpack.c.l.s4 1966171168
    %v10591 = vunpack.c.0.s8 %v10590
    %v10592 = vlaneseq
    %v10593 = vshrl.u32 %v10592, 7
    %v10594 = vsub.s32 %v10591, %v10593
    %v10595 = vrot.slane %v10587, %v10594
    %v10597 = vunpack.c.l.s4 1966171168
    %v10598 = vunpack.c.0.s8 %v10597
    %v10599 = vlaneseq
    %v10600 = vshrl.u32 %v10599, 7
    %v10601 = vsub.s32 %v10598, %v10600
    %v10602 = vrot.slane %v10588, %v10601
    %v10603 = vcombine.low %v10595, %v10602
    %v10604 = vcombine.low %v4573, %v4577
    %v10605 = vcombine.low %v4581, %v4585
    %v10606 = vcombine.low %v4589, %v4593
    %v10607 = vcombine.low %v4597, %v4601
    %v10609 = vunpack.c.l.s4 1966171168
    %v10610 = vunpack.c.0.s8 %v10609
    %v10611 = vlaneseq
    %v10612 = vshrl.u32 %v10611, 7
    %v10613 = vsub.s32 %v10610, %v10612
    %v10614 = vrot.slane %v10604, %v10613
    %v10616 = vunpack.c.l.s4 1966171168
    %v10617 = vunpack.c.0.s8 %v10616
    %v10618 = vlaneseq
    %v10619 = vshrl.u32 %v10618, 7
    %v10620 = vsub.s32 %v10617, %v10619
    %v10621 = vrot.slane %v10605, %v10620
    %v10623 = vunpack.c.l.s4 1966171168
    %v10624 = vunpack.c.0.s8 %v10623
    %v10625 = vlaneseq
    %v10626 = vshrl.u32 %v10625, 7
    %v10627 = vsub.s32 %v10624, %v10626
    %v10628 = vrot.slane %v10606, %v10627
    %v10630 = vunpack.c.l.s4 1966171168
    %v10631 = vunpack.c.0.s8 %v10630
    %v10632 = vlaneseq
    %v10633 = vshrl.u32 %v10632, 7
    %v10634 = vsub.s32 %v10631, %v10633
    %v10635 = vrot.slane %v10607, %v10634
    %v10636 = vcombine.low %v10614, %v10621
    %v10637 = vcombine.low %v10628, %v10635
    %v10639 = vunpack.c.l.s4 1966171168
    %v10640 = vunpack.c.0.s8 %v10639
    %v10641 = vlaneseq
    %v10642 = vshrl.u32 %v10641, 7
    %v10643 = vsub.s32 %v10640, %v10642
    %v10644 = vrot.slane %v10636, %v10643
    %v10646 = vunpack.c.l.s4 1966171168
    %v10647 = vunpack.c.0.s8 %v10646
    %v10648 = vlaneseq
    %v10649 = vshrl.u32 %v10648, 7
    %v10650 = vsub.s32 %v10647, %v10649
    %v10651 = vrot.slane %v10637, %v10650
    %v10652 = vcombine.low %v10644, %v10651
    %v10653 = vcombine.low %v4605, %v4609
    %v10654 = vcombine.low %v4613, %v4617
    %v10655 = vcombine.low %v4621, %v4625
    %v10656 = vcombine.low %v4629, %v4633
    %v10658 = vunpack.c.l.s4 1966171168
    %v10659 = vunpack.c.0.s8 %v10658
    %v10660 = vlaneseq
    %v10661 = vshrl.u32 %v10660, 7
    %v10662 = vsub.s32 %v10659, %v10661
    %v10663 = vrot.slane %v10653, %v10662
    %v10665 = vunpack.c.l.s4 1966171168
    %v10666 = vunpack.c.0.s8 %v10665
    %v10667 = vlaneseq
    %v10668 = vshrl.u32 %v10667, 7
    %v10669 = vsub.s32 %v10666, %v10668
    %v10670 = vrot.slane %v10654, %v10669
    %v10672 = vunpack.c.l.s4 1966171168
    %v10673 = vunpack.c.0.s8 %v10672
    %v10674 = vlaneseq
    %v10675 = vshrl.u32 %v10674, 7
    %v10676 = vsub.s32 %v10673, %v10675
    %v10677 = vrot.slane %v10655, %v10676
    %v10679 = vunpack.c.l.s4 1966171168
    %v10680 = vunpack.c.0.s8 %v10679
    %v10681 = vlaneseq
    %v10682 = vshrl.u32 %v10681, 7
    %v10683 = vsub.s32 %v10680, %v10682
    %v10684 = vrot.slane %v10656, %v10683
    %v10685 = vcombine.low %v10663, %v10670
    %v10686 = vcombine.low %v10677, %v10684
    %v10688 = vunpack.c.l.s4 1966171168
    %v10689 = vunpack.c.0.s8 %v10688
    %v10690 = vlaneseq
    %v10691 = vshrl.u32 %v10690, 7
    %v10692 = vsub.s32 %v10689, %v10691
    %v10693 = vrot.slane %v10685, %v10692
    %v10695 = vunpack.c.l.s4 1966171168
    %v10696 = vunpack.c.0.s8 %v10695
    %v10697 = vlaneseq
    %v10698 = vshrl.u32 %v10697, 7
    %v10699 = vsub.s32 %v10696, %v10698
    %v10700 = vrot.slane %v10686, %v10699
    %v10701 = vcombine.low %v10693, %v10700
    %v10702 = vcombine.low %v4637, %v4641
    %v10703 = vcombine.low %v4645, %v4649
    %v10704 = vcombine.low %v4653, %v4657
    %v10705 = vcombine.low %v4661, %v4665
    %v10707 = vunpack.c.l.s4 1966171168
    %v10708 = vunpack.c.0.s8 %v10707
    %v10709 = vlaneseq
    %v10710 = vshrl.u32 %v10709, 7
    %v10711 = vsub.s32 %v10708, %v10710
    %v10712 = vrot.slane %v10702, %v10711
    %v10714 = vunpack.c.l.s4 1966171168
    %v10715 = vunpack.c.0.s8 %v10714
    %v10716 = vlaneseq
    %v10717 = vshrl.u32 %v10716, 7
    %v10718 = vsub.s32 %v10715, %v10717
    %v10719 = vrot.slane %v10703, %v10718
    %v10721 = vunpack.c.l.s4 1966171168
    %v10722 = vunpack.c.0.s8 %v10721
    %v10723 = vlaneseq
    %v10724 = vshrl.u32 %v10723, 7
    %v10725 = vsub.s32 %v10722, %v10724
    %v10726 = vrot.slane %v10704, %v10725
    %v10728 = vunpack.c.l.s4 1966171168
    %v10729 = vunpack.c.0.s8 %v10728
    %v10730 = vlaneseq
    %v10731 = vshrl.u32 %v10730, 7
    %v10732 = vsub.s32 %v10729, %v10731
    %v10733 = vrot.slane %v10705, %v10732
    %v10734 = vcombine.low %v10712, %v10719
    %v10735 = vcombine.low %v10726, %v10733
    %v10737 = vunpack.c.l.s4 1966171168
    %v10738 = vunpack.c.0.s8 %v10737
    %v10739 = vlaneseq
    %v10740 = vshrl.u32 %v10739, 7
    %v10741 = vsub.s32 %v10738, %v10740
    %v10742 = vrot.slane %v10734, %v10741
    %v10744 = vunpack.c.l.s4 1966171168
    %v10745 = vunpack.c.0.s8 %v10744
    %v10746 = vlaneseq
    %v10747 = vshrl.u32 %v10746, 7
    %v10748 = vsub.s32 %v10745, %v10747
    %v10749 = vrot.slane %v10735, %v10748
    %v10750 = vcombine.low %v10742, %v10749
    %v10751 = vcombine.low %v4669, %v4673
    %v10752 = vcombine.low %v4677, %v4681
    %v10753 = vcombine.low %v4685, %v4689
    %v10754 = vcombine.low %v4693, %v4697
    %v10756 = vunpack.c.l.s4 1966171168
    %v10757 = vunpack.c.0.s8 %v10756
    %v10758 = vlaneseq
    %v10759 = vshrl.u32 %v10758, 7
    %v10760 = vsub.s32 %v10757, %v10759
    %v10761 = vrot.slane %v10751, %v10760
    %v10763 = vunpack.c.l.s4 1966171168
    %v10764 = vunpack.c.0.s8 %v10763
    %v10765 = vlaneseq
    %v10766 = vshrl.u32 %v10765, 7
    %v10767 = vsub.s32 %v10764, %v10766
    %v10768 = vrot.slane %v10752, %v10767
    %v10770 = vunpack.c.l.s4 1966171168
    %v10771 = vunpack.c.0.s8 %v10770
    %v10772 = vlaneseq
    %v10773 = vshrl.u32 %v10772, 7
    %v10774 = vsub.s32 %v10771, %v10773
    %v10775 = vrot.slane %v10753, %v10774
    %v10777 = vunpack.c.l.s4 1966171168
    %v10778 = vunpack.c.0.s8 %v10777
    %v10779 = vlaneseq
    %v10780 = vshrl.u32 %v10779, 7
    %v10781 = vsub.s32 %v10778, %v10780
    %v10782 = vrot.slane %v10754, %v10781
    %v10783 = vcombine.low %v10761, %v10768
    %v10784 = vcombine.low %v10775, %v10782
    %v10786 = vunpack.c.l.s4 1966171168
    %v10787 = vunpack.c.0.s8 %v10786
    %v10788 = vlaneseq
    %v10789 = vshrl.u32 %v10788, 7
    %v10790 = vsub.s32 %v10787, %v10789
    %v10791 = vrot.slane %v10783, %v10790
    %v10793 = vunpack.c.l.s4 1966171168
    %v10794 = vunpack.c.0.s8 %v10793
    %v10795 = vlaneseq
    %v10796 = vshrl.u32 %v10795, 7
    %v10797 = vsub.s32 %v10794, %v10796
    %v10798 = vrot.slane %v10784, %v10797
    %v10799 = vcombine.low %v10791, %v10798
    %v10800 = vcombine.low %v4701, %v4705
    %v10801 = vcombine.low %v4709, %v4713
    %v10802 = vcombine.low %v4717, %v4721
    %v10803 = vcombine.low %v4725, %v4729
    %v10805 = vunpack.c.l.s4 1966171168
    %v10806 = vunpack.c.0.s8 %v10805
    %v10807 = vlaneseq
    %v10808 = vshrl.u32 %v10807, 7
    %v10809 = vsub.s32 %v10806, %v10808
    %v10810 = vrot.slane %v10800, %v10809
    %v10812 = vunpack.c.l.s4 1966171168
    %v10813 = vunpack.c.0.s8 %v10812
    %v10814 = vlaneseq
    %v10815 = vshrl.u32 %v10814, 7
    %v10816 = vsub.s32 %v10813, %v10815
    %v10817 = vrot.slane %v10801, %v10816
    %v10819 = vunpack.c.l.s4 1966171168
    %v10820 = vunpack.c.0.s8 %v10819
    %v10821 = vlaneseq
    %v10822 = vshrl.u32 %v10821, 7
    %v10823 = vsub.s32 %v10820, %v10822
    %v10824 = vrot.slane %v10802, %v10823
    %v10826 = vunpack.c.l.s4 1966171168
    %v10827 = vunpack.c.0.s8 %v10826
    %v10828 = vlaneseq
    %v10829 = vshrl.u32 %v10828, 7
    %v10830 = vsub.s32 %v10827, %v10829
    %v10831 = vrot.slane %v10803, %v10830
    %v10832 = vcombine.low %v10810, %v10817
    %v10833 = vcombine.low %v10824, %v10831
    %v10835 = vunpack.c.l.s4 1966171168
    %v10836 = vunpack.c.0.s8 %v10835
    %v10837 = vlaneseq
    %v10838 = vshrl.u32 %v10837, 7
    %v10839 = vsub.s32 %v10836, %v10838
    %v10840 = vrot.slane %v10832, %v10839
    %v10842 = vunpack.c.l.s4 1966171168
    %v10843 = vunpack.c.0.s8 %v10842
    %v10844 = vlaneseq
    %v10845 = vshrl.u32 %v10844, 7
    %v10846 = vsub.s32 %v10843, %v10845
    %v10847 = vrot.slane %v10833, %v10846
    %v10848 = vcombine.low %v10840, %v10847
    %v10849 = vcombine.low %v4733, %v4737
    %v10850 = vcombine.low %v4741, %v4745
    %v10851 = vcombine.low %v4749, %v4753
    %v10852 = vcombine.low %v4757, %v4761
    %v10854 = vunpack.c.l.s4 1966171168
    %v10855 = vunpack.c.0.s8 %v10854
    %v10856 = vlaneseq
    %v10857 = vshrl.u32 %v10856, 7
    %v10858 = vsub.s32 %v10855, %v10857
    %v10859 = vrot.slane %v10849, %v10858
    %v10861 = vunpack.c.l.s4 1966171168
    %v10862 = vunpack.c.0.s8 %v10861
    %v10863 = vlaneseq
    %v10864 = vshrl.u32 %v10863, 7
    %v10865 = vsub.s32 %v10862, %v10864
    %v10866 = vrot.slane %v10850, %v10865
    %v10868 = vunpack.c.l.s4 1966171168
    %v10869 = vunpack.c.0.s8 %v10868
    %v10870 = vlaneseq
    %v10871 = vshrl.u32 %v10870, 7
    %v10872 = vsub.s32 %v10869, %v10871
    %v10873 = vrot.slane %v10851, %v10872
    %v10875 = vunpack.c.l.s4 1966171168
    %v10876 = vunpack.c.0.s8 %v10875
    %v10877 = vlaneseq
    %v10878 = vshrl.u32 %v10877, 7
    %v10879 = vsub.s32 %v10876, %v10878
    %v10880 = vrot.slane %v10852, %v10879
    %v10881 = vcombine.low %v10859, %v10866
    %v10882 = vcombine.low %v10873, %v10880
    %v10884 = vunpack.c.l.s4 1966171168
    %v10885 = vunpack.c.0.s8 %v10884
    %v10886 = vlaneseq
    %v10887 = vshrl.u32 %v10886, 7
    %v10888 = vsub.s32 %v10885, %v10887
    %v10889 = vrot.slane %v10881, %v10888
    %v10891 = vunpack.c.l.s4 1966171168
    %v10892 = vunpack.c.0.s8 %v10891
    %v10893 = vlaneseq
    %v10894 = vshrl.u32 %v10893, 7
    %v10895 = vsub.s32 %v10892, %v10894
    %v10896 = vrot.slane %v10882, %v10895
    %v10897 = vcombine.low %v10889, %v10896
    %v10898 = vcombine.low %v4765, %v4769
    %v10899 = vcombine.low %v4773, %v4777
    %v10900 = vcombine.low %v4781, %v4785
    %v10901 = vcombine.low %v4789, %v4793
    %v10903 = vunpack.c.l.s4 1966171168
    %v10904 = vunpack.c.0.s8 %v10903
    %v10905 = vlaneseq
    %v10906 = vshrl.u32 %v10905, 7
    %v10907 = vsub.s32 %v10904, %v10906
    %v10908 = vrot.slane %v10898, %v10907
    %v10910 = vunpack.c.l.s4 1966171168
    %v10911 = vunpack.c.0.s8 %v10910
    %v10912 = vlaneseq
    %v10913 = vshrl.u32 %v10912, 7
    %v10914 = vsub.s32 %v10911, %v10913
    %v10915 = vrot.slane %v10899, %v10914
    %v10917 = vunpack.c.l.s4 1966171168
    %v10918 = vunpack.c.0.s8 %v10917
    %v10919 = vlaneseq
    %v10920 = vshrl.u32 %v10919, 7
    %v10921 = vsub.s32 %v10918, %v10920
    %v10922 = vrot.slane %v10900, %v10921
    %v10924 = vunpack.c.l.s4 1966171168
    %v10925 = vunpack.c.0.s8 %v10924
    %v10926 = vlaneseq
    %v10927 = vshrl.u32 %v10926, 7
    %v10928 = vsub.s32 %v10925, %v10927
    %v10929 = vrot.slane %v10901, %v10928
    %v10930 = vcombine.low %v10908, %v10915
    %v10931 = vcombine.low %v10922, %v10929
    %v10933 = vunpack.c.l.s4 1966171168
    %v10934 = vunpack.c.0.s8 %v10933
    %v10935 = vlaneseq
    %v10936 = vshrl.u32 %v10935, 7
    %v10937 = vsub.s32 %v10934, %v10936
    %v10938 = vrot.slane %v10930, %v10937
    %v10940 = vunpack.c.l.s4 1966171168
    %v10941 = vunpack.c.0.s8 %v10940
    %v10942 = vlaneseq
    %v10943 = vshrl.u32 %v10942, 7
    %v10944 = vsub.s32 %v10941, %v10943
    %v10945 = vrot.slane %v10931, %v10944
    %v10946 = vcombine.low %v10938, %v10945
    %v10947 = vcombine.low %v4797, %v4801
    %v10948 = vcombine.low %v4805, %v4809
    %v10949 = vcombine.low %v4813, %v4817
    %v10950 = vcombine.low %v4821, %v4825
    %v10952 = vunpack.c.l.s4 1966171168
    %v10953 = vunpack.c.0.s8 %v10952
    %v10954 = vlaneseq
    %v10955 = vshrl.u32 %v10954, 7
    %v10956 = vsub.s32 %v10953, %v10955
    %v10957 = vrot.slane %v10947, %v10956
    %v10959 = vunpack.c.l.s4 1966171168
    %v10960 = vunpack.c.0.s8 %v10959
    %v10961 = vlaneseq
    %v10962 = vshrl.u32 %v10961, 7
    %v10963 = vsub.s32 %v10960, %v10962
    %v10964 = vrot.slane %v10948, %v10963
    %v10966 = vunpack.c.l.s4 1966171168
    %v10967 = vunpack.c.0.s8 %v10966
    %v10968 = vlaneseq
    %v10969 = vshrl.u32 %v10968, 7
    %v10970 = vsub.s32 %v10967, %v10969
    %v10971 = vrot.slane %v10949, %v10970
    %v10973 = vunpack.c.l.s4 1966171168
    %v10974 = vunpack.c.0.s8 %v10973
    %v10975 = vlaneseq
    %v10976 = vshrl.u32 %v10975, 7
    %v10977 = vsub.s32 %v10974, %v10976
    %v10978 = vrot.slane %v10950, %v10977
    %v10979 = vcombine.low %v10957, %v10964
    %v10980 = vcombine.low %v10971, %v10978
    %v10982 = vunpack.c.l.s4 1966171168
    %v10983 = vunpack.c.0.s8 %v10982
    %v10984 = vlaneseq
    %v10985 = vshrl.u32 %v10984, 7
    %v10986 = vsub.s32 %v10983, %v10985
    %v10987 = vrot.slane %v10979, %v10986
    %v10989 = vunpack.c.l.s4 1966171168
    %v10990 = vunpack.c.0.s8 %v10989
    %v10991 = vlaneseq
    %v10992 = vshrl.u32 %v10991, 7
    %v10993 = vsub.s32 %v10990, %v10992
    %v10994 = vrot.slane %v10980, %v10993
    %v10995 = vcombine.low %v10987, %v10994
    %v10996 = vcombine.low %v4829, %v4833
    %v10997 = vcombine.low %v4837, %v4841
    %v10998 = vcombine.low %v4845, %v4849
    %v10999 = vcombine.low %v4853, %v4857
    %v11001 = vunpack.c.l.s4 1966171168
    %v11002 = vunpack.c.0.s8 %v11001
    %v11003 = vlaneseq
    %v11004 = vshrl.u32 %v11003, 7
    %v11005 = vsub.s32 %v11002, %v11004
    %v11006 = vrot.slane %v10996, %v11005
    %v11008 = vunpack.c.l.s4 1966171168
    %v11009 = vunpack.c.0.s8 %v11008
    %v11010 = vlaneseq
    %v11011 = vshrl.u32 %v11010, 7
    %v11012 = vsub.s32 %v11009, %v11011
    %v11013 = vrot.slane %v10997, %v11012
    %v11015 = vunpack.c.l.s4 1966171168
    %v11016 = vunpack.c.0.s8 %v11015
    %v11017 = vlaneseq
    %v11018 = vshrl.u32 %v11017, 7
    %v11019 = vsub.s32 %v11016, %v11018
    %v11020 = vrot.slane %v10998, %v11019
    %v11022 = vunpack.c.l.s4 1966171168
    %v11023 = vunpack.c.0.s8 %v11022
    %v11024 = vlaneseq
    %v11025 = vshrl.u32 %v11024, 7
    %v11026 = vsub.s32 %v11023, %v11025
    %v11027 = vrot.slane %v10999, %v11026
    %v11028 = vcombine.low %v11006, %v11013
    %v11029 = vcombine.low %v11020, %v11027
    %v11031 = vunpack.c.l.s4 1966171168
    %v11032 = vunpack.c.0.s8 %v11031
    %v11033 = vlaneseq
    %v11034 = vshrl.u32 %v11033, 7
    %v11035 = vsub.s32 %v11032, %v11034
    %v11036 = vrot.slane %v11028, %v11035
    %v11038 = vunpack.c.l.s4 1966171168
    %v11039 = vunpack.c.0.s8 %v11038
    %v11040 = vlaneseq
    %v11041 = vshrl.u32 %v11040, 7
    %v11042 = vsub.s32 %v11039, %v11041
    %v11043 = vrot.slane %v11029, %v11042
    %v11044 = vcombine.low %v11036, %v11043
    %v11045 = vcombine.low %v4861, %v4865
    %v11046 = vcombine.low %v4869, %v4873
    %v11047 = vcombine.low %v4877, %v4881
    %v11048 = vcombine.low %v4885, %v4889
    %v11050 = vunpack.c.l.s4 1966171168
    %v11051 = vunpack.c.0.s8 %v11050
    %v11052 = vlaneseq
    %v11053 = vshrl.u32 %v11052, 7
    %v11054 = vsub.s32 %v11051, %v11053
    %v11055 = vrot.slane %v11045, %v11054
    %v11057 = vunpack.c.l.s4 1966171168
    %v11058 = vunpack.c.0.s8 %v11057
    %v11059 = vlaneseq
    %v11060 = vshrl.u32 %v11059, 7
    %v11061 = vsub.s32 %v11058, %v11060
    %v11062 = vrot.slane %v11046, %v11061
    %v11064 = vunpack.c.l.s4 1966171168
    %v11065 = vunpack.c.0.s8 %v11064
    %v11066 = vlaneseq
    %v11067 = vshrl.u32 %v11066, 7
    %v11068 = vsub.s32 %v11065, %v11067
    %v11069 = vrot.slane %v11047, %v11068
    %v11071 = vunpack.c.l.s4 1966171168
    %v11072 = vunpack.c.0.s8 %v11071
    %v11073 = vlaneseq
    %v11074 = vshrl.u32 %v11073, 7
    %v11075 = vsub.s32 %v11072, %v11074
    %v11076 = vrot.slane %v11048, %v11075
    %v11077 = vcombine.low %v11055, %v11062
    %v11078 = vcombine.low %v11069, %v11076
    %v11080 = vunpack.c.l.s4 1966171168
    %v11081 = vunpack.c.0.s8 %v11080
    %v11082 = vlaneseq
    %v11083 = vshrl.u32 %v11082, 7
    %v11084 = vsub.s32 %v11081, %v11083
    %v11085 = vrot.slane %v11077, %v11084
    %v11087 = vunpack.c.l.s4 1966171168
    %v11088 = vunpack.c.0.s8 %v11087
    %v11089 = vlaneseq
    %v11090 = vshrl.u32 %v11089, 7
    %v11091 = vsub.s32 %v11088, %v11090
    %v11092 = vrot.slane %v11078, %v11091
    %v11093 = vcombine.low %v11085, %v11092
    %v11094 = vcombine.low %v4893, %v4897
    %v11095 = vcombine.low %v4901, %v4905
    %v11096 = vcombine.low %v4909, %v4913
    %v11097 = vcombine.low %v4917, %v4921
    %v11099 = vunpack.c.l.s4 1966171168
    %v11100 = vunpack.c.0.s8 %v11099
    %v11101 = vlaneseq
    %v11102 = vshrl.u32 %v11101, 7
    %v11103 = vsub.s32 %v11100, %v11102
    %v11104 = vrot.slane %v11094, %v11103
    %v11106 = vunpack.c.l.s4 1966171168
    %v11107 = vunpack.c.0.s8 %v11106
    %v11108 = vlaneseq
    %v11109 = vshrl.u32 %v11108, 7
    %v11110 = vsub.s32 %v11107, %v11109
    %v11111 = vrot.slane %v11095, %v11110
    %v11113 = vunpack.c.l.s4 1966171168
    %v11114 = vunpack.c.0.s8 %v11113
    %v11115 = vlaneseq
    %v11116 = vshrl.u32 %v11115, 7
    %v11117 = vsub.s32 %v11114, %v11116
    %v11118 = vrot.slane %v11096, %v11117
    %v11120 = vunpack.c.l.s4 1966171168
    %v11121 = vunpack.c.0.s8 %v11120
    %v11122 = vlaneseq
    %v11123 = vshrl.u32 %v11122, 7
    %v11124 = vsub.s32 %v11121, %v11123
    %v11125 = vrot.slane %v11097, %v11124
    %v11126 = vcombine.low %v11104, %v11111
    %v11127 = vcombine.low %v11118, %v11125
    %v11129 = vunpack.c.l.s4 1966171168
    %v11130 = vunpack.c.0.s8 %v11129
    %v11131 = vlaneseq
    %v11132 = vshrl.u32 %v11131, 7
    %v11133 = vsub.s32 %v11130, %v11132
    %v11134 = vrot.slane %v11126, %v11133
    %v11136 = vunpack.c.l.s4 1966171168
    %v11137 = vunpack.c.0.s8 %v11136
    %v11138 = vlaneseq
    %v11139 = vshrl.u32 %v11138, 7
    %v11140 = vsub.s32 %v11137, %v11139
    %v11141 = vrot.slane %v11127, %v11140
    %v11142 = vcombine.low %v11134, %v11141
    %v11143 = vcombine.low %v4925, %v4929
    %v11144 = vcombine.low %v4933, %v4937
    %v11145 = vcombine.low %v4941, %v4945
    %v11146 = vcombine.low %v4949, %v4953
    %v11148 = vunpack.c.l.s4 1966171168
    %v11149 = vunpack.c.0.s8 %v11148
    %v11150 = vlaneseq
    %v11151 = vshrl.u32 %v11150, 7
    %v11152 = vsub.s32 %v11149, %v11151
    %v11153 = vrot.slane %v11143, %v11152
    %v11155 = vunpack.c.l.s4 1966171168
    %v11156 = vunpack.c.0.s8 %v11155
    %v11157 = vlaneseq
    %v11158 = vshrl.u32 %v11157, 7
    %v11159 = vsub.s32 %v11156, %v11158
    %v11160 = vrot.slane %v11144, %v11159
    %v11162 = vunpack.c.l.s4 1966171168
    %v11163 = vunpack.c.0.s8 %v11162
    %v11164 = vlaneseq
    %v11165 = vshrl.u32 %v11164, 7
    %v11166 = vsub.s32 %v11163, %v11165
    %v11167 = vrot.slane %v11145, %v11166
    %v11169 = vunpack.c.l.s4 1966171168
    %v11170 = vunpack.c.0.s8 %v11169
    %v11171 = vlaneseq
    %v11172 = vshrl.u32 %v11171, 7
    %v11173 = vsub.s32 %v11170, %v11172
    %v11174 = vrot.slane %v11146, %v11173
    %v11175 = vcombine.low %v11153, %v11160
    %v11176 = vcombine.low %v11167, %v11174
    %v11178 = vunpack.c.l.s4 1966171168
    %v11179 = vunpack.c.0.s8 %v11178
    %v11180 = vlaneseq
    %v11181 = vshrl.u32 %v11180, 7
    %v11182 = vsub.s32 %v11179, %v11181
    %v11183 = vrot.slane %v11175, %v11182
    %v11185 = vunpack.c.l.s4 1966171168
    %v11186 = vunpack.c.0.s8 %v11185
    %v11187 = vlaneseq
    %v11188 = vshrl.u32 %v11187, 7
    %v11189 = vsub.s32 %v11186, %v11188
    %v11190 = vrot.slane %v11176, %v11189
    %v11191 = vcombine.low %v11183, %v11190
    %v11192 = vcombine.low %v4957, %v4961
    %v11193 = vcombine.low %v4965, %v4969
    %v11194 = vcombine.low %v4973, %v4977
    %v11195 = vcombine.low %v4981, %v4985
    %v11197 = vunpack.c.l.s4 1966171168
    %v11198 = vunpack.c.0.s8 %v11197
    %v11199 = vlaneseq
    %v11200 = vshrl.u32 %v11199, 7
    %v11201 = vsub.s32 %v11198, %v11200
    %v11202 = vrot.slane %v11192, %v11201
    %v11204 = vunpack.c.l.s4 1966171168
    %v11205 = vunpack.c.0.s8 %v11204
    %v11206 = vlaneseq
    %v11207 = vshrl.u32 %v11206, 7
    %v11208 = vsub.s32 %v11205, %v11207
    %v11209 = vrot.slane %v11193, %v11208
    %v11211 = vunpack.c.l.s4 1966171168
    %v11212 = vunpack.c.0.s8 %v11211
    %v11213 = vlaneseq
    %v11214 = vshrl.u32 %v11213, 7
    %v11215 = vsub.s32 %v11212, %v11214
    %v11216 = vrot.slane %v11194, %v11215
    %v11218 = vunpack.c.l.s4 1966171168
    %v11219 = vunpack.c.0.s8 %v11218
    %v11220 = vlaneseq
    %v11221 = vshrl.u32 %v11220, 7
    %v11222 = vsub.s32 %v11219, %v11221
    %v11223 = vrot.slane %v11195, %v11222
    %v11224 = vcombine.low %v11202, %v11209
    %v11225 = vcombine.low %v11216, %v11223
    %v11227 = vunpack.c.l.s4 1966171168
    %v11228 = vunpack.c.0.s8 %v11227
    %v11229 = vlaneseq
    %v11230 = vshrl.u32 %v11229, 7
    %v11231 = vsub.s32 %v11228, %v11230
    %v11232 = vrot.slane %v11224, %v11231
    %v11234 = vunpack.c.l.s4 1966171168
    %v11235 = vunpack.c.0.s8 %v11234
    %v11236 = vlaneseq
    %v11237 = vshrl.u32 %v11236, 7
    %v11238 = vsub.s32 %v11235, %v11237
    %v11239 = vrot.slane %v11225, %v11238
    %v11240 = vcombine.low %v11232, %v11239
    %v11241 = vcombine.low %v4989, %v4993
    %v11242 = vcombine.low %v4997, %v5001
    %v11243 = vcombine.low %v5005, %v5009
    %v11244 = vcombine.low %v5013, %v5017
    %v11246 = vunpack.c.l.s4 1966171168
    %v11247 = vunpack.c.0.s8 %v11246
    %v11248 = vlaneseq
    %v11249 = vshrl.u32 %v11248, 7
    %v11250 = vsub.s32 %v11247, %v11249
    %v11251 = vrot.slane %v11241, %v11250
    %v11253 = vunpack.c.l.s4 1966171168
    %v11254 = vunpack.c.0.s8 %v11253
    %v11255 = vlaneseq
    %v11256 = vshrl.u32 %v11255, 7
    %v11257 = vsub.s32 %v11254, %v11256
    %v11258 = vrot.slane %v11242, %v11257
    %v11260 = vunpack.c.l.s4 1966171168
    %v11261 = vunpack.c.0.s8 %v11260
    %v11262 = vlaneseq
    %v11263 = vshrl.u32 %v11262, 7
    %v11264 = vsub.s32 %v11261, %v11263
    %v11265 = vrot.slane %v11243, %v11264
    %v11267 = vunpack.c.l.s4 1966171168
    %v11268 = vunpack.c.0.s8 %v11267
    %v11269 = vlaneseq
    %v11270 = vshrl.u32 %v11269, 7
    %v11271 = vsub.s32 %v11268, %v11270
    %v11272 = vrot.slane %v11244, %v11271
    %v11273 = vcombine.low %v11251, %v11258
    %v11274 = vcombine.low %v11265, %v11272
    %v11276 = vunpack.c.l.s4 1966171168
    %v11277 = vunpack.c.0.s8 %v11276
    %v11278 = vlaneseq
    %v11279 = vshrl.u32 %v11278, 7
    %v11280 = vsub.s32 %v11277, %v11279
    %v11281 = vrot.slane %v11273, %v11280
    %v11283 = vunpack.c.l.s4 1966171168
    %v11284 = vunpack.c.0.s8 %v11283
    %v11285 = vlaneseq
    %v11286 = vshrl.u32 %v11285, 7
    %v11287 = vsub.s32 %v11284, %v11286
    %v11288 = vrot.slane %v11274, %v11287
    %v11289 = vcombine.low %v11281, %v11288
    %11290 = vset.pattern.permute.xlu0 0
    %11291 = vperm.xlu0 %11290, %v5066
    %v11292 = vpop.permute.xlu0 %11291
    %11293 = vset.pattern.permute.xlu0 0
    %11294 = vperm.xlu0 %11293, %v5115
    %v11295 = vpop.permute.xlu0 %11294
    %11296 = vset.pattern.permute.xlu0 0
    %11297 = vperm.xlu0 %11296, %v5164
    %v11298 = vpop.permute.xlu0 %11297
    %11299 = vset.pattern.permute.xlu0 0
    %11300 = vperm.xlu0 %11299, %v5213
    %v11301 = vpop.permute.xlu0 %11300
    %11302 = vset.pattern.permute.xlu0 0
    %11303 = vperm.xlu0 %11302, %v5262
    %v11304 = vpop.permute.xlu0 %11303
    %11305 = vset.pattern.permute.xlu0 0
    %11306 = vperm.xlu0 %11305, %v5311
    %v11307 = vpop.permute.xlu0 %11306
    %11308 = vset.pattern.permute.xlu0 0
    %11309 = vperm.xlu0 %11308, %v5360
    %v11310 = vpop.permute.xlu0 %11309
    %11311 = vset.pattern.permute.xlu0 0
    %11312 = vperm.xlu0 %11311, %v5409
    %v11313 = vpop.permute.xlu0 %11312
    %11314 = vset.pattern.permute.xlu0 0
    %11315 = vperm.xlu0 %11314, %v5458
    %v11316 = vpop.permute.xlu0 %11315
    %11317 = vset.pattern.permute.xlu0 0
    %11318 = vperm.xlu0 %11317, %v5507
    %v11319 = vpop.permute.xlu0 %11318
    %11320 = vset.pattern.permute.xlu0 0
    %11321 = vperm.xlu0 %11320, %v5556
    %v11322 = vpop.permute.xlu0 %11321
    %11323 = vset.pattern.permute.xlu0 0
    %11324 = vperm.xlu0 %11323, %v5605
    %v11325 = vpop.permute.xlu0 %11324
    %11326 = vset.pattern.permute.xlu0 0
    %11327 = vperm.xlu0 %11326, %v5654
    %v11328 = vpop.permute.xlu0 %11327
    %11329 = vset.pattern.permute.xlu0 0
    %11330 = vperm.xlu0 %11329, %v5703
    %v11331 = vpop.permute.xlu0 %11330
    %11332 = vset.pattern.permute.xlu0 0
    %11333 = vperm.xlu0 %11332, %v5752
    %v11334 = vpop.permute.xlu0 %11333
    %11335 = vset.pattern.permute.xlu0 0
    %11336 = vperm.xlu0 %11335, %v5801
    %v11337 = vpop.permute.xlu0 %11336
    %11338 = vset.pattern.permute.xlu0 0
    %11339 = vperm.xlu0 %11338, %v5850
    %v11340 = vpop.permute.xlu0 %11339
    %11341 = vset.pattern.permute.xlu0 0
    %11342 = vperm.xlu0 %11341, %v5899
    %v11343 = vpop.permute.xlu0 %11342
    %11344 = vset.pattern.permute.xlu0 0
    %11345 = vperm.xlu0 %11344, %v5948
    %v11346 = vpop.permute.xlu0 %11345
    %11347 = vset.pattern.permute.xlu0 0
    %11348 = vperm.xlu0 %11347, %v5997
    %v11349 = vpop.permute.xlu0 %11348
    %11350 = vset.pattern.permute.xlu0 0
    %11351 = vperm.xlu0 %11350, %v6046
    %v11352 = vpop.permute.xlu0 %11351
    %11353 = vset.pattern.permute.xlu0 0
    %11354 = vperm.xlu0 %11353, %v6095
    %v11355 = vpop.permute.xlu0 %11354
    %11356 = vset.pattern.permute.xlu0 0
    %11357 = vperm.xlu0 %11356, %v6144
    %v11358 = vpop.permute.xlu0 %11357
    %11359 = vset.pattern.permute.xlu0 0
    %11360 = vperm.xlu0 %11359, %v6193
    %v11361 = vpop.permute.xlu0 %11360
    %11362 = vset.pattern.permute.xlu0 0
    %11363 = vperm.xlu0 %11362, %v6242
    %v11364 = vpop.permute.xlu0 %11363
    %11365 = vset.pattern.permute.xlu0 0
    %11366 = vperm.xlu0 %11365, %v6291
    %v11367 = vpop.permute.xlu0 %11366
    %11368 = vset.pattern.permute.xlu0 0
    %11369 = vperm.xlu0 %11368, %v6340
    %v11370 = vpop.permute.xlu0 %11369
    %11371 = vset.pattern.permute.xlu0 0
    %11372 = vperm.xlu0 %11371, %v6389
    %v11373 = vpop.permute.xlu0 %11372
    %11374 = vset.pattern.permute.xlu0 0
    %11375 = vperm.xlu0 %11374, %v6438
    %v11376 = vpop.permute.xlu0 %11375
    %11377 = vset.pattern.permute.xlu0 0
    %11378 = vperm.xlu0 %11377, %v6487
    %v11379 = vpop.permute.xlu0 %11378
    %11380 = vset.pattern.permute.xlu0 0
    %11381 = vperm.xlu0 %11380, %v6536
    %v11382 = vpop.permute.xlu0 %11381
    %11383 = vset.pattern.permute.xlu0 0
    %11384 = vperm.xlu0 %11383, %v6585
    %v11385 = vpop.permute.xlu0 %11384
    %11386 = vset.pattern.permute.xlu0 0
    %11387 = vperm.xlu0 %11386, %v6634
    %v11388 = vpop.permute.xlu0 %11387
    %11389 = vset.pattern.permute.xlu0 0
    %11390 = vperm.xlu0 %11389, %v6683
    %v11391 = vpop.permute.xlu0 %11390
    %11392 = vset.pattern.permute.xlu0 0
    %11393 = vperm.xlu0 %11392, %v6732
    %v11394 = vpop.permute.xlu0 %11393
    %11395 = vset.pattern.permute.xlu0 0
    %11396 = vperm.xlu0 %11395, %v6781
    %v11397 = vpop.permute.xlu0 %11396
    %11398 = vset.pattern.permute.xlu0 0
    %11399 = vperm.xlu0 %11398, %v6830
    %v11400 = vpop.permute.xlu0 %11399
    %11401 = vset.pattern.permute.xlu0 0
    %11402 = vperm.xlu0 %11401, %v6879
    %v11403 = vpop.permute.xlu0 %11402
    %11404 = vset.pattern.permute.xlu0 0
    %11405 = vperm.xlu0 %11404, %v6928
    %v11406 = vpop.permute.xlu0 %11405
    %11407 = vset.pattern.permute.xlu0 0
    %11408 = vperm.xlu0 %11407, %v6977
    %v11409 = vpop.permute.xlu0 %11408
    %11410 = vset.pattern.permute.xlu0 0
    %11411 = vperm.xlu0 %11410, %v7026
    %v11412 = vpop.permute.xlu0 %11411
    %11413 = vset.pattern.permute.xlu0 0
    %11414 = vperm.xlu0 %11413, %v7075
    %v11415 = vpop.permute.xlu0 %11414
    %11416 = vset.pattern.permute.xlu0 0
    %11417 = vperm.xlu0 %11416, %v7124
    %v11418 = vpop.permute.xlu0 %11417
    %11419 = vset.pattern.permute.xlu0 0
    %11420 = vperm.xlu0 %11419, %v7173
    %v11421 = vpop.permute.xlu0 %11420
    %11422 = vset.pattern.permute.xlu0 0
    %11423 = vperm.xlu0 %11422, %v7222
    %v11424 = vpop.permute.xlu0 %11423
    %11425 = vset.pattern.permute.xlu0 0
    %11426 = vperm.xlu0 %11425, %v7271
    %v11427 = vpop.permute.xlu0 %11426
    %11428 = vset.pattern.permute.xlu0 0
    %11429 = vperm.xlu0 %11428, %v7320
    %v11430 = vpop.permute.xlu0 %11429
    %11431 = vset.pattern.permute.xlu0 0
    %11432 = vperm.xlu0 %11431, %v7369
    %v11433 = vpop.permute.xlu0 %11432
    %11434 = vset.pattern.permute.xlu0 0
    %11435 = vperm.xlu0 %11434, %v7418
    %v11436 = vpop.permute.xlu0 %11435
    %11437 = vset.pattern.permute.xlu0 0
    %11438 = vperm.xlu0 %11437, %v7467
    %v11439 = vpop.permute.xlu0 %11438
    %11440 = vset.pattern.permute.xlu0 0
    %11441 = vperm.xlu0 %11440, %v7516
    %v11442 = vpop.permute.xlu0 %11441
    %11443 = vset.pattern.permute.xlu0 0
    %11444 = vperm.xlu0 %11443, %v7565
    %v11445 = vpop.permute.xlu0 %11444
    %11446 = vset.pattern.permute.xlu0 0
    %11447 = vperm.xlu0 %11446, %v7614
    %v11448 = vpop.permute.xlu0 %11447
    %11449 = vset.pattern.permute.xlu0 0
    %11450 = vperm.xlu0 %11449, %v7663
    %v11451 = vpop.permute.xlu0 %11450
    %11452 = vset.pattern.permute.xlu0 0
    %11453 = vperm.xlu0 %11452, %v7712
    %v11454 = vpop.permute.xlu0 %11453
    %11455 = vset.pattern.permute.xlu0 0
    %11456 = vperm.xlu0 %11455, %v7761
    %v11457 = vpop.permute.xlu0 %11456
    %11458 = vset.pattern.permute.xlu0 0
    %11459 = vperm.xlu0 %11458, %v7810
    %v11460 = vpop.permute.xlu0 %11459
    %11461 = vset.pattern.permute.xlu0 0
    %11462 = vperm.xlu0 %11461, %v7859
    %v11463 = vpop.permute.xlu0 %11462
    %11464 = vset.pattern.permute.xlu0 0
    %11465 = vperm.xlu0 %11464, %v7908
    %v11466 = vpop.permute.xlu0 %11465
    %11467 = vset.pattern.permute.xlu0 0
    %11468 = vperm.xlu0 %11467, %v7957
    %v11469 = vpop.permute.xlu0 %11468
    %11470 = vset.pattern.permute.xlu0 0
    %11471 = vperm.xlu0 %11470, %v8006
    %v11472 = vpop.permute.xlu0 %11471
    %11473 = vset.pattern.permute.xlu0 0
    %11474 = vperm.xlu0 %11473, %v8055
    %v11475 = vpop.permute.xlu0 %11474
    %11476 = vset.pattern.permute.xlu0 0
    %11477 = vperm.xlu0 %11476, %v8104
    %v11478 = vpop.permute.xlu0 %11477
    %11479 = vset.pattern.permute.xlu0 0
    %11480 = vperm.xlu0 %11479, %v8153
    %v11481 = vpop.permute.xlu0 %11480
    %11482 = vset.pattern.permute.xlu0 0
    %11483 = vperm.xlu0 %11482, %v8202
    %v11484 = vpop.permute.xlu0 %11483
    %11485 = vset.pattern.permute.xlu0 0
    %11486 = vperm.xlu0 %11485, %v8251
    %v11487 = vpop.permute.xlu0 %11486
    %11488 = vset.pattern.permute.xlu0 0
    %11489 = vperm.xlu0 %11488, %v8300
    %v11490 = vpop.permute.xlu0 %11489
    %11491 = vset.pattern.permute.xlu0 0
    %11492 = vperm.xlu0 %11491, %v8349
    %v11493 = vpop.permute.xlu0 %11492
    %11494 = vset.pattern.permute.xlu0 0
    %11495 = vperm.xlu0 %11494, %v8398
    %v11496 = vpop.permute.xlu0 %11495
    %11497 = vset.pattern.permute.xlu0 0
    %11498 = vperm.xlu0 %11497, %v8447
    %v11499 = vpop.permute.xlu0 %11498
    %11500 = vset.pattern.permute.xlu0 0
    %11501 = vperm.xlu0 %11500, %v8496
    %v11502 = vpop.permute.xlu0 %11501
    %11503 = vset.pattern.permute.xlu0 0
    %11504 = vperm.xlu0 %11503, %v8545
    %v11505 = vpop.permute.xlu0 %11504
    %11506 = vset.pattern.permute.xlu0 0
    %11507 = vperm.xlu0 %11506, %v8594
    %v11508 = vpop.permute.xlu0 %11507
    %11509 = vset.pattern.permute.xlu0 0
    %11510 = vperm.xlu0 %11509, %v8643
    %v11511 = vpop.permute.xlu0 %11510
    %11512 = vset.pattern.permute.xlu0 0
    %11513 = vperm.xlu0 %11512, %v8692
    %v11514 = vpop.permute.xlu0 %11513
    %11515 = vset.pattern.permute.xlu0 0
    %11516 = vperm.xlu0 %11515, %v8741
    %v11517 = vpop.permute.xlu0 %11516
    %11518 = vset.pattern.permute.xlu0 0
    %11519 = vperm.xlu0 %11518, %v8790
    %v11520 = vpop.permute.xlu0 %11519
    %11521 = vset.pattern.permute.xlu0 0
    %11522 = vperm.xlu0 %11521, %v8839
    %v11523 = vpop.permute.xlu0 %11522
    %11524 = vset.pattern.permute.xlu0 0
    %11525 = vperm.xlu0 %11524, %v8888
    %v11526 = vpop.permute.xlu0 %11525
    %11527 = vset.pattern.permute.xlu0 0
    %11528 = vperm.xlu0 %11527, %v8937
    %v11529 = vpop.permute.xlu0 %11528
    %11530 = vset.pattern.permute.xlu0 0
    %11531 = vperm.xlu0 %11530, %v8986
    %v11532 = vpop.permute.xlu0 %11531
    %11533 = vset.pattern.permute.xlu0 0
    %11534 = vperm.xlu0 %11533, %v9035
    %v11535 = vpop.permute.xlu0 %11534
    %11536 = vset.pattern.permute.xlu0 0
    %11537 = vperm.xlu0 %11536, %v9084
    %v11538 = vpop.permute.xlu0 %11537
    %11539 = vset.pattern.permute.xlu0 0
    %11540 = vperm.xlu0 %11539, %v9133
    %v11541 = vpop.permute.xlu0 %11540
    %11542 = vset.pattern.permute.xlu0 0
    %11543 = vperm.xlu0 %11542, %v9182
    %v11544 = vpop.permute.xlu0 %11543
    %11545 = vset.pattern.permute.xlu0 0
    %11546 = vperm.xlu0 %11545, %v9231
    %v11547 = vpop.permute.xlu0 %11546
    %11548 = vset.pattern.permute.xlu0 0
    %11549 = vperm.xlu0 %11548, %v9280
    %v11550 = vpop.permute.xlu0 %11549
    %11551 = vset.pattern.permute.xlu0 0
    %11552 = vperm.xlu0 %11551, %v9329
    %v11553 = vpop.permute.xlu0 %11552
    %11554 = vset.pattern.permute.xlu0 0
    %11555 = vperm.xlu0 %11554, %v9378
    %v11556 = vpop.permute.xlu0 %11555
    %11557 = vset.pattern.permute.xlu0 0
    %11558 = vperm.xlu0 %11557, %v9427
    %v11559 = vpop.permute.xlu0 %11558
    %11560 = vset.pattern.permute.xlu0 0
    %11561 = vperm.xlu0 %11560, %v9476
    %v11562 = vpop.permute.xlu0 %11561
    %11563 = vset.pattern.permute.xlu0 0
    %11564 = vperm.xlu0 %11563, %v9525
    %v11565 = vpop.permute.xlu0 %11564
    %11566 = vset.pattern.permute.xlu0 0
    %11567 = vperm.xlu0 %11566, %v9574
    %v11568 = vpop.permute.xlu0 %11567
    %11569 = vset.pattern.permute.xlu0 0
    %11570 = vperm.xlu0 %11569, %v9623
    %v11571 = vpop.permute.xlu0 %11570
    %11572 = vset.pattern.permute.xlu0 0
    %11573 = vperm.xlu0 %11572, %v9672
    %v11574 = vpop.permute.xlu0 %11573
    %11575 = vset.pattern.permute.xlu0 0
    %11576 = vperm.xlu0 %11575, %v9721
    %v11577 = vpop.permute.xlu0 %11576
    %11578 = vset.pattern.permute.xlu0 0
    %11579 = vperm.xlu0 %11578, %v9770
    %v11580 = vpop.permute.xlu0 %11579
    %11581 = vset.pattern.permute.xlu0 0
    %11582 = vperm.xlu0 %11581, %v9819
    %v11583 = vpop.permute.xlu0 %11582
    %11584 = vset.pattern.permute.xlu0 0
    %11585 = vperm.xlu0 %11584, %v9868
    %v11586 = vpop.permute.xlu0 %11585
    %11587 = vset.pattern.permute.xlu0 0
    %11588 = vperm.xlu0 %11587, %v9917
    %v11589 = vpop.permute.xlu0 %11588
    %11590 = vset.pattern.permute.xlu0 0
    %11591 = vperm.xlu0 %11590, %v9966
    %v11592 = vpop.permute.xlu0 %11591
    %11593 = vset.pattern.permute.xlu0 0
    %11594 = vperm.xlu0 %11593, %v10015
    %v11595 = vpop.permute.xlu0 %11594
    %11596 = vset.pattern.permute.xlu0 0
    %11597 = vperm.xlu0 %11596, %v10064
    %v11598 = vpop.permute.xlu0 %11597
    %11599 = vset.pattern.permute.xlu0 0
    %11600 = vperm.xlu0 %11599, %v10113
    %v11601 = vpop.permute.xlu0 %11600
    %11602 = vset.pattern.permute.xlu0 0
    %11603 = vperm.xlu0 %11602, %v10162
    %v11604 = vpop.permute.xlu0 %11603
    %11605 = vset.pattern.permute.xlu0 0
    %11606 = vperm.xlu0 %11605, %v10211
    %v11607 = vpop.permute.xlu0 %11606
    %11608 = vset.pattern.permute.xlu0 0
    %11609 = vperm.xlu0 %11608, %v10260
    %v11610 = vpop.permute.xlu0 %11609
    %11611 = vset.pattern.permute.xlu0 0
    %11612 = vperm.xlu0 %11611, %v10309
    %v11613 = vpop.permute.xlu0 %11612
    %11614 = vset.pattern.permute.xlu0 0
    %11615 = vperm.xlu0 %11614, %v10358
    %v11616 = vpop.permute.xlu0 %11615
    %11617 = vset.pattern.permute.xlu0 0
    %11618 = vperm.xlu0 %11617, %v10407
    %v11619 = vpop.permute.xlu0 %11618
    %11620 = vset.pattern.permute.xlu0 0
    %11621 = vperm.xlu0 %11620, %v10456
    %v11622 = vpop.permute.xlu0 %11621
    %11623 = vset.pattern.permute.xlu0 0
    %11624 = vperm.xlu0 %11623, %v10505
    %v11625 = vpop.permute.xlu0 %11624
    %11626 = vset.pattern.permute.xlu0 0
    %11627 = vperm.xlu0 %11626, %v10554
    %v11628 = vpop.permute.xlu0 %11627
    %11629 = vset.pattern.permute.xlu0 0
    %11630 = vperm.xlu0 %11629, %v10603
    %v11631 = vpop.permute.xlu0 %11630
    %11632 = vset.pattern.permute.xlu0 0
    %11633 = vperm.xlu0 %11632, %v10652
    %v11634 = vpop.permute.xlu0 %11633
    %11635 = vset.pattern.permute.xlu0 0
    %11636 = vperm.xlu0 %11635, %v10701
    %v11637 = vpop.permute.xlu0 %11636
    %11638 = vset.pattern.permute.xlu0 0
    %11639 = vperm.xlu0 %11638, %v10750
    %v11640 = vpop.permute.xlu0 %11639
    %11641 = vset.pattern.permute.xlu0 0
    %11642 = vperm.xlu0 %11641, %v10799
    %v11643 = vpop.permute.xlu0 %11642
    %11644 = vset.pattern.permute.xlu0 0
    %11645 = vperm.xlu0 %11644, %v10848
    %v11646 = vpop.permute.xlu0 %11645
    %11647 = vset.pattern.permute.xlu0 0
    %11648 = vperm.xlu0 %11647, %v10897
    %v11649 = vpop.permute.xlu0 %11648
    %11650 = vset.pattern.permute.xlu0 0
    %11651 = vperm.xlu0 %11650, %v10946
    %v11652 = vpop.permute.xlu0 %11651
    %11653 = vset.pattern.permute.xlu0 0
    %11654 = vperm.xlu0 %11653, %v10995
    %v11655 = vpop.permute.xlu0 %11654
    %11656 = vset.pattern.permute.xlu0 0
    %11657 = vperm.xlu0 %11656, %v11044
    %v11658 = vpop.permute.xlu0 %11657
    %11659 = vset.pattern.permute.xlu0 0
    %11660 = vperm.xlu0 %11659, %v11093
    %v11661 = vpop.permute.xlu0 %11660
    %11662 = vset.pattern.permute.xlu0 0
    %11663 = vperm.xlu0 %11662, %v11142
    %v11664 = vpop.permute.xlu0 %11663
    %11665 = vset.pattern.permute.xlu0 0
    %11666 = vperm.xlu0 %11665, %v11191
    %v11667 = vpop.permute.xlu0 %11666
    %11668 = vset.pattern.permute.xlu0 0
    %11669 = vperm.xlu0 %11668, %v11240
    %v11670 = vpop.permute.xlu0 %11669
    %11671 = vset.pattern.permute.xlu0 0
    %11672 = vperm.xlu0 %11671, %v11289
    %v11673 = vpop.permute.xlu0 %11672
    %v11674 = vlaneseq
    %v11675 = vand.u32 %v11674, 127
    %v11676 = vlaneseq
    %v11677 = vshrl.u32 %v11676, 7
    %v11678 = vsub.s32 %v11675, %v11677
    %v11679 = vrot.slane %v11292, %v11678
    %v11680 = vadd.s32 %v11675, 4294967288
    %v11681 = vlaneseq
    %v11682 = vshrl.u32 %v11681, 7
    %v11683 = vsub.s32 %v11680, %v11682
    %v11684 = vrot.slane %v11295, %v11683
    %vm11685 = vcmask 130112
    %v11686 = vsel %vm11685, %v11684, %v11679
    %v11687 = vadd.s32 %v11675, 4294967280
    %v11688 = vlaneseq
    %v11689 = vshrl.u32 %v11688, 7
    %v11690 = vsub.s32 %v11687, %v11689
    %v11691 = vrot.slane %v11298, %v11690
    %vm11692 = vcmask 195712
    %v11693 = vsel %vm11692, %v11691, %v11686
    %v11694 = vadd.s32 %v11675, 4294967272
    %v11695 = vlaneseq
    %v11696 = vshrl.u32 %v11695, 7
    %v11697 = vsub.s32 %v11694, %v11696
    %v11698 = vrot.slane %v11301, %v11697
    %vm11699 = vcmask 261312
    %v11700 = vsel %vm11699, %v11698, %v11693
    %v11701 = vadd.s32 %v11675, 4294967264
    %v11702 = vlaneseq
    %v11703 = vshrl.u32 %v11702, 7
    %v11704 = vsub.s32 %v11701, %v11703
    %v11705 = vrot.slane %v11304, %v11704
    %vm11706 = vcmask 326912
    %v11707 = vsel %vm11706, %v11705, %v11700
    %v11708 = vadd.s32 %v11675, 4294967256
    %v11709 = vlaneseq
    %v11710 = vshrl.u32 %v11709, 7
    %v11711 = vsub.s32 %v11708, %v11710
    %v11712 = vrot.slane %v11307, %v11711
    %vm11713 = vcmask 392512
    %v11714 = vsel %vm11713, %v11712, %v11707
    %v11715 = vadd.s32 %v11675, 4294967248
    %v11716 = vlaneseq
    %v11717 = vshrl.u32 %v11716, 7
    %v11718 = vsub.s32 %v11715, %v11717
    %v11719 = vrot.slane %v11310, %v11718
    %vm11720 = vcmask 458112
    %v11721 = vsel %vm11720, %v11719, %v11714
    %v11722 = vadd.s32 %v11675, 4294967240
    %v11723 = vlaneseq
    %v11724 = vshrl.u32 %v11723, 7
    %v11725 = vsub.s32 %v11722, %v11724
    %v11726 = vrot.slane %v11313, %v11725
    %vm11727 = vcmask 523712
    %v11728 = vsel %vm11727, %v11726, %v11721
    %v11729 = vadd.s32 %v11675, 4294967232
    %v11730 = vlaneseq
    %v11731 = vshrl.u32 %v11730, 7
    %v11732 = vsub.s32 %v11729, %v11731
    %v11733 = vrot.slane %v11316, %v11732
    %vm11734 = vcmask 589312
    %v11735 = vsel %vm11734, %v11733, %v11728
    %v11736 = vadd.s32 %v11675, 4294967224
    %v11737 = vlaneseq
    %v11738 = vshrl.u32 %v11737, 7
    %v11739 = vsub.s32 %v11736, %v11738
    %v11740 = vrot.slane %v11319, %v11739
    %vm11741 = vcmask 654912
    %v11742 = vsel %vm11741, %v11740, %v11735
    %v11743 = vadd.s32 %v11675, 4294967216
    %v11744 = vlaneseq
    %v11745 = vshrl.u32 %v11744, 7
    %v11746 = vsub.s32 %v11743, %v11745
    %v11747 = vrot.slane %v11322, %v11746
    %vm11748 = vcmask 720512
    %v11749 = vsel %vm11748, %v11747, %v11742
    %v11750 = vadd.s32 %v11675, 4294967208
    %v11751 = vlaneseq
    %v11752 = vshrl.u32 %v11751, 7
    %v11753 = vsub.s32 %v11750, %v11752
    %v11754 = vrot.slane %v11325, %v11753
    %vm11755 = vcmask 786112
    %v11756 = vsel %vm11755, %v11754, %v11749
    %v11757 = vadd.s32 %v11675, 4294967200
    %v11758 = vlaneseq
    %v11759 = vshrl.u32 %v11758, 7
    %v11760 = vsub.s32 %v11757, %v11759
    %v11761 = vrot.slane %v11328, %v11760
    %vm11762 = vcmask 851712
    %v11763 = vsel %vm11762, %v11761, %v11756
    %v11764 = vadd.s32 %v11675, 4294967192
    %v11765 = vlaneseq
    %v11766 = vshrl.u32 %v11765, 7
    %v11767 = vsub.s32 %v11764, %v11766
    %v11768 = vrot.slane %v11331, %v11767
    %vm11769 = vcmask 917312
    %v11770 = vsel %vm11769, %v11768, %v11763
    %v11771 = vadd.s32 %v11675, 4294967184
    %v11772 = vlaneseq
    %v11773 = vshrl.u32 %v11772, 7
    %v11774 = vsub.s32 %v11771, %v11773
    %v11775 = vrot.slane %v11334, %v11774
    %vm11776 = vcmask 982912
    %v11777 = vsel %vm11776, %v11775, %v11770
    %v11778 = vadd.s32 %v11675, 4294967176
    %v11779 = vlaneseq
    %v11780 = vshrl.u32 %v11779, 7
    %v11781 = vsub.s32 %v11778, %v11780
    %v11782 = vrot.slane %v11337, %v11781
    %vm11783 = vcmask 1048512
    %v11784 = vsel %vm11783, %v11782, %v11777
    %v11785 = vlaneseq
    %v11786 = vshrl.u32 %v11785, 7
    %v11787 = vsub.s32 %v11675, %v11786
    %v11788 = vrot.slane %v11340, %v11787
    %v11789 = vlaneseq
    %v11790 = vshrl.u32 %v11789, 7
    %v11791 = vsub.s32 %v11680, %v11790
    %v11792 = vrot.slane %v11343, %v11791
    %v11793 = vsel %vm11685, %v11792, %v11788
    %v11794 = vlaneseq
    %v11795 = vshrl.u32 %v11794, 7
    %v11796 = vsub.s32 %v11687, %v11795
    %v11797 = vrot.slane %v11346, %v11796
    %v11798 = vsel %vm11692, %v11797, %v11793
    %v11799 = vlaneseq
    %v11800 = vshrl.u32 %v11799, 7
    %v11801 = vsub.s32 %v11694, %v11800
    %v11802 = vrot.slane %v11349, %v11801
    %v11803 = vsel %vm11699, %v11802, %v11798
    %v11804 = vlaneseq
    %v11805 = vshrl.u32 %v11804, 7
    %v11806 = vsub.s32 %v11701, %v11805
    %v11807 = vrot.slane %v11352, %v11806
    %v11808 = vsel %vm11706, %v11807, %v11803
    %v11809 = vlaneseq
    %v11810 = vshrl.u32 %v11809, 7
    %v11811 = vsub.s32 %v11708, %v11810
    %v11812 = vrot.slane %v11355, %v11811
    %v11813 = vsel %vm11713, %v11812, %v11808
    %v11814 = vlaneseq
    %v11815 = vshrl.u32 %v11814, 7
    %v11816 = vsub.s32 %v11715, %v11815
    %v11817 = vrot.slane %v11358, %v11816
    %v11818 = vsel %vm11720, %v11817, %v11813
    %v11819 = vlaneseq
    %v11820 = vshrl.u32 %v11819, 7
    %v11821 = vsub.s32 %v11722, %v11820
    %v11822 = vrot.slane %v11361, %v11821
    %v11823 = vsel %vm11727, %v11822, %v11818
    %v11824 = vlaneseq
    %v11825 = vshrl.u32 %v11824, 7
    %v11826 = vsub.s32 %v11729, %v11825
    %v11827 = vrot.slane %v11364, %v11826
    %v11828 = vsel %vm11734, %v11827, %v11823
    %v11829 = vlaneseq
    %v11830 = vshrl.u32 %v11829, 7
    %v11831 = vsub.s32 %v11736, %v11830
    %v11832 = vrot.slane %v11367, %v11831
    %v11833 = vsel %vm11741, %v11832, %v11828
    %v11834 = vlaneseq
    %v11835 = vshrl.u32 %v11834, 7
    %v11836 = vsub.s32 %v11743, %v11835
    %v11837 = vrot.slane %v11370, %v11836
    %v11838 = vsel %vm11748, %v11837, %v11833
    %v11839 = vlaneseq
    %v11840 = vshrl.u32 %v11839, 7
    %v11841 = vsub.s32 %v11750, %v11840
    %v11842 = vrot.slane %v11373, %v11841
    %v11843 = vsel %vm11755, %v11842, %v11838
    %v11844 = vlaneseq
    %v11845 = vshrl.u32 %v11844, 7
    %v11846 = vsub.s32 %v11757, %v11845
    %v11847 = vrot.slane %v11376, %v11846
    %v11848 = vsel %vm11762, %v11847, %v11843
    %v11849 = vlaneseq
    %v11850 = vshrl.u32 %v11849, 7
    %v11851 = vsub.s32 %v11764, %v11850
    %v11852 = vrot.slane %v11379, %v11851
    %v11853 = vsel %vm11769, %v11852, %v11848
    %v11854 = vlaneseq
    %v11855 = vshrl.u32 %v11854, 7
    %v11856 = vsub.s32 %v11771, %v11855
    %v11857 = vrot.slane %v11382, %v11856
    %v11858 = vsel %vm11776, %v11857, %v11853
    %v11859 = vlaneseq
    %v11860 = vshrl.u32 %v11859, 7
    %v11861 = vsub.s32 %v11778, %v11860
    %v11862 = vrot.slane %v11385, %v11861
    %v11863 = vsel %vm11783, %v11862, %v11858
    %v11864 = vlaneseq
    %v11865 = vshrl.u32 %v11864, 7
    %v11866 = vsub.s32 %v11675, %v11865
    %v11867 = vrot.slane %v11388, %v11866
    %v11868 = vlaneseq
    %v11869 = vshrl.u32 %v11868, 7
    %v11870 = vsub.s32 %v11680, %v11869
    %v11871 = vrot.slane %v11391, %v11870
    %v11872 = vsel %vm11685, %v11871, %v11867
    %v11873 = vlaneseq
    %v11874 = vshrl.u32 %v11873, 7
    %v11875 = vsub.s32 %v11687, %v11874
    %v11876 = vrot.slane %v11394, %v11875
    %v11877 = vsel %vm11692, %v11876, %v11872
    %v11878 = vlaneseq
    %v11879 = vshrl.u32 %v11878, 7
    %v11880 = vsub.s32 %v11694, %v11879
    %v11881 = vrot.slane %v11397, %v11880
    %v11882 = vsel %vm11699, %v11881, %v11877
    %v11883 = vlaneseq
    %v11884 = vshrl.u32 %v11883, 7
    %v11885 = vsub.s32 %v11701, %v11884
    %v11886 = vrot.slane %v11400, %v11885
    %v11887 = vsel %vm11706, %v11886, %v11882
    %v11888 = vlaneseq
    %v11889 = vshrl.u32 %v11888, 7
    %v11890 = vsub.s32 %v11708, %v11889
    %v11891 = vrot.slane %v11403, %v11890
    %v11892 = vsel %vm11713, %v11891, %v11887
    %v11893 = vlaneseq
    %v11894 = vshrl.u32 %v11893, 7
    %v11895 = vsub.s32 %v11715, %v11894
    %v11896 = vrot.slane %v11406, %v11895
    %v11897 = vsel %vm11720, %v11896, %v11892
    %v11898 = vlaneseq
    %v11899 = vshrl.u32 %v11898, 7
    %v11900 = vsub.s32 %v11722, %v11899
    %v11901 = vrot.slane %v11409, %v11900
    %v11902 = vsel %vm11727, %v11901, %v11897
    %v11903 = vlaneseq
    %v11904 = vshrl.u32 %v11903, 7
    %v11905 = vsub.s32 %v11729, %v11904
    %v11906 = vrot.slane %v11412, %v11905
    %v11907 = vsel %vm11734, %v11906, %v11902
    %v11908 = vlaneseq
    %v11909 = vshrl.u32 %v11908, 7
    %v11910 = vsub.s32 %v11736, %v11909
    %v11911 = vrot.slane %v11415, %v11910
    %v11912 = vsel %vm11741, %v11911, %v11907
    %v11913 = vlaneseq
    %v11914 = vshrl.u32 %v11913, 7
    %v11915 = vsub.s32 %v11743, %v11914
    %v11916 = vrot.slane %v11418, %v11915
    %v11917 = vsel %vm11748, %v11916, %v11912
    %v11918 = vlaneseq
    %v11919 = vshrl.u32 %v11918, 7
    %v11920 = vsub.s32 %v11750, %v11919
    %v11921 = vrot.slane %v11421, %v11920
    %v11922 = vsel %vm11755, %v11921, %v11917
    %v11923 = vlaneseq
    %v11924 = vshrl.u32 %v11923, 7
    %v11925 = vsub.s32 %v11757, %v11924
    %v11926 = vrot.slane %v11424, %v11925
    %v11927 = vsel %vm11762, %v11926, %v11922
    %v11928 = vlaneseq
    %v11929 = vshrl.u32 %v11928, 7
    %v11930 = vsub.s32 %v11764, %v11929
    %v11931 = vrot.slane %v11427, %v11930
    %v11932 = vsel %vm11769, %v11931, %v11927
    %v11933 = vlaneseq
    %v11934 = vshrl.u32 %v11933, 7
    %v11935 = vsub.s32 %v11771, %v11934
    %v11936 = vrot.slane %v11430, %v11935
    %v11937 = vsel %vm11776, %v11936, %v11932
    %v11938 = vlaneseq
    %v11939 = vshrl.u32 %v11938, 7
    %v11940 = vsub.s32 %v11778, %v11939
    %v11941 = vrot.slane %v11433, %v11940
    %v11942 = vsel %vm11783, %v11941, %v11937
    %v11943 = vlaneseq
    %v11944 = vshrl.u32 %v11943, 7
    %v11945 = vsub.s32 %v11675, %v11944
    %v11946 = vrot.slane %v11436, %v11945
    %v11947 = vlaneseq
    %v11948 = vshrl.u32 %v11947, 7
    %v11949 = vsub.s32 %v11680, %v11948
    %v11950 = vrot.slane %v11439, %v11949
    %v11951 = vsel %vm11685, %v11950, %v11946
    %v11952 = vlaneseq
    %v11953 = vshrl.u32 %v11952, 7
    %v11954 = vsub.s32 %v11687, %v11953
    %v11955 = vrot.slane %v11442, %v11954
    %v11956 = vsel %vm11692, %v11955, %v11951
    %v11957 = vlaneseq
    %v11958 = vshrl.u32 %v11957, 7
    %v11959 = vsub.s32 %v11694, %v11958
    %v11960 = vrot.slane %v11445, %v11959
    %v11961 = vsel %vm11699, %v11960, %v11956
    %v11962 = vlaneseq
    %v11963 = vshrl.u32 %v11962, 7
    %v11964 = vsub.s32 %v11701, %v11963
    %v11965 = vrot.slane %v11448, %v11964
    %v11966 = vsel %vm11706, %v11965, %v11961
    %v11967 = vlaneseq
    %v11968 = vshrl.u32 %v11967, 7
    %v11969 = vsub.s32 %v11708, %v11968
    %v11970 = vrot.slane %v11451, %v11969
    %v11971 = vsel %vm11713, %v11970, %v11966
    %v11972 = vlaneseq
    %v11973 = vshrl.u32 %v11972, 7
    %v11974 = vsub.s32 %v11715, %v11973
    %v11975 = vrot.slane %v11454, %v11974
    %v11976 = vsel %vm11720, %v11975, %v11971
    %v11977 = vlaneseq
    %v11978 = vshrl.u32 %v11977, 7
    %v11979 = vsub.s32 %v11722, %v11978
    %v11980 = vrot.slane %v11457, %v11979
    %v11981 = vsel %vm11727, %v11980, %v11976
    %v11982 = vlaneseq
    %v11983 = vshrl.u32 %v11982, 7
    %v11984 = vsub.s32 %v11729, %v11983
    %v11985 = vrot.slane %v11460, %v11984
    %v11986 = vsel %vm11734, %v11985, %v11981
    %v11987 = vlaneseq
    %v11988 = vshrl.u32 %v11987, 7
    %v11989 = vsub.s32 %v11736, %v11988
    %v11990 = vrot.slane %v11463, %v11989
    %v11991 = vsel %vm11741, %v11990, %v11986
    %v11992 = vlaneseq
    %v11993 = vshrl.u32 %v11992, 7
    %v11994 = vsub.s32 %v11743, %v11993
    %v11995 = vrot.slane %v11466, %v11994
    %v11996 = vsel %vm11748, %v11995, %v11991
    %v11997 = vlaneseq
    %v11998 = vshrl.u32 %v11997, 7
    %v11999 = vsub.s32 %v11750, %v11998
    %v12000 = vrot.slane %v11469, %v11999
    %v12001 = vsel %vm11755, %v12000, %v11996
    %v12002 = vlaneseq
    %v12003 = vshrl.u32 %v12002, 7
    %v12004 = vsub.s32 %v11757, %v12003
    %v12005 = vrot.slane %v11472, %v12004
    %v12006 = vsel %vm11762, %v12005, %v12001
    %v12007 = vlaneseq
    %v12008 = vshrl.u32 %v12007, 7
    %v12009 = vsub.s32 %v11764, %v12008
    %v12010 = vrot.slane %v11475, %v12009
    %v12011 = vsel %vm11769, %v12010, %v12006
    %v12012 = vlaneseq
    %v12013 = vshrl.u32 %v12012, 7
    %v12014 = vsub.s32 %v11771, %v12013
    %v12015 = vrot.slane %v11478, %v12014
    %v12016 = vsel %vm11776, %v12015, %v12011
    %v12017 = vlaneseq
    %v12018 = vshrl.u32 %v12017, 7
    %v12019 = vsub.s32 %v11778, %v12018
    %v12020 = vrot.slane %v11481, %v12019
    %v12021 = vsel %vm11783, %v12020, %v12016
    %v12022 = vlaneseq
    %v12023 = vshrl.u32 %v12022, 7
    %v12024 = vsub.s32 %v11675, %v12023
    %v12025 = vrot.slane %v11484, %v12024
    %v12026 = vlaneseq
    %v12027 = vshrl.u32 %v12026, 7
    %v12028 = vsub.s32 %v11680, %v12027
    %v12029 = vrot.slane %v11487, %v12028
    %v12030 = vsel %vm11685, %v12029, %v12025
    %v12031 = vlaneseq
    %v12032 = vshrl.u32 %v12031, 7
    %v12033 = vsub.s32 %v11687, %v12032
    %v12034 = vrot.slane %v11490, %v12033
    %v12035 = vsel %vm11692, %v12034, %v12030
    %v12036 = vlaneseq
    %v12037 = vshrl.u32 %v12036, 7
    %v12038 = vsub.s32 %v11694, %v12037
    %v12039 = vrot.slane %v11493, %v12038
    %v12040 = vsel %vm11699, %v12039, %v12035
    %v12041 = vlaneseq
    %v12042 = vshrl.u32 %v12041, 7
    %v12043 = vsub.s32 %v11701, %v12042
    %v12044 = vrot.slane %v11496, %v12043
    %v12045 = vsel %vm11706, %v12044, %v12040
    %v12046 = vlaneseq
    %v12047 = vshrl.u32 %v12046, 7
    %v12048 = vsub.s32 %v11708, %v12047
    %v12049 = vrot.slane %v11499, %v12048
    %v12050 = vsel %vm11713, %v12049, %v12045
    %v12051 = vlaneseq
    %v12052 = vshrl.u32 %v12051, 7
    %v12053 = vsub.s32 %v11715, %v12052
    %v12054 = vrot.slane %v11502, %v12053
    %v12055 = vsel %vm11720, %v12054, %v12050
    %v12056 = vlaneseq
    %v12057 = vshrl.u32 %v12056, 7
    %v12058 = vsub.s32 %v11722, %v12057
    %v12059 = vrot.slane %v11505, %v12058
    %v12060 = vsel %vm11727, %v12059, %v12055
    %v12061 = vlaneseq
    %v12062 = vshrl.u32 %v12061, 7
    %v12063 = vsub.s32 %v11729, %v12062
    %v12064 = vrot.slane %v11508, %v12063
    %v12065 = vsel %vm11734, %v12064, %v12060
    %v12066 = vlaneseq
    %v12067 = vshrl.u32 %v12066, 7
    %v12068 = vsub.s32 %v11736, %v12067
    %v12069 = vrot.slane %v11511, %v12068
    %v12070 = vsel %vm11741, %v12069, %v12065
    %v12071 = vlaneseq
    %v12072 = vshrl.u32 %v12071, 7
    %v12073 = vsub.s32 %v11743, %v12072
    %v12074 = vrot.slane %v11514, %v12073
    %v12075 = vsel %vm11748, %v12074, %v12070
    %v12076 = vlaneseq
    %v12077 = vshrl.u32 %v12076, 7
    %v12078 = vsub.s32 %v11750, %v12077
    %v12079 = vrot.slane %v11517, %v12078
    %v12080 = vsel %vm11755, %v12079, %v12075
    %v12081 = vlaneseq
    %v12082 = vshrl.u32 %v12081, 7
    %v12083 = vsub.s32 %v11757, %v12082
    %v12084 = vrot.slane %v11520, %v12083
    %v12085 = vsel %vm11762, %v12084, %v12080
    %v12086 = vlaneseq
    %v12087 = vshrl.u32 %v12086, 7
    %v12088 = vsub.s32 %v11764, %v12087
    %v12089 = vrot.slane %v11523, %v12088
    %v12090 = vsel %vm11769, %v12089, %v12085
    %v12091 = vlaneseq
    %v12092 = vshrl.u32 %v12091, 7
    %v12093 = vsub.s32 %v11771, %v12092
    %v12094 = vrot.slane %v11526, %v12093
    %v12095 = vsel %vm11776, %v12094, %v12090
    %v12096 = vlaneseq
    %v12097 = vshrl.u32 %v12096, 7
    %v12098 = vsub.s32 %v11778, %v12097
    %v12099 = vrot.slane %v11529, %v12098
    %v12100 = vsel %vm11783, %v12099, %v12095
    %v12101 = vlaneseq
    %v12102 = vshrl.u32 %v12101, 7
    %v12103 = vsub.s32 %v11675, %v12102
    %v12104 = vrot.slane %v11532, %v12103
    %v12105 = vlaneseq
    %v12106 = vshrl.u32 %v12105, 7
    %v12107 = vsub.s32 %v11680, %v12106
    %v12108 = vrot.slane %v11535, %v12107
    %v12109 = vsel %vm11685, %v12108, %v12104
    %v12110 = vlaneseq
    %v12111 = vshrl.u32 %v12110, 7
    %v12112 = vsub.s32 %v11687, %v12111
    %v12113 = vrot.slane %v11538, %v12112
    %v12114 = vsel %vm11692, %v12113, %v12109
    %v12115 = vlaneseq
    %v12116 = vshrl.u32 %v12115, 7
    %v12117 = vsub.s32 %v11694, %v12116
    %v12118 = vrot.slane %v11541, %v12117
    %v12119 = vsel %vm11699, %v12118, %v12114
    %v12120 = vlaneseq
    %v12121 = vshrl.u32 %v12120, 7
    %v12122 = vsub.s32 %v11701, %v12121
    %v12123 = vrot.slane %v11544, %v12122
    %v12124 = vsel %vm11706, %v12123, %v12119
    %v12125 = vlaneseq
    %v12126 = vshrl.u32 %v12125, 7
    %v12127 = vsub.s32 %v11708, %v12126
    %v12128 = vrot.slane %v11547, %v12127
    %v12129 = vsel %vm11713, %v12128, %v12124
    %v12130 = vlaneseq
    %v12131 = vshrl.u32 %v12130, 7
    %v12132 = vsub.s32 %v11715, %v12131
    %v12133 = vrot.slane %v11550, %v12132
    %v12134 = vsel %vm11720, %v12133, %v12129
    %v12135 = vlaneseq
    %v12136 = vshrl.u32 %v12135, 7
    %v12137 = vsub.s32 %v11722, %v12136
    %v12138 = vrot.slane %v11553, %v12137
    %v12139 = vsel %vm11727, %v12138, %v12134
    %v12140 = vlaneseq
    %v12141 = vshrl.u32 %v12140, 7
    %v12142 = vsub.s32 %v11729, %v12141
    %v12143 = vrot.slane %v11556, %v12142
    %v12144 = vsel %vm11734, %v12143, %v12139
    %v12145 = vlaneseq
    %v12146 = vshrl.u32 %v12145, 7
    %v12147 = vsub.s32 %v11736, %v12146
    %v12148 = vrot.slane %v11559, %v12147
    %v12149 = vsel %vm11741, %v12148, %v12144
    %v12150 = vlaneseq
    %v12151 = vshrl.u32 %v12150, 7
    %v12152 = vsub.s32 %v11743, %v12151
    %v12153 = vrot.slane %v11562, %v12152
    %v12154 = vsel %vm11748, %v12153, %v12149
    %v12155 = vlaneseq
    %v12156 = vshrl.u32 %v12155, 7
    %v12157 = vsub.s32 %v11750, %v12156
    %v12158 = vrot.slane %v11565, %v12157
    %v12159 = vsel %vm11755, %v12158, %v12154
    %v12160 = vlaneseq
    %v12161 = vshrl.u32 %v12160, 7
    %v12162 = vsub.s32 %v11757, %v12161
    %v12163 = vrot.slane %v11568, %v12162
    %v12164 = vsel %vm11762, %v12163, %v12159
    %v12165 = vlaneseq
    %v12166 = vshrl.u32 %v12165, 7
    %v12167 = vsub.s32 %v11764, %v12166
    %v12168 = vrot.slane %v11571, %v12167
    %v12169 = vsel %vm11769, %v12168, %v12164
    %v12170 = vlaneseq
    %v12171 = vshrl.u32 %v12170, 7
    %v12172 = vsub.s32 %v11771, %v12171
    %v12173 = vrot.slane %v11574, %v12172
    %v12174 = vsel %vm11776, %v12173, %v12169
    %v12175 = vlaneseq
    %v12176 = vshrl.u32 %v12175, 7
    %v12177 = vsub.s32 %v11778, %v12176
    %v12178 = vrot.slane %v11577, %v12177
    %v12179 = vsel %vm11783, %v12178, %v12174
    %v12180 = vlaneseq
    %v12181 = vshrl.u32 %v12180, 7
    %v12182 = vsub.s32 %v11675, %v12181
    %v12183 = vrot.slane %v11580, %v12182
    %v12184 = vlaneseq
    %v12185 = vshrl.u32 %v12184, 7
    %v12186 = vsub.s32 %v11680, %v12185
    %v12187 = vrot.slane %v11583, %v12186
    %v12188 = vsel %vm11685, %v12187, %v12183
    %v12189 = vlaneseq
    %v12190 = vshrl.u32 %v12189, 7
    %v12191 = vsub.s32 %v11687, %v12190
    %v12192 = vrot.slane %v11586, %v12191
    %v12193 = vsel %vm11692, %v12192, %v12188
    %v12194 = vlaneseq
    %v12195 = vshrl.u32 %v12194, 7
    %v12196 = vsub.s32 %v11694, %v12195
    %v12197 = vrot.slane %v11589, %v12196
    %v12198 = vsel %vm11699, %v12197, %v12193
    %v12199 = vlaneseq
    %v12200 = vshrl.u32 %v12199, 7
    %v12201 = vsub.s32 %v11701, %v12200
    %v12202 = vrot.slane %v11592, %v12201
    %v12203 = vsel %vm11706, %v12202, %v12198
    %v12204 = vlaneseq
    %v12205 = vshrl.u32 %v12204, 7
    %v12206 = vsub.s32 %v11708, %v12205
    %v12207 = vrot.slane %v11595, %v12206
    %v12208 = vsel %vm11713, %v12207, %v12203
    %v12209 = vlaneseq
    %v12210 = vshrl.u32 %v12209, 7
    %v12211 = vsub.s32 %v11715, %v12210
    %v12212 = vrot.slane %v11598, %v12211
    %v12213 = vsel %vm11720, %v12212, %v12208
    %v12214 = vlaneseq
    %v12215 = vshrl.u32 %v12214, 7
    %v12216 = vsub.s32 %v11722, %v12215
    %v12217 = vrot.slane %v11601, %v12216
    %v12218 = vsel %vm11727, %v12217, %v12213
    %v12219 = vlaneseq
    %v12220 = vshrl.u32 %v12219, 7
    %v12221 = vsub.s32 %v11729, %v12220
    %v12222 = vrot.slane %v11604, %v12221
    %v12223 = vsel %vm11734, %v12222, %v12218
    %v12224 = vlaneseq
    %v12225 = vshrl.u32 %v12224, 7
    %v12226 = vsub.s32 %v11736, %v12225
    %v12227 = vrot.slane %v11607, %v12226
    %v12228 = vsel %vm11741, %v12227, %v12223
    %v12229 = vlaneseq
    %v12230 = vshrl.u32 %v12229, 7
    %v12231 = vsub.s32 %v11743, %v12230
    %v12232 = vrot.slane %v11610, %v12231
    %v12233 = vsel %vm11748, %v12232, %v12228
    %v12234 = vlaneseq
    %v12235 = vshrl.u32 %v12234, 7
    %v12236 = vsub.s32 %v11750, %v12235
    %v12237 = vrot.slane %v11613, %v12236
    %v12238 = vsel %vm11755, %v12237, %v12233
    %v12239 = vlaneseq
    %v12240 = vshrl.u32 %v12239, 7
    %v12241 = vsub.s32 %v11757, %v12240
    %v12242 = vrot.slane %v11616, %v12241
    %v12243 = vsel %vm11762, %v12242, %v12238
    %v12244 = vlaneseq
    %v12245 = vshrl.u32 %v12244, 7
    %v12246 = vsub.s32 %v11764, %v12245
    %v12247 = vrot.slane %v11619, %v12246
    %v12248 = vsel %vm11769, %v12247, %v12243
    %v12249 = vlaneseq
    %v12250 = vshrl.u32 %v12249, 7
    %v12251 = vsub.s32 %v11771, %v12250
    %v12252 = vrot.slane %v11622, %v12251
    %v12253 = vsel %vm11776, %v12252, %v12248
    %v12254 = vlaneseq
    %v12255 = vshrl.u32 %v12254, 7
    %v12256 = vsub.s32 %v11778, %v12255
    %v12257 = vrot.slane %v11625, %v12256
    %v12258 = vsel %vm11783, %v12257, %v12253
    %v12259 = vlaneseq
    %v12260 = vshrl.u32 %v12259, 7
    %v12261 = vsub.s32 %v11675, %v12260
    %v12262 = vrot.slane %v11628, %v12261
    %v12263 = vlaneseq
    %v12264 = vshrl.u32 %v12263, 7
    %v12265 = vsub.s32 %v11680, %v12264
    %v12266 = vrot.slane %v11631, %v12265
    %v12267 = vsel %vm11685, %v12266, %v12262
    %v12268 = vlaneseq
    %v12269 = vshrl.u32 %v12268, 7
    %v12270 = vsub.s32 %v11687, %v12269
    %v12271 = vrot.slane %v11634, %v12270
    %v12272 = vsel %vm11692, %v12271, %v12267
    %v12273 = vlaneseq
    %v12274 = vshrl.u32 %v12273, 7
    %v12275 = vsub.s32 %v11694, %v12274
    %v12276 = vrot.slane %v11637, %v12275
    %v12277 = vsel %vm11699, %v12276, %v12272
    %v12278 = vlaneseq
    %v12279 = vshrl.u32 %v12278, 7
    %v12280 = vsub.s32 %v11701, %v12279
    %v12281 = vrot.slane %v11640, %v12280
    %v12282 = vsel %vm11706, %v12281, %v12277
    %v12283 = vlaneseq
    %v12284 = vshrl.u32 %v12283, 7
    %v12285 = vsub.s32 %v11708, %v12284
    %v12286 = vrot.slane %v11643, %v12285
    %v12287 = vsel %vm11713, %v12286, %v12282
    %v12288 = vlaneseq
    %v12289 = vshrl.u32 %v12288, 7
    %v12290 = vsub.s32 %v11715, %v12289
    %v12291 = vrot.slane %v11646, %v12290
    %v12292 = vsel %vm11720, %v12291, %v12287
    %v12293 = vlaneseq
    %v12294 = vshrl.u32 %v12293, 7
    %v12295 = vsub.s32 %v11722, %v12294
    %v12296 = vrot.slane %v11649, %v12295
    %v12297 = vsel %vm11727, %v12296, %v12292
    %v12298 = vlaneseq
    %v12299 = vshrl.u32 %v12298, 7
    %v12300 = vsub.s32 %v11729, %v12299
    %v12301 = vrot.slane %v11652, %v12300
    %v12302 = vsel %vm11734, %v12301, %v12297
    %v12303 = vlaneseq
    %v12304 = vshrl.u32 %v12303, 7
    %v12305 = vsub.s32 %v11736, %v12304
    %v12306 = vrot.slane %v11655, %v12305
    %v12307 = vsel %vm11741, %v12306, %v12302
    %v12308 = vlaneseq
    %v12309 = vshrl.u32 %v12308, 7
    %v12310 = vsub.s32 %v11743, %v12309
    %v12311 = vrot.slane %v11658, %v12310
    %v12312 = vsel %vm11748, %v12311, %v12307
    %v12313 = vlaneseq
    %v12314 = vshrl.u32 %v12313, 7
    %v12315 = vsub.s32 %v11750, %v12314
    %v12316 = vrot.slane %v11661, %v12315
    %v12317 = vsel %vm11755, %v12316, %v12312
    %v12318 = vlaneseq
    %v12319 = vshrl.u32 %v12318, 7
    %v12320 = vsub.s32 %v11757, %v12319
    %v12321 = vrot.slane %v11664, %v12320
    %v12322 = vsel %vm11762, %v12321, %v12317
    %v12323 = vlaneseq
    %v12324 = vshrl.u32 %v12323, 7
    %v12325 = vsub.s32 %v11764, %v12324
    %v12326 = vrot.slane %v11667, %v12325
    %v12327 = vsel %vm11769, %v12326, %v12322
    %v12328 = vlaneseq
    %v12329 = vshrl.u32 %v12328, 7
    %v12330 = vsub.s32 %v11771, %v12329
    %v12331 = vrot.slane %v11670, %v12330
    %v12332 = vsel %vm11776, %v12331, %v12327
    %v12333 = vlaneseq
    %v12334 = vshrl.u32 %v12333, 7
    %v12335 = vsub.s32 %v11778, %v12334
    %v12336 = vrot.slane %v11673, %v12335
    %v12337 = vsel %vm11783, %v12336, %v12332
    %v12338 = vcombine.low %v11784, %v11863
    %v12339 = vcombine.low %v11942, %v12021
    %v12340 = vcombine.low %v12100, %v12179
    %v12341 = vcombine.low %v12258, %v12337
    %v12343 = vunpack.c.l.s4 1966171168
    %v12344 = vunpack.c.0.s8 %v12343
    %v12345 = vlaneseq
    %v12346 = vshrl.u32 %v12345, 7
    %v12347 = vsub.s32 %v12344, %v12346
    %v12348 = vrot.slane %v12338, %v12347
    %v12350 = vunpack.c.l.s4 1966171168
    %v12351 = vunpack.c.0.s8 %v12350
    %v12352 = vlaneseq
    %v12353 = vshrl.u32 %v12352, 7
    %v12354 = vsub.s32 %v12351, %v12353
    %v12355 = vrot.slane %v12339, %v12354
    %v12357 = vunpack.c.l.s4 1966171168
    %v12358 = vunpack.c.0.s8 %v12357
    %v12359 = vlaneseq
    %v12360 = vshrl.u32 %v12359, 7
    %v12361 = vsub.s32 %v12358, %v12360
    %v12362 = vrot.slane %v12340, %v12361
    %v12364 = vunpack.c.l.s4 1966171168
    %v12365 = vunpack.c.0.s8 %v12364
    %v12366 = vlaneseq
    %v12367 = vshrl.u32 %v12366, 7
    %v12368 = vsub.s32 %v12365, %v12367
    %v12369 = vrot.slane %v12341, %v12368
    %v12370 = vcombine.low %v12348, %v12355
    %v12371 = vcombine.low %v12362, %v12369
    %v12373 = vunpack.c.l.s4 1966171168
    %v12374 = vunpack.c.0.s8 %v12373
    %v12375 = vlaneseq
    %v12376 = vshrl.u32 %v12375, 7
    %v12377 = vsub.s32 %v12374, %v12376
    %v12378 = vrot.slane %v12370, %v12377
    %v12380 = vunpack.c.l.s4 1966171168
    %v12381 = vunpack.c.0.s8 %v12380
    %v12382 = vlaneseq
    %v12383 = vshrl.u32 %v12382, 7
    %v12384 = vsub.s32 %v12381, %v12383
    %v12385 = vrot.slane %v12371, %v12384
    %v12386 = vcombine.low %v12378, %v12385
    %12388 = vst [vmem:[#allocation3] sm:$0xff] %v12386
    // Predicated region
    $region14: #{tpu_custom_call.1} parent=1 // pred_check
      _
    $region15: #{tpu_custom_call.1} parent=1 // pred_check_branch
      %12390 = sbr.rel (0) target = $region17
    $region16: #{tpu_custom_call.1} parent=1 // pred_region
      %s12392 = ssub.s32 128, 128
      %12393 = vsyncadd [#allocation4], %s12392
      %s12395 = sshll.u32 [#allocation3], 4
      %s12396 = int_to_ptr.vmem [resolvable:$true] %s12395
      %12398 = dma.vmem_to_hbm [thread:$0]  %s12396, 128, %s3, [#allocation4]
    $region17: #{tpu_custom_call.1} parent=1 // pred_fallthru
      _
    // Predicated region
    $region18: #{tpu_custom_call.1} parent=1 // pred_check
      _
    $region19: #{tpu_custom_call.1} parent=1 // pred_check_branch
      %12400 = sbr.rel (0) target = $region21
    $region20: #{tpu_custom_call.1} parent=1 // pred_region
      %12401 = dma.done [#allocation4], 128
    $region21: #{tpu_custom_call.1} parent=1 // pred_fallthru
      _
    %12402 = vsyncpa [#allocation4], 1

</llo_original>
